<compile_context>
chip_gen: v5e
topology: v5e:2x2
jax: 0.10.0
libtpu: 0.0.40
codegen_flags: <defaults>
</compile_context>

<pallas_src>
import jax
import jax.numpy as jnp
import numpy as np
from jax.experimental import pallas as pl
from jax.experimental.pallas import tpu as pltpu

_LANE = 128
_KSIZE = 5  # both convs use 5x5 kernels


# ---------------------------------------------------------------------------
# The fused Pallas kernel: one batch tile per grid step, everything in VMEM.
# ---------------------------------------------------------------------------
def _lenet_kernel(patch_ref, w1_ref, sp_ref, w2_ref, bias_ref,
                  fw1_ref, fw2_ref, fw3_ref, fb3_ref, out_ref):
    f32 = jnp.float32
    bt, m1, k1p = patch_ref.shape            # (B_TILE, Ho*Wo, 128)
    taps, c1p, c2 = w2_ref.shape             # (25, 8, 16)
    m3 = sp_ref.shape[0] // taps             # conv2 output positions

    # conv1 for the whole batch tile: one lane-dense bf16 matmul, f32 accum.
    x = patch_ref[...].reshape(bt * m1, k1p)                    # no-op reshape
    z1 = jnp.dot(x, w1_ref[...], preferred_element_type=f32)    # (bt*m1, 8)
    a1 = jax.nn.sigmoid(z1 + bias_ref[0:1, 0:c1p])
    # lanes 6,7 are sigmoid(0)=0.5 junk; conv2's zero-padded Cin rows kill them.

    # pool1 + conv2 row-gather folded into one host constant SP (25*m3, m1);
    # per-sample left matmuls are independent (the scheduler overlaps them).
    shifted = [jnp.dot(sp_ref[...], a1[b * m1:(b + 1) * m1, :],
                       preferred_element_type=f32) for b in range(bt)]
    shifted = jnp.stack(shifted, axis=0).reshape(bt * taps, m3, c1p)

    # conv2 weight application: ONE batched matmul over (sample, tap).
    w2_t = jnp.tile(w2_ref[...], (bt, 1, 1))                    # (bt*25, 8, 16)
    z2 = jnp.einsum('kmc,kcn->kmn', shifted, w2_t,
                    preferred_element_type=f32)                 # (bt*25, m3, 16)
    z2 = z2.reshape(bt, taps, m3, c2).sum(axis=1)               # (bt, m3, 16)
    a2 = jax.nn.sigmoid(z2 + bias_ref[1:2, 0:c2])

    # AvgPool2d(2,2) + AdaptiveAvgPool2d((1,1)) == exact mean over spatial.
    feat = jnp.mean(a2, axis=1)                                 # (bt, 16)

    # FC head 16 -> 120 -> 84 -> num_classes, batched across the tile.
    n1, n2 = fw1_ref.shape[1], fw2_ref.shape[1]
    h = jax.nn.sigmoid(jnp.dot(feat, fw1_ref[...], preferred_element_type=f32)
                       + bias_ref[2:3, 0:n1])
    h = jax.nn.sigmoid(jnp.dot(h, fw2_ref[...], preferred_element_type=f32)
                       + bias_ref[3:4, 0:n2])
    out = jnp.dot(h, fw3_ref[...], preferred_element_type=f32) + fb3_ref[...]
    out_ref[0] = out.astype(out_ref.dtype)                      # (bt, 128) lane-dense


# ---------------------------------------------------------------------------
# Constant spatial-mixing matrices (pure numpy; compile-time constants).
# ---------------------------------------------------------------------------
def _avg_pool2x2_matrix(h, w):
    ho, wo = h // 2, w // 2
    m = np.zeros((ho * wo, h * w), np.float32)
    for i in range(ho):
        for j in range(wo):
            for di in (0, 1):
                for dj in (0, 1):
                    m[i * wo + j, (2 * i + di) * w + (2 * j + dj)] = 0.25
    return m


def _shift_select_matrices(h, w, k):
    ho, wo = h - k + 1, w - k + 1
    sel = np.zeros((k * k, ho * wo, h * w), np.float32)
    for dh in range(k):
        for dw in range(k):
            t = dh * k + dw
            for oh in range(ho):
                for ow in range(wo):
                    sel[t, oh * wo + ow, (oh + dh) * w + (ow + dw)] = 1.0
    return sel


# ---------------------------------------------------------------------------
# Wrapper glue: layout only (NCHW->NHWC, conv1 im2col, bf16 cast, padding).
# ---------------------------------------------------------------------------
def _im2col_conv1(x_nhwc, k, pad):
    n, h, w, c = x_nhwc.shape
    xp = jnp.pad(x_nhwc, ((0, 0), (pad, pad), (pad, pad), (0, 0)))
    ho, wo = h + 2 * pad - k + 1, w + 2 * pad - k + 1
    cols = [xp[:, i:i + ho, j:j + wo, :] for i in range(k) for j in range(k)]
    patches = jnp.stack(cols, axis=3).reshape(n, ho * wo, k * k * c)
    return patches, ho, wo


def _pad_to(a, shape):
    return jnp.pad(a, [(0, t - s) for s, t in zip(a.shape, shape)])


def _round_up(x, m):
    return (x + m - 1) // m * m


def lenet_forward(params, x_nchw, *, b_tile=4):
    num_classes = params["fw3"].shape[1]
    n, cin, _, _ = x_nchw.shape
    assert cin == 3, "LeNet expects 3 input channels"
    x = jnp.transpose(x_nchw, (0, 2, 3, 1)).astype(jnp.float32)   # NCHW -> NHWC

    # conv1 im2col on the raw input; K padded to 128 lanes, cast to bf16.
    patches, ho, wo = _im2col_conv1(x, _KSIZE, pad=2)
    k1 = patches.shape[-1]                                        # 5*5*3 = 75
    k1p = _round_up(k1, _LANE)
    patches = jnp.pad(patches, ((0, 0), (0, 0), (0, k1p - k1))).astype(jnp.bfloat16)

    # Shape checks the compile-time pooling/selection constants rely on.
    assert ho % 2 == 0 and wo % 2 == 0, "AvgPool2d(2,2) needs even spatial dims"
    hp1, wp1 = ho // 2, wo // 2
    assert hp1 >= _KSIZE and wp1 >= _KSIZE, "conv2 needs >=5x5 input"
    ho2, wo2 = hp1 - (_KSIZE - 1), wp1 - (_KSIZE - 1)
    assert ho2 % 2 == 0 and wo2 % 2 == 0, "pool2 must tile exactly (=> gpool==mean)"
    m1, m2, m3 = ho * wo, hp1 * wp1, ho2 * wo2
    assert m1 % 8 == 0 and m3 % 8 == 0, "keeps in-kernel reshapes layout-preserving"

    # Pad the batch to a multiple of the tile; keep grid >= 2 when possible.
    n_pad = _round_up(max(n, 1), b_tile)
    if n_pad != n:
        patches = jnp.pad(patches, ((0, n_pad - n), (0, 0), (0, 0)))
    t = n_pad // b_tile

    # Host-side constants: pool1 folded into the conv2 tap row-gather.
    pool1_m = _avg_pool2x2_matrix(ho, wo)                         # (m2, m1)
    sel2 = _shift_select_matrices(hp1, wp1, _KSIZE)               # (25, m3, m2)
    sp = (sel2.reshape(_KSIZE * _KSIZE * m3, m2) @ pool1_m).astype(np.float32)

    # Weights at (near-)real channel widths; only conv1 K and fc3 out padded.
    c1p = 8                                                       # conv1 Cout 6 -> 8
    w1p = _pad_to(params["w1"], (k1p, c1p)).astype(jnp.bfloat16)
    w2p = _pad_to(params["w2"].reshape(_KSIZE * _KSIZE, 6, 16),
                  (_KSIZE * _KSIZE, c1p, 16)).astype(jnp.float32)
    oc_pad = _round_up(num_classes, _LANE)
    fw1 = params["fw1"].astype(jnp.float32)                       # (16, 120)
    fw2 = params["fw2"].astype(jnp.float32)                       # (120, 84)
    fw3 = _pad_to(params["fw3"], (params["fw3"].shape[0], oc_pad)).astype(jnp.float32)
    fb3 = _pad_to(params["fb3"].reshape(1, -1), (1, oc_pad)).astype(jnp.float32)

    # Small biases packed into one (8, 128) slab: rows = [b1, b2, fb1, fb2].
    def _row(v):
        return _pad_to(v.reshape(1, -1).astype(jnp.float32), (1, _LANE))
    bias_slab = jnp.concatenate(
        [_row(params["b1"]), _row(params["b2"]),
         _row(params["fb1"]), _row(params["fb2"]),
         jnp.zeros((4, _LANE), jnp.float32)], axis=0)             # (8, 128)

    const2 = lambda a: pl.BlockSpec(a.shape, lambda i: (0, 0))
    const3 = lambda a: pl.BlockSpec(a.shape, lambda i: (0, 0, 0))

    out = pl.pallas_call(
        _lenet_kernel,
        out_shape=jax.ShapeDtypeStruct((t, b_tile, oc_pad), jnp.float32),
        grid=(t,),
        in_specs=[
            pl.BlockSpec((b_tile, m1, k1p), lambda i: (i, 0, 0)),  # bf16 patches tile
            const2(w1p),        # conv1 weights (128, 8) bf16
            const2(sp),         # pool1 x conv2 row-gather (25*m3, m1) f32
            const3(w2p),        # conv2 weights (25, 8, 16) f32
            const2(bias_slab),  # packed biases (8, 128) f32
            const2(fw1), const2(fw2), const2(fw3), const2(fb3),
        ],
        out_specs=pl.BlockSpec((1, b_tile, oc_pad), lambda i: (i, 0, 0)),
        compiler_params=pltpu.CompilerParams(
            dimension_semantics=("parallel",)),   # shard batch tiles across TCs
    )(patches, w1p, sp, w2p, bias_slab, fw1, fw2, fw3, fb3)

    return out.reshape(n_pad, oc_pad)[:n, :num_classes]


# ---------------------------------------------------------------------------
# Deterministic parameter init (shapes from the PyTorch module __init__).
# ---------------------------------------------------------------------------
def init_params(key, num_classes=10):
    def uniform(k, shape, fan_in):
        bound = 1.0 / (fan_in ** 0.5)
        return jax.random.uniform(k, shape, jnp.float32, -bound, bound)

    ks = jax.random.split(key, 10)
    p = {}
    p["w1"] = uniform(ks[0], (5 * 5 * 3, 6), 5 * 5 * 3)       # conv1 (KH*KW*Cin, Cout)
    p["b1"] = uniform(ks[1], (6,), 5 * 5 * 3)
    p["w2"] = uniform(ks[2], (5 * 5 * 6, 16), 5 * 5 * 6)      # conv2
    p["b2"] = uniform(ks[3], (16,), 5 * 5 * 6)
    p["fw1"] = uniform(ks[4], (16, 120), 16)
    p["fb1"] = uniform(ks[5], (120,), 16)
    p["fw2"] = uniform(ks[6], (120, 84), 120)
    p["fb2"] = uniform(ks[7], (84,), 120)
    p["fw3"] = uniform(ks[8], (84, num_classes), 84)
    p["fb3"] = uniform(ks[9], (num_classes,), 84)
    return p


# ---------------------------------------------------------------------------
# Pure-JAX reference (independent: lax.conv / reduce_window) for validation.
# ---------------------------------------------------------------------------
def lenet_reference(params, x_nchw):
    hi = jax.lax.Precision.HIGHEST
    dn = ("NCHW", "OIHW", "NCHW")

    def to_oihw(w, kh, kw, cin, cout):
        return jnp.transpose(w.reshape(kh, kw, cin, cout), (3, 2, 0, 1))

    x = x_nchw.astype(jnp.float32)
    w1 = to_oihw(params["w1"], 5, 5, 3, 6)
    w2 = to_oihw(params["w2"], 5, 5, 6, 16)

    y = jax.lax.conv_general_dilated(x, w1, (1, 1), ((2, 2), (2, 2)),
                                     dimension_numbers=dn, precision=hi)
    y = jax.nn.sigmoid(y + params["b1"][None, :, None, None])
    y = jax.lax.reduce_window(y, jnp.float32(0.0), jax.lax.add,
                              (1, 1, 2, 2), (1, 1, 2, 2), "VALID") / 4.0
    y = jax.lax.conv_general_dilated(y, w2, (1, 1), "VALID",
                                     dimension_numbers=dn, precision=hi)
    y = jax.nn.sigmoid(y + params["b2"][None, :, None, None])
    y = jax.lax.reduce_window(y, jnp.float32(0.0), jax.lax.add,
                              (1, 1, 2, 2), (1, 1, 2, 2), "VALID") / 4.0
    feat = jnp.mean(y, axis=(2, 3))  # (N, 16)
    h = jax.nn.sigmoid(jnp.dot(feat, params["fw1"], precision=hi) + params["fb1"])
    h = jax.nn.sigmoid(jnp.dot(h, params["fw2"], precision=hi) + params["fb2"])
    return jnp.dot(h, params["fw3"], precision=hi) + params["fb3"]


if __name__ == "__main__":
    num_classes = 10
    key = jax.random.PRNGKey(0)
    kx, kp = jax.random.split(key)

    # Small shapes consistent with the module: NCHW, 3 input channels.
    # N=8 with B_TILE=4 -> grid of 2 steps (keeps both v7x TensorCores busy).
    x = jax.random.normal(kx, (8, 3, 16, 16), jnp.float32)
    params = init_params(kp, num_classes)

    fwd = jax.jit(lambda p, xx: lenet_forward(p, xx, b_tile=4))
    out = jax.block_until_ready(fwd(params, x))
    assert out.shape == (8, num_classes), out.shape

    ref = lenet_reference(params, x)
    max_err = float(jnp.max(jnp.abs(out - ref)))
    # bf16 im2col patches / conv1 weights (f32 accumulation) -> slightly looser tol.
    assert jnp.allclose(out, ref, atol=5e-3, rtol=5e-3), f"max_err={max_err}"

    print("KERNEL_OK")
</pallas_src>

<mosaic_0001>
module attributes {stable_mosaic.version = 11 : i64} {
  func.func @_lenet_kernel(%arg0: i32, %arg1: memref<4x256x128xbf16, #tpu.memory_space<vmem>>, %arg2: memref<128x8xbf16, #tpu.memory_space<vmem>>, %arg3: memref<400x256xf32, #tpu.memory_space<vmem>>, %arg4: memref<25x8x16xf32, #tpu.memory_space<vmem>>, %arg5: memref<8x128xf32, #tpu.memory_space<vmem>>, %arg6: memref<16x120xf32, #tpu.memory_space<vmem>>, %arg7: memref<120x84xf32, #tpu.memory_space<vmem>>, %arg8: memref<84x128xf32, #tpu.memory_space<vmem>>, %arg9: memref<1x128xf32, #tpu.memory_space<vmem>>, %arg10: memref<1x4x128xf32, #tpu.memory_space<vmem>>) attributes {dimension_semantics = [#tpu.dimension_semantics<parallel>], iteration_bounds = array<i64: 2>, scalar_prefetch = 0 : i64, scratch_operands = 0 : i64, tpu.core_type = #tpu.core_type<tc>, window_params = [{transform_indices = @transform_0, window_bounds = array<i64: 4, 256, 128>}, {pipeline_mode = #tpu.pipeline_mode<synchronous>, transform_indices = @transform_1, window_bounds = array<i64: 128, 8>}, {pipeline_mode = #tpu.pipeline_mode<synchronous>, transform_indices = @transform_2, window_bounds = array<i64: 400, 256>}, {pipeline_mode = #tpu.pipeline_mode<synchronous>, transform_indices = @transform_3, window_bounds = array<i64: 25, 8, 16>}, {pipeline_mode = #tpu.pipeline_mode<synchronous>, transform_indices = @transform_4, window_bounds = array<i64: 8, 128>}, {pipeline_mode = #tpu.pipeline_mode<synchronous>, transform_indices = @transform_5, window_bounds = array<i64: 16, 120>}, {pipeline_mode = #tpu.pipeline_mode<synchronous>, transform_indices = @transform_6, window_bounds = array<i64: 120, 84>}, {pipeline_mode = #tpu.pipeline_mode<synchronous>, transform_indices = @transform_7, window_bounds = array<i64: 84, 128>}, {pipeline_mode = #tpu.pipeline_mode<synchronous>, transform_indices = @transform_8, window_bounds = array<i64: 1, 128>}, {transform_indices = @transform_9, window_bounds = array<i64: 1, 4, 128>}]} {
    %c0 = arith.constant 0 : index
    %c0_0 = arith.constant 0 : index
    %c0_1 = arith.constant 0 : index
    %0 = vector.load %arg1[%c0, %c0_0, %c0_1] : memref<4x256x128xbf16, #tpu.memory_space<vmem>>, vector<4x256x128xbf16>
    %1 = vector.shape_cast %0 : vector<4x256x128xbf16> to vector<1024x128xbf16>
    %c0_2 = arith.constant 0 : index
    %c0_3 = arith.constant 0 : index
    %2 = vector.load %arg2[%c0_2, %c0_3] : memref<128x8xbf16, #tpu.memory_space<vmem>>, vector<128x8xbf16>
    %cst = arith.constant dense<0.000000e+00> : vector<1024x8xf32>
    %3 = tpu.matmul %1, %2, %cst {dimension_numbers = #tpu.dot_dimension_numbers<[1], [0], [0], [1], [0, 0, 1, 1], [], []>} : vector<1024x128xbf16>, vector<128x8xbf16>, vector<1024x8xf32> -> vector<1024x8xf32>
    %c0_4 = arith.constant 0 : index
    %c0_5 = arith.constant 0 : index
    %4 = vector.load %arg5[%c0_4, %c0_5] : memref<8x128xf32, #tpu.memory_space<vmem>>, vector<1x8xf32>
    %5 = vector.broadcast %4 : vector<1x8xf32> to vector<1024x8xf32>
    %6 = arith.addf %3, %5 : vector<1024x8xf32>
    %7 = arith.negf %6 : vector<1024x8xf32>
    %8 = math.exp %7 : vector<1024x8xf32>
    %cst_6 = arith.constant 1.000000e+00 : f32
    %9 = vector.broadcast %cst_6 : f32 to vector<1024x8xf32>
    %10 = arith.addf %9, %8 : vector<1024x8xf32>
    %11 = arith.divf %9, %10 : vector<1024x8xf32>
    %c0_7 = arith.constant 0 : index
    %c0_8 = arith.constant 0 : index
    %12 = vector.load %arg3[%c0_7, %c0_8] : memref<400x256xf32, #tpu.memory_space<vmem>>, vector<400x256xf32>
    %13 = vector.extract_strided_slice %11 {offsets = [0, 0], sizes = [256, 8], strides = [1, 1]} : vector<1024x8xf32> to vector<256x8xf32>
    %cst_9 = arith.constant dense<0.000000e+00> : vector<400x8xf32>
    %14 = tpu.matmul %12, %13, %cst_9 {dimension_numbers = #tpu.dot_dimension_numbers<[1], [0], [0], [1], [0, 0, 1, 1], [], []>} : vector<400x256xf32>, vector<256x8xf32>, vector<400x8xf32> -> vector<400x8xf32>
    %c0_10 = arith.constant 0 : index
    %c0_11 = arith.constant 0 : index
    %15 = vector.load %arg3[%c0_10, %c0_11] : memref<400x256xf32, #tpu.memory_space<vmem>>, vector<400x256xf32>
    %16 = vector.extract_strided_slice %11 {offsets = [256, 0], sizes = [256, 8], strides = [1, 1]} : vector<1024x8xf32> to vector<256x8xf32>
    %cst_12 = arith.constant dense<0.000000e+00> : vector<400x8xf32>
    %17 = tpu.matmul %15, %16, %cst_12 {dimension_numbers = #tpu.dot_dimension_numbers<[1], [0], [0], [1], [0, 0, 1, 1], [], []>} : vector<400x256xf32>, vector<256x8xf32>, vector<400x8xf32> -> vector<400x8xf32>
    %c0_13 = arith.constant 0 : index
    %c0_14 = arith.constant 0 : index
    %18 = vector.load %arg3[%c0_13, %c0_14] : memref<400x256xf32, #tpu.memory_space<vmem>>, vector<400x256xf32>
    %19 = vector.extract_strided_slice %11 {offsets = [512, 0], sizes = [256, 8], strides = [1, 1]} : vector<1024x8xf32> to vector<256x8xf32>
    %cst_15 = arith.constant dense<0.000000e+00> : vector<400x8xf32>
    %20 = tpu.matmul %18, %19, %cst_15 {dimension_numbers = #tpu.dot_dimension_numbers<[1], [0], [0], [1], [0, 0, 1, 1], [], []>} : vector<400x256xf32>, vector<256x8xf32>, vector<400x8xf32> -> vector<400x8xf32>
    %c0_16 = arith.constant 0 : index
    %c0_17 = arith.constant 0 : index
    %21 = vector.load %arg3[%c0_16, %c0_17] : memref<400x256xf32, #tpu.memory_space<vmem>>, vector<400x256xf32>
    %22 = vector.extract_strided_slice %11 {offsets = [768, 0], sizes = [256, 8], strides = [1, 1]} : vector<1024x8xf32> to vector<256x8xf32>
    %cst_18 = arith.constant dense<0.000000e+00> : vector<400x8xf32>
    %23 = tpu.matmul %21, %22, %cst_18 {dimension_numbers = #tpu.dot_dimension_numbers<[1], [0], [0], [1], [0, 0, 1, 1], [], []>} : vector<400x256xf32>, vector<256x8xf32>, vector<400x8xf32> -> vector<400x8xf32>
    %24 = vector.shape_cast %14 : vector<400x8xf32> to vector<1x400x8xf32>
    %25 = vector.shape_cast %17 : vector<400x8xf32> to vector<1x400x8xf32>
    %26 = vector.shape_cast %20 : vector<400x8xf32> to vector<1x400x8xf32>
    %27 = vector.shape_cast %23 : vector<400x8xf32> to vector<1x400x8xf32>
    %28 = tpu.concatenate %24, %25, %26, %27 in 0 : vector<1x400x8xf32>, vector<1x400x8xf32>, vector<1x400x8xf32>, vector<1x400x8xf32> -> vector<4x400x8xf32>
    %29 = vector.shape_cast %28 : vector<4x400x8xf32> to vector<100x16x8xf32>
    %c0_19 = arith.constant 0 : index
    %c0_20 = arith.constant 0 : index
    %c0_21 = arith.constant 0 : index
    %30 = vector.load %arg4[%c0_19, %c0_20, %c0_21] : memref<25x8x16xf32, #tpu.memory_space<vmem>>, vector<25x8x16xf32>
    %31 = tpu.concatenate %30, %30, %30, %30 in 0 : vector<25x8x16xf32>, vector<25x8x16xf32>, vector<25x8x16xf32>, vector<25x8x16xf32> -> vector<100x8x16xf32>
    "tpu.trace_start"() <{level = 10 : i32, message = "kmc,kcn->kmn"}> : () -> ()
    %cst_22 = arith.constant dense<0.000000e+00> : vector<100x16x16xf32>
    %32 = tpu.matmul %29, %31, %cst_22 {dimension_numbers = #tpu.dot_dimension_numbers<[2], [1], [1], [2], [0, 0, 0, 1, 1, 2], [0], [0]>} : vector<100x16x8xf32>, vector<100x8x16xf32>, vector<100x16x16xf32> -> vector<100x16x16xf32>
    "tpu.trace_stop"() : () -> ()
    %33 = vector.shape_cast %32 : vector<100x16x16xf32> to vector<4x25x16x16xf32>
    %cst_23 = arith.constant dense<0.000000e+00> : vector<4x16x16xf32>
    %34 = vector.multi_reduction <add>, %33, %cst_23 [1] : vector<4x25x16x16xf32> to vector<4x16x16xf32>
    %c1 = arith.constant 1 : index
    %c0_24 = arith.constant 0 : index
    %35 = vector.load %arg5[%c1, %c0_24] : memref<8x128xf32, #tpu.memory_space<vmem>>, vector<1x16xf32>
    %36 = vector.shape_cast %35 : vector<1x16xf32> to vector<1x1x16xf32>
    %37 = vector.broadcast %36 : vector<1x1x16xf32> to vector<4x16x16xf32>
    %38 = arith.addf %34, %37 : vector<4x16x16xf32>
    %39 = arith.negf %38 : vector<4x16x16xf32>
    %40 = math.exp %39 : vector<4x16x16xf32>
    %cst_25 = arith.constant 1.000000e+00 : f32
    %41 = vector.broadcast %cst_25 : f32 to vector<4x16x16xf32>
    %42 = arith.addf %41, %40 : vector<4x16x16xf32>
    %43 = arith.divf %41, %42 : vector<4x16x16xf32>
    %cst_26 = arith.constant dense<0.000000e+00> : vector<4x16xf32>
    %44 = vector.multi_reduction <add>, %43, %cst_26 [1] : vector<4x16x16xf32> to vector<4x16xf32>
    %cst_27 = arith.constant 1.600000e+01 : f32
    %45 = vector.broadcast %cst_27 : f32 to vector<4x16xf32>
    %46 = arith.divf %44, %45 : vector<4x16xf32>
    %c0_28 = arith.constant 0 : index
    %c0_29 = arith.constant 0 : index
    %47 = vector.load %arg6[%c0_28, %c0_29] : memref<16x120xf32, #tpu.memory_space<vmem>>, vector<16x120xf32>
    %cst_30 = arith.constant dense<0.000000e+00> : vector<4x120xf32>
    %48 = tpu.matmul %46, %47, %cst_30 {dimension_numbers = #tpu.dot_dimension_numbers<[1], [0], [0], [1], [0, 0, 1, 1], [], []>} : vector<4x16xf32>, vector<16x120xf32>, vector<4x120xf32> -> vector<4x120xf32>
    %c2 = arith.constant 2 : index
    %c0_31 = arith.constant 0 : index
    %49 = vector.load %arg5[%c2, %c0_31] : memref<8x128xf32, #tpu.memory_space<vmem>>, vector<1x120xf32>
    %50 = vector.broadcast %49 : vector<1x120xf32> to vector<4x120xf32>
    %51 = arith.addf %48, %50 : vector<4x120xf32>
    %52 = arith.negf %51 : vector<4x120xf32>
    %53 = math.exp %52 : vector<4x120xf32>
    %cst_32 = arith.constant 1.000000e+00 : f32
    %54 = vector.broadcast %cst_32 : f32 to vector<4x120xf32>
    %55 = arith.addf %54, %53 : vector<4x120xf32>
    %56 = arith.divf %54, %55 : vector<4x120xf32>
    %c0_33 = arith.constant 0 : index
    %c0_34 = arith.constant 0 : index
    %57 = vector.load %arg7[%c0_33, %c0_34] : memref<120x84xf32, #tpu.memory_space<vmem>>, vector<120x84xf32>
    %cst_35 = arith.constant dense<0.000000e+00> : vector<4x84xf32>
    %58 = tpu.matmul %56, %57, %cst_35 {dimension_numbers = #tpu.dot_dimension_numbers<[1], [0], [0], [1], [0, 0, 1, 1], [], []>} : vector<4x120xf32>, vector<120x84xf32>, vector<4x84xf32> -> vector<4x84xf32>
    %c3 = arith.constant 3 : index
    %c0_36 = arith.constant 0 : index
    %59 = vector.load %arg5[%c3, %c0_36] : memref<8x128xf32, #tpu.memory_space<vmem>>, vector<1x84xf32>
    %60 = vector.broadcast %59 : vector<1x84xf32> to vector<4x84xf32>
    %61 = arith.addf %58, %60 : vector<4x84xf32>
    %62 = arith.negf %61 : vector<4x84xf32>
    %63 = math.exp %62 : vector<4x84xf32>
    %cst_37 = arith.constant 1.000000e+00 : f32
    %64 = vector.broadcast %cst_37 : f32 to vector<4x84xf32>
    %65 = arith.addf %64, %63 : vector<4x84xf32>
    %66 = arith.divf %64, %65 : vector<4x84xf32>
    %c0_38 = arith.constant 0 : index
    %c0_39 = arith.constant 0 : index
    %67 = vector.load %arg8[%c0_38, %c0_39] : memref<84x128xf32, #tpu.memory_space<vmem>>, vector<84x128xf32>
    %cst_40 = arith.constant dense<0.000000e+00> : vector<4x128xf32>
    %68 = tpu.matmul %66, %67, %cst_40 {dimension_numbers = #tpu.dot_dimension_numbers<[1], [0], [0], [1], [0, 0, 1, 1], [], []>} : vector<4x84xf32>, vector<84x128xf32>, vector<4x128xf32> -> vector<4x128xf32>
    %c0_41 = arith.constant 0 : index
    %c0_42 = arith.constant 0 : index
    %69 = vector.load %arg9[%c0_41, %c0_42] : memref<1x128xf32, #tpu.memory_space<vmem>>, vector<1x128xf32>
    %70 = vector.broadcast %69 : vector<1x128xf32> to vector<4x128xf32>
    %71 = arith.addf %68, %70 : vector<4x128xf32>
    %c0_43 = arith.constant 0 : index
    %c0_44 = arith.constant 0 : index
    %c0_45 = arith.constant 0 : index
    %72 = vector.load %arg10[%c0_43, %c0_44, %c0_45] : memref<1x4x128xf32, #tpu.memory_space<vmem>>, vector<1x4x128xf32>
    %73 = vector.shape_cast %72 : vector<1x4x128xf32> to vector<4x128xf32>
    %74 = vector.shape_cast %71 : vector<4x128xf32> to vector<1x4x128xf32>
    tpu.vector_store %arg10[%c0_43, %c0_44, %c0_45], %74 {strides = array<i32>} : memref<1x4x128xf32, #tpu.memory_space<vmem>>, vector<1x4x128xf32>,
    return
  }
  func.func @transform_0(%arg0: i32) -> (i32, i32, i32) {
    %c0_i32 = arith.constant 0 : i32
    %c0_i32_0 = arith.constant 0 : i32
    %c0_i32_1 = arith.constant 0 : i32
    return %arg0, %c0_i32, %c0_i32_0 : i32, i32, i32
  }
  func.func @transform_1(%arg0: i32) -> (i32, i32) {
    %c0_i32 = arith.constant 0 : i32
    %c0_i32_0 = arith.constant 0 : i32
    %c0_i32_1 = arith.constant 0 : i32
    return %c0_i32, %c0_i32_0 : i32, i32
  }
  func.func @transform_2(%arg0: i32) -> (i32, i32) {
    %c0_i32 = arith.constant 0 : i32
    %c0_i32_0 = arith.constant 0 : i32
    %c0_i32_1 = arith.constant 0 : i32
    return %c0_i32, %c0_i32_0 : i32, i32
  }
  func.func @transform_3(%arg0: i32) -> (i32, i32, i32) {
    %c0_i32 = arith.constant 0 : i32
    %c0_i32_0 = arith.constant 0 : i32
    %c0_i32_1 = arith.constant 0 : i32
    %c0_i32_2 = arith.constant 0 : i32
    return %c0_i32, %c0_i32_0, %c0_i32_1 : i32, i32, i32
  }
  func.func @transform_4(%arg0: i32) -> (i32, i32) {
    %c0_i32 = arith.constant 0 : i32
    %c0_i32_0 = arith.constant 0 : i32
    %c0_i32_1 = arith.constant 0 : i32
    return %c0_i32, %c0_i32_0 : i32, i32
  }
  func.func @transform_5(%arg0: i32) -> (i32, i32) {
    %c0_i32 = arith.constant 0 : i32
    %c0_i32_0 = arith.constant 0 : i32
    %c0_i32_1 = arith.constant 0 : i32
    return %c0_i32, %c0_i32_0 : i32, i32
  }
  func.func @transform_6(%arg0: i32) -> (i32, i32) {
    %c0_i32 = arith.constant 0 : i32
    %c0_i32_0 = arith.constant 0 : i32
    %c0_i32_1 = arith.constant 0 : i32
    return %c0_i32, %c0_i32_0 : i32, i32
  }
  func.func @transform_7(%arg0: i32) -> (i32, i32) {
    %c0_i32 = arith.constant 0 : i32
    %c0_i32_0 = arith.constant 0 : i32
    %c0_i32_1 = arith.constant 0 : i32
    return %c0_i32, %c0_i32_0 : i32, i32
  }
  func.func @transform_8(%arg0: i32) -> (i32, i32) {
    %c0_i32 = arith.constant 0 : i32
    %c0_i32_0 = arith.constant 0 : i32
    %c0_i32_1 = arith.constant 0 : i32
    return %c0_i32, %c0_i32_0 : i32, i32
  }
  func.func @transform_9(%arg0: i32) -> (i32, i32, i32) {
    %c0_i32 = arith.constant 0 : i32
    %c0_i32_0 = arith.constant 0 : i32
    %c0_i32_1 = arith.constant 0 : i32
    return %arg0, %c0_i32, %c0_i32_0 : i32, i32, i32
  }
}

</mosaic_0001>

<llo_original>
// kernel: _lambda_.1
$region0: #{_lambda_.1}
  #allocation0 [shape = 'u32[]', space=smem, size = 0x4, offset = 0x4, fixed_abs, tag = 'smem constant byte address 0x4 - core index']
  #allocation1 [shape = 'u32[72,128]{1,0:T(1,128)}', space=vmem, size = 0x9000, scoped, tag = 'internal scratch']
  %s0 = inlined_call_operand.vmem [shape: bf16[8,256,128], index: 0, kind: input, shape index: {}]
  %s1 = inlined_call_operand.vmem [shape: bf16[128,8], index: 1, kind: input, shape index: {}]
  %s2 = inlined_call_operand.vmem [shape: f32[400,256], index: 2, kind: input, shape index: {}]
  %s3 = inlined_call_operand.vmem [shape: f32[25,8,16], index: 3, kind: input, shape index: {}]
  %s4 = inlined_call_operand.vmem [shape: f32[8,128], index: 4, kind: input, shape index: {}]
  %s5 = inlined_call_operand.vmem [shape: f32[16,120], index: 5, kind: input, shape index: {}]
  %s6 = inlined_call_operand.vmem [shape: f32[120,84], index: 6, kind: input, shape index: {}]
  %s7 = inlined_call_operand.vmem [shape: f32[84,128], index: 7, kind: input, shape index: {}]
  %s8 = inlined_call_operand.vmem [shape: f32[1,128], index: 8, kind: input, shape index: {}]
  %s9 = inlined_call_operand.hbm [shape: f32[2,4,128], index: 9, kind: output, shape index: {}]
  %s10 = sld [smem:[#allocation0]]
  $region69: #{_lambda_.1} parent=0
    _
  %s12 = ssub.s32 1, %s10
  %s13 = scalar_select 0, %s12, %s10
  $region1: #{_lambda_.1} parent=0
    #allocation2 [shape = 'u8[4096]{0}', space=vmem, size = 0x1000, scoped, tag = 'output window, operand 0']
    #allocation3 [shape = 's32[2]{0}', space=sflag, size = 0x8, scoped, tag = 'scoped memory for _lambda_.1']
    %14 = vsyncpa [#allocation3], 0
    %s15 = scalar_lea.sflag [#allocation3], 1
    %16 = vsyncpa %s15, 0
    loop: start=0, step=1, limit=4
    $region2: #{_lambda_.1} parent=1 // loop_pre_header
      _
    $region3: #{_lambda_.1} parent=1 // loop_header
      %s18 = sphi 0, %s22
      %p19 = scmp.ge.s32.totalorder %s18, 4
      %s28 = sphi 0, %s30
      %s31 = sphi 0, %s28
      %s32 = sphi 0, %s31
      %s48 = sphi 0, %s32
      %s52 = sphi 0, %s52
      %s54 = sphi 0, %s52
      %s55 = sphi 0, %s54
      %s69 = sphi 0, %s55
      %s73 = sphi 0, %s73
      %s75 = sphi 0, %s73
      %s76 = sphi 0, %s75
      %s90 = sphi 0, %s76
      %s94 = sphi 0, %s94
      %s96 = sphi 0, %s94
      %s97 = sphi 0, %s96
      %s111 = sphi 0, %s97
      %s115 = sphi 0, %s115
      %s117 = sphi 0, %s115
      %s118 = sphi 0, %s117
      %s132 = sphi 0, %s118
      %s136 = sphi 0, %s136
      %s138 = sphi 0, %s136
      %s139 = sphi 0, %s138
      %s153 = sphi 0, %s139
      %s157 = sphi 0, %s157
      %s159 = sphi 0, %s157
      %s160 = sphi 0, %s159
      %s174 = sphi 0, %s160
      %s178 = sphi 0, %s178
      %s180 = sphi 0, %s178
      %s181 = sphi 0, %s180
      %s195 = sphi 0, %s181
      %s199 = sphi 0, %s199
      %s201 = sphi 0, %s199
      %s202 = sphi 0, %s201
      %s216 = sphi 0, %s202
      %s222 = sphi 0, %s224
      %s225 = sphi 0, %s222
      %s226 = sphi 0, %s225
      %s242 = sphi 0, %s226
    $region4: #{_lambda_.1} parent=1 // loop_header_branch
      %21 = sbr.rel (%p19) target = $region8
    $region5: #{_lambda_.1} parent=1 // loop_body
      %s23 = ssub.s32 %s18, 1
      %s24 = ssub.s32 %s18, 2
      %s25 = sadd.s32 %s18, 1
      %s26 = ssub.s32 %s18, %s25
      %p27 = scmp.eq.s32.totalorder %s26, 0
      %s29 = sadd.s32 %s28, 1
      %s30 = scalar_select %p27, %s28, %s29
      %p33 = pneg %p27
      %p34 = scmp.eq.s32.totalorder %s18, 1
      %p35 = por %p33, %p34
      %p36 = scmp.ne.s32.totalorder %s28, %s31
      %p37 = scmp.eq.s32.totalorder %s18, 0
      %p38 = por %p36, %p37
      %p39 = scmp.ne.s32.totalorder %s28, %s31
      %p40 = scmp.eq.s32.totalorder %s23, 1
      %p41 = por %p39, %p40
      %p42 = scmp.ne.s32.totalorder %s31, %s32
      %p43 = scmp.eq.s32.totalorder %s23, 0
      %p44 = por %p42, %p43
      %p45 = scmp.ne.s32.totalorder %s31, %s32
      %p46 = scmp.eq.s32.totalorder %s24, 1
      %p47 = por %p45, %p46
      %p49 = scmp.ne.s32.totalorder %s32, %s48
      %p50 = scmp.eq.s32.totalorder %s24, 0
      %p51 = por %p49, %p50
      %s53 = sadd.s32 %s52, 1
      %p56 = scmp.eq.s32.totalorder %s18, 1
      %p57 = scmp.ne.s32.totalorder %s52, %s54
      %p58 = scmp.eq.s32.totalorder %s18, 0
      %p59 = por %p57, %p58
      %p60 = scmp.ne.s32.totalorder %s52, %s54
      %p61 = scmp.eq.s32.totalorder %s23, 1
      %p62 = por %p60, %p61
      %p63 = scmp.ne.s32.totalorder %s54, %s55
      %p64 = scmp.eq.s32.totalorder %s23, 0
      %p65 = por %p63, %p64
      %p66 = scmp.ne.s32.totalorder %s54, %s55
      %p67 = scmp.eq.s32.totalorder %s24, 1
      %p68 = por %p66, %p67
      %p70 = scmp.ne.s32.totalorder %s55, %s69
      %p71 = scmp.eq.s32.totalorder %s24, 0
      %p72 = por %p70, %p71
      %s74 = sadd.s32 %s73, 1
      %p77 = scmp.eq.s32.totalorder %s18, 1
      %p78 = scmp.ne.s32.totalorder %s73, %s75
      %p79 = scmp.eq.s32.totalorder %s18, 0
      %p80 = por %p78, %p79
      %p81 = scmp.ne.s32.totalorder %s73, %s75
      %p82 = scmp.eq.s32.totalorder %s23, 1
      %p83 = por %p81, %p82
      %p84 = scmp.ne.s32.totalorder %s75, %s76
      %p85 = scmp.eq.s32.totalorder %s23, 0
      %p86 = por %p84, %p85
      %p87 = scmp.ne.s32.totalorder %s75, %s76
      %p88 = scmp.eq.s32.totalorder %s24, 1
      %p89 = por %p87, %p88
      %p91 = scmp.ne.s32.totalorder %s76, %s90
      %p92 = scmp.eq.s32.totalorder %s24, 0
      %p93 = por %p91, %p92
      %s95 = sadd.s32 %s94, 1
      %p98 = scmp.eq.s32.totalorder %s18, 1
      %p99 = scmp.ne.s32.totalorder %s94, %s96
      %p100 = scmp.eq.s32.totalorder %s18, 0
      %p101 = por %p99, %p100
      %p102 = scmp.ne.s32.totalorder %s94, %s96
      %p103 = scmp.eq.s32.totalorder %s23, 1
      %p104 = por %p102, %p103
      %p105 = scmp.ne.s32.totalorder %s96, %s97
      %p106 = scmp.eq.s32.totalorder %s23, 0
      %p107 = por %p105, %p106
      %p108 = scmp.ne.s32.totalorder %s96, %s97
      %p109 = scmp.eq.s32.totalorder %s24, 1
      %p110 = por %p108, %p109
      %p112 = scmp.ne.s32.totalorder %s97, %s111
      %p113 = scmp.eq.s32.totalorder %s24, 0
      %p114 = por %p112, %p113
      %s116 = sadd.s32 %s115, 1
      %p119 = scmp.eq.s32.totalorder %s18, 1
      %p120 = scmp.ne.s32.totalorder %s115, %s117
      %p121 = scmp.eq.s32.totalorder %s18, 0
      %p122 = por %p120, %p121
      %p123 = scmp.ne.s32.totalorder %s115, %s117
      %p124 = scmp.eq.s32.totalorder %s23, 1
      %p125 = por %p123, %p124
      %p126 = scmp.ne.s32.totalorder %s117, %s118
      %p127 = scmp.eq.s32.totalorder %s23, 0
      %p128 = por %p126, %p127
      %p129 = scmp.ne.s32.totalorder %s117, %s118
      %p130 = scmp.eq.s32.totalorder %s24, 1
      %p131 = por %p129, %p130
      %p133 = scmp.ne.s32.totalorder %s118, %s132
      %p134 = scmp.eq.s32.totalorder %s24, 0
      %p135 = por %p133, %p134
      %s137 = sadd.s32 %s136, 1
      %p140 = scmp.eq.s32.totalorder %s18, 1
      %p141 = scmp.ne.s32.totalorder %s136, %s138
      %p142 = scmp.eq.s32.totalorder %s18, 0
      %p143 = por %p141, %p142
      %p144 = scmp.ne.s32.totalorder %s136, %s138
      %p145 = scmp.eq.s32.totalorder %s23, 1
      %p146 = por %p144, %p145
      %p147 = scmp.ne.s32.totalorder %s138, %s139
      %p148 = scmp.eq.s32.totalorder %s23, 0
      %p149 = por %p147, %p148
      %p150 = scmp.ne.s32.totalorder %s138, %s139
      %p151 = scmp.eq.s32.totalorder %s24, 1
      %p152 = por %p150, %p151
      %p154 = scmp.ne.s32.totalorder %s139, %s153
      %p155 = scmp.eq.s32.totalorder %s24, 0
      %p156 = por %p154, %p155
      %s158 = sadd.s32 %s157, 1
      %p161 = scmp.eq.s32.totalorder %s18, 1
      %p162 = scmp.ne.s32.totalorder %s157, %s159
      %p163 = scmp.eq.s32.totalorder %s18, 0
      %p164 = por %p162, %p163
      %p165 = scmp.ne.s32.totalorder %s157, %s159
      %p166 = scmp.eq.s32.totalorder %s23, 1
      %p167 = por %p165, %p166
      %p168 = scmp.ne.s32.totalorder %s159, %s160
      %p169 = scmp.eq.s32.totalorder %s23, 0
      %p170 = por %p168, %p169
      %p171 = scmp.ne.s32.totalorder %s159, %s160
      %p172 = scmp.eq.s32.totalorder %s24, 1
      %p173 = por %p171, %p172
      %p175 = scmp.ne.s32.totalorder %s160, %s174
      %p176 = scmp.eq.s32.totalorder %s24, 0
      %p177 = por %p175, %p176
      %s179 = sadd.s32 %s178, 1
      %p182 = scmp.eq.s32.totalorder %s18, 1
      %p183 = scmp.ne.s32.totalorder %s178, %s180
      %p184 = scmp.eq.s32.totalorder %s18, 0
      %p185 = por %p183, %p184
      %p186 = scmp.ne.s32.totalorder %s178, %s180
      %p187 = scmp.eq.s32.totalorder %s23, 1
      %p188 = por %p186, %p187
      %p189 = scmp.ne.s32.totalorder %s180, %s181
      %p190 = scmp.eq.s32.totalorder %s23, 0
      %p191 = por %p189, %p190
      %p192 = scmp.ne.s32.totalorder %s180, %s181
      %p193 = scmp.eq.s32.totalorder %s24, 1
      %p194 = por %p192, %p193
      %p196 = scmp.ne.s32.totalorder %s181, %s195
      %p197 = scmp.eq.s32.totalorder %s24, 0
      %p198 = por %p196, %p197
      %s200 = sadd.s32 %s199, 1
      %p203 = scmp.eq.s32.totalorder %s18, 1
      %p204 = scmp.ne.s32.totalorder %s199, %s201
      %p205 = scmp.eq.s32.totalorder %s18, 0
      %p206 = por %p204, %p205
      %p207 = scmp.ne.s32.totalorder %s199, %s201
      %p208 = scmp.eq.s32.totalorder %s23, 1
      %p209 = por %p207, %p208
      %p210 = scmp.ne.s32.totalorder %s201, %s202
      %p211 = scmp.eq.s32.totalorder %s23, 0
      %p212 = por %p210, %p211
      %p213 = scmp.ne.s32.totalorder %s201, %s202
      %p214 = scmp.eq.s32.totalorder %s24, 1
      %p215 = por %p213, %p214
      %p217 = scmp.ne.s32.totalorder %s202, %s216
      %p218 = scmp.eq.s32.totalorder %s24, 0
      %p219 = por %p217, %p218
      %s220 = ssub.s32 %s18, %s25
      %p221 = scmp.eq.s32.totalorder %s220, 0
      %s223 = sadd.s32 %s222, 1
      %s224 = scalar_select %p221, %s222, %s223
      %p227 = pneg %p221
      %p228 = scmp.eq.s32.totalorder %s18, 1
      %p229 = por %p227, %p228
      %p230 = scmp.ne.s32.totalorder %s222, %s225
      %p231 = scmp.eq.s32.totalorder %s18, 0
      %p232 = por %p230, %p231
      %p233 = scmp.ne.s32.totalorder %s222, %s225
      %p234 = scmp.eq.s32.totalorder %s23, 1
      %p235 = por %p233, %p234
      %p236 = scmp.ne.s32.totalorder %s225, %s226
      %p237 = scmp.eq.s32.totalorder %s23, 0
      %p238 = por %p236, %p237
      %p239 = scmp.ne.s32.totalorder %s225, %s226
      %p240 = scmp.eq.s32.totalorder %s24, 1
      %p241 = por %p239, %p240
      %p243 = scmp.ne.s32.totalorder %s226, %s242
      %p244 = scmp.eq.s32.totalorder %s24, 0
      %p245 = por %p243, %p244
      %p246 = scmp.le.s32.totalorder 1, %s18
      %p247 = scmp.lt.s32.totalorder %s18, 3
      %p248 = pnand %p246, %p247
      %p249 = pneg %p248
      // Predicated region
      $region9: #{_lambda_.1} parent=5 // pred_check
        _
      $region10: #{_lambda_.1} parent=5 // pred_check_branch
        %251 = sbr.rel (%p248) target = $region12
      $region11: #{_lambda_.1} parent=5 // pred_region
        %s252 = ssub.s32 %s18, 1
        // Predicated region
        $region13: #{_lambda_.1} parent=11 // pred_check
          %p253 = pneg %p65
        $region14: #{_lambda_.1} parent=11 // pred_check_branch
          %255 = sbr.rel (%p253) target = $region16
        $region15: #{_lambda_.1} parent=11 // pred_region
          _
        $region16: #{_lambda_.1} parent=11 // pred_fallthru
          _
        // Predicated region
        $region17: #{_lambda_.1} parent=11 // pred_check
          %p256 = pneg %p86
        $region18: #{_lambda_.1} parent=11 // pred_check_branch
          %258 = sbr.rel (%p256) target = $region20
        $region19: #{_lambda_.1} parent=11 // pred_region
          _
        $region20: #{_lambda_.1} parent=11 // pred_fallthru
          _
        // Predicated region
        $region21: #{_lambda_.1} parent=11 // pred_check
          %p259 = pneg %p107
        $region22: #{_lambda_.1} parent=11 // pred_check_branch
          %261 = sbr.rel (%p259) target = $region24
        $region23: #{_lambda_.1} parent=11 // pred_region
          _
        $region24: #{_lambda_.1} parent=11 // pred_fallthru
          _
        // Predicated region
        $region25: #{_lambda_.1} parent=11 // pred_check
          %p262 = pneg %p128
        $region26: #{_lambda_.1} parent=11 // pred_check_branch
          %264 = sbr.rel (%p262) target = $region28
        $region27: #{_lambda_.1} parent=11 // pred_region
          _
        $region28: #{_lambda_.1} parent=11 // pred_fallthru
          _
        // Predicated region
        $region29: #{_lambda_.1} parent=11 // pred_check
          %p265 = pneg %p149
        $region30: #{_lambda_.1} parent=11 // pred_check_branch
          %267 = sbr.rel (%p265) target = $region32
        $region31: #{_lambda_.1} parent=11 // pred_region
          _
        $region32: #{_lambda_.1} parent=11 // pred_fallthru
          _
        // Predicated region
        $region33: #{_lambda_.1} parent=11 // pred_check
          %p268 = pneg %p170
        $region34: #{_lambda_.1} parent=11 // pred_check_branch
          %270 = sbr.rel (%p268) target = $region36
        $region35: #{_lambda_.1} parent=11 // pred_region
          _
        $region36: #{_lambda_.1} parent=11 // pred_fallthru
          _
        // Predicated region
        $region37: #{_lambda_.1} parent=11 // pred_check
          %p271 = pneg %p191
        $region38: #{_lambda_.1} parent=11 // pred_check_branch
          %273 = sbr.rel (%p271) target = $region40
        $region39: #{_lambda_.1} parent=11 // pred_region
          _
        $region40: #{_lambda_.1} parent=11 // pred_fallthru
          _
        // Predicated region
        $region41: #{_lambda_.1} parent=11 // pred_check
          %p274 = pneg %p212
        $region42: #{_lambda_.1} parent=11 // pred_check_branch
          %276 = sbr.rel (%p274) target = $region44
        $region43: #{_lambda_.1} parent=11 // pred_region
          _
        $region44: #{_lambda_.1} parent=11 // pred_fallthru
          _
      $region12: #{_lambda_.1} parent=5 // pred_fallthru
        _
      %p277 = scmp.lt.s32.totalorder %s18, 2
      // Predicated region
      $region45: #{_lambda_.1} parent=5 // pred_check
        %p278 = pneg %p277
      $region46: #{_lambda_.1} parent=5 // pred_check_branch
        %280 = sbr.rel (%p278) target = $region48
      $region47: #{_lambda_.1} parent=5 // pred_region
        // Predicated region
        $region49: #{_lambda_.1} parent=47 // pred_check
          %p281 = pneg %p38
        $region50: #{_lambda_.1} parent=47 // pred_check_branch
          %283 = sbr.rel (%p281) target = $region52
        $region51: #{_lambda_.1} parent=47 // pred_region
          %s284 = smul.u32 4, %s18
          %p285 = scmp.lt.s32.totalorder %s284, 7
          %s286 = scalar_select %p285, %s284, 7
          %s287 = smul.addr %s286, 32
          %s288 = smul.addr %s287, 4
          %s289 = scalar_lea.vmem %s0, %s288
          %s290 = smul.u32 4, %s18
        $region52: #{_lambda_.1} parent=47 // pred_fallthru
          _
      $region48: #{_lambda_.1} parent=5 // pred_fallthru
        _
      %p291 = scmp.le.s32.totalorder 1, %s18
      %p292 = scmp.lt.s32.totalorder %s18, 3
      %p293 = pnand %p291, %p292
      %p294 = pneg %p293
      // Predicated region
      $region53: #{_lambda_.1} parent=5 // pred_check
        _
      $region54: #{_lambda_.1} parent=5 // pred_check_branch
        %296 = sbr.rel (%p293) target = $region56
      $region55: #{_lambda_.1} parent=5 // pred_region
        %s297 = ssub.s32 %s18, 1
        %s298 = smul.u32 4, %s23
        %p299 = scmp.lt.s32.totalorder %s298, 7
        %s300 = scalar_select %p299, %s298, 7
        %s301 = smul.addr %s300, 32
        %s302 = smul.addr %s301, 4
        %s303 = scalar_lea.vmem %s0, %s302
        %p304 = pneg %p44
        %p305 = pneg %p41
        %p306 = pneg %p65
        %p307 = pneg %p62
        %p308 = pneg %p86
        %p309 = pneg %p83
        %p310 = pneg %p107
        %p311 = pneg %p104
        %p312 = pneg %p128
        %p313 = pneg %p125
        %p314 = pneg %p149
        %p315 = pneg %p146
        %p316 = pneg %p170
        %p317 = pneg %p167
        %p318 = pneg %p191
        %p319 = pneg %p188
        %p320 = pneg %p212
        %p321 = pneg %p209
        %p322 = pneg %p238
        %p323 = pneg %p235
        %s324 = sand.u32 %s225, 1
        %s325 = scalar_lea.sflag [#allocation3], %s324
        %s326 = sand.u32 %s225, 1
        %s327 = smul.addr %s326, 4
        %s328 = scalar_lea.vmem [#allocation2], %s327
        %s329 = smul.u32 4, %s23
        %p330 = scmp.lt.s32.totalorder %s329, 7
        %s331 = scalar_select %p330, %s329, 7
        %s332 = smul.addr %s331, 32
        %s333 = smul.addr %s332, 4
        %s334 = scalar_lea.vmem %s0, %s333
        %s335 = smul.u32 4, %s23
        %v336 = vld [vmem:[%s334] sm:$0xf]
        %v337 = vld [vmem:[%s334 + $0x4] sm:$0xf]
        %v338 = vld [vmem:[%s334 + $0x8] sm:$0xf]
        %v339 = vld [vmem:[%s334 + $0xc] sm:$0xf]
        %v340 = vld [vmem:[%s334 + $0x10] sm:$0xf]
        %v341 = vld [vmem:[%s334 + $0x14] sm:$0xf]
        %v342 = vld [vmem:[%s334 + $0x18] sm:$0xf]
        %v343 = vld [vmem:[%s334 + $0x1c] sm:$0xf]
        %v344 = vld [vmem:[%s334 + $0x20] sm:$0xf]
        %v345 = vld [vmem:[%s334 + $0x24] sm:$0xf]
        %v346 = vld [vmem:[%s334 + $0x28] sm:$0xf]
        %v347 = vld [vmem:[%s334 + $0x2c] sm:$0xf]
        %v348 = vld [vmem:[%s334 + $0x30] sm:$0xf]
        %v349 = vld [vmem:[%s334 + $0x34] sm:$0xf]
        %v350 = vld [vmem:[%s334 + $0x38] sm:$0xf]
        %v351 = vld [vmem:[%s334 + $0x3c] sm:$0xf]
        %v352 = vld [vmem:[%s334 + $0x40] sm:$0xf]
        %v353 = vld [vmem:[%s334 + $0x44] sm:$0xf]
        %v354 = vld [vmem:[%s334 + $0x48] sm:$0xf]
        %v355 = vld [vmem:[%s334 + $0x4c] sm:$0xf]
        %v356 = vld [vmem:[%s334 + $0x50] sm:$0xf]
        %v357 = vld [vmem:[%s334 + $0x54] sm:$0xf]
        %v358 = vld [vmem:[%s334 + $0x58] sm:$0xf]
        %v359 = vld [vmem:[%s334 + $0x5c] sm:$0xf]
        %v360 = vld [vmem:[%s334 + $0x60] sm:$0xf]
        %v361 = vld [vmem:[%s334 + $0x64] sm:$0xf]
        %v362 = vld [vmem:[%s334 + $0x68] sm:$0xf]
        %v363 = vld [vmem:[%s334 + $0x6c] sm:$0xf]
        %v364 = vld [vmem:[%s334 + $0x70] sm:$0xf]
        %v365 = vld [vmem:[%s334 + $0x74] sm:$0xf]
        %v366 = vld [vmem:[%s334 + $0x78] sm:$0xf]
        %v367 = vld [vmem:[%s334 + $0x7c] sm:$0xf]
        %v368 = vld [vmem:[%s334 + $0x80] sm:$0xf]
        %v369 = vld [vmem:[%s334 + $0x84] sm:$0xf]
        %v370 = vld [vmem:[%s334 + $0x88] sm:$0xf]
        %v371 = vld [vmem:[%s334 + $0x8c] sm:$0xf]
        %v372 = vld [vmem:[%s334 + $0x90] sm:$0xf]
        %v373 = vld [vmem:[%s334 + $0x94] sm:$0xf]
        %v374 = vld [vmem:[%s334 + $0x98] sm:$0xf]
        %v375 = vld [vmem:[%s334 + $0x9c] sm:$0xf]
        %v376 = vld [vmem:[%s334 + $0xa0] sm:$0xf]
        %v377 = vld [vmem:[%s334 + $0xa4] sm:$0xf]
        %v378 = vld [vmem:[%s334 + $0xa8] sm:$0xf]
        %v379 = vld [vmem:[%s334 + $0xac] sm:$0xf]
        %v380 = vld [vmem:[%s334 + $0xb0] sm:$0xf]
        %v381 = vld [vmem:[%s334 + $0xb4] sm:$0xf]
        %v382 = vld [vmem:[%s334 + $0xb8] sm:$0xf]
        %v383 = vld [vmem:[%s334 + $0xbc] sm:$0xf]
        %v384 = vld [vmem:[%s334 + $0xc0] sm:$0xf]
        %v385 = vld [vmem:[%s334 + $0xc4] sm:$0xf]
        %v386 = vld [vmem:[%s334 + $0xc8] sm:$0xf]
        %v387 = vld [vmem:[%s334 + $0xcc] sm:$0xf]
        %v388 = vld [vmem:[%s334 + $0xd0] sm:$0xf]
        %v389 = vld [vmem:[%s334 + $0xd4] sm:$0xf]
        %v390 = vld [vmem:[%s334 + $0xd8] sm:$0xf]
        %v391 = vld [vmem:[%s334 + $0xdc] sm:$0xf]
        %v392 = vld [vmem:[%s334 + $0xe0] sm:$0xf]
        %v393 = vld [vmem:[%s334 + $0xe4] sm:$0xf]
        %v394 = vld [vmem:[%s334 + $0xe8] sm:$0xf]
        %v395 = vld [vmem:[%s334 + $0xec] sm:$0xf]
        %v396 = vld [vmem:[%s334 + $0xf0] sm:$0xf]
        %v397 = vld [vmem:[%s334 + $0xf4] sm:$0xf]
        %v398 = vld [vmem:[%s334 + $0xf8] sm:$0xf]
        %v399 = vld [vmem:[%s334 + $0xfc] sm:$0xf]
        %v400 = vld [vmem:[%s334 + $0x100] sm:$0xf]
        %v401 = vld [vmem:[%s334 + $0x104] sm:$0xf]
        %v402 = vld [vmem:[%s334 + $0x108] sm:$0xf]
        %v403 = vld [vmem:[%s334 + $0x10c] sm:$0xf]
        %v404 = vld [vmem:[%s334 + $0x110] sm:$0xf]
        %v405 = vld [vmem:[%s334 + $0x114] sm:$0xf]
        %v406 = vld [vmem:[%s334 + $0x118] sm:$0xf]
        %v407 = vld [vmem:[%s334 + $0x11c] sm:$0xf]
        %v408 = vld [vmem:[%s334 + $0x120] sm:$0xf]
        %v409 = vld [vmem:[%s334 + $0x124] sm:$0xf]
        %v410 = vld [vmem:[%s334 + $0x128] sm:$0xf]
        %v411 = vld [vmem:[%s334 + $0x12c] sm:$0xf]
        %v412 = vld [vmem:[%s334 + $0x130] sm:$0xf]
        %v413 = vld [vmem:[%s334 + $0x134] sm:$0xf]
        %v414 = vld [vmem:[%s334 + $0x138] sm:$0xf]
        %v415 = vld [vmem:[%s334 + $0x13c] sm:$0xf]
        %v416 = vld [vmem:[%s334 + $0x140] sm:$0xf]
        %v417 = vld [vmem:[%s334 + $0x144] sm:$0xf]
        %v418 = vld [vmem:[%s334 + $0x148] sm:$0xf]
        %v419 = vld [vmem:[%s334 + $0x14c] sm:$0xf]
        %v420 = vld [vmem:[%s334 + $0x150] sm:$0xf]
        %v421 = vld [vmem:[%s334 + $0x154] sm:$0xf]
        %v422 = vld [vmem:[%s334 + $0x158] sm:$0xf]
        %v423 = vld [vmem:[%s334 + $0x15c] sm:$0xf]
        %v424 = vld [vmem:[%s334 + $0x160] sm:$0xf]
        %v425 = vld [vmem:[%s334 + $0x164] sm:$0xf]
        %v426 = vld [vmem:[%s334 + $0x168] sm:$0xf]
        %v427 = vld [vmem:[%s334 + $0x16c] sm:$0xf]
        %v428 = vld [vmem:[%s334 + $0x170] sm:$0xf]
        %v429 = vld [vmem:[%s334 + $0x174] sm:$0xf]
        %v430 = vld [vmem:[%s334 + $0x178] sm:$0xf]
        %v431 = vld [vmem:[%s334 + $0x17c] sm:$0xf]
        %v432 = vld [vmem:[%s334 + $0x180] sm:$0xf]
        %v433 = vld [vmem:[%s334 + $0x184] sm:$0xf]
        %v434 = vld [vmem:[%s334 + $0x188] sm:$0xf]
        %v435 = vld [vmem:[%s334 + $0x18c] sm:$0xf]
        %v436 = vld [vmem:[%s334 + $0x190] sm:$0xf]
        %v437 = vld [vmem:[%s334 + $0x194] sm:$0xf]
        %v438 = vld [vmem:[%s334 + $0x198] sm:$0xf]
        %v439 = vld [vmem:[%s334 + $0x19c] sm:$0xf]
        %v440 = vld [vmem:[%s334 + $0x1a0] sm:$0xf]
        %v441 = vld [vmem:[%s334 + $0x1a4] sm:$0xf]
        %v442 = vld [vmem:[%s334 + $0x1a8] sm:$0xf]
        %v443 = vld [vmem:[%s334 + $0x1ac] sm:$0xf]
        %v444 = vld [vmem:[%s334 + $0x1b0] sm:$0xf]
        %v445 = vld [vmem:[%s334 + $0x1b4] sm:$0xf]
        %v446 = vld [vmem:[%s334 + $0x1b8] sm:$0xf]
        %v447 = vld [vmem:[%s334 + $0x1bc] sm:$0xf]
        %v448 = vld [vmem:[%s334 + $0x1c0] sm:$0xf]
        %v449 = vld [vmem:[%s334 + $0x1c4] sm:$0xf]
        %v450 = vld [vmem:[%s334 + $0x1c8] sm:$0xf]
        %v451 = vld [vmem:[%s334 + $0x1cc] sm:$0xf]
        %v452 = vld [vmem:[%s334 + $0x1d0] sm:$0xf]
        %v453 = vld [vmem:[%s334 + $0x1d4] sm:$0xf]
        %v454 = vld [vmem:[%s334 + $0x1d8] sm:$0xf]
        %v455 = vld [vmem:[%s334 + $0x1dc] sm:$0xf]
        %v456 = vld [vmem:[%s334 + $0x1e0] sm:$0xf]
        %v457 = vld [vmem:[%s334 + $0x1e4] sm:$0xf]
        %v458 = vld [vmem:[%s334 + $0x1e8] sm:$0xf]
        %v459 = vld [vmem:[%s334 + $0x1ec] sm:$0xf]
        %v460 = vld [vmem:[%s334 + $0x1f0] sm:$0xf]
        %v461 = vld [vmem:[%s334 + $0x1f4] sm:$0xf]
        %v462 = vld [vmem:[%s334 + $0x1f8] sm:$0xf]
        %v463 = vld [vmem:[%s334 + $0x1fc] sm:$0xf]
        %v464 = vld [vmem:[%s1] sm:$0xf]
        %v465 = vld [vmem:[%s1 + $0x4] sm:$0xf]
        %v466 = vld [vmem:[%s1 + $0x8] sm:$0xf]
        %v467 = vld [vmem:[%s1 + $0xc] sm:$0xf]
        %v468 = vld [vmem:[%s1 + $0x10] sm:$0xf]
        %v469 = vld [vmem:[%s1 + $0x14] sm:$0xf]
        %v470 = vld [vmem:[%s1 + $0x18] sm:$0xf]
        %v471 = vld [vmem:[%s1 + $0x1c] sm:$0xf]
        %v472 = vld [vmem:[%s1 + $0x20] sm:$0xf]
        %v473 = vld [vmem:[%s1 + $0x24] sm:$0xf]
        %v474 = vld [vmem:[%s1 + $0x28] sm:$0xf]
        %v475 = vld [vmem:[%s1 + $0x2c] sm:$0xf]
        %v476 = vld [vmem:[%s1 + $0x30] sm:$0xf]
        %v477 = vld [vmem:[%s1 + $0x34] sm:$0xf]
        %v478 = vld [vmem:[%s1 + $0x38] sm:$0xf]
        %v479 = vld [vmem:[%s1 + $0x3c] sm:$0xf]
        %v480 = vld [vmem:[%s4] sm:$0x1]
        %v481 = vperm.slane %v480, 0
        %v610 = vunpack.c.l.b16 %v336
        %v611 = vunpack.c.l.b16 %v337
        %v612 = vunpack.c.l.b16 %v338
        %v613 = vunpack.c.l.b16 %v339
        %v614 = vunpack.c.l.b16 %v340
        %v615 = vunpack.c.l.b16 %v341
        %v616 = vunpack.c.l.b16 %v342
        %v617 = vunpack.c.l.b16 %v343
        %v618 = vunpack.c.l.b16 %v344
        %v619 = vunpack.c.l.b16 %v345
        %v620 = vunpack.c.l.b16 %v346
        %v621 = vunpack.c.l.b16 %v347
        %v622 = vunpack.c.l.b16 %v348
        %v623 = vunpack.c.l.b16 %v349
        %v624 = vunpack.c.l.b16 %v350
        %v625 = vunpack.c.l.b16 %v351
        %v626 = vunpack.c.l.b16 %v352
        %v627 = vunpack.c.l.b16 %v353
        %v628 = vunpack.c.l.b16 %v354
        %v629 = vunpack.c.l.b16 %v355
        %v630 = vunpack.c.l.b16 %v356
        %v631 = vunpack.c.l.b16 %v357
        %v632 = vunpack.c.l.b16 %v358
        %v633 = vunpack.c.l.b16 %v359
        %v634 = vunpack.c.l.b16 %v360
        %v635 = vunpack.c.l.b16 %v361
        %v636 = vunpack.c.l.b16 %v362
        %v637 = vunpack.c.l.b16 %v363
        %v638 = vunpack.c.l.b16 %v364
        %v639 = vunpack.c.l.b16 %v365
        %v640 = vunpack.c.l.b16 %v366
        %v641 = vunpack.c.l.b16 %v367
        %v642 = vunpack.c.l.b16 %v368
        %v643 = vunpack.c.l.b16 %v369
        %v644 = vunpack.c.l.b16 %v370
        %v645 = vunpack.c.l.b16 %v371
        %v646 = vunpack.c.l.b16 %v372
        %v647 = vunpack.c.l.b16 %v373
        %v648 = vunpack.c.l.b16 %v374
        %v649 = vunpack.c.l.b16 %v375
        %v650 = vunpack.c.l.b16 %v376
        %v651 = vunpack.c.l.b16 %v377
        %v652 = vunpack.c.l.b16 %v378
        %v653 = vunpack.c.l.b16 %v379
        %v654 = vunpack.c.l.b16 %v380
        %v655 = vunpack.c.l.b16 %v381
        %v656 = vunpack.c.l.b16 %v382
        %v657 = vunpack.c.l.b16 %v383
        %v658 = vunpack.c.l.b16 %v384
        %v659 = vunpack.c.l.b16 %v385
        %v660 = vunpack.c.l.b16 %v386
        %v661 = vunpack.c.l.b16 %v387
        %v662 = vunpack.c.l.b16 %v388
        %v663 = vunpack.c.l.b16 %v389
        %v664 = vunpack.c.l.b16 %v390
        %v665 = vunpack.c.l.b16 %v391
        %v666 = vunpack.c.l.b16 %v392
        %v667 = vunpack.c.l.b16 %v393
        %v668 = vunpack.c.l.b16 %v394
        %v669 = vunpack.c.l.b16 %v395
        %v670 = vunpack.c.l.b16 %v396
        %v671 = vunpack.c.l.b16 %v397
        %v672 = vunpack.c.l.b16 %v398
        %v673 = vunpack.c.l.b16 %v399
        %v674 = vunpack.c.l.b16 %v400
        %v675 = vunpack.c.l.b16 %v401
        %v676 = vunpack.c.l.b16 %v402
        %v677 = vunpack.c.l.b16 %v403
        %v678 = vunpack.c.l.b16 %v404
        %v679 = vunpack.c.l.b16 %v405
        %v680 = vunpack.c.l.b16 %v406
        %v681 = vunpack.c.l.b16 %v407
        %v682 = vunpack.c.l.b16 %v408
        %v683 = vunpack.c.l.b16 %v409
        %v684 = vunpack.c.l.b16 %v410
        %v685 = vunpack.c.l.b16 %v411
        %v686 = vunpack.c.l.b16 %v412
        %v687 = vunpack.c.l.b16 %v413
        %v688 = vunpack.c.l.b16 %v414
        %v689 = vunpack.c.l.b16 %v415
        %v690 = vunpack.c.l.b16 %v416
        %v691 = vunpack.c.l.b16 %v417
        %v692 = vunpack.c.l.b16 %v418
        %v693 = vunpack.c.l.b16 %v419
        %v694 = vunpack.c.l.b16 %v420
        %v695 = vunpack.c.l.b16 %v421
        %v696 = vunpack.c.l.b16 %v422
        %v697 = vunpack.c.l.b16 %v423
        %v698 = vunpack.c.l.b16 %v424
        %v699 = vunpack.c.l.b16 %v425
        %v700 = vunpack.c.l.b16 %v426
        %v701 = vunpack.c.l.b16 %v427
        %v702 = vunpack.c.l.b16 %v428
        %v703 = vunpack.c.l.b16 %v429
        %v704 = vunpack.c.l.b16 %v430
        %v705 = vunpack.c.l.b16 %v431
        %v706 = vunpack.c.l.b16 %v432
        %v707 = vunpack.c.l.b16 %v433
        %v708 = vunpack.c.l.b16 %v434
        %v709 = vunpack.c.l.b16 %v435
        %v710 = vunpack.c.l.b16 %v436
        %v711 = vunpack.c.l.b16 %v437
        %v712 = vunpack.c.l.b16 %v438
        %v713 = vunpack.c.l.b16 %v439
        %v714 = vunpack.c.l.b16 %v440
        %v715 = vunpack.c.l.b16 %v441
        %v716 = vunpack.c.l.b16 %v442
        %v717 = vunpack.c.l.b16 %v443
        %v718 = vunpack.c.l.b16 %v444
        %v719 = vunpack.c.l.b16 %v445
        %v720 = vunpack.c.l.b16 %v446
        %v721 = vunpack.c.l.b16 %v447
        %v722 = vunpack.c.l.b16 %v448
        %v723 = vunpack.c.l.b16 %v449
        %v724 = vunpack.c.l.b16 %v450
        %v725 = vunpack.c.l.b16 %v451
        %v726 = vunpack.c.l.b16 %v452
        %v727 = vunpack.c.l.b16 %v453
        %v728 = vunpack.c.l.b16 %v454
        %v729 = vunpack.c.l.b16 %v455
        %v730 = vunpack.c.l.b16 %v456
        %v731 = vunpack.c.l.b16 %v457
        %v732 = vunpack.c.l.b16 %v458
        %v733 = vunpack.c.l.b16 %v459
        %v734 = vunpack.c.l.b16 %v460
        %v735 = vunpack.c.l.b16 %v461
        %v736 = vunpack.c.l.b16 %v462
        %v737 = vunpack.c.l.b16 %v463
        %v738 = vpack.c.b16 %v611, %v610
        %v739 = vpack.c.b16 %v613, %v612
        %v740 = vpack.c.b16 %v615, %v614
        %v741 = vpack.c.b16 %v617, %v616
        %v742 = vpack.c.b16 %v619, %v618
        %v743 = vpack.c.b16 %v621, %v620
        %v744 = vpack.c.b16 %v623, %v622
        %v745 = vpack.c.b16 %v625, %v624
        %v746 = vpack.c.b16 %v627, %v626
        %v747 = vpack.c.b16 %v629, %v628
        %v748 = vpack.c.b16 %v631, %v630
        %v749 = vpack.c.b16 %v633, %v632
        %v750 = vpack.c.b16 %v635, %v634
        %v751 = vpack.c.b16 %v637, %v636
        %v752 = vpack.c.b16 %v639, %v638
        %v753 = vpack.c.b16 %v641, %v640
        %v754 = vpack.c.b16 %v643, %v642
        %v755 = vpack.c.b16 %v645, %v644
        %v756 = vpack.c.b16 %v647, %v646
        %v757 = vpack.c.b16 %v649, %v648
        %v758 = vpack.c.b16 %v651, %v650
        %v759 = vpack.c.b16 %v653, %v652
        %v760 = vpack.c.b16 %v655, %v654
        %v761 = vpack.c.b16 %v657, %v656
        %v762 = vpack.c.b16 %v659, %v658
        %v763 = vpack.c.b16 %v661, %v660
        %v764 = vpack.c.b16 %v663, %v662
        %v765 = vpack.c.b16 %v665, %v664
        %v766 = vpack.c.b16 %v667, %v666
        %v767 = vpack.c.b16 %v669, %v668
        %v768 = vpack.c.b16 %v671, %v670
        %v769 = vpack.c.b16 %v673, %v672
        %v770 = vpack.c.b16 %v675, %v674
        %v771 = vpack.c.b16 %v677, %v676
        %v772 = vpack.c.b16 %v679, %v678
        %v773 = vpack.c.b16 %v681, %v680
        %v774 = vpack.c.b16 %v683, %v682
        %v775 = vpack.c.b16 %v685, %v684
        %v776 = vpack.c.b16 %v687, %v686
        %v777 = vpack.c.b16 %v689, %v688
        %v778 = vpack.c.b16 %v691, %v690
        %v779 = vpack.c.b16 %v693, %v692
        %v780 = vpack.c.b16 %v695, %v694
        %v781 = vpack.c.b16 %v697, %v696
        %v782 = vpack.c.b16 %v699, %v698
        %v783 = vpack.c.b16 %v701, %v700
        %v784 = vpack.c.b16 %v703, %v702
        %v785 = vpack.c.b16 %v705, %v704
        %v786 = vpack.c.b16 %v707, %v706
        %v787 = vpack.c.b16 %v709, %v708
        %v788 = vpack.c.b16 %v711, %v710
        %v789 = vpack.c.b16 %v713, %v712
        %v790 = vpack.c.b16 %v715, %v714
        %v791 = vpack.c.b16 %v717, %v716
        %v792 = vpack.c.b16 %v719, %v718
        %v793 = vpack.c.b16 %v721, %v720
        %v794 = vpack.c.b16 %v723, %v722
        %v795 = vpack.c.b16 %v725, %v724
        %v796 = vpack.c.b16 %v727, %v726
        %v797 = vpack.c.b16 %v729, %v728
        %v798 = vpack.c.b16 %v731, %v730
        %v799 = vpack.c.b16 %v733, %v732
        %v800 = vpack.c.b16 %v735, %v734
        %v801 = vpack.c.b16 %v737, %v736
        %v882 = vunpack.c.l.b16 %v464
        %v883 = vunpack.c.l.b16 %v465
        %v884 = vunpack.c.l.b16 %v466
        %v885 = vunpack.c.l.b16 %v467
        %v886 = vunpack.c.l.b16 %v468
        %v887 = vunpack.c.l.b16 %v469
        %v888 = vunpack.c.l.b16 %v470
        %v889 = vunpack.c.l.b16 %v471
        %v890 = vunpack.c.l.b16 %v472
        %v891 = vunpack.c.l.b16 %v473
        %v892 = vunpack.c.l.b16 %v474
        %v893 = vunpack.c.l.b16 %v475
        %v894 = vunpack.c.l.b16 %v476
        %v895 = vunpack.c.l.b16 %v477
        %v896 = vunpack.c.l.b16 %v478
        %v897 = vunpack.c.l.b16 %v479
        %v898 = vpack.c.b16 %v883, %v882
        %v899 = vpack.c.b16 %v885, %v884
        %v900 = vpack.c.b16 %v887, %v886
        %v901 = vpack.c.b16 %v889, %v888
        %v902 = vpack.c.b16 %v891, %v890
        %v903 = vpack.c.b16 %v893, %v892
        %v904 = vpack.c.b16 %v895, %v894
        %v905 = vpack.c.b16 %v897, %v896
        %914 = vmatpush.bf16.msra.mxu0 %v905
        %915 = vmatpush.bf16.msra.mxu0 %v904
        %916 = vmatpush.bf16.msra.mxu0 %v903
        %917 = vmatpush.bf16.msra.mxu0 %v902
        %918 = vmatpush.bf16.msra.mxu0 %v901
        %919 = vmatpush.bf16.msra.mxu0 %v900
        %920 = vmatpush.bf16.msra.mxu0 %v899
        %921 = vmatpush.bf16.msra.mxu0 %v898
        %922 = vmatmul.bf16.gmra.mxu0 %v738
        %v923 = vpop.f32.mrf.mxu0
        %v924 = vadd.f32 %v481, %v923
        %v925 = vpop.f32.mrf.mxu0
        %v926 = vadd.f32 %v481, %v925
        %927 = vmatmul.bf16.gmra.mxu0 %v739
        %v928 = vpop.f32.mrf.mxu0
        %v929 = vadd.f32 %v481, %v928
        %v930 = vpop.f32.mrf.mxu0
        %v931 = vadd.f32 %v481, %v930
        %932 = vmatmul.bf16.gmra.mxu0 %v740
        %v933 = vpop.f32.mrf.mxu0
        %v934 = vadd.f32 %v481, %v933
        %v935 = vpop.f32.mrf.mxu0
        %v936 = vadd.f32 %v481, %v935
        %937 = vmatmul.bf16.gmra.mxu0 %v741
        %v938 = vpop.f32.mrf.mxu0
        %v939 = vadd.f32 %v481, %v938
        %v940 = vpop.f32.mrf.mxu0
        %v941 = vadd.f32 %v481, %v940
        %942 = vmatmul.bf16.gmra.mxu0 %v742
        %v943 = vpop.f32.mrf.mxu0
        %v944 = vadd.f32 %v481, %v943
        %v945 = vpop.f32.mrf.mxu0
        %v946 = vadd.f32 %v481, %v945
        %947 = vmatmul.bf16.gmra.mxu0 %v743
        %v948 = vpop.f32.mrf.mxu0
        %v949 = vadd.f32 %v481, %v948
        %v950 = vpop.f32.mrf.mxu0
        %v951 = vadd.f32 %v481, %v950
        %952 = vmatmul.bf16.gmra.mxu0 %v744
        %v953 = vpop.f32.mrf.mxu0
        %v954 = vadd.f32 %v481, %v953
        %v955 = vpop.f32.mrf.mxu0
        %v956 = vadd.f32 %v481, %v955
        %957 = vmatmul.bf16.gmra.mxu0 %v745
        %v958 = vpop.f32.mrf.mxu0
        %v959 = vadd.f32 %v481, %v958
        %v960 = vpop.f32.mrf.mxu0
        %v961 = vadd.f32 %v481, %v960
        %962 = vmatmul.bf16.gmra.mxu0 %v746
        %v963 = vpop.f32.mrf.mxu0
        %v964 = vadd.f32 %v481, %v963
        %v965 = vpop.f32.mrf.mxu0
        %v966 = vadd.f32 %v481, %v965
        %967 = vmatmul.bf16.gmra.mxu0 %v747
        %v968 = vpop.f32.mrf.mxu0
        %v969 = vadd.f32 %v481, %v968
        %v970 = vpop.f32.mrf.mxu0
        %v971 = vadd.f32 %v481, %v970
        %972 = vmatmul.bf16.gmra.mxu0 %v748
        %v973 = vpop.f32.mrf.mxu0
        %v974 = vadd.f32 %v481, %v973
        %v975 = vpop.f32.mrf.mxu0
        %v976 = vadd.f32 %v481, %v975
        %977 = vmatmul.bf16.gmra.mxu0 %v749
        %v978 = vpop.f32.mrf.mxu0
        %v979 = vadd.f32 %v481, %v978
        %v980 = vpop.f32.mrf.mxu0
        %v981 = vadd.f32 %v481, %v980
        %982 = vmatmul.bf16.gmra.mxu0 %v750
        %v983 = vpop.f32.mrf.mxu0
        %v984 = vadd.f32 %v481, %v983
        %v985 = vpop.f32.mrf.mxu0
        %v986 = vadd.f32 %v481, %v985
        %987 = vmatmul.bf16.gmra.mxu0 %v751
        %v988 = vpop.f32.mrf.mxu0
        %v989 = vadd.f32 %v481, %v988
        %v990 = vpop.f32.mrf.mxu0
        %v991 = vadd.f32 %v481, %v990
        %992 = vmatmul.bf16.gmra.mxu0 %v752
        %v993 = vpop.f32.mrf.mxu0
        %v994 = vadd.f32 %v481, %v993
        %v995 = vpop.f32.mrf.mxu0
        %v996 = vadd.f32 %v481, %v995
        %997 = vmatmul.bf16.gmra.mxu0 %v753
        %v998 = vpop.f32.mrf.mxu0
        %v999 = vadd.f32 %v481, %v998
        %v1000 = vpop.f32.mrf.mxu0
        %v1001 = vadd.f32 %v481, %v1000
        %1002 = vmatmul.bf16.gmra.mxu0 %v754
        %v1003 = vpop.f32.mrf.mxu0
        %v1004 = vadd.f32 %v481, %v1003
        %v1005 = vpop.f32.mrf.mxu0
        %v1006 = vadd.f32 %v481, %v1005
        %1007 = vmatmul.bf16.gmra.mxu0 %v755
        %v1008 = vpop.f32.mrf.mxu0
        %v1009 = vadd.f32 %v481, %v1008
        %v1010 = vpop.f32.mrf.mxu0
        %v1011 = vadd.f32 %v481, %v1010
        %1012 = vmatmul.bf16.gmra.mxu0 %v756
        %v1013 = vpop.f32.mrf.mxu0
        %v1014 = vadd.f32 %v481, %v1013
        %v1015 = vpop.f32.mrf.mxu0
        %v1016 = vadd.f32 %v481, %v1015
        %1017 = vmatmul.bf16.gmra.mxu0 %v757
        %v1018 = vpop.f32.mrf.mxu0
        %v1019 = vadd.f32 %v481, %v1018
        %v1020 = vpop.f32.mrf.mxu0
        %v1021 = vadd.f32 %v481, %v1020
        %1022 = vmatmul.bf16.gmra.mxu0 %v758
        %v1023 = vpop.f32.mrf.mxu0
        %v1024 = vadd.f32 %v481, %v1023
        %v1025 = vpop.f32.mrf.mxu0
        %v1026 = vadd.f32 %v481, %v1025
        %1027 = vmatmul.bf16.gmra.mxu0 %v759
        %v1028 = vpop.f32.mrf.mxu0
        %v1029 = vadd.f32 %v481, %v1028
        %v1030 = vpop.f32.mrf.mxu0
        %v1031 = vadd.f32 %v481, %v1030
        %1032 = vmatmul.bf16.gmra.mxu0 %v760
        %v1033 = vpop.f32.mrf.mxu0
        %v1034 = vadd.f32 %v481, %v1033
        %v1035 = vpop.f32.mrf.mxu0
        %v1036 = vadd.f32 %v481, %v1035
        %1037 = vmatmul.bf16.gmra.mxu0 %v761
        %v1038 = vpop.f32.mrf.mxu0
        %v1039 = vadd.f32 %v481, %v1038
        %v1040 = vpop.f32.mrf.mxu0
        %v1041 = vadd.f32 %v481, %v1040
        %1042 = vmatmul.bf16.gmra.mxu0 %v762
        %v1043 = vpop.f32.mrf.mxu0
        %v1044 = vadd.f32 %v481, %v1043
        %v1045 = vpop.f32.mrf.mxu0
        %v1046 = vadd.f32 %v481, %v1045
        %1047 = vmatmul.bf16.gmra.mxu0 %v763
        %v1048 = vpop.f32.mrf.mxu0
        %v1049 = vadd.f32 %v481, %v1048
        %v1050 = vpop.f32.mrf.mxu0
        %v1051 = vadd.f32 %v481, %v1050
        %1052 = vmatmul.bf16.gmra.mxu0 %v764
        %v1053 = vpop.f32.mrf.mxu0
        %v1054 = vadd.f32 %v481, %v1053
        %v1055 = vpop.f32.mrf.mxu0
        %v1056 = vadd.f32 %v481, %v1055
        %1057 = vmatmul.bf16.gmra.mxu0 %v765
        %v1058 = vpop.f32.mrf.mxu0
        %v1059 = vadd.f32 %v481, %v1058
        %v1060 = vpop.f32.mrf.mxu0
        %v1061 = vadd.f32 %v481, %v1060
        %1062 = vmatmul.bf16.gmra.mxu0 %v766
        %v1063 = vpop.f32.mrf.mxu0
        %v1064 = vadd.f32 %v481, %v1063
        %v1065 = vpop.f32.mrf.mxu0
        %v1066 = vadd.f32 %v481, %v1065
        %1067 = vmatmul.bf16.gmra.mxu0 %v767
        %v1068 = vpop.f32.mrf.mxu0
        %v1069 = vadd.f32 %v481, %v1068
        %v1070 = vpop.f32.mrf.mxu0
        %v1071 = vadd.f32 %v481, %v1070
        %1072 = vmatmul.bf16.gmra.mxu0 %v768
        %v1073 = vpop.f32.mrf.mxu0
        %v1074 = vadd.f32 %v481, %v1073
        %v1075 = vpop.f32.mrf.mxu0
        %v1076 = vadd.f32 %v481, %v1075
        %1077 = vmatmul.bf16.gmra.mxu0 %v769
        %v1078 = vpop.f32.mrf.mxu0
        %v1079 = vadd.f32 %v481, %v1078
        %v1080 = vpop.f32.mrf.mxu0
        %v1081 = vadd.f32 %v481, %v1080
        %1082 = vmatmul.bf16.gmra.mxu0 %v770
        %v1083 = vpop.f32.mrf.mxu0
        %v1084 = vadd.f32 %v481, %v1083
        %v1085 = vpop.f32.mrf.mxu0
        %v1086 = vadd.f32 %v481, %v1085
        %1087 = vmatmul.bf16.gmra.mxu0 %v771
        %v1088 = vpop.f32.mrf.mxu0
        %v1089 = vadd.f32 %v481, %v1088
        %v1090 = vpop.f32.mrf.mxu0
        %v1091 = vadd.f32 %v481, %v1090
        %1092 = vmatmul.bf16.gmra.mxu0 %v772
        %v1093 = vpop.f32.mrf.mxu0
        %v1094 = vadd.f32 %v481, %v1093
        %v1095 = vpop.f32.mrf.mxu0
        %v1096 = vadd.f32 %v481, %v1095
        %1097 = vmatmul.bf16.gmra.mxu0 %v773
        %v1098 = vpop.f32.mrf.mxu0
        %v1099 = vadd.f32 %v481, %v1098
        %v1100 = vpop.f32.mrf.mxu0
        %v1101 = vadd.f32 %v481, %v1100
        %1102 = vmatmul.bf16.gmra.mxu0 %v774
        %v1103 = vpop.f32.mrf.mxu0
        %v1104 = vadd.f32 %v481, %v1103
        %v1105 = vpop.f32.mrf.mxu0
        %v1106 = vadd.f32 %v481, %v1105
        %1107 = vmatmul.bf16.gmra.mxu0 %v775
        %v1108 = vpop.f32.mrf.mxu0
        %v1109 = vadd.f32 %v481, %v1108
        %v1110 = vpop.f32.mrf.mxu0
        %v1111 = vadd.f32 %v481, %v1110
        %1112 = vmatmul.bf16.gmra.mxu0 %v776
        %v1113 = vpop.f32.mrf.mxu0
        %v1114 = vadd.f32 %v481, %v1113
        %v1115 = vpop.f32.mrf.mxu0
        %v1116 = vadd.f32 %v481, %v1115
        %1117 = vmatmul.bf16.gmra.mxu0 %v777
        %v1118 = vpop.f32.mrf.mxu0
        %v1119 = vadd.f32 %v481, %v1118
        %v1120 = vpop.f32.mrf.mxu0
        %v1121 = vadd.f32 %v481, %v1120
        %1122 = vmatmul.bf16.gmra.mxu0 %v778
        %v1123 = vpop.f32.mrf.mxu0
        %v1124 = vadd.f32 %v481, %v1123
        %v1125 = vpop.f32.mrf.mxu0
        %v1126 = vadd.f32 %v481, %v1125
        %1127 = vmatmul.bf16.gmra.mxu0 %v779
        %v1128 = vpop.f32.mrf.mxu0
        %v1129 = vadd.f32 %v481, %v1128
        %v1130 = vpop.f32.mrf.mxu0
        %v1131 = vadd.f32 %v481, %v1130
        %1132 = vmatmul.bf16.gmra.mxu0 %v780
        %v1133 = vpop.f32.mrf.mxu0
        %v1134 = vadd.f32 %v481, %v1133
        %v1135 = vpop.f32.mrf.mxu0
        %v1136 = vadd.f32 %v481, %v1135
        %1137 = vmatmul.bf16.gmra.mxu0 %v781
        %v1138 = vpop.f32.mrf.mxu0
        %v1139 = vadd.f32 %v481, %v1138
        %v1140 = vpop.f32.mrf.mxu0
        %v1141 = vadd.f32 %v481, %v1140
        %1142 = vmatmul.bf16.gmra.mxu0 %v782
        %v1143 = vpop.f32.mrf.mxu0
        %v1144 = vadd.f32 %v481, %v1143
        %v1145 = vpop.f32.mrf.mxu0
        %v1146 = vadd.f32 %v481, %v1145
        %1147 = vmatmul.bf16.gmra.mxu0 %v783
        %v1148 = vpop.f32.mrf.mxu0
        %v1149 = vadd.f32 %v481, %v1148
        %v1150 = vpop.f32.mrf.mxu0
        %v1151 = vadd.f32 %v481, %v1150
        %1152 = vmatmul.bf16.gmra.mxu0 %v784
        %v1153 = vpop.f32.mrf.mxu0
        %v1154 = vadd.f32 %v481, %v1153
        %v1155 = vpop.f32.mrf.mxu0
        %v1156 = vadd.f32 %v481, %v1155
        %1157 = vmatmul.bf16.gmra.mxu0 %v785
        %v1158 = vpop.f32.mrf.mxu0
        %v1159 = vadd.f32 %v481, %v1158
        %v1160 = vpop.f32.mrf.mxu0
        %v1161 = vadd.f32 %v481, %v1160
        %1162 = vmatmul.bf16.gmra.mxu0 %v786
        %v1163 = vpop.f32.mrf.mxu0
        %v1164 = vadd.f32 %v481, %v1163
        %v1165 = vpop.f32.mrf.mxu0
        %v1166 = vadd.f32 %v481, %v1165
        %1167 = vmatmul.bf16.gmra.mxu0 %v787
        %v1168 = vpop.f32.mrf.mxu0
        %v1169 = vadd.f32 %v481, %v1168
        %v1170 = vpop.f32.mrf.mxu0
        %v1171 = vadd.f32 %v481, %v1170
        %1172 = vmatmul.bf16.gmra.mxu0 %v788
        %v1173 = vpop.f32.mrf.mxu0
        %v1174 = vadd.f32 %v481, %v1173
        %v1175 = vpop.f32.mrf.mxu0
        %v1176 = vadd.f32 %v481, %v1175
        %1177 = vmatmul.bf16.gmra.mxu0 %v789
        %v1178 = vpop.f32.mrf.mxu0
        %v1179 = vadd.f32 %v481, %v1178
        %v1180 = vpop.f32.mrf.mxu0
        %v1181 = vadd.f32 %v481, %v1180
        %1182 = vmatmul.bf16.gmra.mxu0 %v790
        %v1183 = vpop.f32.mrf.mxu0
        %v1184 = vadd.f32 %v481, %v1183
        %v1185 = vpop.f32.mrf.mxu0
        %v1186 = vadd.f32 %v481, %v1185
        %1187 = vmatmul.bf16.gmra.mxu0 %v791
        %v1188 = vpop.f32.mrf.mxu0
        %v1189 = vadd.f32 %v481, %v1188
        %v1190 = vpop.f32.mrf.mxu0
        %v1191 = vadd.f32 %v481, %v1190
        %1192 = vmatmul.bf16.gmra.mxu0 %v792
        %v1193 = vpop.f32.mrf.mxu0
        %v1194 = vadd.f32 %v481, %v1193
        %v1195 = vpop.f32.mrf.mxu0
        %v1196 = vadd.f32 %v481, %v1195
        %1197 = vmatmul.bf16.gmra.mxu0 %v793
        %v1198 = vpop.f32.mrf.mxu0
        %v1199 = vadd.f32 %v481, %v1198
        %v1200 = vpop.f32.mrf.mxu0
        %v1201 = vadd.f32 %v481, %v1200
        %1202 = vmatmul.bf16.gmra.mxu0 %v794
        %v1203 = vpop.f32.mrf.mxu0
        %v1204 = vadd.f32 %v481, %v1203
        %v1205 = vpop.f32.mrf.mxu0
        %v1206 = vadd.f32 %v481, %v1205
        %1207 = vmatmul.bf16.gmra.mxu0 %v795
        %v1208 = vpop.f32.mrf.mxu0
        %v1209 = vadd.f32 %v481, %v1208
        %v1210 = vpop.f32.mrf.mxu0
        %v1211 = vadd.f32 %v481, %v1210
        %1212 = vmatmul.bf16.gmra.mxu0 %v796
        %v1213 = vpop.f32.mrf.mxu0
        %v1214 = vadd.f32 %v481, %v1213
        %v1215 = vpop.f32.mrf.mxu0
        %v1216 = vadd.f32 %v481, %v1215
        %1217 = vmatmul.bf16.gmra.mxu0 %v797
        %v1218 = vpop.f32.mrf.mxu0
        %v1219 = vadd.f32 %v481, %v1218
        %v1220 = vpop.f32.mrf.mxu0
        %v1221 = vadd.f32 %v481, %v1220
        %1222 = vmatmul.bf16.gmra.mxu0 %v798
        %v1223 = vpop.f32.mrf.mxu0
        %v1224 = vadd.f32 %v481, %v1223
        %v1225 = vpop.f32.mrf.mxu0
        %v1226 = vadd.f32 %v481, %v1225
        %1227 = vmatmul.bf16.gmra.mxu0 %v799
        %v1228 = vpop.f32.mrf.mxu0
        %v1229 = vadd.f32 %v481, %v1228
        %v1230 = vpop.f32.mrf.mxu0
        %v1231 = vadd.f32 %v481, %v1230
        %1232 = vmatmul.bf16.gmra.mxu0 %v800
        %v1233 = vpop.f32.mrf.mxu0
        %v1234 = vadd.f32 %v481, %v1233
        %v1235 = vpop.f32.mrf.mxu0
        %v1236 = vadd.f32 %v481, %v1235
        %1237 = vmatmul.bf16.gmra.mxu0 %v801
        %v1238 = vpop.f32.mrf.mxu0
        %v1239 = vadd.f32 %v481, %v1238
        %v1240 = vpop.f32.mrf.mxu0
        %v1241 = vadd.f32 %v481, %v1240
        %1242 = vdwg.mxu0
        %v1243 = vxor.u32 %v924, 2147483648
        %v1244 = vxor.u32 %v926, 2147483648
        %v1245 = vxor.u32 %v929, 2147483648
        %v1246 = vxor.u32 %v931, 2147483648
        %v1247 = vxor.u32 %v934, 2147483648
        %v1248 = vxor.u32 %v936, 2147483648
        %v1249 = vxor.u32 %v939, 2147483648
        %v1250 = vxor.u32 %v941, 2147483648
        %v1251 = vxor.u32 %v944, 2147483648
        %v1252 = vxor.u32 %v946, 2147483648
        %v1253 = vxor.u32 %v949, 2147483648
        %v1254 = vxor.u32 %v951, 2147483648
        %v1255 = vxor.u32 %v954, 2147483648
        %v1256 = vxor.u32 %v956, 2147483648
        %v1257 = vxor.u32 %v959, 2147483648
        %v1258 = vxor.u32 %v961, 2147483648
        %v1259 = vxor.u32 %v964, 2147483648
        %v1260 = vxor.u32 %v966, 2147483648
        %v1261 = vxor.u32 %v969, 2147483648
        %v1262 = vxor.u32 %v971, 2147483648
        %v1263 = vxor.u32 %v974, 2147483648
        %v1264 = vxor.u32 %v976, 2147483648
        %v1265 = vxor.u32 %v979, 2147483648
        %v1266 = vxor.u32 %v981, 2147483648
        %v1267 = vxor.u32 %v984, 2147483648
        %v1268 = vxor.u32 %v986, 2147483648
        %v1269 = vxor.u32 %v989, 2147483648
        %v1270 = vxor.u32 %v991, 2147483648
        %v1271 = vxor.u32 %v994, 2147483648
        %v1272 = vxor.u32 %v996, 2147483648
        %v1273 = vxor.u32 %v999, 2147483648
        %v1274 = vxor.u32 %v1001, 2147483648
        %v1275 = vxor.u32 %v1004, 2147483648
        %v1276 = vxor.u32 %v1006, 2147483648
        %v1277 = vxor.u32 %v1009, 2147483648
        %v1278 = vxor.u32 %v1011, 2147483648
        %v1279 = vxor.u32 %v1014, 2147483648
        %v1280 = vxor.u32 %v1016, 2147483648
        %v1281 = vxor.u32 %v1019, 2147483648
        %v1282 = vxor.u32 %v1021, 2147483648
        %v1283 = vxor.u32 %v1024, 2147483648
        %v1284 = vxor.u32 %v1026, 2147483648
        %v1285 = vxor.u32 %v1029, 2147483648
        %v1286 = vxor.u32 %v1031, 2147483648
        %v1287 = vxor.u32 %v1034, 2147483648
        %v1288 = vxor.u32 %v1036, 2147483648
        %v1289 = vxor.u32 %v1039, 2147483648
        %v1290 = vxor.u32 %v1041, 2147483648
        %v1291 = vxor.u32 %v1044, 2147483648
        %v1292 = vxor.u32 %v1046, 2147483648
        %v1293 = vxor.u32 %v1049, 2147483648
        %v1294 = vxor.u32 %v1051, 2147483648
        %v1295 = vxor.u32 %v1054, 2147483648
        %v1296 = vxor.u32 %v1056, 2147483648
        %v1297 = vxor.u32 %v1059, 2147483648
        %v1298 = vxor.u32 %v1061, 2147483648
        %v1299 = vxor.u32 %v1064, 2147483648
        %v1300 = vxor.u32 %v1066, 2147483648
        %v1301 = vxor.u32 %v1069, 2147483648
        %v1302 = vxor.u32 %v1071, 2147483648
        %v1303 = vxor.u32 %v1074, 2147483648
        %v1304 = vxor.u32 %v1076, 2147483648
        %v1305 = vxor.u32 %v1079, 2147483648
        %v1306 = vxor.u32 %v1081, 2147483648
        %v1307 = vxor.u32 %v1084, 2147483648
        %v1308 = vxor.u32 %v1086, 2147483648
        %v1309 = vxor.u32 %v1089, 2147483648
        %v1310 = vxor.u32 %v1091, 2147483648
        %v1311 = vxor.u32 %v1094, 2147483648
        %v1312 = vxor.u32 %v1096, 2147483648
        %v1313 = vxor.u32 %v1099, 2147483648
        %v1314 = vxor.u32 %v1101, 2147483648
        %v1315 = vxor.u32 %v1104, 2147483648
        %v1316 = vxor.u32 %v1106, 2147483648
        %v1317 = vxor.u32 %v1109, 2147483648
        %v1318 = vxor.u32 %v1111, 2147483648
        %v1319 = vxor.u32 %v1114, 2147483648
        %v1320 = vxor.u32 %v1116, 2147483648
        %v1321 = vxor.u32 %v1119, 2147483648
        %v1322 = vxor.u32 %v1121, 2147483648
        %v1323 = vxor.u32 %v1124, 2147483648
        %v1324 = vxor.u32 %v1126, 2147483648
        %v1325 = vxor.u32 %v1129, 2147483648
        %v1326 = vxor.u32 %v1131, 2147483648
        %v1327 = vxor.u32 %v1134, 2147483648
        %v1328 = vxor.u32 %v1136, 2147483648
        %v1329 = vxor.u32 %v1139, 2147483648
        %v1330 = vxor.u32 %v1141, 2147483648
        %v1331 = vxor.u32 %v1144, 2147483648
        %v1332 = vxor.u32 %v1146, 2147483648
        %v1333 = vxor.u32 %v1149, 2147483648
        %v1334 = vxor.u32 %v1151, 2147483648
        %v1335 = vxor.u32 %v1154, 2147483648
        %v1336 = vxor.u32 %v1156, 2147483648
        %v1337 = vxor.u32 %v1159, 2147483648
        %v1338 = vxor.u32 %v1161, 2147483648
        %v1339 = vxor.u32 %v1164, 2147483648
        %v1340 = vxor.u32 %v1166, 2147483648
        %v1341 = vxor.u32 %v1169, 2147483648
        %v1342 = vxor.u32 %v1171, 2147483648
        %v1343 = vxor.u32 %v1174, 2147483648
        %v1344 = vxor.u32 %v1176, 2147483648
        %v1345 = vxor.u32 %v1179, 2147483648
        %v1346 = vxor.u32 %v1181, 2147483648
        %v1347 = vxor.u32 %v1184, 2147483648
        %v1348 = vxor.u32 %v1186, 2147483648
        %v1349 = vxor.u32 %v1189, 2147483648
        %v1350 = vxor.u32 %v1191, 2147483648
        %v1351 = vxor.u32 %v1194, 2147483648
        %v1352 = vxor.u32 %v1196, 2147483648
        %v1353 = vxor.u32 %v1199, 2147483648
        %v1354 = vxor.u32 %v1201, 2147483648
        %v1355 = vxor.u32 %v1204, 2147483648
        %v1356 = vxor.u32 %v1206, 2147483648
        %v1357 = vxor.u32 %v1209, 2147483648
        %v1358 = vxor.u32 %v1211, 2147483648
        %v1359 = vxor.u32 %v1214, 2147483648
        %v1360 = vxor.u32 %v1216, 2147483648
        %v1361 = vxor.u32 %v1219, 2147483648
        %v1362 = vxor.u32 %v1221, 2147483648
        %v1363 = vxor.u32 %v1224, 2147483648
        %v1364 = vxor.u32 %v1226, 2147483648
        %v1365 = vxor.u32 %v1229, 2147483648
        %v1366 = vxor.u32 %v1231, 2147483648
        %v1367 = vxor.u32 %v1234, 2147483648
        %v1368 = vxor.u32 %v1236, 2147483648
        %v1369 = vxor.u32 %v1239, 2147483648
        %v1370 = vxor.u32 %v1241, 2147483648
        %v1371 = vmul.f32 %v1243, 1.442695
        %v1372 = vpow.pop %v1371
        %v1373 = vmul.f32 %v1244, 1.442695
        %v1374 = vpow.pop %v1373
        %v1375 = vmul.f32 %v1245, 1.442695
        %v1376 = vpow.pop %v1375
        %v1377 = vmul.f32 %v1246, 1.442695
        %v1378 = vpow.pop %v1377
        %v1379 = vmul.f32 %v1247, 1.442695
        %v1380 = vpow.pop %v1379
        %v1381 = vmul.f32 %v1248, 1.442695
        %v1382 = vpow.pop %v1381
        %v1383 = vmul.f32 %v1249, 1.442695
        %v1384 = vpow.pop %v1383
        %v1385 = vmul.f32 %v1250, 1.442695
        %v1386 = vpow.pop %v1385
        %v1387 = vmul.f32 %v1251, 1.442695
        %v1388 = vpow.pop %v1387
        %v1389 = vmul.f32 %v1252, 1.442695
        %v1390 = vpow.pop %v1389
        %v1391 = vmul.f32 %v1253, 1.442695
        %v1392 = vpow.pop %v1391
        %v1393 = vmul.f32 %v1254, 1.442695
        %v1394 = vpow.pop %v1393
        %v1395 = vmul.f32 %v1255, 1.442695
        %v1396 = vpow.pop %v1395
        %v1397 = vmul.f32 %v1256, 1.442695
        %v1398 = vpow.pop %v1397
        %v1399 = vmul.f32 %v1257, 1.442695
        %v1400 = vpow.pop %v1399
        %v1401 = vmul.f32 %v1258, 1.442695
        %v1402 = vpow.pop %v1401
        %v1403 = vmul.f32 %v1259, 1.442695
        %v1404 = vpow.pop %v1403
        %v1405 = vmul.f32 %v1260, 1.442695
        %v1406 = vpow.pop %v1405
        %v1407 = vmul.f32 %v1261, 1.442695
        %v1408 = vpow.pop %v1407
        %v1409 = vmul.f32 %v1262, 1.442695
        %v1410 = vpow.pop %v1409
        %v1411 = vmul.f32 %v1263, 1.442695
        %v1412 = vpow.pop %v1411
        %v1413 = vmul.f32 %v1264, 1.442695
        %v1414 = vpow.pop %v1413
        %v1415 = vmul.f32 %v1265, 1.442695
        %v1416 = vpow.pop %v1415
        %v1417 = vmul.f32 %v1266, 1.442695
        %v1418 = vpow.pop %v1417
        %v1419 = vmul.f32 %v1267, 1.442695
        %v1420 = vpow.pop %v1419
        %v1421 = vmul.f32 %v1268, 1.442695
        %v1422 = vpow.pop %v1421
        %v1423 = vmul.f32 %v1269, 1.442695
        %v1424 = vpow.pop %v1423
        %v1425 = vmul.f32 %v1270, 1.442695
        %v1426 = vpow.pop %v1425
        %v1427 = vmul.f32 %v1271, 1.442695
        %v1428 = vpow.pop %v1427
        %v1429 = vmul.f32 %v1272, 1.442695
        %v1430 = vpow.pop %v1429
        %v1431 = vmul.f32 %v1273, 1.442695
        %v1432 = vpow.pop %v1431
        %v1433 = vmul.f32 %v1274, 1.442695
        %v1434 = vpow.pop %v1433
        %v1435 = vmul.f32 %v1275, 1.442695
        %v1436 = vpow.pop %v1435
        %v1437 = vmul.f32 %v1276, 1.442695
        %v1438 = vpow.pop %v1437
        %v1439 = vmul.f32 %v1277, 1.442695
        %v1440 = vpow.pop %v1439
        %v1441 = vmul.f32 %v1278, 1.442695
        %v1442 = vpow.pop %v1441
        %v1443 = vmul.f32 %v1279, 1.442695
        %v1444 = vpow.pop %v1443
        %v1445 = vmul.f32 %v1280, 1.442695
        %v1446 = vpow.pop %v1445
        %v1447 = vmul.f32 %v1281, 1.442695
        %v1448 = vpow.pop %v1447
        %v1449 = vmul.f32 %v1282, 1.442695
        %v1450 = vpow.pop %v1449
        %v1451 = vmul.f32 %v1283, 1.442695
        %v1452 = vpow.pop %v1451
        %v1453 = vmul.f32 %v1284, 1.442695
        %v1454 = vpow.pop %v1453
        %v1455 = vmul.f32 %v1285, 1.442695
        %v1456 = vpow.pop %v1455
        %v1457 = vmul.f32 %v1286, 1.442695
        %v1458 = vpow.pop %v1457
        %v1459 = vmul.f32 %v1287, 1.442695
        %v1460 = vpow.pop %v1459
        %v1461 = vmul.f32 %v1288, 1.442695
        %v1462 = vpow.pop %v1461
        %v1463 = vmul.f32 %v1289, 1.442695
        %v1464 = vpow.pop %v1463
        %v1465 = vmul.f32 %v1290, 1.442695
        %v1466 = vpow.pop %v1465
        %v1467 = vmul.f32 %v1291, 1.442695
        %v1468 = vpow.pop %v1467
        %v1469 = vmul.f32 %v1292, 1.442695
        %v1470 = vpow.pop %v1469
        %v1471 = vmul.f32 %v1293, 1.442695
        %v1472 = vpow.pop %v1471
        %v1473 = vmul.f32 %v1294, 1.442695
        %v1474 = vpow.pop %v1473
        %v1475 = vmul.f32 %v1295, 1.442695
        %v1476 = vpow.pop %v1475
        %v1477 = vmul.f32 %v1296, 1.442695
        %v1478 = vpow.pop %v1477
        %v1479 = vmul.f32 %v1297, 1.442695
        %v1480 = vpow.pop %v1479
        %v1481 = vmul.f32 %v1298, 1.442695
        %v1482 = vpow.pop %v1481
        %v1483 = vmul.f32 %v1299, 1.442695
        %v1484 = vpow.pop %v1483
        %v1485 = vmul.f32 %v1300, 1.442695
        %v1486 = vpow.pop %v1485
        %v1487 = vmul.f32 %v1301, 1.442695
        %v1488 = vpow.pop %v1487
        %v1489 = vmul.f32 %v1302, 1.442695
        %v1490 = vpow.pop %v1489
        %v1491 = vmul.f32 %v1303, 1.442695
        %v1492 = vpow.pop %v1491
        %v1493 = vmul.f32 %v1304, 1.442695
        %v1494 = vpow.pop %v1493
        %v1495 = vmul.f32 %v1305, 1.442695
        %v1496 = vpow.pop %v1495
        %v1497 = vmul.f32 %v1306, 1.442695
        %v1498 = vpow.pop %v1497
        %v1499 = vmul.f32 %v1307, 1.442695
        %v1500 = vpow.pop %v1499
        %v1501 = vmul.f32 %v1308, 1.442695
        %v1502 = vpow.pop %v1501
        %v1503 = vmul.f32 %v1309, 1.442695
        %v1504 = vpow.pop %v1503
        %v1505 = vmul.f32 %v1310, 1.442695
        %v1506 = vpow.pop %v1505
        %v1507 = vmul.f32 %v1311, 1.442695
        %v1508 = vpow.pop %v1507
        %v1509 = vmul.f32 %v1312, 1.442695
        %v1510 = vpow.pop %v1509
        %v1511 = vmul.f32 %v1313, 1.442695
        %v1512 = vpow.pop %v1511
        %v1513 = vmul.f32 %v1314, 1.442695
        %v1514 = vpow.pop %v1513
        %v1515 = vmul.f32 %v1315, 1.442695
        %v1516 = vpow.pop %v1515
        %v1517 = vmul.f32 %v1316, 1.442695
        %v1518 = vpow.pop %v1517
        %v1519 = vmul.f32 %v1317, 1.442695
        %v1520 = vpow.pop %v1519
        %v1521 = vmul.f32 %v1318, 1.442695
        %v1522 = vpow.pop %v1521
        %v1523 = vmul.f32 %v1319, 1.442695
        %v1524 = vpow.pop %v1523
        %v1525 = vmul.f32 %v1320, 1.442695
        %v1526 = vpow.pop %v1525
        %v1527 = vmul.f32 %v1321, 1.442695
        %v1528 = vpow.pop %v1527
        %v1529 = vmul.f32 %v1322, 1.442695
        %v1530 = vpow.pop %v1529
        %v1531 = vmul.f32 %v1323, 1.442695
        %v1532 = vpow.pop %v1531
        %v1533 = vmul.f32 %v1324, 1.442695
        %v1534 = vpow.pop %v1533
        %v1535 = vmul.f32 %v1325, 1.442695
        %v1536 = vpow.pop %v1535
        %v1537 = vmul.f32 %v1326, 1.442695
        %v1538 = vpow.pop %v1537
        %v1539 = vmul.f32 %v1327, 1.442695
        %v1540 = vpow.pop %v1539
        %v1541 = vmul.f32 %v1328, 1.442695
        %v1542 = vpow.pop %v1541
        %v1543 = vmul.f32 %v1329, 1.442695
        %v1544 = vpow.pop %v1543
        %v1545 = vmul.f32 %v1330, 1.442695
        %v1546 = vpow.pop %v1545
        %v1547 = vmul.f32 %v1331, 1.442695
        %v1548 = vpow.pop %v1547
        %v1549 = vmul.f32 %v1332, 1.442695
        %v1550 = vpow.pop %v1549
        %v1551 = vmul.f32 %v1333, 1.442695
        %v1552 = vpow.pop %v1551
        %v1553 = vmul.f32 %v1334, 1.442695
        %v1554 = vpow.pop %v1553
        %v1555 = vmul.f32 %v1335, 1.442695
        %v1556 = vpow.pop %v1555
        %v1557 = vmul.f32 %v1336, 1.442695
        %v1558 = vpow.pop %v1557
        %v1559 = vmul.f32 %v1337, 1.442695
        %v1560 = vpow.pop %v1559
        %v1561 = vmul.f32 %v1338, 1.442695
        %v1562 = vpow.pop %v1561
        %v1563 = vmul.f32 %v1339, 1.442695
        %v1564 = vpow.pop %v1563
        %v1565 = vmul.f32 %v1340, 1.442695
        %v1566 = vpow.pop %v1565
        %v1567 = vmul.f32 %v1341, 1.442695
        %v1568 = vpow.pop %v1567
        %v1569 = vmul.f32 %v1342, 1.442695
        %v1570 = vpow.pop %v1569
        %v1571 = vmul.f32 %v1343, 1.442695
        %v1572 = vpow.pop %v1571
        %v1573 = vmul.f32 %v1344, 1.442695
        %v1574 = vpow.pop %v1573
        %v1575 = vmul.f32 %v1345, 1.442695
        %v1576 = vpow.pop %v1575
        %v1577 = vmul.f32 %v1346, 1.442695
        %v1578 = vpow.pop %v1577
        %v1579 = vmul.f32 %v1347, 1.442695
        %v1580 = vpow.pop %v1579
        %v1581 = vmul.f32 %v1348, 1.442695
        %v1582 = vpow.pop %v1581
        %v1583 = vmul.f32 %v1349, 1.442695
        %v1584 = vpow.pop %v1583
        %v1585 = vmul.f32 %v1350, 1.442695
        %v1586 = vpow.pop %v1585
        %v1587 = vmul.f32 %v1351, 1.442695
        %v1588 = vpow.pop %v1587
        %v1589 = vmul.f32 %v1352, 1.442695
        %v1590 = vpow.pop %v1589
        %v1591 = vmul.f32 %v1353, 1.442695
        %v1592 = vpow.pop %v1591
        %v1593 = vmul.f32 %v1354, 1.442695
        %v1594 = vpow.pop %v1593
        %v1595 = vmul.f32 %v1355, 1.442695
        %v1596 = vpow.pop %v1595
        %v1597 = vmul.f32 %v1356, 1.442695
        %v1598 = vpow.pop %v1597
        %v1599 = vmul.f32 %v1357, 1.442695
        %v1600 = vpow.pop %v1599
        %v1601 = vmul.f32 %v1358, 1.442695
        %v1602 = vpow.pop %v1601
        %v1603 = vmul.f32 %v1359, 1.442695
        %v1604 = vpow.pop %v1603
        %v1605 = vmul.f32 %v1360, 1.442695
        %v1606 = vpow.pop %v1605
        %v1607 = vmul.f32 %v1361, 1.442695
        %v1608 = vpow.pop %v1607
        %v1609 = vmul.f32 %v1362, 1.442695
        %v1610 = vpow.pop %v1609
        %v1611 = vmul.f32 %v1363, 1.442695
        %v1612 = vpow.pop %v1611
        %v1613 = vmul.f32 %v1364, 1.442695
        %v1614 = vpow.pop %v1613
        %v1615 = vmul.f32 %v1365, 1.442695
        %v1616 = vpow.pop %v1615
        %v1617 = vmul.f32 %v1366, 1.442695
        %v1618 = vpow.pop %v1617
        %v1619 = vmul.f32 %v1367, 1.442695
        %v1620 = vpow.pop %v1619
        %v1621 = vmul.f32 %v1368, 1.442695
        %v1622 = vpow.pop %v1621
        %v1623 = vmul.f32 %v1369, 1.442695
        %v1624 = vpow.pop %v1623
        %v1625 = vmul.f32 %v1370, 1.442695
        %v1626 = vpow.pop %v1625
        %v1627 = vadd.f32 %v1372, 1.0
        %v1628 = vadd.f32 %v1374, 1.0
        %v1629 = vadd.f32 %v1376, 1.0
        %v1630 = vadd.f32 %v1378, 1.0
        %v1631 = vadd.f32 %v1380, 1.0
        %v1632 = vadd.f32 %v1382, 1.0
        %v1633 = vadd.f32 %v1384, 1.0
        %v1634 = vadd.f32 %v1386, 1.0
        %v1635 = vadd.f32 %v1388, 1.0
        %v1636 = vadd.f32 %v1390, 1.0
        %v1637 = vadd.f32 %v1392, 1.0
        %v1638 = vadd.f32 %v1394, 1.0
        %v1639 = vadd.f32 %v1396, 1.0
        %v1640 = vadd.f32 %v1398, 1.0
        %v1641 = vadd.f32 %v1400, 1.0
        %v1642 = vadd.f32 %v1402, 1.0
        %v1643 = vadd.f32 %v1404, 1.0
        %v1644 = vadd.f32 %v1406, 1.0
        %v1645 = vadd.f32 %v1408, 1.0
        %v1646 = vadd.f32 %v1410, 1.0
        %v1647 = vadd.f32 %v1412, 1.0
        %v1648 = vadd.f32 %v1414, 1.0
        %v1649 = vadd.f32 %v1416, 1.0
        %v1650 = vadd.f32 %v1418, 1.0
        %v1651 = vadd.f32 %v1420, 1.0
        %v1652 = vadd.f32 %v1422, 1.0
        %v1653 = vadd.f32 %v1424, 1.0
        %v1654 = vadd.f32 %v1426, 1.0
        %v1655 = vadd.f32 %v1428, 1.0
        %v1656 = vadd.f32 %v1430, 1.0
        %v1657 = vadd.f32 %v1432, 1.0
        %v1658 = vadd.f32 %v1434, 1.0
        %v1659 = vadd.f32 %v1436, 1.0
        %v1660 = vadd.f32 %v1438, 1.0
        %v1661 = vadd.f32 %v1440, 1.0
        %v1662 = vadd.f32 %v1442, 1.0
        %v1663 = vadd.f32 %v1444, 1.0
        %v1664 = vadd.f32 %v1446, 1.0
        %v1665 = vadd.f32 %v1448, 1.0
        %v1666 = vadd.f32 %v1450, 1.0
        %v1667 = vadd.f32 %v1452, 1.0
        %v1668 = vadd.f32 %v1454, 1.0
        %v1669 = vadd.f32 %v1456, 1.0
        %v1670 = vadd.f32 %v1458, 1.0
        %v1671 = vadd.f32 %v1460, 1.0
        %v1672 = vadd.f32 %v1462, 1.0
        %v1673 = vadd.f32 %v1464, 1.0
        %v1674 = vadd.f32 %v1466, 1.0
        %v1675 = vadd.f32 %v1468, 1.0
        %v1676 = vadd.f32 %v1470, 1.0
        %v1677 = vadd.f32 %v1472, 1.0
        %v1678 = vadd.f32 %v1474, 1.0
        %v1679 = vadd.f32 %v1476, 1.0
        %v1680 = vadd.f32 %v1478, 1.0
        %v1681 = vadd.f32 %v1480, 1.0
        %v1682 = vadd.f32 %v1482, 1.0
        %v1683 = vadd.f32 %v1484, 1.0
        %v1684 = vadd.f32 %v1486, 1.0
        %v1685 = vadd.f32 %v1488, 1.0
        %v1686 = vadd.f32 %v1490, 1.0
        %v1687 = vadd.f32 %v1492, 1.0
        %v1688 = vadd.f32 %v1494, 1.0
        %v1689 = vadd.f32 %v1496, 1.0
        %v1690 = vadd.f32 %v1498, 1.0
        %v1691 = vadd.f32 %v1500, 1.0
        %v1692 = vadd.f32 %v1502, 1.0
        %v1693 = vadd.f32 %v1504, 1.0
        %v1694 = vadd.f32 %v1506, 1.0
        %v1695 = vadd.f32 %v1508, 1.0
        %v1696 = vadd.f32 %v1510, 1.0
        %v1697 = vadd.f32 %v1512, 1.0
        %v1698 = vadd.f32 %v1514, 1.0
        %v1699 = vadd.f32 %v1516, 1.0
        %v1700 = vadd.f32 %v1518, 1.0
        %v1701 = vadd.f32 %v1520, 1.0
        %v1702 = vadd.f32 %v1522, 1.0
        %v1703 = vadd.f32 %v1524, 1.0
        %v1704 = vadd.f32 %v1526, 1.0
        %v1705 = vadd.f32 %v1528, 1.0
        %v1706 = vadd.f32 %v1530, 1.0
        %v1707 = vadd.f32 %v1532, 1.0
        %v1708 = vadd.f32 %v1534, 1.0
        %v1709 = vadd.f32 %v1536, 1.0
        %v1710 = vadd.f32 %v1538, 1.0
        %v1711 = vadd.f32 %v1540, 1.0
        %v1712 = vadd.f32 %v1542, 1.0
        %v1713 = vadd.f32 %v1544, 1.0
        %v1714 = vadd.f32 %v1546, 1.0
        %v1715 = vadd.f32 %v1548, 1.0
        %v1716 = vadd.f32 %v1550, 1.0
        %v1717 = vadd.f32 %v1552, 1.0
        %v1718 = vadd.f32 %v1554, 1.0
        %v1719 = vadd.f32 %v1556, 1.0
        %v1720 = vadd.f32 %v1558, 1.0
        %v1721 = vadd.f32 %v1560, 1.0
        %v1722 = vadd.f32 %v1562, 1.0
        %v1723 = vadd.f32 %v1564, 1.0
        %v1724 = vadd.f32 %v1566, 1.0
        %v1725 = vadd.f32 %v1568, 1.0
        %v1726 = vadd.f32 %v1570, 1.0
        %v1727 = vadd.f32 %v1572, 1.0
        %v1728 = vadd.f32 %v1574, 1.0
        %v1729 = vadd.f32 %v1576, 1.0
        %v1730 = vadd.f32 %v1578, 1.0
        %v1731 = vadd.f32 %v1580, 1.0
        %v1732 = vadd.f32 %v1582, 1.0
        %v1733 = vadd.f32 %v1584, 1.0
        %v1734 = vadd.f32 %v1586, 1.0
        %v1735 = vadd.f32 %v1588, 1.0
        %v1736 = vadd.f32 %v1590, 1.0
        %v1737 = vadd.f32 %v1592, 1.0
        %v1738 = vadd.f32 %v1594, 1.0
        %v1739 = vadd.f32 %v1596, 1.0
        %v1740 = vadd.f32 %v1598, 1.0
        %v1741 = vadd.f32 %v1600, 1.0
        %v1742 = vadd.f32 %v1602, 1.0
        %v1743 = vadd.f32 %v1604, 1.0
        %v1744 = vadd.f32 %v1606, 1.0
        %v1745 = vadd.f32 %v1608, 1.0
        %v1746 = vadd.f32 %v1610, 1.0
        %v1747 = vadd.f32 %v1612, 1.0
        %v1748 = vadd.f32 %v1614, 1.0
        %v1749 = vadd.f32 %v1616, 1.0
        %v1750 = vadd.f32 %v1618, 1.0
        %v1751 = vadd.f32 %v1620, 1.0
        %v1752 = vadd.f32 %v1622, 1.0
        %v1753 = vadd.f32 %v1624, 1.0
        %v1754 = vadd.f32 %v1626, 1.0
        %v1755 = vrcp.pop %v1627
        %v1756 = vmul.f32 %v1627, %v1755
        %v1757 = vsub.f32 1.0, %v1756
        %v1758 = vmul.f32 %v1755, %v1757
        %v1759 = vadd.f32 %v1755, %v1758
        %vm1760 = vweird.f32 %v1627
        %vm1761 = vweird.f32 %v1755
        %vm1762 = vmor %vm1760, %vm1761
        %v1763 = vsel %vm1762, %v1755, %v1759
        %v1764 = vand.u32 2147483647, %v1627
        %vm1765 = vcmp.eq.f32.partialorder %v1764, 8.507059e+37
        %v1766 = vand.u32 %v1627, 2147483648
        %v1767 = vor.u32 1.1754944e-38, %v1766
        %v1768 = vsel %vm1765, %v1767, %v1763
        %v1769 = vmul.f32 1.0, %v1768
        %v1770 = vrcp.pop %v1628
        %v1771 = vmul.f32 %v1628, %v1770
        %v1772 = vsub.f32 1.0, %v1771
        %v1773 = vmul.f32 %v1770, %v1772
        %v1774 = vadd.f32 %v1770, %v1773
        %vm1775 = vweird.f32 %v1628
        %vm1776 = vweird.f32 %v1770
        %vm1777 = vmor %vm1775, %vm1776
        %v1778 = vsel %vm1777, %v1770, %v1774
        %v1779 = vand.u32 2147483647, %v1628
        %vm1780 = vcmp.eq.f32.partialorder %v1779, 8.507059e+37
        %v1781 = vand.u32 %v1628, 2147483648
        %v1782 = vor.u32 1.1754944e-38, %v1781
        %v1783 = vsel %vm1780, %v1782, %v1778
        %v1784 = vmul.f32 1.0, %v1783
        %v1785 = vrcp.pop %v1629
        %v1786 = vmul.f32 %v1629, %v1785
        %v1787 = vsub.f32 1.0, %v1786
        %v1788 = vmul.f32 %v1785, %v1787
        %v1789 = vadd.f32 %v1785, %v1788
        %vm1790 = vweird.f32 %v1629
        %vm1791 = vweird.f32 %v1785
        %vm1792 = vmor %vm1790, %vm1791
        %v1793 = vsel %vm1792, %v1785, %v1789
        %v1794 = vand.u32 2147483647, %v1629
        %vm1795 = vcmp.eq.f32.partialorder %v1794, 8.507059e+37
        %v1796 = vand.u32 %v1629, 2147483648
        %v1797 = vor.u32 1.1754944e-38, %v1796
        %v1798 = vsel %vm1795, %v1797, %v1793
        %v1799 = vmul.f32 1.0, %v1798
        %v1800 = vrcp.pop %v1630
        %v1801 = vmul.f32 %v1630, %v1800
        %v1802 = vsub.f32 1.0, %v1801
        %v1803 = vmul.f32 %v1800, %v1802
        %v1804 = vadd.f32 %v1800, %v1803
        %vm1805 = vweird.f32 %v1630
        %vm1806 = vweird.f32 %v1800
        %vm1807 = vmor %vm1805, %vm1806
        %v1808 = vsel %vm1807, %v1800, %v1804
        %v1809 = vand.u32 2147483647, %v1630
        %vm1810 = vcmp.eq.f32.partialorder %v1809, 8.507059e+37
        %v1811 = vand.u32 %v1630, 2147483648
        %v1812 = vor.u32 1.1754944e-38, %v1811
        %v1813 = vsel %vm1810, %v1812, %v1808
        %v1814 = vmul.f32 1.0, %v1813
        %v1815 = vrcp.pop %v1631
        %v1816 = vmul.f32 %v1631, %v1815
        %v1817 = vsub.f32 1.0, %v1816
        %v1818 = vmul.f32 %v1815, %v1817
        %v1819 = vadd.f32 %v1815, %v1818
        %vm1820 = vweird.f32 %v1631
        %vm1821 = vweird.f32 %v1815
        %vm1822 = vmor %vm1820, %vm1821
        %v1823 = vsel %vm1822, %v1815, %v1819
        %v1824 = vand.u32 2147483647, %v1631
        %vm1825 = vcmp.eq.f32.partialorder %v1824, 8.507059e+37
        %v1826 = vand.u32 %v1631, 2147483648
        %v1827 = vor.u32 1.1754944e-38, %v1826
        %v1828 = vsel %vm1825, %v1827, %v1823
        %v1829 = vmul.f32 1.0, %v1828
        %v1830 = vrcp.pop %v1632
        %v1831 = vmul.f32 %v1632, %v1830
        %v1832 = vsub.f32 1.0, %v1831
        %v1833 = vmul.f32 %v1830, %v1832
        %v1834 = vadd.f32 %v1830, %v1833
        %vm1835 = vweird.f32 %v1632
        %vm1836 = vweird.f32 %v1830
        %vm1837 = vmor %vm1835, %vm1836
        %v1838 = vsel %vm1837, %v1830, %v1834
        %v1839 = vand.u32 2147483647, %v1632
        %vm1840 = vcmp.eq.f32.partialorder %v1839, 8.507059e+37
        %v1841 = vand.u32 %v1632, 2147483648
        %v1842 = vor.u32 1.1754944e-38, %v1841
        %v1843 = vsel %vm1840, %v1842, %v1838
        %v1844 = vmul.f32 1.0, %v1843
        %v1845 = vrcp.pop %v1633
        %v1846 = vmul.f32 %v1633, %v1845
        %v1847 = vsub.f32 1.0, %v1846
        %v1848 = vmul.f32 %v1845, %v1847
        %v1849 = vadd.f32 %v1845, %v1848
        %vm1850 = vweird.f32 %v1633
        %vm1851 = vweird.f32 %v1845
        %vm1852 = vmor %vm1850, %vm1851
        %v1853 = vsel %vm1852, %v1845, %v1849
        %v1854 = vand.u32 2147483647, %v1633
        %vm1855 = vcmp.eq.f32.partialorder %v1854, 8.507059e+37
        %v1856 = vand.u32 %v1633, 2147483648
        %v1857 = vor.u32 1.1754944e-38, %v1856
        %v1858 = vsel %vm1855, %v1857, %v1853
        %v1859 = vmul.f32 1.0, %v1858
        %v1860 = vrcp.pop %v1634
        %v1861 = vmul.f32 %v1634, %v1860
        %v1862 = vsub.f32 1.0, %v1861
        %v1863 = vmul.f32 %v1860, %v1862
        %v1864 = vadd.f32 %v1860, %v1863
        %vm1865 = vweird.f32 %v1634
        %vm1866 = vweird.f32 %v1860
        %vm1867 = vmor %vm1865, %vm1866
        %v1868 = vsel %vm1867, %v1860, %v1864
        %v1869 = vand.u32 2147483647, %v1634
        %vm1870 = vcmp.eq.f32.partialorder %v1869, 8.507059e+37
        %v1871 = vand.u32 %v1634, 2147483648
        %v1872 = vor.u32 1.1754944e-38, %v1871
        %v1873 = vsel %vm1870, %v1872, %v1868
        %v1874 = vmul.f32 1.0, %v1873
        %v1875 = vrcp.pop %v1635
        %v1876 = vmul.f32 %v1635, %v1875
        %v1877 = vsub.f32 1.0, %v1876
        %v1878 = vmul.f32 %v1875, %v1877
        %v1879 = vadd.f32 %v1875, %v1878
        %vm1880 = vweird.f32 %v1635
        %vm1881 = vweird.f32 %v1875
        %vm1882 = vmor %vm1880, %vm1881
        %v1883 = vsel %vm1882, %v1875, %v1879
        %v1884 = vand.u32 2147483647, %v1635
        %vm1885 = vcmp.eq.f32.partialorder %v1884, 8.507059e+37
        %v1886 = vand.u32 %v1635, 2147483648
        %v1887 = vor.u32 1.1754944e-38, %v1886
        %v1888 = vsel %vm1885, %v1887, %v1883
        %v1889 = vmul.f32 1.0, %v1888
        %v1890 = vrcp.pop %v1636
        %v1891 = vmul.f32 %v1636, %v1890
        %v1892 = vsub.f32 1.0, %v1891
        %v1893 = vmul.f32 %v1890, %v1892
        %v1894 = vadd.f32 %v1890, %v1893
        %vm1895 = vweird.f32 %v1636
        %vm1896 = vweird.f32 %v1890
        %vm1897 = vmor %vm1895, %vm1896
        %v1898 = vsel %vm1897, %v1890, %v1894
        %v1899 = vand.u32 2147483647, %v1636
        %vm1900 = vcmp.eq.f32.partialorder %v1899, 8.507059e+37
        %v1901 = vand.u32 %v1636, 2147483648
        %v1902 = vor.u32 1.1754944e-38, %v1901
        %v1903 = vsel %vm1900, %v1902, %v1898
        %v1904 = vmul.f32 1.0, %v1903
        %v1905 = vrcp.pop %v1637
        %v1906 = vmul.f32 %v1637, %v1905
        %v1907 = vsub.f32 1.0, %v1906
        %v1908 = vmul.f32 %v1905, %v1907
        %v1909 = vadd.f32 %v1905, %v1908
        %vm1910 = vweird.f32 %v1637
        %vm1911 = vweird.f32 %v1905
        %vm1912 = vmor %vm1910, %vm1911
        %v1913 = vsel %vm1912, %v1905, %v1909
        %v1914 = vand.u32 2147483647, %v1637
        %vm1915 = vcmp.eq.f32.partialorder %v1914, 8.507059e+37
        %v1916 = vand.u32 %v1637, 2147483648
        %v1917 = vor.u32 1.1754944e-38, %v1916
        %v1918 = vsel %vm1915, %v1917, %v1913
        %v1919 = vmul.f32 1.0, %v1918
        %v1920 = vrcp.pop %v1638
        %v1921 = vmul.f32 %v1638, %v1920
        %v1922 = vsub.f32 1.0, %v1921
        %v1923 = vmul.f32 %v1920, %v1922
        %v1924 = vadd.f32 %v1920, %v1923
        %vm1925 = vweird.f32 %v1638
        %vm1926 = vweird.f32 %v1920
        %vm1927 = vmor %vm1925, %vm1926
        %v1928 = vsel %vm1927, %v1920, %v1924
        %v1929 = vand.u32 2147483647, %v1638
        %vm1930 = vcmp.eq.f32.partialorder %v1929, 8.507059e+37
        %v1931 = vand.u32 %v1638, 2147483648
        %v1932 = vor.u32 1.1754944e-38, %v1931
        %v1933 = vsel %vm1930, %v1932, %v1928
        %v1934 = vmul.f32 1.0, %v1933
        %v1935 = vrcp.pop %v1639
        %v1936 = vmul.f32 %v1639, %v1935
        %v1937 = vsub.f32 1.0, %v1936
        %v1938 = vmul.f32 %v1935, %v1937
        %v1939 = vadd.f32 %v1935, %v1938
        %vm1940 = vweird.f32 %v1639
        %vm1941 = vweird.f32 %v1935
        %vm1942 = vmor %vm1940, %vm1941
        %v1943 = vsel %vm1942, %v1935, %v1939
        %v1944 = vand.u32 2147483647, %v1639
        %vm1945 = vcmp.eq.f32.partialorder %v1944, 8.507059e+37
        %v1946 = vand.u32 %v1639, 2147483648
        %v1947 = vor.u32 1.1754944e-38, %v1946
        %v1948 = vsel %vm1945, %v1947, %v1943
        %v1949 = vmul.f32 1.0, %v1948
        %v1950 = vrcp.pop %v1640
        %v1951 = vmul.f32 %v1640, %v1950
        %v1952 = vsub.f32 1.0, %v1951
        %v1953 = vmul.f32 %v1950, %v1952
        %v1954 = vadd.f32 %v1950, %v1953
        %vm1955 = vweird.f32 %v1640
        %vm1956 = vweird.f32 %v1950
        %vm1957 = vmor %vm1955, %vm1956
        %v1958 = vsel %vm1957, %v1950, %v1954
        %v1959 = vand.u32 2147483647, %v1640
        %vm1960 = vcmp.eq.f32.partialorder %v1959, 8.507059e+37
        %v1961 = vand.u32 %v1640, 2147483648
        %v1962 = vor.u32 1.1754944e-38, %v1961
        %v1963 = vsel %vm1960, %v1962, %v1958
        %v1964 = vmul.f32 1.0, %v1963
        %v1965 = vrcp.pop %v1641
        %v1966 = vmul.f32 %v1641, %v1965
        %v1967 = vsub.f32 1.0, %v1966
        %v1968 = vmul.f32 %v1965, %v1967
        %v1969 = vadd.f32 %v1965, %v1968
        %vm1970 = vweird.f32 %v1641
        %vm1971 = vweird.f32 %v1965
        %vm1972 = vmor %vm1970, %vm1971
        %v1973 = vsel %vm1972, %v1965, %v1969
        %v1974 = vand.u32 2147483647, %v1641
        %vm1975 = vcmp.eq.f32.partialorder %v1974, 8.507059e+37
        %v1976 = vand.u32 %v1641, 2147483648
        %v1977 = vor.u32 1.1754944e-38, %v1976
        %v1978 = vsel %vm1975, %v1977, %v1973
        %v1979 = vmul.f32 1.0, %v1978
        %v1980 = vrcp.pop %v1642
        %v1981 = vmul.f32 %v1642, %v1980
        %v1982 = vsub.f32 1.0, %v1981
        %v1983 = vmul.f32 %v1980, %v1982
        %v1984 = vadd.f32 %v1980, %v1983
        %vm1985 = vweird.f32 %v1642
        %vm1986 = vweird.f32 %v1980
        %vm1987 = vmor %vm1985, %vm1986
        %v1988 = vsel %vm1987, %v1980, %v1984
        %v1989 = vand.u32 2147483647, %v1642
        %vm1990 = vcmp.eq.f32.partialorder %v1989, 8.507059e+37
        %v1991 = vand.u32 %v1642, 2147483648
        %v1992 = vor.u32 1.1754944e-38, %v1991
        %v1993 = vsel %vm1990, %v1992, %v1988
        %v1994 = vmul.f32 1.0, %v1993
        %v1995 = vrcp.pop %v1643
        %v1996 = vmul.f32 %v1643, %v1995
        %v1997 = vsub.f32 1.0, %v1996
        %v1998 = vmul.f32 %v1995, %v1997
        %v1999 = vadd.f32 %v1995, %v1998
        %vm2000 = vweird.f32 %v1643
        %vm2001 = vweird.f32 %v1995
        %vm2002 = vmor %vm2000, %vm2001
        %v2003 = vsel %vm2002, %v1995, %v1999
        %v2004 = vand.u32 2147483647, %v1643
        %vm2005 = vcmp.eq.f32.partialorder %v2004, 8.507059e+37
        %v2006 = vand.u32 %v1643, 2147483648
        %v2007 = vor.u32 1.1754944e-38, %v2006
        %v2008 = vsel %vm2005, %v2007, %v2003
        %v2009 = vmul.f32 1.0, %v2008
        %v2010 = vrcp.pop %v1644
        %v2011 = vmul.f32 %v1644, %v2010
        %v2012 = vsub.f32 1.0, %v2011
        %v2013 = vmul.f32 %v2010, %v2012
        %v2014 = vadd.f32 %v2010, %v2013
        %vm2015 = vweird.f32 %v1644
        %vm2016 = vweird.f32 %v2010
        %vm2017 = vmor %vm2015, %vm2016
        %v2018 = vsel %vm2017, %v2010, %v2014
        %v2019 = vand.u32 2147483647, %v1644
        %vm2020 = vcmp.eq.f32.partialorder %v2019, 8.507059e+37
        %v2021 = vand.u32 %v1644, 2147483648
        %v2022 = vor.u32 1.1754944e-38, %v2021
        %v2023 = vsel %vm2020, %v2022, %v2018
        %v2024 = vmul.f32 1.0, %v2023
        %v2025 = vrcp.pop %v1645
        %v2026 = vmul.f32 %v1645, %v2025
        %v2027 = vsub.f32 1.0, %v2026
        %v2028 = vmul.f32 %v2025, %v2027
        %v2029 = vadd.f32 %v2025, %v2028
        %vm2030 = vweird.f32 %v1645
        %vm2031 = vweird.f32 %v2025
        %vm2032 = vmor %vm2030, %vm2031
        %v2033 = vsel %vm2032, %v2025, %v2029
        %v2034 = vand.u32 2147483647, %v1645
        %vm2035 = vcmp.eq.f32.partialorder %v2034, 8.507059e+37
        %v2036 = vand.u32 %v1645, 2147483648
        %v2037 = vor.u32 1.1754944e-38, %v2036
        %v2038 = vsel %vm2035, %v2037, %v2033
        %v2039 = vmul.f32 1.0, %v2038
        %v2040 = vrcp.pop %v1646
        %v2041 = vmul.f32 %v1646, %v2040
        %v2042 = vsub.f32 1.0, %v2041
        %v2043 = vmul.f32 %v2040, %v2042
        %v2044 = vadd.f32 %v2040, %v2043
        %vm2045 = vweird.f32 %v1646
        %vm2046 = vweird.f32 %v2040
        %vm2047 = vmor %vm2045, %vm2046
        %v2048 = vsel %vm2047, %v2040, %v2044
        %v2049 = vand.u32 2147483647, %v1646
        %vm2050 = vcmp.eq.f32.partialorder %v2049, 8.507059e+37
        %v2051 = vand.u32 %v1646, 2147483648
        %v2052 = vor.u32 1.1754944e-38, %v2051
        %v2053 = vsel %vm2050, %v2052, %v2048
        %v2054 = vmul.f32 1.0, %v2053
        %v2055 = vrcp.pop %v1647
        %v2056 = vmul.f32 %v1647, %v2055
        %v2057 = vsub.f32 1.0, %v2056
        %v2058 = vmul.f32 %v2055, %v2057
        %v2059 = vadd.f32 %v2055, %v2058
        %vm2060 = vweird.f32 %v1647
        %vm2061 = vweird.f32 %v2055
        %vm2062 = vmor %vm2060, %vm2061
        %v2063 = vsel %vm2062, %v2055, %v2059
        %v2064 = vand.u32 2147483647, %v1647
        %vm2065 = vcmp.eq.f32.partialorder %v2064, 8.507059e+37
        %v2066 = vand.u32 %v1647, 2147483648
        %v2067 = vor.u32 1.1754944e-38, %v2066
        %v2068 = vsel %vm2065, %v2067, %v2063
        %v2069 = vmul.f32 1.0, %v2068
        %v2070 = vrcp.pop %v1648
        %v2071 = vmul.f32 %v1648, %v2070
        %v2072 = vsub.f32 1.0, %v2071
        %v2073 = vmul.f32 %v2070, %v2072
        %v2074 = vadd.f32 %v2070, %v2073
        %vm2075 = vweird.f32 %v1648
        %vm2076 = vweird.f32 %v2070
        %vm2077 = vmor %vm2075, %vm2076
        %v2078 = vsel %vm2077, %v2070, %v2074
        %v2079 = vand.u32 2147483647, %v1648
        %vm2080 = vcmp.eq.f32.partialorder %v2079, 8.507059e+37
        %v2081 = vand.u32 %v1648, 2147483648
        %v2082 = vor.u32 1.1754944e-38, %v2081
        %v2083 = vsel %vm2080, %v2082, %v2078
        %v2084 = vmul.f32 1.0, %v2083
        %v2085 = vrcp.pop %v1649
        %v2086 = vmul.f32 %v1649, %v2085
        %v2087 = vsub.f32 1.0, %v2086
        %v2088 = vmul.f32 %v2085, %v2087
        %v2089 = vadd.f32 %v2085, %v2088
        %vm2090 = vweird.f32 %v1649
        %vm2091 = vweird.f32 %v2085
        %vm2092 = vmor %vm2090, %vm2091
        %v2093 = vsel %vm2092, %v2085, %v2089
        %v2094 = vand.u32 2147483647, %v1649
        %vm2095 = vcmp.eq.f32.partialorder %v2094, 8.507059e+37
        %v2096 = vand.u32 %v1649, 2147483648
        %v2097 = vor.u32 1.1754944e-38, %v2096
        %v2098 = vsel %vm2095, %v2097, %v2093
        %v2099 = vmul.f32 1.0, %v2098
        %v2100 = vrcp.pop %v1650
        %v2101 = vmul.f32 %v1650, %v2100
        %v2102 = vsub.f32 1.0, %v2101
        %v2103 = vmul.f32 %v2100, %v2102
        %v2104 = vadd.f32 %v2100, %v2103
        %vm2105 = vweird.f32 %v1650
        %vm2106 = vweird.f32 %v2100
        %vm2107 = vmor %vm2105, %vm2106
        %v2108 = vsel %vm2107, %v2100, %v2104
        %v2109 = vand.u32 2147483647, %v1650
        %vm2110 = vcmp.eq.f32.partialorder %v2109, 8.507059e+37
        %v2111 = vand.u32 %v1650, 2147483648
        %v2112 = vor.u32 1.1754944e-38, %v2111
        %v2113 = vsel %vm2110, %v2112, %v2108
        %v2114 = vmul.f32 1.0, %v2113
        %v2115 = vrcp.pop %v1651
        %v2116 = vmul.f32 %v1651, %v2115
        %v2117 = vsub.f32 1.0, %v2116
        %v2118 = vmul.f32 %v2115, %v2117
        %v2119 = vadd.f32 %v2115, %v2118
        %vm2120 = vweird.f32 %v1651
        %vm2121 = vweird.f32 %v2115
        %vm2122 = vmor %vm2120, %vm2121
        %v2123 = vsel %vm2122, %v2115, %v2119
        %v2124 = vand.u32 2147483647, %v1651
        %vm2125 = vcmp.eq.f32.partialorder %v2124, 8.507059e+37
        %v2126 = vand.u32 %v1651, 2147483648
        %v2127 = vor.u32 1.1754944e-38, %v2126
        %v2128 = vsel %vm2125, %v2127, %v2123
        %v2129 = vmul.f32 1.0, %v2128
        %v2130 = vrcp.pop %v1652
        %v2131 = vmul.f32 %v1652, %v2130
        %v2132 = vsub.f32 1.0, %v2131
        %v2133 = vmul.f32 %v2130, %v2132
        %v2134 = vadd.f32 %v2130, %v2133
        %vm2135 = vweird.f32 %v1652
        %vm2136 = vweird.f32 %v2130
        %vm2137 = vmor %vm2135, %vm2136
        %v2138 = vsel %vm2137, %v2130, %v2134
        %v2139 = vand.u32 2147483647, %v1652
        %vm2140 = vcmp.eq.f32.partialorder %v2139, 8.507059e+37
        %v2141 = vand.u32 %v1652, 2147483648
        %v2142 = vor.u32 1.1754944e-38, %v2141
        %v2143 = vsel %vm2140, %v2142, %v2138
        %v2144 = vmul.f32 1.0, %v2143
        %v2145 = vrcp.pop %v1653
        %v2146 = vmul.f32 %v1653, %v2145
        %v2147 = vsub.f32 1.0, %v2146
        %v2148 = vmul.f32 %v2145, %v2147
        %v2149 = vadd.f32 %v2145, %v2148
        %vm2150 = vweird.f32 %v1653
        %vm2151 = vweird.f32 %v2145
        %vm2152 = vmor %vm2150, %vm2151
        %v2153 = vsel %vm2152, %v2145, %v2149
        %v2154 = vand.u32 2147483647, %v1653
        %vm2155 = vcmp.eq.f32.partialorder %v2154, 8.507059e+37
        %v2156 = vand.u32 %v1653, 2147483648
        %v2157 = vor.u32 1.1754944e-38, %v2156
        %v2158 = vsel %vm2155, %v2157, %v2153
        %v2159 = vmul.f32 1.0, %v2158
        %v2160 = vrcp.pop %v1654
        %v2161 = vmul.f32 %v1654, %v2160
        %v2162 = vsub.f32 1.0, %v2161
        %v2163 = vmul.f32 %v2160, %v2162
        %v2164 = vadd.f32 %v2160, %v2163
        %vm2165 = vweird.f32 %v1654
        %vm2166 = vweird.f32 %v2160
        %vm2167 = vmor %vm2165, %vm2166
        %v2168 = vsel %vm2167, %v2160, %v2164
        %v2169 = vand.u32 2147483647, %v1654
        %vm2170 = vcmp.eq.f32.partialorder %v2169, 8.507059e+37
        %v2171 = vand.u32 %v1654, 2147483648
        %v2172 = vor.u32 1.1754944e-38, %v2171
        %v2173 = vsel %vm2170, %v2172, %v2168
        %v2174 = vmul.f32 1.0, %v2173
        %v2175 = vrcp.pop %v1655
        %v2176 = vmul.f32 %v1655, %v2175
        %v2177 = vsub.f32 1.0, %v2176
        %v2178 = vmul.f32 %v2175, %v2177
        %v2179 = vadd.f32 %v2175, %v2178
        %vm2180 = vweird.f32 %v1655
        %vm2181 = vweird.f32 %v2175
        %vm2182 = vmor %vm2180, %vm2181
        %v2183 = vsel %vm2182, %v2175, %v2179
        %v2184 = vand.u32 2147483647, %v1655
        %vm2185 = vcmp.eq.f32.partialorder %v2184, 8.507059e+37
        %v2186 = vand.u32 %v1655, 2147483648
        %v2187 = vor.u32 1.1754944e-38, %v2186
        %v2188 = vsel %vm2185, %v2187, %v2183
        %v2189 = vmul.f32 1.0, %v2188
        %v2190 = vrcp.pop %v1656
        %v2191 = vmul.f32 %v1656, %v2190
        %v2192 = vsub.f32 1.0, %v2191
        %v2193 = vmul.f32 %v2190, %v2192
        %v2194 = vadd.f32 %v2190, %v2193
        %vm2195 = vweird.f32 %v1656
        %vm2196 = vweird.f32 %v2190
        %vm2197 = vmor %vm2195, %vm2196
        %v2198 = vsel %vm2197, %v2190, %v2194
        %v2199 = vand.u32 2147483647, %v1656
        %vm2200 = vcmp.eq.f32.partialorder %v2199, 8.507059e+37
        %v2201 = vand.u32 %v1656, 2147483648
        %v2202 = vor.u32 1.1754944e-38, %v2201
        %v2203 = vsel %vm2200, %v2202, %v2198
        %v2204 = vmul.f32 1.0, %v2203
        %v2205 = vrcp.pop %v1657
        %v2206 = vmul.f32 %v1657, %v2205
        %v2207 = vsub.f32 1.0, %v2206
        %v2208 = vmul.f32 %v2205, %v2207
        %v2209 = vadd.f32 %v2205, %v2208
        %vm2210 = vweird.f32 %v1657
        %vm2211 = vweird.f32 %v2205
        %vm2212 = vmor %vm2210, %vm2211
        %v2213 = vsel %vm2212, %v2205, %v2209
        %v2214 = vand.u32 2147483647, %v1657
        %vm2215 = vcmp.eq.f32.partialorder %v2214, 8.507059e+37
        %v2216 = vand.u32 %v1657, 2147483648
        %v2217 = vor.u32 1.1754944e-38, %v2216
        %v2218 = vsel %vm2215, %v2217, %v2213
        %v2219 = vmul.f32 1.0, %v2218
        %v2220 = vrcp.pop %v1658
        %v2221 = vmul.f32 %v1658, %v2220
        %v2222 = vsub.f32 1.0, %v2221
        %v2223 = vmul.f32 %v2220, %v2222
        %v2224 = vadd.f32 %v2220, %v2223
        %vm2225 = vweird.f32 %v1658
        %vm2226 = vweird.f32 %v2220
        %vm2227 = vmor %vm2225, %vm2226
        %v2228 = vsel %vm2227, %v2220, %v2224
        %v2229 = vand.u32 2147483647, %v1658
        %vm2230 = vcmp.eq.f32.partialorder %v2229, 8.507059e+37
        %v2231 = vand.u32 %v1658, 2147483648
        %v2232 = vor.u32 1.1754944e-38, %v2231
        %v2233 = vsel %vm2230, %v2232, %v2228
        %v2234 = vmul.f32 1.0, %v2233
        %v2235 = vrcp.pop %v1659
        %v2236 = vmul.f32 %v1659, %v2235
        %v2237 = vsub.f32 1.0, %v2236
        %v2238 = vmul.f32 %v2235, %v2237
        %v2239 = vadd.f32 %v2235, %v2238
        %vm2240 = vweird.f32 %v1659
        %vm2241 = vweird.f32 %v2235
        %vm2242 = vmor %vm2240, %vm2241
        %v2243 = vsel %vm2242, %v2235, %v2239
        %v2244 = vand.u32 2147483647, %v1659
        %vm2245 = vcmp.eq.f32.partialorder %v2244, 8.507059e+37
        %v2246 = vand.u32 %v1659, 2147483648
        %v2247 = vor.u32 1.1754944e-38, %v2246
        %v2248 = vsel %vm2245, %v2247, %v2243
        %v2249 = vmul.f32 1.0, %v2248
        %v2250 = vrcp.pop %v1660
        %v2251 = vmul.f32 %v1660, %v2250
        %v2252 = vsub.f32 1.0, %v2251
        %v2253 = vmul.f32 %v2250, %v2252
        %v2254 = vadd.f32 %v2250, %v2253
        %vm2255 = vweird.f32 %v1660
        %vm2256 = vweird.f32 %v2250
        %vm2257 = vmor %vm2255, %vm2256
        %v2258 = vsel %vm2257, %v2250, %v2254
        %v2259 = vand.u32 2147483647, %v1660
        %vm2260 = vcmp.eq.f32.partialorder %v2259, 8.507059e+37
        %v2261 = vand.u32 %v1660, 2147483648
        %v2262 = vor.u32 1.1754944e-38, %v2261
        %v2263 = vsel %vm2260, %v2262, %v2258
        %v2264 = vmul.f32 1.0, %v2263
        %v2265 = vrcp.pop %v1661
        %v2266 = vmul.f32 %v1661, %v2265
        %v2267 = vsub.f32 1.0, %v2266
        %v2268 = vmul.f32 %v2265, %v2267
        %v2269 = vadd.f32 %v2265, %v2268
        %vm2270 = vweird.f32 %v1661
        %vm2271 = vweird.f32 %v2265
        %vm2272 = vmor %vm2270, %vm2271
        %v2273 = vsel %vm2272, %v2265, %v2269
        %v2274 = vand.u32 2147483647, %v1661
        %vm2275 = vcmp.eq.f32.partialorder %v2274, 8.507059e+37
        %v2276 = vand.u32 %v1661, 2147483648
        %v2277 = vor.u32 1.1754944e-38, %v2276
        %v2278 = vsel %vm2275, %v2277, %v2273
        %v2279 = vmul.f32 1.0, %v2278
        %v2280 = vrcp.pop %v1662
        %v2281 = vmul.f32 %v1662, %v2280
        %v2282 = vsub.f32 1.0, %v2281
        %v2283 = vmul.f32 %v2280, %v2282
        %v2284 = vadd.f32 %v2280, %v2283
        %vm2285 = vweird.f32 %v1662
        %vm2286 = vweird.f32 %v2280
        %vm2287 = vmor %vm2285, %vm2286
        %v2288 = vsel %vm2287, %v2280, %v2284
        %v2289 = vand.u32 2147483647, %v1662
        %vm2290 = vcmp.eq.f32.partialorder %v2289, 8.507059e+37
        %v2291 = vand.u32 %v1662, 2147483648
        %v2292 = vor.u32 1.1754944e-38, %v2291
        %v2293 = vsel %vm2290, %v2292, %v2288
        %v2294 = vmul.f32 1.0, %v2293
        %v2295 = vrcp.pop %v1663
        %v2296 = vmul.f32 %v1663, %v2295
        %v2297 = vsub.f32 1.0, %v2296
        %v2298 = vmul.f32 %v2295, %v2297
        %v2299 = vadd.f32 %v2295, %v2298
        %vm2300 = vweird.f32 %v1663
        %vm2301 = vweird.f32 %v2295
        %vm2302 = vmor %vm2300, %vm2301
        %v2303 = vsel %vm2302, %v2295, %v2299
        %v2304 = vand.u32 2147483647, %v1663
        %vm2305 = vcmp.eq.f32.partialorder %v2304, 8.507059e+37
        %v2306 = vand.u32 %v1663, 2147483648
        %v2307 = vor.u32 1.1754944e-38, %v2306
        %v2308 = vsel %vm2305, %v2307, %v2303
        %v2309 = vmul.f32 1.0, %v2308
        %v2310 = vrcp.pop %v1664
        %v2311 = vmul.f32 %v1664, %v2310
        %v2312 = vsub.f32 1.0, %v2311
        %v2313 = vmul.f32 %v2310, %v2312
        %v2314 = vadd.f32 %v2310, %v2313
        %vm2315 = vweird.f32 %v1664
        %vm2316 = vweird.f32 %v2310
        %vm2317 = vmor %vm2315, %vm2316
        %v2318 = vsel %vm2317, %v2310, %v2314
        %v2319 = vand.u32 2147483647, %v1664
        %vm2320 = vcmp.eq.f32.partialorder %v2319, 8.507059e+37
        %v2321 = vand.u32 %v1664, 2147483648
        %v2322 = vor.u32 1.1754944e-38, %v2321
        %v2323 = vsel %vm2320, %v2322, %v2318
        %v2324 = vmul.f32 1.0, %v2323
        %v2325 = vrcp.pop %v1665
        %v2326 = vmul.f32 %v1665, %v2325
        %v2327 = vsub.f32 1.0, %v2326
        %v2328 = vmul.f32 %v2325, %v2327
        %v2329 = vadd.f32 %v2325, %v2328
        %vm2330 = vweird.f32 %v1665
        %vm2331 = vweird.f32 %v2325
        %vm2332 = vmor %vm2330, %vm2331
        %v2333 = vsel %vm2332, %v2325, %v2329
        %v2334 = vand.u32 2147483647, %v1665
        %vm2335 = vcmp.eq.f32.partialorder %v2334, 8.507059e+37
        %v2336 = vand.u32 %v1665, 2147483648
        %v2337 = vor.u32 1.1754944e-38, %v2336
        %v2338 = vsel %vm2335, %v2337, %v2333
        %v2339 = vmul.f32 1.0, %v2338
        %v2340 = vrcp.pop %v1666
        %v2341 = vmul.f32 %v1666, %v2340
        %v2342 = vsub.f32 1.0, %v2341
        %v2343 = vmul.f32 %v2340, %v2342
        %v2344 = vadd.f32 %v2340, %v2343
        %vm2345 = vweird.f32 %v1666
        %vm2346 = vweird.f32 %v2340
        %vm2347 = vmor %vm2345, %vm2346
        %v2348 = vsel %vm2347, %v2340, %v2344
        %v2349 = vand.u32 2147483647, %v1666
        %vm2350 = vcmp.eq.f32.partialorder %v2349, 8.507059e+37
        %v2351 = vand.u32 %v1666, 2147483648
        %v2352 = vor.u32 1.1754944e-38, %v2351
        %v2353 = vsel %vm2350, %v2352, %v2348
        %v2354 = vmul.f32 1.0, %v2353
        %v2355 = vrcp.pop %v1667
        %v2356 = vmul.f32 %v1667, %v2355
        %v2357 = vsub.f32 1.0, %v2356
        %v2358 = vmul.f32 %v2355, %v2357
        %v2359 = vadd.f32 %v2355, %v2358
        %vm2360 = vweird.f32 %v1667
        %vm2361 = vweird.f32 %v2355
        %vm2362 = vmor %vm2360, %vm2361
        %v2363 = vsel %vm2362, %v2355, %v2359
        %v2364 = vand.u32 2147483647, %v1667
        %vm2365 = vcmp.eq.f32.partialorder %v2364, 8.507059e+37
        %v2366 = vand.u32 %v1667, 2147483648
        %v2367 = vor.u32 1.1754944e-38, %v2366
        %v2368 = vsel %vm2365, %v2367, %v2363
        %v2369 = vmul.f32 1.0, %v2368
        %v2370 = vrcp.pop %v1668
        %v2371 = vmul.f32 %v1668, %v2370
        %v2372 = vsub.f32 1.0, %v2371
        %v2373 = vmul.f32 %v2370, %v2372
        %v2374 = vadd.f32 %v2370, %v2373
        %vm2375 = vweird.f32 %v1668
        %vm2376 = vweird.f32 %v2370
        %vm2377 = vmor %vm2375, %vm2376
        %v2378 = vsel %vm2377, %v2370, %v2374
        %v2379 = vand.u32 2147483647, %v1668
        %vm2380 = vcmp.eq.f32.partialorder %v2379, 8.507059e+37
        %v2381 = vand.u32 %v1668, 2147483648
        %v2382 = vor.u32 1.1754944e-38, %v2381
        %v2383 = vsel %vm2380, %v2382, %v2378
        %v2384 = vmul.f32 1.0, %v2383
        %v2385 = vrcp.pop %v1669
        %v2386 = vmul.f32 %v1669, %v2385
        %v2387 = vsub.f32 1.0, %v2386
        %v2388 = vmul.f32 %v2385, %v2387
        %v2389 = vadd.f32 %v2385, %v2388
        %vm2390 = vweird.f32 %v1669
        %vm2391 = vweird.f32 %v2385
        %vm2392 = vmor %vm2390, %vm2391
        %v2393 = vsel %vm2392, %v2385, %v2389
        %v2394 = vand.u32 2147483647, %v1669
        %vm2395 = vcmp.eq.f32.partialorder %v2394, 8.507059e+37
        %v2396 = vand.u32 %v1669, 2147483648
        %v2397 = vor.u32 1.1754944e-38, %v2396
        %v2398 = vsel %vm2395, %v2397, %v2393
        %v2399 = vmul.f32 1.0, %v2398
        %v2400 = vrcp.pop %v1670
        %v2401 = vmul.f32 %v1670, %v2400
        %v2402 = vsub.f32 1.0, %v2401
        %v2403 = vmul.f32 %v2400, %v2402
        %v2404 = vadd.f32 %v2400, %v2403
        %vm2405 = vweird.f32 %v1670
        %vm2406 = vweird.f32 %v2400
        %vm2407 = vmor %vm2405, %vm2406
        %v2408 = vsel %vm2407, %v2400, %v2404
        %v2409 = vand.u32 2147483647, %v1670
        %vm2410 = vcmp.eq.f32.partialorder %v2409, 8.507059e+37
        %v2411 = vand.u32 %v1670, 2147483648
        %v2412 = vor.u32 1.1754944e-38, %v2411
        %v2413 = vsel %vm2410, %v2412, %v2408
        %v2414 = vmul.f32 1.0, %v2413
        %v2415 = vrcp.pop %v1671
        %v2416 = vmul.f32 %v1671, %v2415
        %v2417 = vsub.f32 1.0, %v2416
        %v2418 = vmul.f32 %v2415, %v2417
        %v2419 = vadd.f32 %v2415, %v2418
        %vm2420 = vweird.f32 %v1671
        %vm2421 = vweird.f32 %v2415
        %vm2422 = vmor %vm2420, %vm2421
        %v2423 = vsel %vm2422, %v2415, %v2419
        %v2424 = vand.u32 2147483647, %v1671
        %vm2425 = vcmp.eq.f32.partialorder %v2424, 8.507059e+37
        %v2426 = vand.u32 %v1671, 2147483648
        %v2427 = vor.u32 1.1754944e-38, %v2426
        %v2428 = vsel %vm2425, %v2427, %v2423
        %v2429 = vmul.f32 1.0, %v2428
        %v2430 = vrcp.pop %v1672
        %v2431 = vmul.f32 %v1672, %v2430
        %v2432 = vsub.f32 1.0, %v2431
        %v2433 = vmul.f32 %v2430, %v2432
        %v2434 = vadd.f32 %v2430, %v2433
        %vm2435 = vweird.f32 %v1672
        %vm2436 = vweird.f32 %v2430
        %vm2437 = vmor %vm2435, %vm2436
        %v2438 = vsel %vm2437, %v2430, %v2434
        %v2439 = vand.u32 2147483647, %v1672
        %vm2440 = vcmp.eq.f32.partialorder %v2439, 8.507059e+37
        %v2441 = vand.u32 %v1672, 2147483648
        %v2442 = vor.u32 1.1754944e-38, %v2441
        %v2443 = vsel %vm2440, %v2442, %v2438
        %v2444 = vmul.f32 1.0, %v2443
        %v2445 = vrcp.pop %v1673
        %v2446 = vmul.f32 %v1673, %v2445
        %v2447 = vsub.f32 1.0, %v2446
        %v2448 = vmul.f32 %v2445, %v2447
        %v2449 = vadd.f32 %v2445, %v2448
        %vm2450 = vweird.f32 %v1673
        %vm2451 = vweird.f32 %v2445
        %vm2452 = vmor %vm2450, %vm2451
        %v2453 = vsel %vm2452, %v2445, %v2449
        %v2454 = vand.u32 2147483647, %v1673
        %vm2455 = vcmp.eq.f32.partialorder %v2454, 8.507059e+37
        %v2456 = vand.u32 %v1673, 2147483648
        %v2457 = vor.u32 1.1754944e-38, %v2456
        %v2458 = vsel %vm2455, %v2457, %v2453
        %v2459 = vmul.f32 1.0, %v2458
        %v2460 = vrcp.pop %v1674
        %v2461 = vmul.f32 %v1674, %v2460
        %v2462 = vsub.f32 1.0, %v2461
        %v2463 = vmul.f32 %v2460, %v2462
        %v2464 = vadd.f32 %v2460, %v2463
        %vm2465 = vweird.f32 %v1674
        %vm2466 = vweird.f32 %v2460
        %vm2467 = vmor %vm2465, %vm2466
        %v2468 = vsel %vm2467, %v2460, %v2464
        %v2469 = vand.u32 2147483647, %v1674
        %vm2470 = vcmp.eq.f32.partialorder %v2469, 8.507059e+37
        %v2471 = vand.u32 %v1674, 2147483648
        %v2472 = vor.u32 1.1754944e-38, %v2471
        %v2473 = vsel %vm2470, %v2472, %v2468
        %v2474 = vmul.f32 1.0, %v2473
        %v2475 = vrcp.pop %v1675
        %v2476 = vmul.f32 %v1675, %v2475
        %v2477 = vsub.f32 1.0, %v2476
        %v2478 = vmul.f32 %v2475, %v2477
        %v2479 = vadd.f32 %v2475, %v2478
        %vm2480 = vweird.f32 %v1675
        %vm2481 = vweird.f32 %v2475
        %vm2482 = vmor %vm2480, %vm2481
        %v2483 = vsel %vm2482, %v2475, %v2479
        %v2484 = vand.u32 2147483647, %v1675
        %vm2485 = vcmp.eq.f32.partialorder %v2484, 8.507059e+37
        %v2486 = vand.u32 %v1675, 2147483648
        %v2487 = vor.u32 1.1754944e-38, %v2486
        %v2488 = vsel %vm2485, %v2487, %v2483
        %v2489 = vmul.f32 1.0, %v2488
        %v2490 = vrcp.pop %v1676
        %v2491 = vmul.f32 %v1676, %v2490
        %v2492 = vsub.f32 1.0, %v2491
        %v2493 = vmul.f32 %v2490, %v2492
        %v2494 = vadd.f32 %v2490, %v2493
        %vm2495 = vweird.f32 %v1676
        %vm2496 = vweird.f32 %v2490
        %vm2497 = vmor %vm2495, %vm2496
        %v2498 = vsel %vm2497, %v2490, %v2494
        %v2499 = vand.u32 2147483647, %v1676
        %vm2500 = vcmp.eq.f32.partialorder %v2499, 8.507059e+37
        %v2501 = vand.u32 %v1676, 2147483648
        %v2502 = vor.u32 1.1754944e-38, %v2501
        %v2503 = vsel %vm2500, %v2502, %v2498
        %v2504 = vmul.f32 1.0, %v2503
        %v2505 = vrcp.pop %v1677
        %v2506 = vmul.f32 %v1677, %v2505
        %v2507 = vsub.f32 1.0, %v2506
        %v2508 = vmul.f32 %v2505, %v2507
        %v2509 = vadd.f32 %v2505, %v2508
        %vm2510 = vweird.f32 %v1677
        %vm2511 = vweird.f32 %v2505
        %vm2512 = vmor %vm2510, %vm2511
        %v2513 = vsel %vm2512, %v2505, %v2509
        %v2514 = vand.u32 2147483647, %v1677
        %vm2515 = vcmp.eq.f32.partialorder %v2514, 8.507059e+37
        %v2516 = vand.u32 %v1677, 2147483648
        %v2517 = vor.u32 1.1754944e-38, %v2516
        %v2518 = vsel %vm2515, %v2517, %v2513
        %v2519 = vmul.f32 1.0, %v2518
        %v2520 = vrcp.pop %v1678
        %v2521 = vmul.f32 %v1678, %v2520
        %v2522 = vsub.f32 1.0, %v2521
        %v2523 = vmul.f32 %v2520, %v2522
        %v2524 = vadd.f32 %v2520, %v2523
        %vm2525 = vweird.f32 %v1678
        %vm2526 = vweird.f32 %v2520
        %vm2527 = vmor %vm2525, %vm2526
        %v2528 = vsel %vm2527, %v2520, %v2524
        %v2529 = vand.u32 2147483647, %v1678
        %vm2530 = vcmp.eq.f32.partialorder %v2529, 8.507059e+37
        %v2531 = vand.u32 %v1678, 2147483648
        %v2532 = vor.u32 1.1754944e-38, %v2531
        %v2533 = vsel %vm2530, %v2532, %v2528
        %v2534 = vmul.f32 1.0, %v2533
        %v2535 = vrcp.pop %v1679
        %v2536 = vmul.f32 %v1679, %v2535
        %v2537 = vsub.f32 1.0, %v2536
        %v2538 = vmul.f32 %v2535, %v2537
        %v2539 = vadd.f32 %v2535, %v2538
        %vm2540 = vweird.f32 %v1679
        %vm2541 = vweird.f32 %v2535
        %vm2542 = vmor %vm2540, %vm2541
        %v2543 = vsel %vm2542, %v2535, %v2539
        %v2544 = vand.u32 2147483647, %v1679
        %vm2545 = vcmp.eq.f32.partialorder %v2544, 8.507059e+37
        %v2546 = vand.u32 %v1679, 2147483648
        %v2547 = vor.u32 1.1754944e-38, %v2546
        %v2548 = vsel %vm2545, %v2547, %v2543
        %v2549 = vmul.f32 1.0, %v2548
        %v2550 = vrcp.pop %v1680
        %v2551 = vmul.f32 %v1680, %v2550
        %v2552 = vsub.f32 1.0, %v2551
        %v2553 = vmul.f32 %v2550, %v2552
        %v2554 = vadd.f32 %v2550, %v2553
        %vm2555 = vweird.f32 %v1680
        %vm2556 = vweird.f32 %v2550
        %vm2557 = vmor %vm2555, %vm2556
        %v2558 = vsel %vm2557, %v2550, %v2554
        %v2559 = vand.u32 2147483647, %v1680
        %vm2560 = vcmp.eq.f32.partialorder %v2559, 8.507059e+37
        %v2561 = vand.u32 %v1680, 2147483648
        %v2562 = vor.u32 1.1754944e-38, %v2561
        %v2563 = vsel %vm2560, %v2562, %v2558
        %v2564 = vmul.f32 1.0, %v2563
        %v2565 = vrcp.pop %v1681
        %v2566 = vmul.f32 %v1681, %v2565
        %v2567 = vsub.f32 1.0, %v2566
        %v2568 = vmul.f32 %v2565, %v2567
        %v2569 = vadd.f32 %v2565, %v2568
        %vm2570 = vweird.f32 %v1681
        %vm2571 = vweird.f32 %v2565
        %vm2572 = vmor %vm2570, %vm2571
        %v2573 = vsel %vm2572, %v2565, %v2569
        %v2574 = vand.u32 2147483647, %v1681
        %vm2575 = vcmp.eq.f32.partialorder %v2574, 8.507059e+37
        %v2576 = vand.u32 %v1681, 2147483648
        %v2577 = vor.u32 1.1754944e-38, %v2576
        %v2578 = vsel %vm2575, %v2577, %v2573
        %v2579 = vmul.f32 1.0, %v2578
        %v2580 = vrcp.pop %v1682
        %v2581 = vmul.f32 %v1682, %v2580
        %v2582 = vsub.f32 1.0, %v2581
        %v2583 = vmul.f32 %v2580, %v2582
        %v2584 = vadd.f32 %v2580, %v2583
        %vm2585 = vweird.f32 %v1682
        %vm2586 = vweird.f32 %v2580
        %vm2587 = vmor %vm2585, %vm2586
        %v2588 = vsel %vm2587, %v2580, %v2584
        %v2589 = vand.u32 2147483647, %v1682
        %vm2590 = vcmp.eq.f32.partialorder %v2589, 8.507059e+37
        %v2591 = vand.u32 %v1682, 2147483648
        %v2592 = vor.u32 1.1754944e-38, %v2591
        %v2593 = vsel %vm2590, %v2592, %v2588
        %v2594 = vmul.f32 1.0, %v2593
        %v2595 = vrcp.pop %v1683
        %v2596 = vmul.f32 %v1683, %v2595
        %v2597 = vsub.f32 1.0, %v2596
        %v2598 = vmul.f32 %v2595, %v2597
        %v2599 = vadd.f32 %v2595, %v2598
        %vm2600 = vweird.f32 %v1683
        %vm2601 = vweird.f32 %v2595
        %vm2602 = vmor %vm2600, %vm2601
        %v2603 = vsel %vm2602, %v2595, %v2599
        %v2604 = vand.u32 2147483647, %v1683
        %vm2605 = vcmp.eq.f32.partialorder %v2604, 8.507059e+37
        %v2606 = vand.u32 %v1683, 2147483648
        %v2607 = vor.u32 1.1754944e-38, %v2606
        %v2608 = vsel %vm2605, %v2607, %v2603
        %v2609 = vmul.f32 1.0, %v2608
        %v2610 = vrcp.pop %v1684
        %v2611 = vmul.f32 %v1684, %v2610
        %v2612 = vsub.f32 1.0, %v2611
        %v2613 = vmul.f32 %v2610, %v2612
        %v2614 = vadd.f32 %v2610, %v2613
        %vm2615 = vweird.f32 %v1684
        %vm2616 = vweird.f32 %v2610
        %vm2617 = vmor %vm2615, %vm2616
        %v2618 = vsel %vm2617, %v2610, %v2614
        %v2619 = vand.u32 2147483647, %v1684
        %vm2620 = vcmp.eq.f32.partialorder %v2619, 8.507059e+37
        %v2621 = vand.u32 %v1684, 2147483648
        %v2622 = vor.u32 1.1754944e-38, %v2621
        %v2623 = vsel %vm2620, %v2622, %v2618
        %v2624 = vmul.f32 1.0, %v2623
        %v2625 = vrcp.pop %v1685
        %v2626 = vmul.f32 %v1685, %v2625
        %v2627 = vsub.f32 1.0, %v2626
        %v2628 = vmul.f32 %v2625, %v2627
        %v2629 = vadd.f32 %v2625, %v2628
        %vm2630 = vweird.f32 %v1685
        %vm2631 = vweird.f32 %v2625
        %vm2632 = vmor %vm2630, %vm2631
        %v2633 = vsel %vm2632, %v2625, %v2629
        %v2634 = vand.u32 2147483647, %v1685
        %vm2635 = vcmp.eq.f32.partialorder %v2634, 8.507059e+37
        %v2636 = vand.u32 %v1685, 2147483648
        %v2637 = vor.u32 1.1754944e-38, %v2636
        %v2638 = vsel %vm2635, %v2637, %v2633
        %v2639 = vmul.f32 1.0, %v2638
        %v2640 = vrcp.pop %v1686
        %v2641 = vmul.f32 %v1686, %v2640
        %v2642 = vsub.f32 1.0, %v2641
        %v2643 = vmul.f32 %v2640, %v2642
        %v2644 = vadd.f32 %v2640, %v2643
        %vm2645 = vweird.f32 %v1686
        %vm2646 = vweird.f32 %v2640
        %vm2647 = vmor %vm2645, %vm2646
        %v2648 = vsel %vm2647, %v2640, %v2644
        %v2649 = vand.u32 2147483647, %v1686
        %vm2650 = vcmp.eq.f32.partialorder %v2649, 8.507059e+37
        %v2651 = vand.u32 %v1686, 2147483648
        %v2652 = vor.u32 1.1754944e-38, %v2651
        %v2653 = vsel %vm2650, %v2652, %v2648
        %v2654 = vmul.f32 1.0, %v2653
        %v2655 = vrcp.pop %v1687
        %v2656 = vmul.f32 %v1687, %v2655
        %v2657 = vsub.f32 1.0, %v2656
        %v2658 = vmul.f32 %v2655, %v2657
        %v2659 = vadd.f32 %v2655, %v2658
        %vm2660 = vweird.f32 %v1687
        %vm2661 = vweird.f32 %v2655
        %vm2662 = vmor %vm2660, %vm2661
        %v2663 = vsel %vm2662, %v2655, %v2659
        %v2664 = vand.u32 2147483647, %v1687
        %vm2665 = vcmp.eq.f32.partialorder %v2664, 8.507059e+37
        %v2666 = vand.u32 %v1687, 2147483648
        %v2667 = vor.u32 1.1754944e-38, %v2666
        %v2668 = vsel %vm2665, %v2667, %v2663
        %v2669 = vmul.f32 1.0, %v2668
        %v2670 = vrcp.pop %v1688
        %v2671 = vmul.f32 %v1688, %v2670
        %v2672 = vsub.f32 1.0, %v2671
        %v2673 = vmul.f32 %v2670, %v2672
        %v2674 = vadd.f32 %v2670, %v2673
        %vm2675 = vweird.f32 %v1688
        %vm2676 = vweird.f32 %v2670
        %vm2677 = vmor %vm2675, %vm2676
        %v2678 = vsel %vm2677, %v2670, %v2674
        %v2679 = vand.u32 2147483647, %v1688
        %vm2680 = vcmp.eq.f32.partialorder %v2679, 8.507059e+37
        %v2681 = vand.u32 %v1688, 2147483648
        %v2682 = vor.u32 1.1754944e-38, %v2681
        %v2683 = vsel %vm2680, %v2682, %v2678
        %v2684 = vmul.f32 1.0, %v2683
        %v2685 = vrcp.pop %v1689
        %v2686 = vmul.f32 %v1689, %v2685
        %v2687 = vsub.f32 1.0, %v2686
        %v2688 = vmul.f32 %v2685, %v2687
        %v2689 = vadd.f32 %v2685, %v2688
        %vm2690 = vweird.f32 %v1689
        %vm2691 = vweird.f32 %v2685
        %vm2692 = vmor %vm2690, %vm2691
        %v2693 = vsel %vm2692, %v2685, %v2689
        %v2694 = vand.u32 2147483647, %v1689
        %vm2695 = vcmp.eq.f32.partialorder %v2694, 8.507059e+37
        %v2696 = vand.u32 %v1689, 2147483648
        %v2697 = vor.u32 1.1754944e-38, %v2696
        %v2698 = vsel %vm2695, %v2697, %v2693
        %v2699 = vmul.f32 1.0, %v2698
        %v2700 = vrcp.pop %v1690
        %v2701 = vmul.f32 %v1690, %v2700
        %v2702 = vsub.f32 1.0, %v2701
        %v2703 = vmul.f32 %v2700, %v2702
        %v2704 = vadd.f32 %v2700, %v2703
        %vm2705 = vweird.f32 %v1690
        %vm2706 = vweird.f32 %v2700
        %vm2707 = vmor %vm2705, %vm2706
        %v2708 = vsel %vm2707, %v2700, %v2704
        %v2709 = vand.u32 2147483647, %v1690
        %vm2710 = vcmp.eq.f32.partialorder %v2709, 8.507059e+37
        %v2711 = vand.u32 %v1690, 2147483648
        %v2712 = vor.u32 1.1754944e-38, %v2711
        %v2713 = vsel %vm2710, %v2712, %v2708
        %v2714 = vmul.f32 1.0, %v2713
        %v2715 = vrcp.pop %v1691
        %v2716 = vmul.f32 %v1691, %v2715
        %v2717 = vsub.f32 1.0, %v2716
        %v2718 = vmul.f32 %v2715, %v2717
        %v2719 = vadd.f32 %v2715, %v2718
        %vm2720 = vweird.f32 %v1691
        %vm2721 = vweird.f32 %v2715
        %vm2722 = vmor %vm2720, %vm2721
        %v2723 = vsel %vm2722, %v2715, %v2719
        %v2724 = vand.u32 2147483647, %v1691
        %vm2725 = vcmp.eq.f32.partialorder %v2724, 8.507059e+37
        %v2726 = vand.u32 %v1691, 2147483648
        %v2727 = vor.u32 1.1754944e-38, %v2726
        %v2728 = vsel %vm2725, %v2727, %v2723
        %v2729 = vmul.f32 1.0, %v2728
        %v2730 = vrcp.pop %v1692
        %v2731 = vmul.f32 %v1692, %v2730
        %v2732 = vsub.f32 1.0, %v2731
        %v2733 = vmul.f32 %v2730, %v2732
        %v2734 = vadd.f32 %v2730, %v2733
        %vm2735 = vweird.f32 %v1692
        %vm2736 = vweird.f32 %v2730
        %vm2737 = vmor %vm2735, %vm2736
        %v2738 = vsel %vm2737, %v2730, %v2734
        %v2739 = vand.u32 2147483647, %v1692
        %vm2740 = vcmp.eq.f32.partialorder %v2739, 8.507059e+37
        %v2741 = vand.u32 %v1692, 2147483648
        %v2742 = vor.u32 1.1754944e-38, %v2741
        %v2743 = vsel %vm2740, %v2742, %v2738
        %v2744 = vmul.f32 1.0, %v2743
        %v2745 = vrcp.pop %v1693
        %v2746 = vmul.f32 %v1693, %v2745
        %v2747 = vsub.f32 1.0, %v2746
        %v2748 = vmul.f32 %v2745, %v2747
        %v2749 = vadd.f32 %v2745, %v2748
        %vm2750 = vweird.f32 %v1693
        %vm2751 = vweird.f32 %v2745
        %vm2752 = vmor %vm2750, %vm2751
        %v2753 = vsel %vm2752, %v2745, %v2749
        %v2754 = vand.u32 2147483647, %v1693
        %vm2755 = vcmp.eq.f32.partialorder %v2754, 8.507059e+37
        %v2756 = vand.u32 %v1693, 2147483648
        %v2757 = vor.u32 1.1754944e-38, %v2756
        %v2758 = vsel %vm2755, %v2757, %v2753
        %v2759 = vmul.f32 1.0, %v2758
        %v2760 = vrcp.pop %v1694
        %v2761 = vmul.f32 %v1694, %v2760
        %v2762 = vsub.f32 1.0, %v2761
        %v2763 = vmul.f32 %v2760, %v2762
        %v2764 = vadd.f32 %v2760, %v2763
        %vm2765 = vweird.f32 %v1694
        %vm2766 = vweird.f32 %v2760
        %vm2767 = vmor %vm2765, %vm2766
        %v2768 = vsel %vm2767, %v2760, %v2764
        %v2769 = vand.u32 2147483647, %v1694
        %vm2770 = vcmp.eq.f32.partialorder %v2769, 8.507059e+37
        %v2771 = vand.u32 %v1694, 2147483648
        %v2772 = vor.u32 1.1754944e-38, %v2771
        %v2773 = vsel %vm2770, %v2772, %v2768
        %v2774 = vmul.f32 1.0, %v2773
        %v2775 = vrcp.pop %v1695
        %v2776 = vmul.f32 %v1695, %v2775
        %v2777 = vsub.f32 1.0, %v2776
        %v2778 = vmul.f32 %v2775, %v2777
        %v2779 = vadd.f32 %v2775, %v2778
        %vm2780 = vweird.f32 %v1695
        %vm2781 = vweird.f32 %v2775
        %vm2782 = vmor %vm2780, %vm2781
        %v2783 = vsel %vm2782, %v2775, %v2779
        %v2784 = vand.u32 2147483647, %v1695
        %vm2785 = vcmp.eq.f32.partialorder %v2784, 8.507059e+37
        %v2786 = vand.u32 %v1695, 2147483648
        %v2787 = vor.u32 1.1754944e-38, %v2786
        %v2788 = vsel %vm2785, %v2787, %v2783
        %v2789 = vmul.f32 1.0, %v2788
        %v2790 = vrcp.pop %v1696
        %v2791 = vmul.f32 %v1696, %v2790
        %v2792 = vsub.f32 1.0, %v2791
        %v2793 = vmul.f32 %v2790, %v2792
        %v2794 = vadd.f32 %v2790, %v2793
        %vm2795 = vweird.f32 %v1696
        %vm2796 = vweird.f32 %v2790
        %vm2797 = vmor %vm2795, %vm2796
        %v2798 = vsel %vm2797, %v2790, %v2794
        %v2799 = vand.u32 2147483647, %v1696
        %vm2800 = vcmp.eq.f32.partialorder %v2799, 8.507059e+37
        %v2801 = vand.u32 %v1696, 2147483648
        %v2802 = vor.u32 1.1754944e-38, %v2801
        %v2803 = vsel %vm2800, %v2802, %v2798
        %v2804 = vmul.f32 1.0, %v2803
        %v2805 = vrcp.pop %v1697
        %v2806 = vmul.f32 %v1697, %v2805
        %v2807 = vsub.f32 1.0, %v2806
        %v2808 = vmul.f32 %v2805, %v2807
        %v2809 = vadd.f32 %v2805, %v2808
        %vm2810 = vweird.f32 %v1697
        %vm2811 = vweird.f32 %v2805
        %vm2812 = vmor %vm2810, %vm2811
        %v2813 = vsel %vm2812, %v2805, %v2809
        %v2814 = vand.u32 2147483647, %v1697
        %vm2815 = vcmp.eq.f32.partialorder %v2814, 8.507059e+37
        %v2816 = vand.u32 %v1697, 2147483648
        %v2817 = vor.u32 1.1754944e-38, %v2816
        %v2818 = vsel %vm2815, %v2817, %v2813
        %v2819 = vmul.f32 1.0, %v2818
        %v2820 = vrcp.pop %v1698
        %v2821 = vmul.f32 %v1698, %v2820
        %v2822 = vsub.f32 1.0, %v2821
        %v2823 = vmul.f32 %v2820, %v2822
        %v2824 = vadd.f32 %v2820, %v2823
        %vm2825 = vweird.f32 %v1698
        %vm2826 = vweird.f32 %v2820
        %vm2827 = vmor %vm2825, %vm2826
        %v2828 = vsel %vm2827, %v2820, %v2824
        %v2829 = vand.u32 2147483647, %v1698
        %vm2830 = vcmp.eq.f32.partialorder %v2829, 8.507059e+37
        %v2831 = vand.u32 %v1698, 2147483648
        %v2832 = vor.u32 1.1754944e-38, %v2831
        %v2833 = vsel %vm2830, %v2832, %v2828
        %v2834 = vmul.f32 1.0, %v2833
        %v2835 = vrcp.pop %v1699
        %v2836 = vmul.f32 %v1699, %v2835
        %v2837 = vsub.f32 1.0, %v2836
        %v2838 = vmul.f32 %v2835, %v2837
        %v2839 = vadd.f32 %v2835, %v2838
        %vm2840 = vweird.f32 %v1699
        %vm2841 = vweird.f32 %v2835
        %vm2842 = vmor %vm2840, %vm2841
        %v2843 = vsel %vm2842, %v2835, %v2839
        %v2844 = vand.u32 2147483647, %v1699
        %vm2845 = vcmp.eq.f32.partialorder %v2844, 8.507059e+37
        %v2846 = vand.u32 %v1699, 2147483648
        %v2847 = vor.u32 1.1754944e-38, %v2846
        %v2848 = vsel %vm2845, %v2847, %v2843
        %v2849 = vmul.f32 1.0, %v2848
        %v2850 = vrcp.pop %v1700
        %v2851 = vmul.f32 %v1700, %v2850
        %v2852 = vsub.f32 1.0, %v2851
        %v2853 = vmul.f32 %v2850, %v2852
        %v2854 = vadd.f32 %v2850, %v2853
        %vm2855 = vweird.f32 %v1700
        %vm2856 = vweird.f32 %v2850
        %vm2857 = vmor %vm2855, %vm2856
        %v2858 = vsel %vm2857, %v2850, %v2854
        %v2859 = vand.u32 2147483647, %v1700
        %vm2860 = vcmp.eq.f32.partialorder %v2859, 8.507059e+37
        %v2861 = vand.u32 %v1700, 2147483648
        %v2862 = vor.u32 1.1754944e-38, %v2861
        %v2863 = vsel %vm2860, %v2862, %v2858
        %v2864 = vmul.f32 1.0, %v2863
        %v2865 = vrcp.pop %v1701
        %v2866 = vmul.f32 %v1701, %v2865
        %v2867 = vsub.f32 1.0, %v2866
        %v2868 = vmul.f32 %v2865, %v2867
        %v2869 = vadd.f32 %v2865, %v2868
        %vm2870 = vweird.f32 %v1701
        %vm2871 = vweird.f32 %v2865
        %vm2872 = vmor %vm2870, %vm2871
        %v2873 = vsel %vm2872, %v2865, %v2869
        %v2874 = vand.u32 2147483647, %v1701
        %vm2875 = vcmp.eq.f32.partialorder %v2874, 8.507059e+37
        %v2876 = vand.u32 %v1701, 2147483648
        %v2877 = vor.u32 1.1754944e-38, %v2876
        %v2878 = vsel %vm2875, %v2877, %v2873
        %v2879 = vmul.f32 1.0, %v2878
        %v2880 = vrcp.pop %v1702
        %v2881 = vmul.f32 %v1702, %v2880
        %v2882 = vsub.f32 1.0, %v2881
        %v2883 = vmul.f32 %v2880, %v2882
        %v2884 = vadd.f32 %v2880, %v2883
        %vm2885 = vweird.f32 %v1702
        %vm2886 = vweird.f32 %v2880
        %vm2887 = vmor %vm2885, %vm2886
        %v2888 = vsel %vm2887, %v2880, %v2884
        %v2889 = vand.u32 2147483647, %v1702
        %vm2890 = vcmp.eq.f32.partialorder %v2889, 8.507059e+37
        %v2891 = vand.u32 %v1702, 2147483648
        %v2892 = vor.u32 1.1754944e-38, %v2891
        %v2893 = vsel %vm2890, %v2892, %v2888
        %v2894 = vmul.f32 1.0, %v2893
        %v2895 = vrcp.pop %v1703
        %v2896 = vmul.f32 %v1703, %v2895
        %v2897 = vsub.f32 1.0, %v2896
        %v2898 = vmul.f32 %v2895, %v2897
        %v2899 = vadd.f32 %v2895, %v2898
        %vm2900 = vweird.f32 %v1703
        %vm2901 = vweird.f32 %v2895
        %vm2902 = vmor %vm2900, %vm2901
        %v2903 = vsel %vm2902, %v2895, %v2899
        %v2904 = vand.u32 2147483647, %v1703
        %vm2905 = vcmp.eq.f32.partialorder %v2904, 8.507059e+37
        %v2906 = vand.u32 %v1703, 2147483648
        %v2907 = vor.u32 1.1754944e-38, %v2906
        %v2908 = vsel %vm2905, %v2907, %v2903
        %v2909 = vmul.f32 1.0, %v2908
        %v2910 = vrcp.pop %v1704
        %v2911 = vmul.f32 %v1704, %v2910
        %v2912 = vsub.f32 1.0, %v2911
        %v2913 = vmul.f32 %v2910, %v2912
        %v2914 = vadd.f32 %v2910, %v2913
        %vm2915 = vweird.f32 %v1704
        %vm2916 = vweird.f32 %v2910
        %vm2917 = vmor %vm2915, %vm2916
        %v2918 = vsel %vm2917, %v2910, %v2914
        %v2919 = vand.u32 2147483647, %v1704
        %vm2920 = vcmp.eq.f32.partialorder %v2919, 8.507059e+37
        %v2921 = vand.u32 %v1704, 2147483648
        %v2922 = vor.u32 1.1754944e-38, %v2921
        %v2923 = vsel %vm2920, %v2922, %v2918
        %v2924 = vmul.f32 1.0, %v2923
        %v2925 = vrcp.pop %v1705
        %v2926 = vmul.f32 %v1705, %v2925
        %v2927 = vsub.f32 1.0, %v2926
        %v2928 = vmul.f32 %v2925, %v2927
        %v2929 = vadd.f32 %v2925, %v2928
        %vm2930 = vweird.f32 %v1705
        %vm2931 = vweird.f32 %v2925
        %vm2932 = vmor %vm2930, %vm2931
        %v2933 = vsel %vm2932, %v2925, %v2929
        %v2934 = vand.u32 2147483647, %v1705
        %vm2935 = vcmp.eq.f32.partialorder %v2934, 8.507059e+37
        %v2936 = vand.u32 %v1705, 2147483648
        %v2937 = vor.u32 1.1754944e-38, %v2936
        %v2938 = vsel %vm2935, %v2937, %v2933
        %v2939 = vmul.f32 1.0, %v2938
        %v2940 = vrcp.pop %v1706
        %v2941 = vmul.f32 %v1706, %v2940
        %v2942 = vsub.f32 1.0, %v2941
        %v2943 = vmul.f32 %v2940, %v2942
        %v2944 = vadd.f32 %v2940, %v2943
        %vm2945 = vweird.f32 %v1706
        %vm2946 = vweird.f32 %v2940
        %vm2947 = vmor %vm2945, %vm2946
        %v2948 = vsel %vm2947, %v2940, %v2944
        %v2949 = vand.u32 2147483647, %v1706
        %vm2950 = vcmp.eq.f32.partialorder %v2949, 8.507059e+37
        %v2951 = vand.u32 %v1706, 2147483648
        %v2952 = vor.u32 1.1754944e-38, %v2951
        %v2953 = vsel %vm2950, %v2952, %v2948
        %v2954 = vmul.f32 1.0, %v2953
        %v2955 = vrcp.pop %v1707
        %v2956 = vmul.f32 %v1707, %v2955
        %v2957 = vsub.f32 1.0, %v2956
        %v2958 = vmul.f32 %v2955, %v2957
        %v2959 = vadd.f32 %v2955, %v2958
        %vm2960 = vweird.f32 %v1707
        %vm2961 = vweird.f32 %v2955
        %vm2962 = vmor %vm2960, %vm2961
        %v2963 = vsel %vm2962, %v2955, %v2959
        %v2964 = vand.u32 2147483647, %v1707
        %vm2965 = vcmp.eq.f32.partialorder %v2964, 8.507059e+37
        %v2966 = vand.u32 %v1707, 2147483648
        %v2967 = vor.u32 1.1754944e-38, %v2966
        %v2968 = vsel %vm2965, %v2967, %v2963
        %v2969 = vmul.f32 1.0, %v2968
        %v2970 = vrcp.pop %v1708
        %v2971 = vmul.f32 %v1708, %v2970
        %v2972 = vsub.f32 1.0, %v2971
        %v2973 = vmul.f32 %v2970, %v2972
        %v2974 = vadd.f32 %v2970, %v2973
        %vm2975 = vweird.f32 %v1708
        %vm2976 = vweird.f32 %v2970
        %vm2977 = vmor %vm2975, %vm2976
        %v2978 = vsel %vm2977, %v2970, %v2974
        %v2979 = vand.u32 2147483647, %v1708
        %vm2980 = vcmp.eq.f32.partialorder %v2979, 8.507059e+37
        %v2981 = vand.u32 %v1708, 2147483648
        %v2982 = vor.u32 1.1754944e-38, %v2981
        %v2983 = vsel %vm2980, %v2982, %v2978
        %v2984 = vmul.f32 1.0, %v2983
        %v2985 = vrcp.pop %v1709
        %v2986 = vmul.f32 %v1709, %v2985
        %v2987 = vsub.f32 1.0, %v2986
        %v2988 = vmul.f32 %v2985, %v2987
        %v2989 = vadd.f32 %v2985, %v2988
        %vm2990 = vweird.f32 %v1709
        %vm2991 = vweird.f32 %v2985
        %vm2992 = vmor %vm2990, %vm2991
        %v2993 = vsel %vm2992, %v2985, %v2989
        %v2994 = vand.u32 2147483647, %v1709
        %vm2995 = vcmp.eq.f32.partialorder %v2994, 8.507059e+37
        %v2996 = vand.u32 %v1709, 2147483648
        %v2997 = vor.u32 1.1754944e-38, %v2996
        %v2998 = vsel %vm2995, %v2997, %v2993
        %v2999 = vmul.f32 1.0, %v2998
        %v3000 = vrcp.pop %v1710
        %v3001 = vmul.f32 %v1710, %v3000
        %v3002 = vsub.f32 1.0, %v3001
        %v3003 = vmul.f32 %v3000, %v3002
        %v3004 = vadd.f32 %v3000, %v3003
        %vm3005 = vweird.f32 %v1710
        %vm3006 = vweird.f32 %v3000
        %vm3007 = vmor %vm3005, %vm3006
        %v3008 = vsel %vm3007, %v3000, %v3004
        %v3009 = vand.u32 2147483647, %v1710
        %vm3010 = vcmp.eq.f32.partialorder %v3009, 8.507059e+37
        %v3011 = vand.u32 %v1710, 2147483648
        %v3012 = vor.u32 1.1754944e-38, %v3011
        %v3013 = vsel %vm3010, %v3012, %v3008
        %v3014 = vmul.f32 1.0, %v3013
        %v3015 = vrcp.pop %v1711
        %v3016 = vmul.f32 %v1711, %v3015
        %v3017 = vsub.f32 1.0, %v3016
        %v3018 = vmul.f32 %v3015, %v3017
        %v3019 = vadd.f32 %v3015, %v3018
        %vm3020 = vweird.f32 %v1711
        %vm3021 = vweird.f32 %v3015
        %vm3022 = vmor %vm3020, %vm3021
        %v3023 = vsel %vm3022, %v3015, %v3019
        %v3024 = vand.u32 2147483647, %v1711
        %vm3025 = vcmp.eq.f32.partialorder %v3024, 8.507059e+37
        %v3026 = vand.u32 %v1711, 2147483648
        %v3027 = vor.u32 1.1754944e-38, %v3026
        %v3028 = vsel %vm3025, %v3027, %v3023
        %v3029 = vmul.f32 1.0, %v3028
        %v3030 = vrcp.pop %v1712
        %v3031 = vmul.f32 %v1712, %v3030
        %v3032 = vsub.f32 1.0, %v3031
        %v3033 = vmul.f32 %v3030, %v3032
        %v3034 = vadd.f32 %v3030, %v3033
        %vm3035 = vweird.f32 %v1712
        %vm3036 = vweird.f32 %v3030
        %vm3037 = vmor %vm3035, %vm3036
        %v3038 = vsel %vm3037, %v3030, %v3034
        %v3039 = vand.u32 2147483647, %v1712
        %vm3040 = vcmp.eq.f32.partialorder %v3039, 8.507059e+37
        %v3041 = vand.u32 %v1712, 2147483648
        %v3042 = vor.u32 1.1754944e-38, %v3041
        %v3043 = vsel %vm3040, %v3042, %v3038
        %v3044 = vmul.f32 1.0, %v3043
        %v3045 = vrcp.pop %v1713
        %v3046 = vmul.f32 %v1713, %v3045
        %v3047 = vsub.f32 1.0, %v3046
        %v3048 = vmul.f32 %v3045, %v3047
        %v3049 = vadd.f32 %v3045, %v3048
        %vm3050 = vweird.f32 %v1713
        %vm3051 = vweird.f32 %v3045
        %vm3052 = vmor %vm3050, %vm3051
        %v3053 = vsel %vm3052, %v3045, %v3049
        %v3054 = vand.u32 2147483647, %v1713
        %vm3055 = vcmp.eq.f32.partialorder %v3054, 8.507059e+37
        %v3056 = vand.u32 %v1713, 2147483648
        %v3057 = vor.u32 1.1754944e-38, %v3056
        %v3058 = vsel %vm3055, %v3057, %v3053
        %v3059 = vmul.f32 1.0, %v3058
        %v3060 = vrcp.pop %v1714
        %v3061 = vmul.f32 %v1714, %v3060
        %v3062 = vsub.f32 1.0, %v3061
        %v3063 = vmul.f32 %v3060, %v3062
        %v3064 = vadd.f32 %v3060, %v3063
        %vm3065 = vweird.f32 %v1714
        %vm3066 = vweird.f32 %v3060
        %vm3067 = vmor %vm3065, %vm3066
        %v3068 = vsel %vm3067, %v3060, %v3064
        %v3069 = vand.u32 2147483647, %v1714
        %vm3070 = vcmp.eq.f32.partialorder %v3069, 8.507059e+37
        %v3071 = vand.u32 %v1714, 2147483648
        %v3072 = vor.u32 1.1754944e-38, %v3071
        %v3073 = vsel %vm3070, %v3072, %v3068
        %v3074 = vmul.f32 1.0, %v3073
        %v3075 = vrcp.pop %v1715
        %v3076 = vmul.f32 %v1715, %v3075
        %v3077 = vsub.f32 1.0, %v3076
        %v3078 = vmul.f32 %v3075, %v3077
        %v3079 = vadd.f32 %v3075, %v3078
        %vm3080 = vweird.f32 %v1715
        %vm3081 = vweird.f32 %v3075
        %vm3082 = vmor %vm3080, %vm3081
        %v3083 = vsel %vm3082, %v3075, %v3079
        %v3084 = vand.u32 2147483647, %v1715
        %vm3085 = vcmp.eq.f32.partialorder %v3084, 8.507059e+37
        %v3086 = vand.u32 %v1715, 2147483648
        %v3087 = vor.u32 1.1754944e-38, %v3086
        %v3088 = vsel %vm3085, %v3087, %v3083
        %v3089 = vmul.f32 1.0, %v3088
        %v3090 = vrcp.pop %v1716
        %v3091 = vmul.f32 %v1716, %v3090
        %v3092 = vsub.f32 1.0, %v3091
        %v3093 = vmul.f32 %v3090, %v3092
        %v3094 = vadd.f32 %v3090, %v3093
        %vm3095 = vweird.f32 %v1716
        %vm3096 = vweird.f32 %v3090
        %vm3097 = vmor %vm3095, %vm3096
        %v3098 = vsel %vm3097, %v3090, %v3094
        %v3099 = vand.u32 2147483647, %v1716
        %vm3100 = vcmp.eq.f32.partialorder %v3099, 8.507059e+37
        %v3101 = vand.u32 %v1716, 2147483648
        %v3102 = vor.u32 1.1754944e-38, %v3101
        %v3103 = vsel %vm3100, %v3102, %v3098
        %v3104 = vmul.f32 1.0, %v3103
        %v3105 = vrcp.pop %v1717
        %v3106 = vmul.f32 %v1717, %v3105
        %v3107 = vsub.f32 1.0, %v3106
        %v3108 = vmul.f32 %v3105, %v3107
        %v3109 = vadd.f32 %v3105, %v3108
        %vm3110 = vweird.f32 %v1717
        %vm3111 = vweird.f32 %v3105
        %vm3112 = vmor %vm3110, %vm3111
        %v3113 = vsel %vm3112, %v3105, %v3109
        %v3114 = vand.u32 2147483647, %v1717
        %vm3115 = vcmp.eq.f32.partialorder %v3114, 8.507059e+37
        %v3116 = vand.u32 %v1717, 2147483648
        %v3117 = vor.u32 1.1754944e-38, %v3116
        %v3118 = vsel %vm3115, %v3117, %v3113
        %v3119 = vmul.f32 1.0, %v3118
        %v3120 = vrcp.pop %v1718
        %v3121 = vmul.f32 %v1718, %v3120
        %v3122 = vsub.f32 1.0, %v3121
        %v3123 = vmul.f32 %v3120, %v3122
        %v3124 = vadd.f32 %v3120, %v3123
        %vm3125 = vweird.f32 %v1718
        %vm3126 = vweird.f32 %v3120
        %vm3127 = vmor %vm3125, %vm3126
        %v3128 = vsel %vm3127, %v3120, %v3124
        %v3129 = vand.u32 2147483647, %v1718
        %vm3130 = vcmp.eq.f32.partialorder %v3129, 8.507059e+37
        %v3131 = vand.u32 %v1718, 2147483648
        %v3132 = vor.u32 1.1754944e-38, %v3131
        %v3133 = vsel %vm3130, %v3132, %v3128
        %v3134 = vmul.f32 1.0, %v3133
        %v3135 = vrcp.pop %v1719
        %v3136 = vmul.f32 %v1719, %v3135
        %v3137 = vsub.f32 1.0, %v3136
        %v3138 = vmul.f32 %v3135, %v3137
        %v3139 = vadd.f32 %v3135, %v3138
        %vm3140 = vweird.f32 %v1719
        %vm3141 = vweird.f32 %v3135
        %vm3142 = vmor %vm3140, %vm3141
        %v3143 = vsel %vm3142, %v3135, %v3139
        %v3144 = vand.u32 2147483647, %v1719
        %vm3145 = vcmp.eq.f32.partialorder %v3144, 8.507059e+37
        %v3146 = vand.u32 %v1719, 2147483648
        %v3147 = vor.u32 1.1754944e-38, %v3146
        %v3148 = vsel %vm3145, %v3147, %v3143
        %v3149 = vmul.f32 1.0, %v3148
        %v3150 = vrcp.pop %v1720
        %v3151 = vmul.f32 %v1720, %v3150
        %v3152 = vsub.f32 1.0, %v3151
        %v3153 = vmul.f32 %v3150, %v3152
        %v3154 = vadd.f32 %v3150, %v3153
        %vm3155 = vweird.f32 %v1720
        %vm3156 = vweird.f32 %v3150
        %vm3157 = vmor %vm3155, %vm3156
        %v3158 = vsel %vm3157, %v3150, %v3154
        %v3159 = vand.u32 2147483647, %v1720
        %vm3160 = vcmp.eq.f32.partialorder %v3159, 8.507059e+37
        %v3161 = vand.u32 %v1720, 2147483648
        %v3162 = vor.u32 1.1754944e-38, %v3161
        %v3163 = vsel %vm3160, %v3162, %v3158
        %v3164 = vmul.f32 1.0, %v3163
        %v3165 = vrcp.pop %v1721
        %v3166 = vmul.f32 %v1721, %v3165
        %v3167 = vsub.f32 1.0, %v3166
        %v3168 = vmul.f32 %v3165, %v3167
        %v3169 = vadd.f32 %v3165, %v3168
        %vm3170 = vweird.f32 %v1721
        %vm3171 = vweird.f32 %v3165
        %vm3172 = vmor %vm3170, %vm3171
        %v3173 = vsel %vm3172, %v3165, %v3169
        %v3174 = vand.u32 2147483647, %v1721
        %vm3175 = vcmp.eq.f32.partialorder %v3174, 8.507059e+37
        %v3176 = vand.u32 %v1721, 2147483648
        %v3177 = vor.u32 1.1754944e-38, %v3176
        %v3178 = vsel %vm3175, %v3177, %v3173
        %v3179 = vmul.f32 1.0, %v3178
        %v3180 = vrcp.pop %v1722
        %v3181 = vmul.f32 %v1722, %v3180
        %v3182 = vsub.f32 1.0, %v3181
        %v3183 = vmul.f32 %v3180, %v3182
        %v3184 = vadd.f32 %v3180, %v3183
        %vm3185 = vweird.f32 %v1722
        %vm3186 = vweird.f32 %v3180
        %vm3187 = vmor %vm3185, %vm3186
        %v3188 = vsel %vm3187, %v3180, %v3184
        %v3189 = vand.u32 2147483647, %v1722
        %vm3190 = vcmp.eq.f32.partialorder %v3189, 8.507059e+37
        %v3191 = vand.u32 %v1722, 2147483648
        %v3192 = vor.u32 1.1754944e-38, %v3191
        %v3193 = vsel %vm3190, %v3192, %v3188
        %v3194 = vmul.f32 1.0, %v3193
        %v3195 = vrcp.pop %v1723
        %v3196 = vmul.f32 %v1723, %v3195
        %v3197 = vsub.f32 1.0, %v3196
        %v3198 = vmul.f32 %v3195, %v3197
        %v3199 = vadd.f32 %v3195, %v3198
        %vm3200 = vweird.f32 %v1723
        %vm3201 = vweird.f32 %v3195
        %vm3202 = vmor %vm3200, %vm3201
        %v3203 = vsel %vm3202, %v3195, %v3199
        %v3204 = vand.u32 2147483647, %v1723
        %vm3205 = vcmp.eq.f32.partialorder %v3204, 8.507059e+37
        %v3206 = vand.u32 %v1723, 2147483648
        %v3207 = vor.u32 1.1754944e-38, %v3206
        %v3208 = vsel %vm3205, %v3207, %v3203
        %v3209 = vmul.f32 1.0, %v3208
        %v3210 = vrcp.pop %v1724
        %v3211 = vmul.f32 %v1724, %v3210
        %v3212 = vsub.f32 1.0, %v3211
        %v3213 = vmul.f32 %v3210, %v3212
        %v3214 = vadd.f32 %v3210, %v3213
        %vm3215 = vweird.f32 %v1724
        %vm3216 = vweird.f32 %v3210
        %vm3217 = vmor %vm3215, %vm3216
        %v3218 = vsel %vm3217, %v3210, %v3214
        %v3219 = vand.u32 2147483647, %v1724
        %vm3220 = vcmp.eq.f32.partialorder %v3219, 8.507059e+37
        %v3221 = vand.u32 %v1724, 2147483648
        %v3222 = vor.u32 1.1754944e-38, %v3221
        %v3223 = vsel %vm3220, %v3222, %v3218
        %v3224 = vmul.f32 1.0, %v3223
        %v3225 = vrcp.pop %v1725
        %v3226 = vmul.f32 %v1725, %v3225
        %v3227 = vsub.f32 1.0, %v3226
        %v3228 = vmul.f32 %v3225, %v3227
        %v3229 = vadd.f32 %v3225, %v3228
        %vm3230 = vweird.f32 %v1725
        %vm3231 = vweird.f32 %v3225
        %vm3232 = vmor %vm3230, %vm3231
        %v3233 = vsel %vm3232, %v3225, %v3229
        %v3234 = vand.u32 2147483647, %v1725
        %vm3235 = vcmp.eq.f32.partialorder %v3234, 8.507059e+37
        %v3236 = vand.u32 %v1725, 2147483648
        %v3237 = vor.u32 1.1754944e-38, %v3236
        %v3238 = vsel %vm3235, %v3237, %v3233
        %v3239 = vmul.f32 1.0, %v3238
        %v3240 = vrcp.pop %v1726
        %v3241 = vmul.f32 %v1726, %v3240
        %v3242 = vsub.f32 1.0, %v3241
        %v3243 = vmul.f32 %v3240, %v3242
        %v3244 = vadd.f32 %v3240, %v3243
        %vm3245 = vweird.f32 %v1726
        %vm3246 = vweird.f32 %v3240
        %vm3247 = vmor %vm3245, %vm3246
        %v3248 = vsel %vm3247, %v3240, %v3244
        %v3249 = vand.u32 2147483647, %v1726
        %vm3250 = vcmp.eq.f32.partialorder %v3249, 8.507059e+37
        %v3251 = vand.u32 %v1726, 2147483648
        %v3252 = vor.u32 1.1754944e-38, %v3251
        %v3253 = vsel %vm3250, %v3252, %v3248
        %v3254 = vmul.f32 1.0, %v3253
        %v3255 = vrcp.pop %v1727
        %v3256 = vmul.f32 %v1727, %v3255
        %v3257 = vsub.f32 1.0, %v3256
        %v3258 = vmul.f32 %v3255, %v3257
        %v3259 = vadd.f32 %v3255, %v3258
        %vm3260 = vweird.f32 %v1727
        %vm3261 = vweird.f32 %v3255
        %vm3262 = vmor %vm3260, %vm3261
        %v3263 = vsel %vm3262, %v3255, %v3259
        %v3264 = vand.u32 2147483647, %v1727
        %vm3265 = vcmp.eq.f32.partialorder %v3264, 8.507059e+37
        %v3266 = vand.u32 %v1727, 2147483648
        %v3267 = vor.u32 1.1754944e-38, %v3266
        %v3268 = vsel %vm3265, %v3267, %v3263
        %v3269 = vmul.f32 1.0, %v3268
        %v3270 = vrcp.pop %v1728
        %v3271 = vmul.f32 %v1728, %v3270
        %v3272 = vsub.f32 1.0, %v3271
        %v3273 = vmul.f32 %v3270, %v3272
        %v3274 = vadd.f32 %v3270, %v3273
        %vm3275 = vweird.f32 %v1728
        %vm3276 = vweird.f32 %v3270
        %vm3277 = vmor %vm3275, %vm3276
        %v3278 = vsel %vm3277, %v3270, %v3274
        %v3279 = vand.u32 2147483647, %v1728
        %vm3280 = vcmp.eq.f32.partialorder %v3279, 8.507059e+37
        %v3281 = vand.u32 %v1728, 2147483648
        %v3282 = vor.u32 1.1754944e-38, %v3281
        %v3283 = vsel %vm3280, %v3282, %v3278
        %v3284 = vmul.f32 1.0, %v3283
        %v3285 = vrcp.pop %v1729
        %v3286 = vmul.f32 %v1729, %v3285
        %v3287 = vsub.f32 1.0, %v3286
        %v3288 = vmul.f32 %v3285, %v3287
        %v3289 = vadd.f32 %v3285, %v3288
        %vm3290 = vweird.f32 %v1729
        %vm3291 = vweird.f32 %v3285
        %vm3292 = vmor %vm3290, %vm3291
        %v3293 = vsel %vm3292, %v3285, %v3289
        %v3294 = vand.u32 2147483647, %v1729
        %vm3295 = vcmp.eq.f32.partialorder %v3294, 8.507059e+37
        %v3296 = vand.u32 %v1729, 2147483648
        %v3297 = vor.u32 1.1754944e-38, %v3296
        %v3298 = vsel %vm3295, %v3297, %v3293
        %v3299 = vmul.f32 1.0, %v3298
        %v3300 = vrcp.pop %v1730
        %v3301 = vmul.f32 %v1730, %v3300
        %v3302 = vsub.f32 1.0, %v3301
        %v3303 = vmul.f32 %v3300, %v3302
        %v3304 = vadd.f32 %v3300, %v3303
        %vm3305 = vweird.f32 %v1730
        %vm3306 = vweird.f32 %v3300
        %vm3307 = vmor %vm3305, %vm3306
        %v3308 = vsel %vm3307, %v3300, %v3304
        %v3309 = vand.u32 2147483647, %v1730
        %vm3310 = vcmp.eq.f32.partialorder %v3309, 8.507059e+37
        %v3311 = vand.u32 %v1730, 2147483648
        %v3312 = vor.u32 1.1754944e-38, %v3311
        %v3313 = vsel %vm3310, %v3312, %v3308
        %v3314 = vmul.f32 1.0, %v3313
        %v3315 = vrcp.pop %v1731
        %v3316 = vmul.f32 %v1731, %v3315
        %v3317 = vsub.f32 1.0, %v3316
        %v3318 = vmul.f32 %v3315, %v3317
        %v3319 = vadd.f32 %v3315, %v3318
        %vm3320 = vweird.f32 %v1731
        %vm3321 = vweird.f32 %v3315
        %vm3322 = vmor %vm3320, %vm3321
        %v3323 = vsel %vm3322, %v3315, %v3319
        %v3324 = vand.u32 2147483647, %v1731
        %vm3325 = vcmp.eq.f32.partialorder %v3324, 8.507059e+37
        %v3326 = vand.u32 %v1731, 2147483648
        %v3327 = vor.u32 1.1754944e-38, %v3326
        %v3328 = vsel %vm3325, %v3327, %v3323
        %v3329 = vmul.f32 1.0, %v3328
        %v3330 = vrcp.pop %v1732
        %v3331 = vmul.f32 %v1732, %v3330
        %v3332 = vsub.f32 1.0, %v3331
        %v3333 = vmul.f32 %v3330, %v3332
        %v3334 = vadd.f32 %v3330, %v3333
        %vm3335 = vweird.f32 %v1732
        %vm3336 = vweird.f32 %v3330
        %vm3337 = vmor %vm3335, %vm3336
        %v3338 = vsel %vm3337, %v3330, %v3334
        %v3339 = vand.u32 2147483647, %v1732
        %vm3340 = vcmp.eq.f32.partialorder %v3339, 8.507059e+37
        %v3341 = vand.u32 %v1732, 2147483648
        %v3342 = vor.u32 1.1754944e-38, %v3341
        %v3343 = vsel %vm3340, %v3342, %v3338
        %v3344 = vmul.f32 1.0, %v3343
        %v3345 = vrcp.pop %v1733
        %v3346 = vmul.f32 %v1733, %v3345
        %v3347 = vsub.f32 1.0, %v3346
        %v3348 = vmul.f32 %v3345, %v3347
        %v3349 = vadd.f32 %v3345, %v3348
        %vm3350 = vweird.f32 %v1733
        %vm3351 = vweird.f32 %v3345
        %vm3352 = vmor %vm3350, %vm3351
        %v3353 = vsel %vm3352, %v3345, %v3349
        %v3354 = vand.u32 2147483647, %v1733
        %vm3355 = vcmp.eq.f32.partialorder %v3354, 8.507059e+37
        %v3356 = vand.u32 %v1733, 2147483648
        %v3357 = vor.u32 1.1754944e-38, %v3356
        %v3358 = vsel %vm3355, %v3357, %v3353
        %v3359 = vmul.f32 1.0, %v3358
        %v3360 = vrcp.pop %v1734
        %v3361 = vmul.f32 %v1734, %v3360
        %v3362 = vsub.f32 1.0, %v3361
        %v3363 = vmul.f32 %v3360, %v3362
        %v3364 = vadd.f32 %v3360, %v3363
        %vm3365 = vweird.f32 %v1734
        %vm3366 = vweird.f32 %v3360
        %vm3367 = vmor %vm3365, %vm3366
        %v3368 = vsel %vm3367, %v3360, %v3364
        %v3369 = vand.u32 2147483647, %v1734
        %vm3370 = vcmp.eq.f32.partialorder %v3369, 8.507059e+37
        %v3371 = vand.u32 %v1734, 2147483648
        %v3372 = vor.u32 1.1754944e-38, %v3371
        %v3373 = vsel %vm3370, %v3372, %v3368
        %v3374 = vmul.f32 1.0, %v3373
        %v3375 = vrcp.pop %v1735
        %v3376 = vmul.f32 %v1735, %v3375
        %v3377 = vsub.f32 1.0, %v3376
        %v3378 = vmul.f32 %v3375, %v3377
        %v3379 = vadd.f32 %v3375, %v3378
        %vm3380 = vweird.f32 %v1735
        %vm3381 = vweird.f32 %v3375
        %vm3382 = vmor %vm3380, %vm3381
        %v3383 = vsel %vm3382, %v3375, %v3379
        %v3384 = vand.u32 2147483647, %v1735
        %vm3385 = vcmp.eq.f32.partialorder %v3384, 8.507059e+37
        %v3386 = vand.u32 %v1735, 2147483648
        %v3387 = vor.u32 1.1754944e-38, %v3386
        %v3388 = vsel %vm3385, %v3387, %v3383
        %v3389 = vmul.f32 1.0, %v3388
        %v3390 = vrcp.pop %v1736
        %v3391 = vmul.f32 %v1736, %v3390
        %v3392 = vsub.f32 1.0, %v3391
        %v3393 = vmul.f32 %v3390, %v3392
        %v3394 = vadd.f32 %v3390, %v3393
        %vm3395 = vweird.f32 %v1736
        %vm3396 = vweird.f32 %v3390
        %vm3397 = vmor %vm3395, %vm3396
        %v3398 = vsel %vm3397, %v3390, %v3394
        %v3399 = vand.u32 2147483647, %v1736
        %vm3400 = vcmp.eq.f32.partialorder %v3399, 8.507059e+37
        %v3401 = vand.u32 %v1736, 2147483648
        %v3402 = vor.u32 1.1754944e-38, %v3401
        %v3403 = vsel %vm3400, %v3402, %v3398
        %v3404 = vmul.f32 1.0, %v3403
        %v3405 = vrcp.pop %v1737
        %v3406 = vmul.f32 %v1737, %v3405
        %v3407 = vsub.f32 1.0, %v3406
        %v3408 = vmul.f32 %v3405, %v3407
        %v3409 = vadd.f32 %v3405, %v3408
        %vm3410 = vweird.f32 %v1737
        %vm3411 = vweird.f32 %v3405
        %vm3412 = vmor %vm3410, %vm3411
        %v3413 = vsel %vm3412, %v3405, %v3409
        %v3414 = vand.u32 2147483647, %v1737
        %vm3415 = vcmp.eq.f32.partialorder %v3414, 8.507059e+37
        %v3416 = vand.u32 %v1737, 2147483648
        %v3417 = vor.u32 1.1754944e-38, %v3416
        %v3418 = vsel %vm3415, %v3417, %v3413
        %v3419 = vmul.f32 1.0, %v3418
        %v3420 = vrcp.pop %v1738
        %v3421 = vmul.f32 %v1738, %v3420
        %v3422 = vsub.f32 1.0, %v3421
        %v3423 = vmul.f32 %v3420, %v3422
        %v3424 = vadd.f32 %v3420, %v3423
        %vm3425 = vweird.f32 %v1738
        %vm3426 = vweird.f32 %v3420
        %vm3427 = vmor %vm3425, %vm3426
        %v3428 = vsel %vm3427, %v3420, %v3424
        %v3429 = vand.u32 2147483647, %v1738
        %vm3430 = vcmp.eq.f32.partialorder %v3429, 8.507059e+37
        %v3431 = vand.u32 %v1738, 2147483648
        %v3432 = vor.u32 1.1754944e-38, %v3431
        %v3433 = vsel %vm3430, %v3432, %v3428
        %v3434 = vmul.f32 1.0, %v3433
        %v3435 = vrcp.pop %v1739
        %v3436 = vmul.f32 %v1739, %v3435
        %v3437 = vsub.f32 1.0, %v3436
        %v3438 = vmul.f32 %v3435, %v3437
        %v3439 = vadd.f32 %v3435, %v3438
        %vm3440 = vweird.f32 %v1739
        %vm3441 = vweird.f32 %v3435
        %vm3442 = vmor %vm3440, %vm3441
        %v3443 = vsel %vm3442, %v3435, %v3439
        %v3444 = vand.u32 2147483647, %v1739
        %vm3445 = vcmp.eq.f32.partialorder %v3444, 8.507059e+37
        %v3446 = vand.u32 %v1739, 2147483648
        %v3447 = vor.u32 1.1754944e-38, %v3446
        %v3448 = vsel %vm3445, %v3447, %v3443
        %v3449 = vmul.f32 1.0, %v3448
        %v3450 = vrcp.pop %v1740
        %v3451 = vmul.f32 %v1740, %v3450
        %v3452 = vsub.f32 1.0, %v3451
        %v3453 = vmul.f32 %v3450, %v3452
        %v3454 = vadd.f32 %v3450, %v3453
        %vm3455 = vweird.f32 %v1740
        %vm3456 = vweird.f32 %v3450
        %vm3457 = vmor %vm3455, %vm3456
        %v3458 = vsel %vm3457, %v3450, %v3454
        %v3459 = vand.u32 2147483647, %v1740
        %vm3460 = vcmp.eq.f32.partialorder %v3459, 8.507059e+37
        %v3461 = vand.u32 %v1740, 2147483648
        %v3462 = vor.u32 1.1754944e-38, %v3461
        %v3463 = vsel %vm3460, %v3462, %v3458
        %v3464 = vmul.f32 1.0, %v3463
        %v3465 = vrcp.pop %v1741
        %v3466 = vmul.f32 %v1741, %v3465
        %v3467 = vsub.f32 1.0, %v3466
        %v3468 = vmul.f32 %v3465, %v3467
        %v3469 = vadd.f32 %v3465, %v3468
        %vm3470 = vweird.f32 %v1741
        %vm3471 = vweird.f32 %v3465
        %vm3472 = vmor %vm3470, %vm3471
        %v3473 = vsel %vm3472, %v3465, %v3469
        %v3474 = vand.u32 2147483647, %v1741
        %vm3475 = vcmp.eq.f32.partialorder %v3474, 8.507059e+37
        %v3476 = vand.u32 %v1741, 2147483648
        %v3477 = vor.u32 1.1754944e-38, %v3476
        %v3478 = vsel %vm3475, %v3477, %v3473
        %v3479 = vmul.f32 1.0, %v3478
        %v3480 = vrcp.pop %v1742
        %v3481 = vmul.f32 %v1742, %v3480
        %v3482 = vsub.f32 1.0, %v3481
        %v3483 = vmul.f32 %v3480, %v3482
        %v3484 = vadd.f32 %v3480, %v3483
        %vm3485 = vweird.f32 %v1742
        %vm3486 = vweird.f32 %v3480
        %vm3487 = vmor %vm3485, %vm3486
        %v3488 = vsel %vm3487, %v3480, %v3484
        %v3489 = vand.u32 2147483647, %v1742
        %vm3490 = vcmp.eq.f32.partialorder %v3489, 8.507059e+37
        %v3491 = vand.u32 %v1742, 2147483648
        %v3492 = vor.u32 1.1754944e-38, %v3491
        %v3493 = vsel %vm3490, %v3492, %v3488
        %v3494 = vmul.f32 1.0, %v3493
        %v3495 = vrcp.pop %v1743
        %v3496 = vmul.f32 %v1743, %v3495
        %v3497 = vsub.f32 1.0, %v3496
        %v3498 = vmul.f32 %v3495, %v3497
        %v3499 = vadd.f32 %v3495, %v3498
        %vm3500 = vweird.f32 %v1743
        %vm3501 = vweird.f32 %v3495
        %vm3502 = vmor %vm3500, %vm3501
        %v3503 = vsel %vm3502, %v3495, %v3499
        %v3504 = vand.u32 2147483647, %v1743
        %vm3505 = vcmp.eq.f32.partialorder %v3504, 8.507059e+37
        %v3506 = vand.u32 %v1743, 2147483648
        %v3507 = vor.u32 1.1754944e-38, %v3506
        %v3508 = vsel %vm3505, %v3507, %v3503
        %v3509 = vmul.f32 1.0, %v3508
        %v3510 = vrcp.pop %v1744
        %v3511 = vmul.f32 %v1744, %v3510
        %v3512 = vsub.f32 1.0, %v3511
        %v3513 = vmul.f32 %v3510, %v3512
        %v3514 = vadd.f32 %v3510, %v3513
        %vm3515 = vweird.f32 %v1744
        %vm3516 = vweird.f32 %v3510
        %vm3517 = vmor %vm3515, %vm3516
        %v3518 = vsel %vm3517, %v3510, %v3514
        %v3519 = vand.u32 2147483647, %v1744
        %vm3520 = vcmp.eq.f32.partialorder %v3519, 8.507059e+37
        %v3521 = vand.u32 %v1744, 2147483648
        %v3522 = vor.u32 1.1754944e-38, %v3521
        %v3523 = vsel %vm3520, %v3522, %v3518
        %v3524 = vmul.f32 1.0, %v3523
        %v3525 = vrcp.pop %v1745
        %v3526 = vmul.f32 %v1745, %v3525
        %v3527 = vsub.f32 1.0, %v3526
        %v3528 = vmul.f32 %v3525, %v3527
        %v3529 = vadd.f32 %v3525, %v3528
        %vm3530 = vweird.f32 %v1745
        %vm3531 = vweird.f32 %v3525
        %vm3532 = vmor %vm3530, %vm3531
        %v3533 = vsel %vm3532, %v3525, %v3529
        %v3534 = vand.u32 2147483647, %v1745
        %vm3535 = vcmp.eq.f32.partialorder %v3534, 8.507059e+37
        %v3536 = vand.u32 %v1745, 2147483648
        %v3537 = vor.u32 1.1754944e-38, %v3536
        %v3538 = vsel %vm3535, %v3537, %v3533
        %v3539 = vmul.f32 1.0, %v3538
        %v3540 = vrcp.pop %v1746
        %v3541 = vmul.f32 %v1746, %v3540
        %v3542 = vsub.f32 1.0, %v3541
        %v3543 = vmul.f32 %v3540, %v3542
        %v3544 = vadd.f32 %v3540, %v3543
        %vm3545 = vweird.f32 %v1746
        %vm3546 = vweird.f32 %v3540
        %vm3547 = vmor %vm3545, %vm3546
        %v3548 = vsel %vm3547, %v3540, %v3544
        %v3549 = vand.u32 2147483647, %v1746
        %vm3550 = vcmp.eq.f32.partialorder %v3549, 8.507059e+37
        %v3551 = vand.u32 %v1746, 2147483648
        %v3552 = vor.u32 1.1754944e-38, %v3551
        %v3553 = vsel %vm3550, %v3552, %v3548
        %v3554 = vmul.f32 1.0, %v3553
        %v3555 = vrcp.pop %v1747
        %v3556 = vmul.f32 %v1747, %v3555
        %v3557 = vsub.f32 1.0, %v3556
        %v3558 = vmul.f32 %v3555, %v3557
        %v3559 = vadd.f32 %v3555, %v3558
        %vm3560 = vweird.f32 %v1747
        %vm3561 = vweird.f32 %v3555
        %vm3562 = vmor %vm3560, %vm3561
        %v3563 = vsel %vm3562, %v3555, %v3559
        %v3564 = vand.u32 2147483647, %v1747
        %vm3565 = vcmp.eq.f32.partialorder %v3564, 8.507059e+37
        %v3566 = vand.u32 %v1747, 2147483648
        %v3567 = vor.u32 1.1754944e-38, %v3566
        %v3568 = vsel %vm3565, %v3567, %v3563
        %v3569 = vmul.f32 1.0, %v3568
        %v3570 = vrcp.pop %v1748
        %v3571 = vmul.f32 %v1748, %v3570
        %v3572 = vsub.f32 1.0, %v3571
        %v3573 = vmul.f32 %v3570, %v3572
        %v3574 = vadd.f32 %v3570, %v3573
        %vm3575 = vweird.f32 %v1748
        %vm3576 = vweird.f32 %v3570
        %vm3577 = vmor %vm3575, %vm3576
        %v3578 = vsel %vm3577, %v3570, %v3574
        %v3579 = vand.u32 2147483647, %v1748
        %vm3580 = vcmp.eq.f32.partialorder %v3579, 8.507059e+37
        %v3581 = vand.u32 %v1748, 2147483648
        %v3582 = vor.u32 1.1754944e-38, %v3581
        %v3583 = vsel %vm3580, %v3582, %v3578
        %v3584 = vmul.f32 1.0, %v3583
        %v3585 = vrcp.pop %v1749
        %v3586 = vmul.f32 %v1749, %v3585
        %v3587 = vsub.f32 1.0, %v3586
        %v3588 = vmul.f32 %v3585, %v3587
        %v3589 = vadd.f32 %v3585, %v3588
        %vm3590 = vweird.f32 %v1749
        %vm3591 = vweird.f32 %v3585
        %vm3592 = vmor %vm3590, %vm3591
        %v3593 = vsel %vm3592, %v3585, %v3589
        %v3594 = vand.u32 2147483647, %v1749
        %vm3595 = vcmp.eq.f32.partialorder %v3594, 8.507059e+37
        %v3596 = vand.u32 %v1749, 2147483648
        %v3597 = vor.u32 1.1754944e-38, %v3596
        %v3598 = vsel %vm3595, %v3597, %v3593
        %v3599 = vmul.f32 1.0, %v3598
        %v3600 = vrcp.pop %v1750
        %v3601 = vmul.f32 %v1750, %v3600
        %v3602 = vsub.f32 1.0, %v3601
        %v3603 = vmul.f32 %v3600, %v3602
        %v3604 = vadd.f32 %v3600, %v3603
        %vm3605 = vweird.f32 %v1750
        %vm3606 = vweird.f32 %v3600
        %vm3607 = vmor %vm3605, %vm3606
        %v3608 = vsel %vm3607, %v3600, %v3604
        %v3609 = vand.u32 2147483647, %v1750
        %vm3610 = vcmp.eq.f32.partialorder %v3609, 8.507059e+37
        %v3611 = vand.u32 %v1750, 2147483648
        %v3612 = vor.u32 1.1754944e-38, %v3611
        %v3613 = vsel %vm3610, %v3612, %v3608
        %v3614 = vmul.f32 1.0, %v3613
        %v3615 = vrcp.pop %v1751
        %v3616 = vmul.f32 %v1751, %v3615
        %v3617 = vsub.f32 1.0, %v3616
        %v3618 = vmul.f32 %v3615, %v3617
        %v3619 = vadd.f32 %v3615, %v3618
        %vm3620 = vweird.f32 %v1751
        %vm3621 = vweird.f32 %v3615
        %vm3622 = vmor %vm3620, %vm3621
        %v3623 = vsel %vm3622, %v3615, %v3619
        %v3624 = vand.u32 2147483647, %v1751
        %vm3625 = vcmp.eq.f32.partialorder %v3624, 8.507059e+37
        %v3626 = vand.u32 %v1751, 2147483648
        %v3627 = vor.u32 1.1754944e-38, %v3626
        %v3628 = vsel %vm3625, %v3627, %v3623
        %v3629 = vmul.f32 1.0, %v3628
        %v3630 = vrcp.pop %v1752
        %v3631 = vmul.f32 %v1752, %v3630
        %v3632 = vsub.f32 1.0, %v3631
        %v3633 = vmul.f32 %v3630, %v3632
        %v3634 = vadd.f32 %v3630, %v3633
        %vm3635 = vweird.f32 %v1752
        %vm3636 = vweird.f32 %v3630
        %vm3637 = vmor %vm3635, %vm3636
        %v3638 = vsel %vm3637, %v3630, %v3634
        %v3639 = vand.u32 2147483647, %v1752
        %vm3640 = vcmp.eq.f32.partialorder %v3639, 8.507059e+37
        %v3641 = vand.u32 %v1752, 2147483648
        %v3642 = vor.u32 1.1754944e-38, %v3641
        %v3643 = vsel %vm3640, %v3642, %v3638
        %v3644 = vmul.f32 1.0, %v3643
        %v3645 = vrcp.pop %v1753
        %v3646 = vmul.f32 %v1753, %v3645
        %v3647 = vsub.f32 1.0, %v3646
        %v3648 = vmul.f32 %v3645, %v3647
        %v3649 = vadd.f32 %v3645, %v3648
        %vm3650 = vweird.f32 %v1753
        %vm3651 = vweird.f32 %v3645
        %vm3652 = vmor %vm3650, %vm3651
        %v3653 = vsel %vm3652, %v3645, %v3649
        %v3654 = vand.u32 2147483647, %v1753
        %vm3655 = vcmp.eq.f32.partialorder %v3654, 8.507059e+37
        %v3656 = vand.u32 %v1753, 2147483648
        %v3657 = vor.u32 1.1754944e-38, %v3656
        %v3658 = vsel %vm3655, %v3657, %v3653
        %v3659 = vmul.f32 1.0, %v3658
        %v3660 = vrcp.pop %v1754
        %v3661 = vmul.f32 %v1754, %v3660
        %v3662 = vsub.f32 1.0, %v3661
        %v3663 = vmul.f32 %v3660, %v3662
        %v3664 = vadd.f32 %v3660, %v3663
        %vm3665 = vweird.f32 %v1754
        %vm3666 = vweird.f32 %v3660
        %vm3667 = vmor %vm3665, %vm3666
        %v3668 = vsel %vm3667, %v3660, %v3664
        %v3669 = vand.u32 2147483647, %v1754
        %vm3670 = vcmp.eq.f32.partialorder %v3669, 8.507059e+37
        %v3671 = vand.u32 %v1754, 2147483648
        %v3672 = vor.u32 1.1754944e-38, %v3671
        %v3673 = vsel %vm3670, %v3672, %v3668
        %v3674 = vmul.f32 1.0, %v3673
        %v3675 = vld [vmem:[%s2] sm:$0xff]
        %v3676 = vld [vmem:[%s2 + $0x8] sm:$0xff]
        %v3677 = vld [vmem:[%s2 + $0x10] sm:$0xff]
        %v3678 = vld [vmem:[%s2 + $0x18] sm:$0xff]
        %v3679 = vld [vmem:[%s2 + $0x20] sm:$0xff]
        %v3680 = vld [vmem:[%s2 + $0x28] sm:$0xff]
        %v3681 = vld [vmem:[%s2 + $0x30] sm:$0xff]
        %v3682 = vld [vmem:[%s2 + $0x38] sm:$0xff]
        %v3683 = vld [vmem:[%s2 + $0x40] sm:$0xff]
        %v3684 = vld [vmem:[%s2 + $0x48] sm:$0xff]
        %v3685 = vld [vmem:[%s2 + $0x50] sm:$0xff]
        %v3686 = vld [vmem:[%s2 + $0x58] sm:$0xff]
        %v3687 = vld [vmem:[%s2 + $0x60] sm:$0xff]
        %v3688 = vld [vmem:[%s2 + $0x68] sm:$0xff]
        %v3689 = vld [vmem:[%s2 + $0x70] sm:$0xff]
        %v3690 = vld [vmem:[%s2 + $0x78] sm:$0xff]
        %v3691 = vld [vmem:[%s2 + $0x80] sm:$0xff]
        %v3692 = vld [vmem:[%s2 + $0x88] sm:$0xff]
        %v3693 = vld [vmem:[%s2 + $0x90] sm:$0xff]
        %v3694 = vld [vmem:[%s2 + $0x98] sm:$0xff]
        %v3695 = vld [vmem:[%s2 + $0xa0] sm:$0xff]
        %v3696 = vld [vmem:[%s2 + $0xa8] sm:$0xff]
        %v3697 = vld [vmem:[%s2 + $0xb0] sm:$0xff]
        %v3698 = vld [vmem:[%s2 + $0xb8] sm:$0xff]
        %v3699 = vld [vmem:[%s2 + $0xc0] sm:$0xff]
        %v3700 = vld [vmem:[%s2 + $0xc8] sm:$0xff]
        %v3701 = vld [vmem:[%s2 + $0xd0] sm:$0xff]
        %v3702 = vld [vmem:[%s2 + $0xd8] sm:$0xff]
        %v3703 = vld [vmem:[%s2 + $0xe0] sm:$0xff]
        %v3704 = vld [vmem:[%s2 + $0xe8] sm:$0xff]
        %v3705 = vld [vmem:[%s2 + $0xf0] sm:$0xff]
        %v3706 = vld [vmem:[%s2 + $0xf8] sm:$0xff]
        %v3707 = vld [vmem:[%s2 + $0x100] sm:$0xff]
        %v3708 = vld [vmem:[%s2 + $0x108] sm:$0xff]
        %v3709 = vld [vmem:[%s2 + $0x110] sm:$0xff]
        %v3710 = vld [vmem:[%s2 + $0x118] sm:$0xff]
        %v3711 = vld [vmem:[%s2 + $0x120] sm:$0xff]
        %v3712 = vld [vmem:[%s2 + $0x128] sm:$0xff]
        %v3713 = vld [vmem:[%s2 + $0x130] sm:$0xff]
        %v3714 = vld [vmem:[%s2 + $0x138] sm:$0xff]
        %v3715 = vld [vmem:[%s2 + $0x140] sm:$0xff]
        %v3716 = vld [vmem:[%s2 + $0x148] sm:$0xff]
        %v3717 = vld [vmem:[%s2 + $0x150] sm:$0xff]
        %v3718 = vld [vmem:[%s2 + $0x158] sm:$0xff]
        %v3719 = vld [vmem:[%s2 + $0x160] sm:$0xff]
        %v3720 = vld [vmem:[%s2 + $0x168] sm:$0xff]
        %v3721 = vld [vmem:[%s2 + $0x170] sm:$0xff]
        %v3722 = vld [vmem:[%s2 + $0x178] sm:$0xff]
        %v3723 = vld [vmem:[%s2 + $0x180] sm:$0xff]
        %v3724 = vld [vmem:[%s2 + $0x188] sm:$0xff]
        %v3725 = vld [vmem:[%s2 + $0x190] sm:$0xff]
        %v3726 = vld [vmem:[%s2 + $0x198] sm:$0xff]
        %v3727 = vld [vmem:[%s2 + $0x1a0] sm:$0xff]
        %v3728 = vld [vmem:[%s2 + $0x1a8] sm:$0xff]
        %v3729 = vld [vmem:[%s2 + $0x1b0] sm:$0xff]
        %v3730 = vld [vmem:[%s2 + $0x1b8] sm:$0xff]
        %v3731 = vld [vmem:[%s2 + $0x1c0] sm:$0xff]
        %v3732 = vld [vmem:[%s2 + $0x1c8] sm:$0xff]
        %v3733 = vld [vmem:[%s2 + $0x1d0] sm:$0xff]
        %v3734 = vld [vmem:[%s2 + $0x1d8] sm:$0xff]
        %v3735 = vld [vmem:[%s2 + $0x1e0] sm:$0xff]
        %v3736 = vld [vmem:[%s2 + $0x1e8] sm:$0xff]
        %v3737 = vld [vmem:[%s2 + $0x1f0] sm:$0xff]
        %v3738 = vld [vmem:[%s2 + $0x1f8] sm:$0xff]
        %v3739 = vld [vmem:[%s2 + $0x200] sm:$0xff]
        %v3740 = vld [vmem:[%s2 + $0x208] sm:$0xff]
        %v3741 = vld [vmem:[%s2 + $0x210] sm:$0xff]
        %v3742 = vld [vmem:[%s2 + $0x218] sm:$0xff]
        %v3743 = vld [vmem:[%s2 + $0x220] sm:$0xff]
        %v3744 = vld [vmem:[%s2 + $0x228] sm:$0xff]
        %v3745 = vld [vmem:[%s2 + $0x230] sm:$0xff]
        %v3746 = vld [vmem:[%s2 + $0x238] sm:$0xff]
        %v3747 = vld [vmem:[%s2 + $0x240] sm:$0xff]
        %v3748 = vld [vmem:[%s2 + $0x248] sm:$0xff]
        %v3749 = vld [vmem:[%s2 + $0x250] sm:$0xff]
        %v3750 = vld [vmem:[%s2 + $0x258] sm:$0xff]
        %v3751 = vld [vmem:[%s2 + $0x260] sm:$0xff]
        %v3752 = vld [vmem:[%s2 + $0x268] sm:$0xff]
        %v3753 = vld [vmem:[%s2 + $0x270] sm:$0xff]
        %v3754 = vld [vmem:[%s2 + $0x278] sm:$0xff]
        %v3755 = vld [vmem:[%s2 + $0x280] sm:$0xff]
        %v3756 = vld [vmem:[%s2 + $0x288] sm:$0xff]
        %v3757 = vld [vmem:[%s2 + $0x290] sm:$0xff]
        %v3758 = vld [vmem:[%s2 + $0x298] sm:$0xff]
        %v3759 = vld [vmem:[%s2 + $0x2a0] sm:$0xff]
        %v3760 = vld [vmem:[%s2 + $0x2a8] sm:$0xff]
        %v3761 = vld [vmem:[%s2 + $0x2b0] sm:$0xff]
        %v3762 = vld [vmem:[%s2 + $0x2b8] sm:$0xff]
        %v3763 = vld [vmem:[%s2 + $0x2c0] sm:$0xff]
        %v3764 = vld [vmem:[%s2 + $0x2c8] sm:$0xff]
        %v3765 = vld [vmem:[%s2 + $0x2d0] sm:$0xff]
        %v3766 = vld [vmem:[%s2 + $0x2d8] sm:$0xff]
        %v3767 = vld [vmem:[%s2 + $0x2e0] sm:$0xff]
        %v3768 = vld [vmem:[%s2 + $0x2e8] sm:$0xff]
        %v3769 = vld [vmem:[%s2 + $0x2f0] sm:$0xff]
        %v3770 = vld [vmem:[%s2 + $0x2f8] sm:$0xff]
        %v3771 = vld [vmem:[%s2 + $0x300] sm:$0xff]
        %v3772 = vld [vmem:[%s2 + $0x308] sm:$0xff]
        %v3773 = vld [vmem:[%s2 + $0x310] sm:$0xff]
        %v3774 = vld [vmem:[%s2 + $0x318] sm:$0xff]
        %3775 = vmatpush.msra.mxu0 %v1994
        %3776 = vmatpush.msra.mxu0 %v1979
        %3777 = vmatpush.msra.mxu0 %v1964
        %3778 = vmatpush.msra.mxu0 %v1949
        %3779 = vmatpush.msra.mxu0 %v1934
        %3780 = vmatpush.msra.mxu0 %v1919
        %3781 = vmatpush.msra.mxu0 %v1904
        %3782 = vmatpush.msra.mxu0 %v1889
        %3783 = vmatpush.msra.mxu0 %v1874
        %3784 = vmatpush.msra.mxu0 %v1859
        %3785 = vmatpush.msra.mxu0 %v1844
        %3786 = vmatpush.msra.mxu0 %v1829
        %3787 = vmatpush.msra.mxu0 %v1814
        %3788 = vmatpush.msra.mxu0 %v1799
        %3789 = vmatpush.msra.mxu0 %v1784
        %3790 = vmatpush.msra.mxu0 %v1769
        %3791 = vmatmul.f32.gmra.mxu0 %v3675
        %v3792 = vpop.f32.mrf.mxu0
        %v3793 = vadd.f32 0.0, %v3792
        %3794 = vmatmul.f32.gmra.mxu0 %v3677
        %v3795 = vpop.f32.mrf.mxu0
        %v3796 = vadd.f32 0.0, %v3795
        %3797 = vmatmul.f32.gmra.mxu0 %v3679
        %v3798 = vpop.f32.mrf.mxu0
        %v3799 = vadd.f32 0.0, %v3798
        %3800 = vmatmul.f32.gmra.mxu0 %v3681
        %v3801 = vpop.f32.mrf.mxu0
        %v3802 = vadd.f32 0.0, %v3801
        %3803 = vmatmul.f32.gmra.mxu0 %v3683
        %v3804 = vpop.f32.mrf.mxu0
        %v3805 = vadd.f32 0.0, %v3804
        %3806 = vmatmul.f32.gmra.mxu0 %v3685
        %v3807 = vpop.f32.mrf.mxu0
        %v3808 = vadd.f32 0.0, %v3807
        %3809 = vmatmul.f32.gmra.mxu0 %v3687
        %v3810 = vpop.f32.mrf.mxu0
        %v3811 = vadd.f32 0.0, %v3810
        %3812 = vmatmul.f32.gmra.mxu0 %v3689
        %v3813 = vpop.f32.mrf.mxu0
        %v3814 = vadd.f32 0.0, %v3813
        %3815 = vmatmul.f32.gmra.mxu0 %v3691
        %v3816 = vpop.f32.mrf.mxu0
        %v3817 = vadd.f32 0.0, %v3816
        %3818 = vmatmul.f32.gmra.mxu0 %v3693
        %v3819 = vpop.f32.mrf.mxu0
        %v3820 = vadd.f32 0.0, %v3819
        %3821 = vmatmul.f32.gmra.mxu0 %v3695
        %v3822 = vpop.f32.mrf.mxu0
        %v3823 = vadd.f32 0.0, %v3822
        %3824 = vmatmul.f32.gmra.mxu0 %v3697
        %v3825 = vpop.f32.mrf.mxu0
        %v3826 = vadd.f32 0.0, %v3825
        %3827 = vmatmul.f32.gmra.mxu0 %v3699
        %v3828 = vpop.f32.mrf.mxu0
        %v3829 = vadd.f32 0.0, %v3828
        %3830 = vmatmul.f32.gmra.mxu0 %v3701
        %v3831 = vpop.f32.mrf.mxu0
        %v3832 = vadd.f32 0.0, %v3831
        %3833 = vmatmul.f32.gmra.mxu0 %v3703
        %v3834 = vpop.f32.mrf.mxu0
        %v3835 = vadd.f32 0.0, %v3834
        %3836 = vmatmul.f32.gmra.mxu0 %v3705
        %v3837 = vpop.f32.mrf.mxu0
        %v3838 = vadd.f32 0.0, %v3837
        %3839 = vmatmul.f32.gmra.mxu0 %v3707
        %v3840 = vpop.f32.mrf.mxu0
        %v3841 = vadd.f32 0.0, %v3840
        %3842 = vmatmul.f32.gmra.mxu0 %v3709
        %v3843 = vpop.f32.mrf.mxu0
        %v3844 = vadd.f32 0.0, %v3843
        %3845 = vmatmul.f32.gmra.mxu0 %v3711
        %v3846 = vpop.f32.mrf.mxu0
        %v3847 = vadd.f32 0.0, %v3846
        %3848 = vmatmul.f32.gmra.mxu0 %v3713
        %v3849 = vpop.f32.mrf.mxu0
        %v3850 = vadd.f32 0.0, %v3849
        %3851 = vmatmul.f32.gmra.mxu0 %v3715
        %v3852 = vpop.f32.mrf.mxu0
        %v3853 = vadd.f32 0.0, %v3852
        %3854 = vmatmul.f32.gmra.mxu0 %v3717
        %v3855 = vpop.f32.mrf.mxu0
        %v3856 = vadd.f32 0.0, %v3855
        %3857 = vmatmul.f32.gmra.mxu0 %v3719
        %v3858 = vpop.f32.mrf.mxu0
        %v3859 = vadd.f32 0.0, %v3858
        %3860 = vmatmul.f32.gmra.mxu0 %v3721
        %v3861 = vpop.f32.mrf.mxu0
        %v3862 = vadd.f32 0.0, %v3861
        %3863 = vmatmul.f32.gmra.mxu0 %v3723
        %v3864 = vpop.f32.mrf.mxu0
        %v3865 = vadd.f32 0.0, %v3864
        %3866 = vmatmul.f32.gmra.mxu0 %v3725
        %v3867 = vpop.f32.mrf.mxu0
        %v3868 = vadd.f32 0.0, %v3867
        %3869 = vmatmul.f32.gmra.mxu0 %v3727
        %v3870 = vpop.f32.mrf.mxu0
        %v3871 = vadd.f32 0.0, %v3870
        %3872 = vmatmul.f32.gmra.mxu0 %v3729
        %v3873 = vpop.f32.mrf.mxu0
        %v3874 = vadd.f32 0.0, %v3873
        %3875 = vmatmul.f32.gmra.mxu0 %v3731
        %v3876 = vpop.f32.mrf.mxu0
        %v3877 = vadd.f32 0.0, %v3876
        %3878 = vmatmul.f32.gmra.mxu0 %v3733
        %v3879 = vpop.f32.mrf.mxu0
        %v3880 = vadd.f32 0.0, %v3879
        %3881 = vmatmul.f32.gmra.mxu0 %v3735
        %v3882 = vpop.f32.mrf.mxu0
        %v3883 = vadd.f32 0.0, %v3882
        %3884 = vmatmul.f32.gmra.mxu0 %v3737
        %v3885 = vpop.f32.mrf.mxu0
        %v3886 = vadd.f32 0.0, %v3885
        %3887 = vmatmul.f32.gmra.mxu0 %v3739
        %v3888 = vpop.f32.mrf.mxu0
        %v3889 = vadd.f32 0.0, %v3888
        %3890 = vmatmul.f32.gmra.mxu0 %v3741
        %v3891 = vpop.f32.mrf.mxu0
        %v3892 = vadd.f32 0.0, %v3891
        %3893 = vmatmul.f32.gmra.mxu0 %v3743
        %v3894 = vpop.f32.mrf.mxu0
        %v3895 = vadd.f32 0.0, %v3894
        %3896 = vmatmul.f32.gmra.mxu0 %v3745
        %v3897 = vpop.f32.mrf.mxu0
        %v3898 = vadd.f32 0.0, %v3897
        %3899 = vmatmul.f32.gmra.mxu0 %v3747
        %v3900 = vpop.f32.mrf.mxu0
        %v3901 = vadd.f32 0.0, %v3900
        %3902 = vmatmul.f32.gmra.mxu0 %v3749
        %v3903 = vpop.f32.mrf.mxu0
        %v3904 = vadd.f32 0.0, %v3903
        %3905 = vmatmul.f32.gmra.mxu0 %v3751
        %v3906 = vpop.f32.mrf.mxu0
        %v3907 = vadd.f32 0.0, %v3906
        %3908 = vmatmul.f32.gmra.mxu0 %v3753
        %v3909 = vpop.f32.mrf.mxu0
        %v3910 = vadd.f32 0.0, %v3909
        %3911 = vmatmul.f32.gmra.mxu0 %v3755
        %v3912 = vpop.f32.mrf.mxu0
        %v3913 = vadd.f32 0.0, %v3912
        %3914 = vmatmul.f32.gmra.mxu0 %v3757
        %v3915 = vpop.f32.mrf.mxu0
        %v3916 = vadd.f32 0.0, %v3915
        %3917 = vmatmul.f32.gmra.mxu0 %v3759
        %v3918 = vpop.f32.mrf.mxu0
        %v3919 = vadd.f32 0.0, %v3918
        %3920 = vmatmul.f32.gmra.mxu0 %v3761
        %v3921 = vpop.f32.mrf.mxu0
        %v3922 = vadd.f32 0.0, %v3921
        %3923 = vmatmul.f32.gmra.mxu0 %v3763
        %v3924 = vpop.f32.mrf.mxu0
        %v3925 = vadd.f32 0.0, %v3924
        %3926 = vmatmul.f32.gmra.mxu0 %v3765
        %v3927 = vpop.f32.mrf.mxu0
        %v3928 = vadd.f32 0.0, %v3927
        %3929 = vmatmul.f32.gmra.mxu0 %v3767
        %v3930 = vpop.f32.mrf.mxu0
        %v3931 = vadd.f32 0.0, %v3930
        %3932 = vmatmul.f32.gmra.mxu0 %v3769
        %v3933 = vpop.f32.mrf.mxu0
        %v3934 = vadd.f32 0.0, %v3933
        %3935 = vmatmul.f32.gmra.mxu0 %v3771
        %v3936 = vpop.f32.mrf.mxu0
        %v3937 = vadd.f32 0.0, %v3936
        %3938 = vmatmul.f32.gmra.mxu0 %v3773
        %v3939 = vpop.f32.mrf.mxu0
        %v3940 = vadd.f32 0.0, %v3939
        %3941 = vdwg.mxu0
        %3942 = vmatpush.msra.mxu0 %v2234
        %3943 = vmatpush.msra.mxu0 %v2219
        %3944 = vmatpush.msra.mxu0 %v2204
        %3945 = vmatpush.msra.mxu0 %v2189
        %3946 = vmatpush.msra.mxu0 %v2174
        %3947 = vmatpush.msra.mxu0 %v2159
        %3948 = vmatpush.msra.mxu0 %v2144
        %3949 = vmatpush.msra.mxu0 %v2129
        %3950 = vmatpush.msra.mxu0 %v2114
        %3951 = vmatpush.msra.mxu0 %v2099
        %3952 = vmatpush.msra.mxu0 %v2084
        %3953 = vmatpush.msra.mxu0 %v2069
        %3954 = vmatpush.msra.mxu0 %v2054
        %3955 = vmatpush.msra.mxu0 %v2039
        %3956 = vmatpush.msra.mxu0 %v2024
        %3957 = vmatpush.msra.mxu0 %v2009
        %3958 = vmatmul.f32.gmra.mxu0 %v3676
        %v3959 = vpop.f32.mrf.mxu0
        %v3960 = vadd.f32 %v3793, %v3959
        %3961 = vmatmul.f32.gmra.mxu0 %v3678
        %v3962 = vpop.f32.mrf.mxu0
        %v3963 = vadd.f32 %v3796, %v3962
        %3964 = vmatmul.f32.gmra.mxu0 %v3680
        %v3965 = vpop.f32.mrf.mxu0
        %v3966 = vadd.f32 %v3799, %v3965
        %3967 = vmatmul.f32.gmra.mxu0 %v3682
        %v3968 = vpop.f32.mrf.mxu0
        %v3969 = vadd.f32 %v3802, %v3968
        %3970 = vmatmul.f32.gmra.mxu0 %v3684
        %v3971 = vpop.f32.mrf.mxu0
        %v3972 = vadd.f32 %v3805, %v3971
        %3973 = vmatmul.f32.gmra.mxu0 %v3686
        %v3974 = vpop.f32.mrf.mxu0
        %v3975 = vadd.f32 %v3808, %v3974
        %3976 = vmatmul.f32.gmra.mxu0 %v3688
        %v3977 = vpop.f32.mrf.mxu0
        %v3978 = vadd.f32 %v3811, %v3977
        %3979 = vmatmul.f32.gmra.mxu0 %v3690
        %v3980 = vpop.f32.mrf.mxu0
        %v3981 = vadd.f32 %v3814, %v3980
        %3982 = vmatmul.f32.gmra.mxu0 %v3692
        %v3983 = vpop.f32.mrf.mxu0
        %v3984 = vadd.f32 %v3817, %v3983
        %3985 = vmatmul.f32.gmra.mxu0 %v3694
        %v3986 = vpop.f32.mrf.mxu0
        %v3987 = vadd.f32 %v3820, %v3986
        %3988 = vmatmul.f32.gmra.mxu0 %v3696
        %v3989 = vpop.f32.mrf.mxu0
        %v3990 = vadd.f32 %v3823, %v3989
        %3991 = vmatmul.f32.gmra.mxu0 %v3698
        %v3992 = vpop.f32.mrf.mxu0
        %v3993 = vadd.f32 %v3826, %v3992
        %3994 = vmatmul.f32.gmra.mxu0 %v3700
        %v3995 = vpop.f32.mrf.mxu0
        %v3996 = vadd.f32 %v3829, %v3995
        %3997 = vmatmul.f32.gmra.mxu0 %v3702
        %v3998 = vpop.f32.mrf.mxu0
        %v3999 = vadd.f32 %v3832, %v3998
        %4000 = vmatmul.f32.gmra.mxu0 %v3704
        %v4001 = vpop.f32.mrf.mxu0
        %v4002 = vadd.f32 %v3835, %v4001
        %4003 = vmatmul.f32.gmra.mxu0 %v3706
        %v4004 = vpop.f32.mrf.mxu0
        %v4005 = vadd.f32 %v3838, %v4004
        %4006 = vmatmul.f32.gmra.mxu0 %v3708
        %v4007 = vpop.f32.mrf.mxu0
        %v4008 = vadd.f32 %v3841, %v4007
        %4009 = vmatmul.f32.gmra.mxu0 %v3710
        %v4010 = vpop.f32.mrf.mxu0
        %v4011 = vadd.f32 %v3844, %v4010
        %4012 = vmatmul.f32.gmra.mxu0 %v3712
        %v4013 = vpop.f32.mrf.mxu0
        %v4014 = vadd.f32 %v3847, %v4013
        %4015 = vmatmul.f32.gmra.mxu0 %v3714
        %v4016 = vpop.f32.mrf.mxu0
        %v4017 = vadd.f32 %v3850, %v4016
        %4018 = vmatmul.f32.gmra.mxu0 %v3716
        %v4019 = vpop.f32.mrf.mxu0
        %v4020 = vadd.f32 %v3853, %v4019
        %4021 = vmatmul.f32.gmra.mxu0 %v3718
        %v4022 = vpop.f32.mrf.mxu0
        %v4023 = vadd.f32 %v3856, %v4022
        %4024 = vmatmul.f32.gmra.mxu0 %v3720
        %v4025 = vpop.f32.mrf.mxu0
        %v4026 = vadd.f32 %v3859, %v4025
        %4027 = vmatmul.f32.gmra.mxu0 %v3722
        %v4028 = vpop.f32.mrf.mxu0
        %v4029 = vadd.f32 %v3862, %v4028
        %4030 = vmatmul.f32.gmra.mxu0 %v3724
        %v4031 = vpop.f32.mrf.mxu0
        %v4032 = vadd.f32 %v3865, %v4031
        %4033 = vmatmul.f32.gmra.mxu0 %v3726
        %v4034 = vpop.f32.mrf.mxu0
        %v4035 = vadd.f32 %v3868, %v4034
        %4036 = vmatmul.f32.gmra.mxu0 %v3728
        %v4037 = vpop.f32.mrf.mxu0
        %v4038 = vadd.f32 %v3871, %v4037
        %4039 = vmatmul.f32.gmra.mxu0 %v3730
        %v4040 = vpop.f32.mrf.mxu0
        %v4041 = vadd.f32 %v3874, %v4040
        %4042 = vmatmul.f32.gmra.mxu0 %v3732
        %v4043 = vpop.f32.mrf.mxu0
        %v4044 = vadd.f32 %v3877, %v4043
        %4045 = vmatmul.f32.gmra.mxu0 %v3734
        %v4046 = vpop.f32.mrf.mxu0
        %v4047 = vadd.f32 %v3880, %v4046
        %4048 = vmatmul.f32.gmra.mxu0 %v3736
        %v4049 = vpop.f32.mrf.mxu0
        %v4050 = vadd.f32 %v3883, %v4049
        %4051 = vmatmul.f32.gmra.mxu0 %v3738
        %v4052 = vpop.f32.mrf.mxu0
        %v4053 = vadd.f32 %v3886, %v4052
        %4054 = vmatmul.f32.gmra.mxu0 %v3740
        %v4055 = vpop.f32.mrf.mxu0
        %v4056 = vadd.f32 %v3889, %v4055
        %4057 = vmatmul.f32.gmra.mxu0 %v3742
        %v4058 = vpop.f32.mrf.mxu0
        %v4059 = vadd.f32 %v3892, %v4058
        %4060 = vmatmul.f32.gmra.mxu0 %v3744
        %v4061 = vpop.f32.mrf.mxu0
        %v4062 = vadd.f32 %v3895, %v4061
        %4063 = vmatmul.f32.gmra.mxu0 %v3746
        %v4064 = vpop.f32.mrf.mxu0
        %v4065 = vadd.f32 %v3898, %v4064
        %4066 = vmatmul.f32.gmra.mxu0 %v3748
        %v4067 = vpop.f32.mrf.mxu0
        %v4068 = vadd.f32 %v3901, %v4067
        %4069 = vmatmul.f32.gmra.mxu0 %v3750
        %v4070 = vpop.f32.mrf.mxu0
        %v4071 = vadd.f32 %v3904, %v4070
        %4072 = vmatmul.f32.gmra.mxu0 %v3752
        %v4073 = vpop.f32.mrf.mxu0
        %v4074 = vadd.f32 %v3907, %v4073
        %4075 = vmatmul.f32.gmra.mxu0 %v3754
        %v4076 = vpop.f32.mrf.mxu0
        %v4077 = vadd.f32 %v3910, %v4076
        %4078 = vmatmul.f32.gmra.mxu0 %v3756
        %v4079 = vpop.f32.mrf.mxu0
        %v4080 = vadd.f32 %v3913, %v4079
        %4081 = vmatmul.f32.gmra.mxu0 %v3758
        %v4082 = vpop.f32.mrf.mxu0
        %v4083 = vadd.f32 %v3916, %v4082
        %4084 = vmatmul.f32.gmra.mxu0 %v3760
        %v4085 = vpop.f32.mrf.mxu0
        %v4086 = vadd.f32 %v3919, %v4085
        %4087 = vmatmul.f32.gmra.mxu0 %v3762
        %v4088 = vpop.f32.mrf.mxu0
        %v4089 = vadd.f32 %v3922, %v4088
        %4090 = vmatmul.f32.gmra.mxu0 %v3764
        %v4091 = vpop.f32.mrf.mxu0
        %v4092 = vadd.f32 %v3925, %v4091
        %4093 = vmatmul.f32.gmra.mxu0 %v3766
        %v4094 = vpop.f32.mrf.mxu0
        %v4095 = vadd.f32 %v3928, %v4094
        %4096 = vmatmul.f32.gmra.mxu0 %v3768
        %v4097 = vpop.f32.mrf.mxu0
        %v4098 = vadd.f32 %v3931, %v4097
        %4099 = vmatmul.f32.gmra.mxu0 %v3770
        %v4100 = vpop.f32.mrf.mxu0
        %v4101 = vadd.f32 %v3934, %v4100
        %4102 = vmatmul.f32.gmra.mxu0 %v3772
        %v4103 = vpop.f32.mrf.mxu0
        %v4104 = vadd.f32 %v3937, %v4103
        %4105 = vmatmul.f32.gmra.mxu0 %v3774
        %v4106 = vpop.f32.mrf.mxu0
        %v4107 = vadd.f32 %v3940, %v4106
        %4108 = vdwg.mxu0
        %4109 = vmatpush.msra.mxu0 %v2474
        %4110 = vmatpush.msra.mxu0 %v2459
        %4111 = vmatpush.msra.mxu0 %v2444
        %4112 = vmatpush.msra.mxu0 %v2429
        %4113 = vmatpush.msra.mxu0 %v2414
        %4114 = vmatpush.msra.mxu0 %v2399
        %4115 = vmatpush.msra.mxu0 %v2384
        %4116 = vmatpush.msra.mxu0 %v2369
        %4117 = vmatpush.msra.mxu0 %v2354
        %4118 = vmatpush.msra.mxu0 %v2339
        %4119 = vmatpush.msra.mxu0 %v2324
        %4120 = vmatpush.msra.mxu0 %v2309
        %4121 = vmatpush.msra.mxu0 %v2294
        %4122 = vmatpush.msra.mxu0 %v2279
        %4123 = vmatpush.msra.mxu0 %v2264
        %4124 = vmatpush.msra.mxu0 %v2249
        %4125 = vmatmul.f32.gmra.mxu0 %v3675
        %v4126 = vpop.f32.mrf.mxu0
        %v4127 = vadd.f32 0.0, %v4126
        %4128 = vmatmul.f32.gmra.mxu0 %v3677
        %v4129 = vpop.f32.mrf.mxu0
        %v4130 = vadd.f32 0.0, %v4129
        %4131 = vmatmul.f32.gmra.mxu0 %v3679
        %v4132 = vpop.f32.mrf.mxu0
        %v4133 = vadd.f32 0.0, %v4132
        %4134 = vmatmul.f32.gmra.mxu0 %v3681
        %v4135 = vpop.f32.mrf.mxu0
        %v4136 = vadd.f32 0.0, %v4135
        %4137 = vmatmul.f32.gmra.mxu0 %v3683
        %v4138 = vpop.f32.mrf.mxu0
        %v4139 = vadd.f32 0.0, %v4138
        %4140 = vmatmul.f32.gmra.mxu0 %v3685
        %v4141 = vpop.f32.mrf.mxu0
        %v4142 = vadd.f32 0.0, %v4141
        %4143 = vmatmul.f32.gmra.mxu0 %v3687
        %v4144 = vpop.f32.mrf.mxu0
        %v4145 = vadd.f32 0.0, %v4144
        %4146 = vmatmul.f32.gmra.mxu0 %v3689
        %v4147 = vpop.f32.mrf.mxu0
        %v4148 = vadd.f32 0.0, %v4147
        %4149 = vmatmul.f32.gmra.mxu0 %v3691
        %v4150 = vpop.f32.mrf.mxu0
        %v4151 = vadd.f32 0.0, %v4150
        %4152 = vmatmul.f32.gmra.mxu0 %v3693
        %v4153 = vpop.f32.mrf.mxu0
        %v4154 = vadd.f32 0.0, %v4153
        %4155 = vmatmul.f32.gmra.mxu0 %v3695
        %v4156 = vpop.f32.mrf.mxu0
        %v4157 = vadd.f32 0.0, %v4156
        %4158 = vmatmul.f32.gmra.mxu0 %v3697
        %v4159 = vpop.f32.mrf.mxu0
        %v4160 = vadd.f32 0.0, %v4159
        %4161 = vmatmul.f32.gmra.mxu0 %v3699
        %v4162 = vpop.f32.mrf.mxu0
        %v4163 = vadd.f32 0.0, %v4162
        %4164 = vmatmul.f32.gmra.mxu0 %v3701
        %v4165 = vpop.f32.mrf.mxu0
        %v4166 = vadd.f32 0.0, %v4165
        %4167 = vmatmul.f32.gmra.mxu0 %v3703
        %v4168 = vpop.f32.mrf.mxu0
        %v4169 = vadd.f32 0.0, %v4168
        %4170 = vmatmul.f32.gmra.mxu0 %v3705
        %v4171 = vpop.f32.mrf.mxu0
        %v4172 = vadd.f32 0.0, %v4171
        %4173 = vmatmul.f32.gmra.mxu0 %v3707
        %v4174 = vpop.f32.mrf.mxu0
        %v4175 = vadd.f32 0.0, %v4174
        %4176 = vmatmul.f32.gmra.mxu0 %v3709
        %v4177 = vpop.f32.mrf.mxu0
        %v4178 = vadd.f32 0.0, %v4177
        %4179 = vmatmul.f32.gmra.mxu0 %v3711
        %v4180 = vpop.f32.mrf.mxu0
        %v4181 = vadd.f32 0.0, %v4180
        %4182 = vmatmul.f32.gmra.mxu0 %v3713
        %v4183 = vpop.f32.mrf.mxu0
        %v4184 = vadd.f32 0.0, %v4183
        %4185 = vmatmul.f32.gmra.mxu0 %v3715
        %v4186 = vpop.f32.mrf.mxu0
        %v4187 = vadd.f32 0.0, %v4186
        %4188 = vmatmul.f32.gmra.mxu0 %v3717
        %v4189 = vpop.f32.mrf.mxu0
        %v4190 = vadd.f32 0.0, %v4189
        %4191 = vmatmul.f32.gmra.mxu0 %v3719
        %v4192 = vpop.f32.mrf.mxu0
        %v4193 = vadd.f32 0.0, %v4192
        %4194 = vmatmul.f32.gmra.mxu0 %v3721
        %v4195 = vpop.f32.mrf.mxu0
        %v4196 = vadd.f32 0.0, %v4195
        %4197 = vmatmul.f32.gmra.mxu0 %v3723
        %v4198 = vpop.f32.mrf.mxu0
        %v4199 = vadd.f32 0.0, %v4198
        %4200 = vmatmul.f32.gmra.mxu0 %v3725
        %v4201 = vpop.f32.mrf.mxu0
        %v4202 = vadd.f32 0.0, %v4201
        %4203 = vmatmul.f32.gmra.mxu0 %v3727
        %v4204 = vpop.f32.mrf.mxu0
        %v4205 = vadd.f32 0.0, %v4204
        %4206 = vmatmul.f32.gmra.mxu0 %v3729
        %v4207 = vpop.f32.mrf.mxu0
        %v4208 = vadd.f32 0.0, %v4207
        %4209 = vmatmul.f32.gmra.mxu0 %v3731
        %v4210 = vpop.f32.mrf.mxu0
        %v4211 = vadd.f32 0.0, %v4210
        %4212 = vmatmul.f32.gmra.mxu0 %v3733
        %v4213 = vpop.f32.mrf.mxu0
        %v4214 = vadd.f32 0.0, %v4213
        %4215 = vmatmul.f32.gmra.mxu0 %v3735
        %v4216 = vpop.f32.mrf.mxu0
        %v4217 = vadd.f32 0.0, %v4216
        %4218 = vmatmul.f32.gmra.mxu0 %v3737
        %v4219 = vpop.f32.mrf.mxu0
        %v4220 = vadd.f32 0.0, %v4219
        %4221 = vmatmul.f32.gmra.mxu0 %v3739
        %v4222 = vpop.f32.mrf.mxu0
        %v4223 = vadd.f32 0.0, %v4222
        %4224 = vmatmul.f32.gmra.mxu0 %v3741
        %v4225 = vpop.f32.mrf.mxu0
        %v4226 = vadd.f32 0.0, %v4225
        %4227 = vmatmul.f32.gmra.mxu0 %v3743
        %v4228 = vpop.f32.mrf.mxu0
        %v4229 = vadd.f32 0.0, %v4228
        %4230 = vmatmul.f32.gmra.mxu0 %v3745
        %v4231 = vpop.f32.mrf.mxu0
        %v4232 = vadd.f32 0.0, %v4231
        %4233 = vmatmul.f32.gmra.mxu0 %v3747
        %v4234 = vpop.f32.mrf.mxu0
        %v4235 = vadd.f32 0.0, %v4234
        %4236 = vmatmul.f32.gmra.mxu0 %v3749
        %v4237 = vpop.f32.mrf.mxu0
        %v4238 = vadd.f32 0.0, %v4237
        %4239 = vmatmul.f32.gmra.mxu0 %v3751
        %v4240 = vpop.f32.mrf.mxu0
        %v4241 = vadd.f32 0.0, %v4240
        %4242 = vmatmul.f32.gmra.mxu0 %v3753
        %v4243 = vpop.f32.mrf.mxu0
        %v4244 = vadd.f32 0.0, %v4243
        %4245 = vmatmul.f32.gmra.mxu0 %v3755
        %v4246 = vpop.f32.mrf.mxu0
        %v4247 = vadd.f32 0.0, %v4246
        %4248 = vmatmul.f32.gmra.mxu0 %v3757
        %v4249 = vpop.f32.mrf.mxu0
        %v4250 = vadd.f32 0.0, %v4249
        %4251 = vmatmul.f32.gmra.mxu0 %v3759
        %v4252 = vpop.f32.mrf.mxu0
        %v4253 = vadd.f32 0.0, %v4252
        %4254 = vmatmul.f32.gmra.mxu0 %v3761
        %v4255 = vpop.f32.mrf.mxu0
        %v4256 = vadd.f32 0.0, %v4255
        %4257 = vmatmul.f32.gmra.mxu0 %v3763
        %v4258 = vpop.f32.mrf.mxu0
        %v4259 = vadd.f32 0.0, %v4258
        %4260 = vmatmul.f32.gmra.mxu0 %v3765
        %v4261 = vpop.f32.mrf.mxu0
        %v4262 = vadd.f32 0.0, %v4261
        %4263 = vmatmul.f32.gmra.mxu0 %v3767
        %v4264 = vpop.f32.mrf.mxu0
        %v4265 = vadd.f32 0.0, %v4264
        %4266 = vmatmul.f32.gmra.mxu0 %v3769
        %v4267 = vpop.f32.mrf.mxu0
        %v4268 = vadd.f32 0.0, %v4267
        %4269 = vmatmul.f32.gmra.mxu0 %v3771
        %v4270 = vpop.f32.mrf.mxu0
        %v4271 = vadd.f32 0.0, %v4270
        %4272 = vmatmul.f32.gmra.mxu0 %v3773
        %v4273 = vpop.f32.mrf.mxu0
        %v4274 = vadd.f32 0.0, %v4273
        %4275 = vdwg.mxu0
        %4276 = vmatpush.msra.mxu0 %v2714
        %4277 = vmatpush.msra.mxu0 %v2699
        %4278 = vmatpush.msra.mxu0 %v2684
        %4279 = vmatpush.msra.mxu0 %v2669
        %4280 = vmatpush.msra.mxu0 %v2654
        %4281 = vmatpush.msra.mxu0 %v2639
        %4282 = vmatpush.msra.mxu0 %v2624
        %4283 = vmatpush.msra.mxu0 %v2609
        %4284 = vmatpush.msra.mxu0 %v2594
        %4285 = vmatpush.msra.mxu0 %v2579
        %4286 = vmatpush.msra.mxu0 %v2564
        %4287 = vmatpush.msra.mxu0 %v2549
        %4288 = vmatpush.msra.mxu0 %v2534
        %4289 = vmatpush.msra.mxu0 %v2519
        %4290 = vmatpush.msra.mxu0 %v2504
        %4291 = vmatpush.msra.mxu0 %v2489
        %4292 = vmatmul.f32.gmra.mxu0 %v3676
        %v4293 = vpop.f32.mrf.mxu0
        %v4294 = vadd.f32 %v4127, %v4293
        %4295 = vmatmul.f32.gmra.mxu0 %v3678
        %v4296 = vpop.f32.mrf.mxu0
        %v4297 = vadd.f32 %v4130, %v4296
        %4298 = vmatmul.f32.gmra.mxu0 %v3680
        %v4299 = vpop.f32.mrf.mxu0
        %v4300 = vadd.f32 %v4133, %v4299
        %4301 = vmatmul.f32.gmra.mxu0 %v3682
        %v4302 = vpop.f32.mrf.mxu0
        %v4303 = vadd.f32 %v4136, %v4302
        %4304 = vmatmul.f32.gmra.mxu0 %v3684
        %v4305 = vpop.f32.mrf.mxu0
        %v4306 = vadd.f32 %v4139, %v4305
        %4307 = vmatmul.f32.gmra.mxu0 %v3686
        %v4308 = vpop.f32.mrf.mxu0
        %v4309 = vadd.f32 %v4142, %v4308
        %4310 = vmatmul.f32.gmra.mxu0 %v3688
        %v4311 = vpop.f32.mrf.mxu0
        %v4312 = vadd.f32 %v4145, %v4311
        %4313 = vmatmul.f32.gmra.mxu0 %v3690
        %v4314 = vpop.f32.mrf.mxu0
        %v4315 = vadd.f32 %v4148, %v4314
        %4316 = vmatmul.f32.gmra.mxu0 %v3692
        %v4317 = vpop.f32.mrf.mxu0
        %v4318 = vadd.f32 %v4151, %v4317
        %4319 = vmatmul.f32.gmra.mxu0 %v3694
        %v4320 = vpop.f32.mrf.mxu0
        %v4321 = vadd.f32 %v4154, %v4320
        %4322 = vmatmul.f32.gmra.mxu0 %v3696
        %v4323 = vpop.f32.mrf.mxu0
        %v4324 = vadd.f32 %v4157, %v4323
        %4325 = vmatmul.f32.gmra.mxu0 %v3698
        %v4326 = vpop.f32.mrf.mxu0
        %v4327 = vadd.f32 %v4160, %v4326
        %4328 = vmatmul.f32.gmra.mxu0 %v3700
        %v4329 = vpop.f32.mrf.mxu0
        %v4330 = vadd.f32 %v4163, %v4329
        %4331 = vmatmul.f32.gmra.mxu0 %v3702
        %v4332 = vpop.f32.mrf.mxu0
        %v4333 = vadd.f32 %v4166, %v4332
        %4334 = vmatmul.f32.gmra.mxu0 %v3704
        %v4335 = vpop.f32.mrf.mxu0
        %v4336 = vadd.f32 %v4169, %v4335
        %4337 = vmatmul.f32.gmra.mxu0 %v3706
        %v4338 = vpop.f32.mrf.mxu0
        %v4339 = vadd.f32 %v4172, %v4338
        %4340 = vmatmul.f32.gmra.mxu0 %v3708
        %v4341 = vpop.f32.mrf.mxu0
        %v4342 = vadd.f32 %v4175, %v4341
        %4343 = vmatmul.f32.gmra.mxu0 %v3710
        %v4344 = vpop.f32.mrf.mxu0
        %v4345 = vadd.f32 %v4178, %v4344
        %4346 = vmatmul.f32.gmra.mxu0 %v3712
        %v4347 = vpop.f32.mrf.mxu0
        %v4348 = vadd.f32 %v4181, %v4347
        %4349 = vmatmul.f32.gmra.mxu0 %v3714
        %v4350 = vpop.f32.mrf.mxu0
        %v4351 = vadd.f32 %v4184, %v4350
        %4352 = vmatmul.f32.gmra.mxu0 %v3716
        %v4353 = vpop.f32.mrf.mxu0
        %v4354 = vadd.f32 %v4187, %v4353
        %4355 = vmatmul.f32.gmra.mxu0 %v3718
        %v4356 = vpop.f32.mrf.mxu0
        %v4357 = vadd.f32 %v4190, %v4356
        %4358 = vmatmul.f32.gmra.mxu0 %v3720
        %v4359 = vpop.f32.mrf.mxu0
        %v4360 = vadd.f32 %v4193, %v4359
        %4361 = vmatmul.f32.gmra.mxu0 %v3722
        %v4362 = vpop.f32.mrf.mxu0
        %v4363 = vadd.f32 %v4196, %v4362
        %4364 = vmatmul.f32.gmra.mxu0 %v3724
        %v4365 = vpop.f32.mrf.mxu0
        %v4366 = vadd.f32 %v4199, %v4365
        %4367 = vmatmul.f32.gmra.mxu0 %v3726
        %v4368 = vpop.f32.mrf.mxu0
        %v4369 = vadd.f32 %v4202, %v4368
        %4370 = vmatmul.f32.gmra.mxu0 %v3728
        %v4371 = vpop.f32.mrf.mxu0
        %v4372 = vadd.f32 %v4205, %v4371
        %4373 = vmatmul.f32.gmra.mxu0 %v3730
        %v4374 = vpop.f32.mrf.mxu0
        %v4375 = vadd.f32 %v4208, %v4374
        %4376 = vmatmul.f32.gmra.mxu0 %v3732
        %v4377 = vpop.f32.mrf.mxu0
        %v4378 = vadd.f32 %v4211, %v4377
        %4379 = vmatmul.f32.gmra.mxu0 %v3734
        %v4380 = vpop.f32.mrf.mxu0
        %v4381 = vadd.f32 %v4214, %v4380
        %4382 = vmatmul.f32.gmra.mxu0 %v3736
        %v4383 = vpop.f32.mrf.mxu0
        %v4384 = vadd.f32 %v4217, %v4383
        %4385 = vmatmul.f32.gmra.mxu0 %v3738
        %v4386 = vpop.f32.mrf.mxu0
        %v4387 = vadd.f32 %v4220, %v4386
        %4388 = vmatmul.f32.gmra.mxu0 %v3740
        %v4389 = vpop.f32.mrf.mxu0
        %v4390 = vadd.f32 %v4223, %v4389
        %4391 = vmatmul.f32.gmra.mxu0 %v3742
        %v4392 = vpop.f32.mrf.mxu0
        %v4393 = vadd.f32 %v4226, %v4392
        %4394 = vmatmul.f32.gmra.mxu0 %v3744
        %v4395 = vpop.f32.mrf.mxu0
        %v4396 = vadd.f32 %v4229, %v4395
        %4397 = vmatmul.f32.gmra.mxu0 %v3746
        %v4398 = vpop.f32.mrf.mxu0
        %v4399 = vadd.f32 %v4232, %v4398
        %4400 = vmatmul.f32.gmra.mxu0 %v3748
        %v4401 = vpop.f32.mrf.mxu0
        %v4402 = vadd.f32 %v4235, %v4401
        %4403 = vmatmul.f32.gmra.mxu0 %v3750
        %v4404 = vpop.f32.mrf.mxu0
        %v4405 = vadd.f32 %v4238, %v4404
        %4406 = vmatmul.f32.gmra.mxu0 %v3752
        %v4407 = vpop.f32.mrf.mxu0
        %v4408 = vadd.f32 %v4241, %v4407
        %4409 = vmatmul.f32.gmra.mxu0 %v3754
        %v4410 = vpop.f32.mrf.mxu0
        %v4411 = vadd.f32 %v4244, %v4410
        %4412 = vmatmul.f32.gmra.mxu0 %v3756
        %v4413 = vpop.f32.mrf.mxu0
        %v4414 = vadd.f32 %v4247, %v4413
        %4415 = vmatmul.f32.gmra.mxu0 %v3758
        %v4416 = vpop.f32.mrf.mxu0
        %v4417 = vadd.f32 %v4250, %v4416
        %4418 = vmatmul.f32.gmra.mxu0 %v3760
        %v4419 = vpop.f32.mrf.mxu0
        %v4420 = vadd.f32 %v4253, %v4419
        %4421 = vmatmul.f32.gmra.mxu0 %v3762
        %v4422 = vpop.f32.mrf.mxu0
        %v4423 = vadd.f32 %v4256, %v4422
        %4424 = vmatmul.f32.gmra.mxu0 %v3764
        %v4425 = vpop.f32.mrf.mxu0
        %v4426 = vadd.f32 %v4259, %v4425
        %4427 = vmatmul.f32.gmra.mxu0 %v3766
        %v4428 = vpop.f32.mrf.mxu0
        %v4429 = vadd.f32 %v4262, %v4428
        %4430 = vmatmul.f32.gmra.mxu0 %v3768
        %v4431 = vpop.f32.mrf.mxu0
        %v4432 = vadd.f32 %v4265, %v4431
        %4433 = vmatmul.f32.gmra.mxu0 %v3770
        %v4434 = vpop.f32.mrf.mxu0
        %v4435 = vadd.f32 %v4268, %v4434
        %4436 = vmatmul.f32.gmra.mxu0 %v3772
        %v4437 = vpop.f32.mrf.mxu0
        %v4438 = vadd.f32 %v4271, %v4437
        %4439 = vmatmul.f32.gmra.mxu0 %v3774
        %v4440 = vpop.f32.mrf.mxu0
        %v4441 = vadd.f32 %v4274, %v4440
        %4442 = vdwg.mxu0
        %4443 = vmatpush.msra.mxu0 %v2954
        %4444 = vmatpush.msra.mxu0 %v2939
        %4445 = vmatpush.msra.mxu0 %v2924
        %4446 = vmatpush.msra.mxu0 %v2909
        %4447 = vmatpush.msra.mxu0 %v2894
        %4448 = vmatpush.msra.mxu0 %v2879
        %4449 = vmatpush.msra.mxu0 %v2864
        %4450 = vmatpush.msra.mxu0 %v2849
        %4451 = vmatpush.msra.mxu0 %v2834
        %4452 = vmatpush.msra.mxu0 %v2819
        %4453 = vmatpush.msra.mxu0 %v2804
        %4454 = vmatpush.msra.mxu0 %v2789
        %4455 = vmatpush.msra.mxu0 %v2774
        %4456 = vmatpush.msra.mxu0 %v2759
        %4457 = vmatpush.msra.mxu0 %v2744
        %4458 = vmatpush.msra.mxu0 %v2729
        %4459 = vmatmul.f32.gmra.mxu0 %v3675
        %v4460 = vpop.f32.mrf.mxu0
        %v4461 = vadd.f32 0.0, %v4460
        %4462 = vmatmul.f32.gmra.mxu0 %v3677
        %v4463 = vpop.f32.mrf.mxu0
        %v4464 = vadd.f32 0.0, %v4463
        %4465 = vmatmul.f32.gmra.mxu0 %v3679
        %v4466 = vpop.f32.mrf.mxu0
        %v4467 = vadd.f32 0.0, %v4466
        %4468 = vmatmul.f32.gmra.mxu0 %v3681
        %v4469 = vpop.f32.mrf.mxu0
        %v4470 = vadd.f32 0.0, %v4469
        %4471 = vmatmul.f32.gmra.mxu0 %v3683
        %v4472 = vpop.f32.mrf.mxu0
        %v4473 = vadd.f32 0.0, %v4472
        %4474 = vmatmul.f32.gmra.mxu0 %v3685
        %v4475 = vpop.f32.mrf.mxu0
        %v4476 = vadd.f32 0.0, %v4475
        %4477 = vmatmul.f32.gmra.mxu0 %v3687
        %v4478 = vpop.f32.mrf.mxu0
        %v4479 = vadd.f32 0.0, %v4478
        %4480 = vmatmul.f32.gmra.mxu0 %v3689
        %v4481 = vpop.f32.mrf.mxu0
        %v4482 = vadd.f32 0.0, %v4481
        %4483 = vmatmul.f32.gmra.mxu0 %v3691
        %v4484 = vpop.f32.mrf.mxu0
        %v4485 = vadd.f32 0.0, %v4484
        %4486 = vmatmul.f32.gmra.mxu0 %v3693
        %v4487 = vpop.f32.mrf.mxu0
        %v4488 = vadd.f32 0.0, %v4487
        %4489 = vmatmul.f32.gmra.mxu0 %v3695
        %v4490 = vpop.f32.mrf.mxu0
        %v4491 = vadd.f32 0.0, %v4490
        %4492 = vmatmul.f32.gmra.mxu0 %v3697
        %v4493 = vpop.f32.mrf.mxu0
        %v4494 = vadd.f32 0.0, %v4493
        %4495 = vmatmul.f32.gmra.mxu0 %v3699
        %v4496 = vpop.f32.mrf.mxu0
        %v4497 = vadd.f32 0.0, %v4496
        %4498 = vmatmul.f32.gmra.mxu0 %v3701
        %v4499 = vpop.f32.mrf.mxu0
        %v4500 = vadd.f32 0.0, %v4499
        %4501 = vmatmul.f32.gmra.mxu0 %v3703
        %v4502 = vpop.f32.mrf.mxu0
        %v4503 = vadd.f32 0.0, %v4502
        %4504 = vmatmul.f32.gmra.mxu0 %v3705
        %v4505 = vpop.f32.mrf.mxu0
        %v4506 = vadd.f32 0.0, %v4505
        %4507 = vmatmul.f32.gmra.mxu0 %v3707
        %v4508 = vpop.f32.mrf.mxu0
        %v4509 = vadd.f32 0.0, %v4508
        %4510 = vmatmul.f32.gmra.mxu0 %v3709
        %v4511 = vpop.f32.mrf.mxu0
        %v4512 = vadd.f32 0.0, %v4511
        %4513 = vmatmul.f32.gmra.mxu0 %v3711
        %v4514 = vpop.f32.mrf.mxu0
        %v4515 = vadd.f32 0.0, %v4514
        %4516 = vmatmul.f32.gmra.mxu0 %v3713
        %v4517 = vpop.f32.mrf.mxu0
        %v4518 = vadd.f32 0.0, %v4517
        %4519 = vmatmul.f32.gmra.mxu0 %v3715
        %v4520 = vpop.f32.mrf.mxu0
        %v4521 = vadd.f32 0.0, %v4520
        %4522 = vmatmul.f32.gmra.mxu0 %v3717
        %v4523 = vpop.f32.mrf.mxu0
        %v4524 = vadd.f32 0.0, %v4523
        %4525 = vmatmul.f32.gmra.mxu0 %v3719
        %v4526 = vpop.f32.mrf.mxu0
        %v4527 = vadd.f32 0.0, %v4526
        %4528 = vmatmul.f32.gmra.mxu0 %v3721
        %v4529 = vpop.f32.mrf.mxu0
        %v4530 = vadd.f32 0.0, %v4529
        %4531 = vmatmul.f32.gmra.mxu0 %v3723
        %v4532 = vpop.f32.mrf.mxu0
        %v4533 = vadd.f32 0.0, %v4532
        %4534 = vmatmul.f32.gmra.mxu0 %v3725
        %v4535 = vpop.f32.mrf.mxu0
        %v4536 = vadd.f32 0.0, %v4535
        %4537 = vmatmul.f32.gmra.mxu0 %v3727
        %v4538 = vpop.f32.mrf.mxu0
        %v4539 = vadd.f32 0.0, %v4538
        %4540 = vmatmul.f32.gmra.mxu0 %v3729
        %v4541 = vpop.f32.mrf.mxu0
        %v4542 = vadd.f32 0.0, %v4541
        %4543 = vmatmul.f32.gmra.mxu0 %v3731
        %v4544 = vpop.f32.mrf.mxu0
        %v4545 = vadd.f32 0.0, %v4544
        %4546 = vmatmul.f32.gmra.mxu0 %v3733
        %v4547 = vpop.f32.mrf.mxu0
        %v4548 = vadd.f32 0.0, %v4547
        %4549 = vmatmul.f32.gmra.mxu0 %v3735
        %v4550 = vpop.f32.mrf.mxu0
        %v4551 = vadd.f32 0.0, %v4550
        %4552 = vmatmul.f32.gmra.mxu0 %v3737
        %v4553 = vpop.f32.mrf.mxu0
        %v4554 = vadd.f32 0.0, %v4553
        %4555 = vmatmul.f32.gmra.mxu0 %v3739
        %v4556 = vpop.f32.mrf.mxu0
        %v4557 = vadd.f32 0.0, %v4556
        %4558 = vmatmul.f32.gmra.mxu0 %v3741
        %v4559 = vpop.f32.mrf.mxu0
        %v4560 = vadd.f32 0.0, %v4559
        %4561 = vmatmul.f32.gmra.mxu0 %v3743
        %v4562 = vpop.f32.mrf.mxu0
        %v4563 = vadd.f32 0.0, %v4562
        %4564 = vmatmul.f32.gmra.mxu0 %v3745
        %v4565 = vpop.f32.mrf.mxu0
        %v4566 = vadd.f32 0.0, %v4565
        %4567 = vmatmul.f32.gmra.mxu0 %v3747
        %v4568 = vpop.f32.mrf.mxu0
        %v4569 = vadd.f32 0.0, %v4568
        %4570 = vmatmul.f32.gmra.mxu0 %v3749
        %v4571 = vpop.f32.mrf.mxu0
        %v4572 = vadd.f32 0.0, %v4571
        %4573 = vmatmul.f32.gmra.mxu0 %v3751
        %v4574 = vpop.f32.mrf.mxu0
        %v4575 = vadd.f32 0.0, %v4574
        %4576 = vmatmul.f32.gmra.mxu0 %v3753
        %v4577 = vpop.f32.mrf.mxu0
        %v4578 = vadd.f32 0.0, %v4577
        %4579 = vmatmul.f32.gmra.mxu0 %v3755
        %v4580 = vpop.f32.mrf.mxu0
        %v4581 = vadd.f32 0.0, %v4580
        %4582 = vmatmul.f32.gmra.mxu0 %v3757
        %v4583 = vpop.f32.mrf.mxu0
        %v4584 = vadd.f32 0.0, %v4583
        %4585 = vmatmul.f32.gmra.mxu0 %v3759
        %v4586 = vpop.f32.mrf.mxu0
        %v4587 = vadd.f32 0.0, %v4586
        %4588 = vmatmul.f32.gmra.mxu0 %v3761
        %v4589 = vpop.f32.mrf.mxu0
        %v4590 = vadd.f32 0.0, %v4589
        %4591 = vmatmul.f32.gmra.mxu0 %v3763
        %v4592 = vpop.f32.mrf.mxu0
        %v4593 = vadd.f32 0.0, %v4592
        %4594 = vmatmul.f32.gmra.mxu0 %v3765
        %v4595 = vpop.f32.mrf.mxu0
        %v4596 = vadd.f32 0.0, %v4595
        %4597 = vmatmul.f32.gmra.mxu0 %v3767
        %v4598 = vpop.f32.mrf.mxu0
        %v4599 = vadd.f32 0.0, %v4598
        %4600 = vmatmul.f32.gmra.mxu0 %v3769
        %v4601 = vpop.f32.mrf.mxu0
        %v4602 = vadd.f32 0.0, %v4601
        %4603 = vmatmul.f32.gmra.mxu0 %v3771
        %v4604 = vpop.f32.mrf.mxu0
        %v4605 = vadd.f32 0.0, %v4604
        %4606 = vmatmul.f32.gmra.mxu0 %v3773
        %v4607 = vpop.f32.mrf.mxu0
        %v4608 = vadd.f32 0.0, %v4607
        %4609 = vdwg.mxu0
        %4610 = vmatpush.msra.mxu0 %v3194
        %4611 = vmatpush.msra.mxu0 %v3179
        %4612 = vmatpush.msra.mxu0 %v3164
        %4613 = vmatpush.msra.mxu0 %v3149
        %4614 = vmatpush.msra.mxu0 %v3134
        %4615 = vmatpush.msra.mxu0 %v3119
        %4616 = vmatpush.msra.mxu0 %v3104
        %4617 = vmatpush.msra.mxu0 %v3089
        %4618 = vmatpush.msra.mxu0 %v3074
        %4619 = vmatpush.msra.mxu0 %v3059
        %4620 = vmatpush.msra.mxu0 %v3044
        %4621 = vmatpush.msra.mxu0 %v3029
        %4622 = vmatpush.msra.mxu0 %v3014
        %4623 = vmatpush.msra.mxu0 %v2999
        %4624 = vmatpush.msra.mxu0 %v2984
        %4625 = vmatpush.msra.mxu0 %v2969
        %4626 = vmatmul.f32.gmra.mxu0 %v3676
        %v4627 = vpop.f32.mrf.mxu0
        %v4628 = vadd.f32 %v4461, %v4627
        %4629 = vmatmul.f32.gmra.mxu0 %v3678
        %v4630 = vpop.f32.mrf.mxu0
        %v4631 = vadd.f32 %v4464, %v4630
        %4632 = vmatmul.f32.gmra.mxu0 %v3680
        %v4633 = vpop.f32.mrf.mxu0
        %v4634 = vadd.f32 %v4467, %v4633
        %4635 = vmatmul.f32.gmra.mxu0 %v3682
        %v4636 = vpop.f32.mrf.mxu0
        %v4637 = vadd.f32 %v4470, %v4636
        %4638 = vmatmul.f32.gmra.mxu0 %v3684
        %v4639 = vpop.f32.mrf.mxu0
        %v4640 = vadd.f32 %v4473, %v4639
        %4641 = vmatmul.f32.gmra.mxu0 %v3686
        %v4642 = vpop.f32.mrf.mxu0
        %v4643 = vadd.f32 %v4476, %v4642
        %4644 = vmatmul.f32.gmra.mxu0 %v3688
        %v4645 = vpop.f32.mrf.mxu0
        %v4646 = vadd.f32 %v4479, %v4645
        %4647 = vmatmul.f32.gmra.mxu0 %v3690
        %v4648 = vpop.f32.mrf.mxu0
        %v4649 = vadd.f32 %v4482, %v4648
        %4650 = vmatmul.f32.gmra.mxu0 %v3692
        %v4651 = vpop.f32.mrf.mxu0
        %v4652 = vadd.f32 %v4485, %v4651
        %4653 = vmatmul.f32.gmra.mxu0 %v3694
        %v4654 = vpop.f32.mrf.mxu0
        %v4655 = vadd.f32 %v4488, %v4654
        %4656 = vmatmul.f32.gmra.mxu0 %v3696
        %v4657 = vpop.f32.mrf.mxu0
        %v4658 = vadd.f32 %v4491, %v4657
        %4659 = vmatmul.f32.gmra.mxu0 %v3698
        %v4660 = vpop.f32.mrf.mxu0
        %v4661 = vadd.f32 %v4494, %v4660
        %4662 = vmatmul.f32.gmra.mxu0 %v3700
        %v4663 = vpop.f32.mrf.mxu0
        %v4664 = vadd.f32 %v4497, %v4663
        %4665 = vmatmul.f32.gmra.mxu0 %v3702
        %v4666 = vpop.f32.mrf.mxu0
        %v4667 = vadd.f32 %v4500, %v4666
        %4668 = vmatmul.f32.gmra.mxu0 %v3704
        %v4669 = vpop.f32.mrf.mxu0
        %v4670 = vadd.f32 %v4503, %v4669
        %4671 = vmatmul.f32.gmra.mxu0 %v3706
        %v4672 = vpop.f32.mrf.mxu0
        %v4673 = vadd.f32 %v4506, %v4672
        %4674 = vmatmul.f32.gmra.mxu0 %v3708
        %v4675 = vpop.f32.mrf.mxu0
        %v4676 = vadd.f32 %v4509, %v4675
        %4677 = vmatmul.f32.gmra.mxu0 %v3710
        %v4678 = vpop.f32.mrf.mxu0
        %v4679 = vadd.f32 %v4512, %v4678
        %4680 = vmatmul.f32.gmra.mxu0 %v3712
        %v4681 = vpop.f32.mrf.mxu0
        %v4682 = vadd.f32 %v4515, %v4681
        %4683 = vmatmul.f32.gmra.mxu0 %v3714
        %v4684 = vpop.f32.mrf.mxu0
        %v4685 = vadd.f32 %v4518, %v4684
        %4686 = vmatmul.f32.gmra.mxu0 %v3716
        %v4687 = vpop.f32.mrf.mxu0
        %v4688 = vadd.f32 %v4521, %v4687
        %4689 = vmatmul.f32.gmra.mxu0 %v3718
        %v4690 = vpop.f32.mrf.mxu0
        %v4691 = vadd.f32 %v4524, %v4690
        %4692 = vmatmul.f32.gmra.mxu0 %v3720
        %v4693 = vpop.f32.mrf.mxu0
        %v4694 = vadd.f32 %v4527, %v4693
        %4695 = vmatmul.f32.gmra.mxu0 %v3722
        %v4696 = vpop.f32.mrf.mxu0
        %v4697 = vadd.f32 %v4530, %v4696
        %4698 = vmatmul.f32.gmra.mxu0 %v3724
        %v4699 = vpop.f32.mrf.mxu0
        %v4700 = vadd.f32 %v4533, %v4699
        %4701 = vmatmul.f32.gmra.mxu0 %v3726
        %v4702 = vpop.f32.mrf.mxu0
        %v4703 = vadd.f32 %v4536, %v4702
        %4704 = vmatmul.f32.gmra.mxu0 %v3728
        %v4705 = vpop.f32.mrf.mxu0
        %v4706 = vadd.f32 %v4539, %v4705
        %4707 = vmatmul.f32.gmra.mxu0 %v3730
        %v4708 = vpop.f32.mrf.mxu0
        %v4709 = vadd.f32 %v4542, %v4708
        %4710 = vmatmul.f32.gmra.mxu0 %v3732
        %v4711 = vpop.f32.mrf.mxu0
        %v4712 = vadd.f32 %v4545, %v4711
        %4713 = vmatmul.f32.gmra.mxu0 %v3734
        %v4714 = vpop.f32.mrf.mxu0
        %v4715 = vadd.f32 %v4548, %v4714
        %4716 = vmatmul.f32.gmra.mxu0 %v3736
        %v4717 = vpop.f32.mrf.mxu0
        %v4718 = vadd.f32 %v4551, %v4717
        %4719 = vmatmul.f32.gmra.mxu0 %v3738
        %v4720 = vpop.f32.mrf.mxu0
        %v4721 = vadd.f32 %v4554, %v4720
        %4722 = vmatmul.f32.gmra.mxu0 %v3740
        %v4723 = vpop.f32.mrf.mxu0
        %v4724 = vadd.f32 %v4557, %v4723
        %4725 = vmatmul.f32.gmra.mxu0 %v3742
        %v4726 = vpop.f32.mrf.mxu0
        %v4727 = vadd.f32 %v4560, %v4726
        %4728 = vmatmul.f32.gmra.mxu0 %v3744
        %v4729 = vpop.f32.mrf.mxu0
        %v4730 = vadd.f32 %v4563, %v4729
        %4731 = vmatmul.f32.gmra.mxu0 %v3746
        %v4732 = vpop.f32.mrf.mxu0
        %v4733 = vadd.f32 %v4566, %v4732
        %4734 = vmatmul.f32.gmra.mxu0 %v3748
        %v4735 = vpop.f32.mrf.mxu0
        %v4736 = vadd.f32 %v4569, %v4735
        %4737 = vmatmul.f32.gmra.mxu0 %v3750
        %v4738 = vpop.f32.mrf.mxu0
        %v4739 = vadd.f32 %v4572, %v4738
        %4740 = vmatmul.f32.gmra.mxu0 %v3752
        %v4741 = vpop.f32.mrf.mxu0
        %v4742 = vadd.f32 %v4575, %v4741
        %4743 = vmatmul.f32.gmra.mxu0 %v3754
        %v4744 = vpop.f32.mrf.mxu0
        %v4745 = vadd.f32 %v4578, %v4744
        %4746 = vmatmul.f32.gmra.mxu0 %v3756
        %v4747 = vpop.f32.mrf.mxu0
        %v4748 = vadd.f32 %v4581, %v4747
        %4749 = vmatmul.f32.gmra.mxu0 %v3758
        %v4750 = vpop.f32.mrf.mxu0
        %v4751 = vadd.f32 %v4584, %v4750
        %4752 = vmatmul.f32.gmra.mxu0 %v3760
        %v4753 = vpop.f32.mrf.mxu0
        %v4754 = vadd.f32 %v4587, %v4753
        %4755 = vmatmul.f32.gmra.mxu0 %v3762
        %v4756 = vpop.f32.mrf.mxu0
        %v4757 = vadd.f32 %v4590, %v4756
        %4758 = vmatmul.f32.gmra.mxu0 %v3764
        %v4759 = vpop.f32.mrf.mxu0
        %v4760 = vadd.f32 %v4593, %v4759
        %4761 = vmatmul.f32.gmra.mxu0 %v3766
        %v4762 = vpop.f32.mrf.mxu0
        %v4763 = vadd.f32 %v4596, %v4762
        %4764 = vmatmul.f32.gmra.mxu0 %v3768
        %v4765 = vpop.f32.mrf.mxu0
        %v4766 = vadd.f32 %v4599, %v4765
        %4767 = vmatmul.f32.gmra.mxu0 %v3770
        %v4768 = vpop.f32.mrf.mxu0
        %v4769 = vadd.f32 %v4602, %v4768
        %4770 = vmatmul.f32.gmra.mxu0 %v3772
        %v4771 = vpop.f32.mrf.mxu0
        %v4772 = vadd.f32 %v4605, %v4771
        %4773 = vmatmul.f32.gmra.mxu0 %v3774
        %v4774 = vpop.f32.mrf.mxu0
        %v4775 = vadd.f32 %v4608, %v4774
        %4776 = vdwg.mxu0
        %4777 = vmatpush.msra.mxu0 %v3434
        %4778 = vmatpush.msra.mxu0 %v3419
        %4779 = vmatpush.msra.mxu0 %v3404
        %4780 = vmatpush.msra.mxu0 %v3389
        %4781 = vmatpush.msra.mxu0 %v3374
        %4782 = vmatpush.msra.mxu0 %v3359
        %4783 = vmatpush.msra.mxu0 %v3344
        %4784 = vmatpush.msra.mxu0 %v3329
        %4785 = vmatpush.msra.mxu0 %v3314
        %4786 = vmatpush.msra.mxu0 %v3299
        %4787 = vmatpush.msra.mxu0 %v3284
        %4788 = vmatpush.msra.mxu0 %v3269
        %4789 = vmatpush.msra.mxu0 %v3254
        %4790 = vmatpush.msra.mxu0 %v3239
        %4791 = vmatpush.msra.mxu0 %v3224
        %4792 = vmatpush.msra.mxu0 %v3209
        %4793 = vmatmul.f32.gmra.mxu0 %v3675
        %v4794 = vpop.f32.mrf.mxu0
        %v4795 = vadd.f32 0.0, %v4794
        %4796 = vmatmul.f32.gmra.mxu0 %v3677
        %v4797 = vpop.f32.mrf.mxu0
        %v4798 = vadd.f32 0.0, %v4797
        %4799 = vmatmul.f32.gmra.mxu0 %v3679
        %v4800 = vpop.f32.mrf.mxu0
        %v4801 = vadd.f32 0.0, %v4800
        %4802 = vmatmul.f32.gmra.mxu0 %v3681
        %v4803 = vpop.f32.mrf.mxu0
        %v4804 = vadd.f32 0.0, %v4803
        %4805 = vmatmul.f32.gmra.mxu0 %v3683
        %v4806 = vpop.f32.mrf.mxu0
        %v4807 = vadd.f32 0.0, %v4806
        %4808 = vmatmul.f32.gmra.mxu0 %v3685
        %v4809 = vpop.f32.mrf.mxu0
        %v4810 = vadd.f32 0.0, %v4809
        %4811 = vmatmul.f32.gmra.mxu0 %v3687
        %v4812 = vpop.f32.mrf.mxu0
        %v4813 = vadd.f32 0.0, %v4812
        %4814 = vmatmul.f32.gmra.mxu0 %v3689
        %v4815 = vpop.f32.mrf.mxu0
        %v4816 = vadd.f32 0.0, %v4815
        %4817 = vmatmul.f32.gmra.mxu0 %v3691
        %v4818 = vpop.f32.mrf.mxu0
        %v4819 = vadd.f32 0.0, %v4818
        %4820 = vmatmul.f32.gmra.mxu0 %v3693
        %v4821 = vpop.f32.mrf.mxu0
        %v4822 = vadd.f32 0.0, %v4821
        %4823 = vmatmul.f32.gmra.mxu0 %v3695
        %v4824 = vpop.f32.mrf.mxu0
        %v4825 = vadd.f32 0.0, %v4824
        %4826 = vmatmul.f32.gmra.mxu0 %v3697
        %v4827 = vpop.f32.mrf.mxu0
        %v4828 = vadd.f32 0.0, %v4827
        %4829 = vmatmul.f32.gmra.mxu0 %v3699
        %v4830 = vpop.f32.mrf.mxu0
        %v4831 = vadd.f32 0.0, %v4830
        %4832 = vmatmul.f32.gmra.mxu0 %v3701
        %v4833 = vpop.f32.mrf.mxu0
        %v4834 = vadd.f32 0.0, %v4833
        %4835 = vmatmul.f32.gmra.mxu0 %v3703
        %v4836 = vpop.f32.mrf.mxu0
        %v4837 = vadd.f32 0.0, %v4836
        %4838 = vmatmul.f32.gmra.mxu0 %v3705
        %v4839 = vpop.f32.mrf.mxu0
        %v4840 = vadd.f32 0.0, %v4839
        %4841 = vmatmul.f32.gmra.mxu0 %v3707
        %v4842 = vpop.f32.mrf.mxu0
        %v4843 = vadd.f32 0.0, %v4842
        %4844 = vmatmul.f32.gmra.mxu0 %v3709
        %v4845 = vpop.f32.mrf.mxu0
        %v4846 = vadd.f32 0.0, %v4845
        %4847 = vmatmul.f32.gmra.mxu0 %v3711
        %v4848 = vpop.f32.mrf.mxu0
        %v4849 = vadd.f32 0.0, %v4848
        %4850 = vmatmul.f32.gmra.mxu0 %v3713
        %v4851 = vpop.f32.mrf.mxu0
        %v4852 = vadd.f32 0.0, %v4851
        %4853 = vmatmul.f32.gmra.mxu0 %v3715
        %v4854 = vpop.f32.mrf.mxu0
        %v4855 = vadd.f32 0.0, %v4854
        %4856 = vmatmul.f32.gmra.mxu0 %v3717
        %v4857 = vpop.f32.mrf.mxu0
        %v4858 = vadd.f32 0.0, %v4857
        %4859 = vmatmul.f32.gmra.mxu0 %v3719
        %v4860 = vpop.f32.mrf.mxu0
        %v4861 = vadd.f32 0.0, %v4860
        %4862 = vmatmul.f32.gmra.mxu0 %v3721
        %v4863 = vpop.f32.mrf.mxu0
        %v4864 = vadd.f32 0.0, %v4863
        %4865 = vmatmul.f32.gmra.mxu0 %v3723
        %v4866 = vpop.f32.mrf.mxu0
        %v4867 = vadd.f32 0.0, %v4866
        %4868 = vmatmul.f32.gmra.mxu0 %v3725
        %v4869 = vpop.f32.mrf.mxu0
        %v4870 = vadd.f32 0.0, %v4869
        %4871 = vmatmul.f32.gmra.mxu0 %v3727
        %v4872 = vpop.f32.mrf.mxu0
        %v4873 = vadd.f32 0.0, %v4872
        %4874 = vmatmul.f32.gmra.mxu0 %v3729
        %v4875 = vpop.f32.mrf.mxu0
        %v4876 = vadd.f32 0.0, %v4875
        %4877 = vmatmul.f32.gmra.mxu0 %v3731
        %v4878 = vpop.f32.mrf.mxu0
        %v4879 = vadd.f32 0.0, %v4878
        %4880 = vmatmul.f32.gmra.mxu0 %v3733
        %v4881 = vpop.f32.mrf.mxu0
        %v4882 = vadd.f32 0.0, %v4881
        %4883 = vmatmul.f32.gmra.mxu0 %v3735
        %v4884 = vpop.f32.mrf.mxu0
        %v4885 = vadd.f32 0.0, %v4884
        %4886 = vmatmul.f32.gmra.mxu0 %v3737
        %v4887 = vpop.f32.mrf.mxu0
        %v4888 = vadd.f32 0.0, %v4887
        %4889 = vmatmul.f32.gmra.mxu0 %v3739
        %v4890 = vpop.f32.mrf.mxu0
        %v4891 = vadd.f32 0.0, %v4890
        %4892 = vmatmul.f32.gmra.mxu0 %v3741
        %v4893 = vpop.f32.mrf.mxu0
        %v4894 = vadd.f32 0.0, %v4893
        %4895 = vmatmul.f32.gmra.mxu0 %v3743
        %v4896 = vpop.f32.mrf.mxu0
        %v4897 = vadd.f32 0.0, %v4896
        %4898 = vmatmul.f32.gmra.mxu0 %v3745
        %v4899 = vpop.f32.mrf.mxu0
        %v4900 = vadd.f32 0.0, %v4899
        %4901 = vmatmul.f32.gmra.mxu0 %v3747
        %v4902 = vpop.f32.mrf.mxu0
        %v4903 = vadd.f32 0.0, %v4902
        %4904 = vmatmul.f32.gmra.mxu0 %v3749
        %v4905 = vpop.f32.mrf.mxu0
        %v4906 = vadd.f32 0.0, %v4905
        %4907 = vmatmul.f32.gmra.mxu0 %v3751
        %v4908 = vpop.f32.mrf.mxu0
        %v4909 = vadd.f32 0.0, %v4908
        %4910 = vmatmul.f32.gmra.mxu0 %v3753
        %v4911 = vpop.f32.mrf.mxu0
        %v4912 = vadd.f32 0.0, %v4911
        %4913 = vmatmul.f32.gmra.mxu0 %v3755
        %v4914 = vpop.f32.mrf.mxu0
        %v4915 = vadd.f32 0.0, %v4914
        %4916 = vmatmul.f32.gmra.mxu0 %v3757
        %v4917 = vpop.f32.mrf.mxu0
        %v4918 = vadd.f32 0.0, %v4917
        %4919 = vmatmul.f32.gmra.mxu0 %v3759
        %v4920 = vpop.f32.mrf.mxu0
        %v4921 = vadd.f32 0.0, %v4920
        %4922 = vmatmul.f32.gmra.mxu0 %v3761
        %v4923 = vpop.f32.mrf.mxu0
        %v4924 = vadd.f32 0.0, %v4923
        %4925 = vmatmul.f32.gmra.mxu0 %v3763
        %v4926 = vpop.f32.mrf.mxu0
        %v4927 = vadd.f32 0.0, %v4926
        %4928 = vmatmul.f32.gmra.mxu0 %v3765
        %v4929 = vpop.f32.mrf.mxu0
        %v4930 = vadd.f32 0.0, %v4929
        %4931 = vmatmul.f32.gmra.mxu0 %v3767
        %v4932 = vpop.f32.mrf.mxu0
        %v4933 = vadd.f32 0.0, %v4932
        %4934 = vmatmul.f32.gmra.mxu0 %v3769
        %v4935 = vpop.f32.mrf.mxu0
        %v4936 = vadd.f32 0.0, %v4935
        %4937 = vmatmul.f32.gmra.mxu0 %v3771
        %v4938 = vpop.f32.mrf.mxu0
        %v4939 = vadd.f32 0.0, %v4938
        %4940 = vmatmul.f32.gmra.mxu0 %v3773
        %v4941 = vpop.f32.mrf.mxu0
        %v4942 = vadd.f32 0.0, %v4941
        %4943 = vdwg.mxu0
        %4944 = vmatpush.msra.mxu0 %v3674
        %4945 = vmatpush.msra.mxu0 %v3659
        %4946 = vmatpush.msra.mxu0 %v3644
        %4947 = vmatpush.msra.mxu0 %v3629
        %4948 = vmatpush.msra.mxu0 %v3614
        %4949 = vmatpush.msra.mxu0 %v3599
        %4950 = vmatpush.msra.mxu0 %v3584
        %4951 = vmatpush.msra.mxu0 %v3569
        %4952 = vmatpush.msra.mxu0 %v3554
        %4953 = vmatpush.msra.mxu0 %v3539
        %4954 = vmatpush.msra.mxu0 %v3524
        %4955 = vmatpush.msra.mxu0 %v3509
        %4956 = vmatpush.msra.mxu0 %v3494
        %4957 = vmatpush.msra.mxu0 %v3479
        %4958 = vmatpush.msra.mxu0 %v3464
        %4959 = vmatpush.msra.mxu0 %v3449
        %4960 = vmatmul.f32.gmra.mxu0 %v3676
        %v4961 = vpop.f32.mrf.mxu0
        %v4962 = vadd.f32 %v4795, %v4961
        %4963 = vmatmul.f32.gmra.mxu0 %v3678
        %v4964 = vpop.f32.mrf.mxu0
        %v4965 = vadd.f32 %v4798, %v4964
        %4966 = vmatmul.f32.gmra.mxu0 %v3680
        %v4967 = vpop.f32.mrf.mxu0
        %v4968 = vadd.f32 %v4801, %v4967
        %4969 = vmatmul.f32.gmra.mxu0 %v3682
        %v4970 = vpop.f32.mrf.mxu0
        %v4971 = vadd.f32 %v4804, %v4970
        %4972 = vmatmul.f32.gmra.mxu0 %v3684
        %v4973 = vpop.f32.mrf.mxu0
        %v4974 = vadd.f32 %v4807, %v4973
        %4975 = vmatmul.f32.gmra.mxu0 %v3686
        %v4976 = vpop.f32.mrf.mxu0
        %v4977 = vadd.f32 %v4810, %v4976
        %4978 = vmatmul.f32.gmra.mxu0 %v3688
        %v4979 = vpop.f32.mrf.mxu0
        %v4980 = vadd.f32 %v4813, %v4979
        %4981 = vmatmul.f32.gmra.mxu0 %v3690
        %v4982 = vpop.f32.mrf.mxu0
        %v4983 = vadd.f32 %v4816, %v4982
        %4984 = vmatmul.f32.gmra.mxu0 %v3692
        %v4985 = vpop.f32.mrf.mxu0
        %v4986 = vadd.f32 %v4819, %v4985
        %4987 = vmatmul.f32.gmra.mxu0 %v3694
        %v4988 = vpop.f32.mrf.mxu0
        %v4989 = vadd.f32 %v4822, %v4988
        %4990 = vmatmul.f32.gmra.mxu0 %v3696
        %v4991 = vpop.f32.mrf.mxu0
        %v4992 = vadd.f32 %v4825, %v4991
        %4993 = vmatmul.f32.gmra.mxu0 %v3698
        %v4994 = vpop.f32.mrf.mxu0
        %v4995 = vadd.f32 %v4828, %v4994
        %4996 = vmatmul.f32.gmra.mxu0 %v3700
        %v4997 = vpop.f32.mrf.mxu0
        %v4998 = vadd.f32 %v4831, %v4997
        %4999 = vmatmul.f32.gmra.mxu0 %v3702
        %v5000 = vpop.f32.mrf.mxu0
        %v5001 = vadd.f32 %v4834, %v5000
        %5002 = vmatmul.f32.gmra.mxu0 %v3704
        %v5003 = vpop.f32.mrf.mxu0
        %v5004 = vadd.f32 %v4837, %v5003
        %5005 = vmatmul.f32.gmra.mxu0 %v3706
        %v5006 = vpop.f32.mrf.mxu0
        %v5007 = vadd.f32 %v4840, %v5006
        %5008 = vmatmul.f32.gmra.mxu0 %v3708
        %v5009 = vpop.f32.mrf.mxu0
        %v5010 = vadd.f32 %v4843, %v5009
        %5011 = vmatmul.f32.gmra.mxu0 %v3710
        %v5012 = vpop.f32.mrf.mxu0
        %v5013 = vadd.f32 %v4846, %v5012
        %5014 = vmatmul.f32.gmra.mxu0 %v3712
        %v5015 = vpop.f32.mrf.mxu0
        %v5016 = vadd.f32 %v4849, %v5015
        %5017 = vmatmul.f32.gmra.mxu0 %v3714
        %v5018 = vpop.f32.mrf.mxu0
        %v5019 = vadd.f32 %v4852, %v5018
        %5020 = vmatmul.f32.gmra.mxu0 %v3716
        %v5021 = vpop.f32.mrf.mxu0
        %v5022 = vadd.f32 %v4855, %v5021
        %5023 = vmatmul.f32.gmra.mxu0 %v3718
        %v5024 = vpop.f32.mrf.mxu0
        %v5025 = vadd.f32 %v4858, %v5024
        %5026 = vmatmul.f32.gmra.mxu0 %v3720
        %v5027 = vpop.f32.mrf.mxu0
        %v5028 = vadd.f32 %v4861, %v5027
        %5029 = vmatmul.f32.gmra.mxu0 %v3722
        %v5030 = vpop.f32.mrf.mxu0
        %v5031 = vadd.f32 %v4864, %v5030
        %5032 = vmatmul.f32.gmra.mxu0 %v3724
        %v5033 = vpop.f32.mrf.mxu0
        %v5034 = vadd.f32 %v4867, %v5033
        %5035 = vmatmul.f32.gmra.mxu0 %v3726
        %v5036 = vpop.f32.mrf.mxu0
        %v5037 = vadd.f32 %v4870, %v5036
        %5038 = vmatmul.f32.gmra.mxu0 %v3728
        %v5039 = vpop.f32.mrf.mxu0
        %v5040 = vadd.f32 %v4873, %v5039
        %5041 = vmatmul.f32.gmra.mxu0 %v3730
        %v5042 = vpop.f32.mrf.mxu0
        %v5043 = vadd.f32 %v4876, %v5042
        %5044 = vmatmul.f32.gmra.mxu0 %v3732
        %v5045 = vpop.f32.mrf.mxu0
        %v5046 = vadd.f32 %v4879, %v5045
        %5047 = vmatmul.f32.gmra.mxu0 %v3734
        %v5048 = vpop.f32.mrf.mxu0
        %v5049 = vadd.f32 %v4882, %v5048
        %5050 = vmatmul.f32.gmra.mxu0 %v3736
        %v5051 = vpop.f32.mrf.mxu0
        %v5052 = vadd.f32 %v4885, %v5051
        %5053 = vmatmul.f32.gmra.mxu0 %v3738
        %v5054 = vpop.f32.mrf.mxu0
        %v5055 = vadd.f32 %v4888, %v5054
        %5056 = vmatmul.f32.gmra.mxu0 %v3740
        %v5057 = vpop.f32.mrf.mxu0
        %v5058 = vadd.f32 %v4891, %v5057
        %5059 = vmatmul.f32.gmra.mxu0 %v3742
        %v5060 = vpop.f32.mrf.mxu0
        %v5061 = vadd.f32 %v4894, %v5060
        %5062 = vmatmul.f32.gmra.mxu0 %v3744
        %v5063 = vpop.f32.mrf.mxu0
        %v5064 = vadd.f32 %v4897, %v5063
        %5065 = vmatmul.f32.gmra.mxu0 %v3746
        %v5066 = vpop.f32.mrf.mxu0
        %v5067 = vadd.f32 %v4900, %v5066
        %5068 = vmatmul.f32.gmra.mxu0 %v3748
        %v5069 = vpop.f32.mrf.mxu0
        %v5070 = vadd.f32 %v4903, %v5069
        %5071 = vmatmul.f32.gmra.mxu0 %v3750
        %v5072 = vpop.f32.mrf.mxu0
        %v5073 = vadd.f32 %v4906, %v5072
        %5074 = vmatmul.f32.gmra.mxu0 %v3752
        %v5075 = vpop.f32.mrf.mxu0
        %v5076 = vadd.f32 %v4909, %v5075
        %5077 = vmatmul.f32.gmra.mxu0 %v3754
        %v5078 = vpop.f32.mrf.mxu0
        %v5079 = vadd.f32 %v4912, %v5078
        %5080 = vmatmul.f32.gmra.mxu0 %v3756
        %v5081 = vpop.f32.mrf.mxu0
        %v5082 = vadd.f32 %v4915, %v5081
        %5083 = vmatmul.f32.gmra.mxu0 %v3758
        %v5084 = vpop.f32.mrf.mxu0
        %v5085 = vadd.f32 %v4918, %v5084
        %5086 = vmatmul.f32.gmra.mxu0 %v3760
        %v5087 = vpop.f32.mrf.mxu0
        %v5088 = vadd.f32 %v4921, %v5087
        %5089 = vmatmul.f32.gmra.mxu0 %v3762
        %v5090 = vpop.f32.mrf.mxu0
        %v5091 = vadd.f32 %v4924, %v5090
        %5092 = vmatmul.f32.gmra.mxu0 %v3764
        %v5093 = vpop.f32.mrf.mxu0
        %v5094 = vadd.f32 %v4927, %v5093
        %5095 = vmatmul.f32.gmra.mxu0 %v3766
        %v5096 = vpop.f32.mrf.mxu0
        %v5097 = vadd.f32 %v4930, %v5096
        %5098 = vmatmul.f32.gmra.mxu0 %v3768
        %v5099 = vpop.f32.mrf.mxu0
        %v5100 = vadd.f32 %v4933, %v5099
        %5101 = vmatmul.f32.gmra.mxu0 %v3770
        %v5102 = vpop.f32.mrf.mxu0
        %v5103 = vadd.f32 %v4936, %v5102
        %5104 = vmatmul.f32.gmra.mxu0 %v3772
        %v5105 = vpop.f32.mrf.mxu0
        %v5106 = vadd.f32 %v4939, %v5105
        %5107 = vmatmul.f32.gmra.mxu0 %v3774
        %v5108 = vpop.f32.mrf.mxu0
        %v5109 = vadd.f32 %v4942, %v5108
        %5110 = vdwg.mxu0
        %v5111 = vld [vmem:[%s3] sm:$0xff]
        %v5112 = vld [vmem:[%s3 + $0x8] sm:$0xff]
        %v5113 = vld [vmem:[%s3 + $0x10] sm:$0xff]
        %v5114 = vld [vmem:[%s3 + $0x18] sm:$0xff]
        %v5115 = vld [vmem:[%s3 + $0x20] sm:$0xff]
        %v5116 = vld [vmem:[%s3 + $0x28] sm:$0xff]
        %v5117 = vld [vmem:[%s3 + $0x30] sm:$0xff]
        %v5118 = vld [vmem:[%s3 + $0x38] sm:$0xff]
        %v5119 = vld [vmem:[%s3 + $0x40] sm:$0xff]
        %v5120 = vld [vmem:[%s3 + $0x48] sm:$0xff]
        %v5121 = vld [vmem:[%s3 + $0x50] sm:$0xff]
        %v5122 = vld [vmem:[%s3 + $0x58] sm:$0xff]
        %v5123 = vld [vmem:[%s3 + $0x60] sm:$0xff]
        %v5124 = vld [vmem:[%s3 + $0x68] sm:$0xff]
        %v5125 = vld [vmem:[%s3 + $0x70] sm:$0xff]
        %v5126 = vld [vmem:[%s3 + $0x78] sm:$0xff]
        %v5127 = vld [vmem:[%s3 + $0x80] sm:$0xff]
        %v5128 = vld [vmem:[%s3 + $0x88] sm:$0xff]
        %v5129 = vld [vmem:[%s3 + $0x90] sm:$0xff]
        %v5130 = vld [vmem:[%s3 + $0x98] sm:$0xff]
        %v5131 = vld [vmem:[%s3 + $0xa0] sm:$0xff]
        %v5132 = vld [vmem:[%s3 + $0xa8] sm:$0xff]
        %v5133 = vld [vmem:[%s3 + $0xb0] sm:$0xff]
        %v5134 = vld [vmem:[%s3 + $0xb8] sm:$0xff]
        %v5135 = vld [vmem:[%s3 + $0xc0] sm:$0xff]
        %vm5136 = vcmask 64512
        %v5138 = vsel %vm5136, %v3960, 0
        %v5141 = vsel %vm5136, %v3963, 0
        %5143 = vmatpush.msra.mxu0 0.0
        %5144 = vmatpush.msra.mxu0 0.0
        %5145 = vmatpush.msra.mxu0 0.0
        %5146 = vmatpush.msra.mxu0 0.0
        %5147 = vmatpush.msra.mxu0 0.0
        %5148 = vmatpush.msra.mxu0 0.0
        %5149 = vmatpush.msra.mxu0 0.0
        %5150 = vmatpush.msra.mxu0 0.0
        %5151 = vmatpush.msra.mxu0 0.0
        %5152 = vmatpush.msra.mxu0 0.0
        %5153 = vmatpush.msra.mxu0 0.0
        %5154 = vmatpush.msra.mxu0 0.0
        %5155 = vmatpush.msra.mxu0 0.0
        %5156 = vmatpush.msra.mxu0 0.0
        %5157 = vmatpush.msra.mxu0 0.0
        %5158 = vmatpush.msra.mxu0 %v5111
        %5159 = vmatmul.f32.gmra.mxu0 %v5138
        %v5160 = vpop.f32.mrf.mxu0
        %v5161 = vadd.f32 0.0, %v5160
        %5162 = vmatmul.f32.gmra.mxu0 %v5141
        %v5163 = vpop.f32.mrf.mxu0
        %v5164 = vadd.f32 0.0, %v5163
        %5165 = vdwg.mxu0
        %v5167 = vsel %vm5136, %v3966, 0
        %v5170 = vsel %vm5136, %v3969, 0
        %5172 = vmatpush.msra.mxu0 0.0
        %5173 = vmatpush.msra.mxu0 0.0
        %5174 = vmatpush.msra.mxu0 0.0
        %5175 = vmatpush.msra.mxu0 0.0
        %5176 = vmatpush.msra.mxu0 0.0
        %5177 = vmatpush.msra.mxu0 0.0
        %5178 = vmatpush.msra.mxu0 0.0
        %5179 = vmatpush.msra.mxu0 0.0
        %5180 = vmatpush.msra.mxu0 0.0
        %5181 = vmatpush.msra.mxu0 0.0
        %5182 = vmatpush.msra.mxu0 0.0
        %5183 = vmatpush.msra.mxu0 0.0
        %5184 = vmatpush.msra.mxu0 0.0
        %5185 = vmatpush.msra.mxu0 0.0
        %5186 = vmatpush.msra.mxu0 0.0
        %5187 = vmatpush.msra.mxu0 %v5112
        %5188 = vmatmul.f32.gmra.mxu0 %v5167
        %v5189 = vpop.f32.mrf.mxu0
        %v5190 = vadd.f32 0.0, %v5189
        %5191 = vmatmul.f32.gmra.mxu0 %v5170
        %v5192 = vpop.f32.mrf.mxu0
        %v5193 = vadd.f32 0.0, %v5192
        %5194 = vdwg.mxu0
        %v5196 = vsel %vm5136, %v3972, 0
        %v5199 = vsel %vm5136, %v3975, 0
        %5201 = vmatpush.msra.mxu0 0.0
        %5202 = vmatpush.msra.mxu0 0.0
        %5203 = vmatpush.msra.mxu0 0.0
        %5204 = vmatpush.msra.mxu0 0.0
        %5205 = vmatpush.msra.mxu0 0.0
        %5206 = vmatpush.msra.mxu0 0.0
        %5207 = vmatpush.msra.mxu0 0.0
        %5208 = vmatpush.msra.mxu0 0.0
        %5209 = vmatpush.msra.mxu0 0.0
        %5210 = vmatpush.msra.mxu0 0.0
        %5211 = vmatpush.msra.mxu0 0.0
        %5212 = vmatpush.msra.mxu0 0.0
        %5213 = vmatpush.msra.mxu0 0.0
        %5214 = vmatpush.msra.mxu0 0.0
        %5215 = vmatpush.msra.mxu0 0.0
        %5216 = vmatpush.msra.mxu0 %v5113
        %5217 = vmatmul.f32.gmra.mxu0 %v5196
        %v5218 = vpop.f32.mrf.mxu0
        %v5219 = vadd.f32 0.0, %v5218
        %5220 = vmatmul.f32.gmra.mxu0 %v5199
        %v5221 = vpop.f32.mrf.mxu0
        %v5222 = vadd.f32 0.0, %v5221
        %5223 = vdwg.mxu0
        %v5225 = vsel %vm5136, %v3978, 0
        %v5228 = vsel %vm5136, %v3981, 0
        %5230 = vmatpush.msra.mxu0 0.0
        %5231 = vmatpush.msra.mxu0 0.0
        %5232 = vmatpush.msra.mxu0 0.0
        %5233 = vmatpush.msra.mxu0 0.0
        %5234 = vmatpush.msra.mxu0 0.0
        %5235 = vmatpush.msra.mxu0 0.0
        %5236 = vmatpush.msra.mxu0 0.0
        %5237 = vmatpush.msra.mxu0 0.0
        %5238 = vmatpush.msra.mxu0 0.0
        %5239 = vmatpush.msra.mxu0 0.0
        %5240 = vmatpush.msra.mxu0 0.0
        %5241 = vmatpush.msra.mxu0 0.0
        %5242 = vmatpush.msra.mxu0 0.0
        %5243 = vmatpush.msra.mxu0 0.0
        %5244 = vmatpush.msra.mxu0 0.0
        %5245 = vmatpush.msra.mxu0 %v5114
        %5246 = vmatmul.f32.gmra.mxu0 %v5225
        %v5247 = vpop.f32.mrf.mxu0
        %v5248 = vadd.f32 0.0, %v5247
        %5249 = vmatmul.f32.gmra.mxu0 %v5228
        %v5250 = vpop.f32.mrf.mxu0
        %v5251 = vadd.f32 0.0, %v5250
        %5252 = vdwg.mxu0
        %v5254 = vsel %vm5136, %v3984, 0
        %v5257 = vsel %vm5136, %v3987, 0
        %5259 = vmatpush.msra.mxu0 0.0
        %5260 = vmatpush.msra.mxu0 0.0
        %5261 = vmatpush.msra.mxu0 0.0
        %5262 = vmatpush.msra.mxu0 0.0
        %5263 = vmatpush.msra.mxu0 0.0
        %5264 = vmatpush.msra.mxu0 0.0
        %5265 = vmatpush.msra.mxu0 0.0
        %5266 = vmatpush.msra.mxu0 0.0
        %5267 = vmatpush.msra.mxu0 0.0
        %5268 = vmatpush.msra.mxu0 0.0
        %5269 = vmatpush.msra.mxu0 0.0
        %5270 = vmatpush.msra.mxu0 0.0
        %5271 = vmatpush.msra.mxu0 0.0
        %5272 = vmatpush.msra.mxu0 0.0
        %5273 = vmatpush.msra.mxu0 0.0
        %5274 = vmatpush.msra.mxu0 %v5115
        %5275 = vmatmul.f32.gmra.mxu0 %v5254
        %v5276 = vpop.f32.mrf.mxu0
        %v5277 = vadd.f32 0.0, %v5276
        %5278 = vmatmul.f32.gmra.mxu0 %v5257
        %v5279 = vpop.f32.mrf.mxu0
        %v5280 = vadd.f32 0.0, %v5279
        %5281 = vdwg.mxu0
        %v5283 = vsel %vm5136, %v3990, 0
        %v5286 = vsel %vm5136, %v3993, 0
        %5288 = vmatpush.msra.mxu0 0.0
        %5289 = vmatpush.msra.mxu0 0.0
        %5290 = vmatpush.msra.mxu0 0.0
        %5291 = vmatpush.msra.mxu0 0.0
        %5292 = vmatpush.msra.mxu0 0.0
        %5293 = vmatpush.msra.mxu0 0.0
        %5294 = vmatpush.msra.mxu0 0.0
        %5295 = vmatpush.msra.mxu0 0.0
        %5296 = vmatpush.msra.mxu0 0.0
        %5297 = vmatpush.msra.mxu0 0.0
        %5298 = vmatpush.msra.mxu0 0.0
        %5299 = vmatpush.msra.mxu0 0.0
        %5300 = vmatpush.msra.mxu0 0.0
        %5301 = vmatpush.msra.mxu0 0.0
        %5302 = vmatpush.msra.mxu0 0.0
        %5303 = vmatpush.msra.mxu0 %v5116
        %5304 = vmatmul.f32.gmra.mxu0 %v5283
        %v5305 = vpop.f32.mrf.mxu0
        %v5306 = vadd.f32 0.0, %v5305
        %5307 = vmatmul.f32.gmra.mxu0 %v5286
        %v5308 = vpop.f32.mrf.mxu0
        %v5309 = vadd.f32 0.0, %v5308
        %5310 = vdwg.mxu0
        %v5312 = vsel %vm5136, %v3996, 0
        %v5315 = vsel %vm5136, %v3999, 0
        %5317 = vmatpush.msra.mxu0 0.0
        %5318 = vmatpush.msra.mxu0 0.0
        %5319 = vmatpush.msra.mxu0 0.0
        %5320 = vmatpush.msra.mxu0 0.0
        %5321 = vmatpush.msra.mxu0 0.0
        %5322 = vmatpush.msra.mxu0 0.0
        %5323 = vmatpush.msra.mxu0 0.0
        %5324 = vmatpush.msra.mxu0 0.0
        %5325 = vmatpush.msra.mxu0 0.0
        %5326 = vmatpush.msra.mxu0 0.0
        %5327 = vmatpush.msra.mxu0 0.0
        %5328 = vmatpush.msra.mxu0 0.0
        %5329 = vmatpush.msra.mxu0 0.0
        %5330 = vmatpush.msra.mxu0 0.0
        %5331 = vmatpush.msra.mxu0 0.0
        %5332 = vmatpush.msra.mxu0 %v5117
        %5333 = vmatmul.f32.gmra.mxu0 %v5312
        %v5334 = vpop.f32.mrf.mxu0
        %v5335 = vadd.f32 0.0, %v5334
        %5336 = vmatmul.f32.gmra.mxu0 %v5315
        %v5337 = vpop.f32.mrf.mxu0
        %v5338 = vadd.f32 0.0, %v5337
        %5339 = vdwg.mxu0
        %v5341 = vsel %vm5136, %v4002, 0
        %v5344 = vsel %vm5136, %v4005, 0
        %5346 = vmatpush.msra.mxu0 0.0
        %5347 = vmatpush.msra.mxu0 0.0
        %5348 = vmatpush.msra.mxu0 0.0
        %5349 = vmatpush.msra.mxu0 0.0
        %5350 = vmatpush.msra.mxu0 0.0
        %5351 = vmatpush.msra.mxu0 0.0
        %5352 = vmatpush.msra.mxu0 0.0
        %5353 = vmatpush.msra.mxu0 0.0
        %5354 = vmatpush.msra.mxu0 0.0
        %5355 = vmatpush.msra.mxu0 0.0
        %5356 = vmatpush.msra.mxu0 0.0
        %5357 = vmatpush.msra.mxu0 0.0
        %5358 = vmatpush.msra.mxu0 0.0
        %5359 = vmatpush.msra.mxu0 0.0
        %5360 = vmatpush.msra.mxu0 0.0
        %5361 = vmatpush.msra.mxu0 %v5118
        %5362 = vmatmul.f32.gmra.mxu0 %v5341
        %v5363 = vpop.f32.mrf.mxu0
        %v5364 = vadd.f32 0.0, %v5363
        %5365 = vmatmul.f32.gmra.mxu0 %v5344
        %v5366 = vpop.f32.mrf.mxu0
        %v5367 = vadd.f32 0.0, %v5366
        %5368 = vdwg.mxu0
        %v5370 = vsel %vm5136, %v4008, 0
        %v5373 = vsel %vm5136, %v4011, 0
        %5375 = vmatpush.msra.mxu0 0.0
        %5376 = vmatpush.msra.mxu0 0.0
        %5377 = vmatpush.msra.mxu0 0.0
        %5378 = vmatpush.msra.mxu0 0.0
        %5379 = vmatpush.msra.mxu0 0.0
        %5380 = vmatpush.msra.mxu0 0.0
        %5381 = vmatpush.msra.mxu0 0.0
        %5382 = vmatpush.msra.mxu0 0.0
        %5383 = vmatpush.msra.mxu0 0.0
        %5384 = vmatpush.msra.mxu0 0.0
        %5385 = vmatpush.msra.mxu0 0.0
        %5386 = vmatpush.msra.mxu0 0.0
        %5387 = vmatpush.msra.mxu0 0.0
        %5388 = vmatpush.msra.mxu0 0.0
        %5389 = vmatpush.msra.mxu0 0.0
        %5390 = vmatpush.msra.mxu0 %v5119
        %5391 = vmatmul.f32.gmra.mxu0 %v5370
        %v5392 = vpop.f32.mrf.mxu0
        %v5393 = vadd.f32 0.0, %v5392
        %5394 = vmatmul.f32.gmra.mxu0 %v5373
        %v5395 = vpop.f32.mrf.mxu0
        %v5396 = vadd.f32 0.0, %v5395
        %5397 = vdwg.mxu0
        %v5399 = vsel %vm5136, %v4014, 0
        %v5402 = vsel %vm5136, %v4017, 0
        %5404 = vmatpush.msra.mxu0 0.0
        %5405 = vmatpush.msra.mxu0 0.0
        %5406 = vmatpush.msra.mxu0 0.0
        %5407 = vmatpush.msra.mxu0 0.0
        %5408 = vmatpush.msra.mxu0 0.0
        %5409 = vmatpush.msra.mxu0 0.0
        %5410 = vmatpush.msra.mxu0 0.0
        %5411 = vmatpush.msra.mxu0 0.0
        %5412 = vmatpush.msra.mxu0 0.0
        %5413 = vmatpush.msra.mxu0 0.0
        %5414 = vmatpush.msra.mxu0 0.0
        %5415 = vmatpush.msra.mxu0 0.0
        %5416 = vmatpush.msra.mxu0 0.0
        %5417 = vmatpush.msra.mxu0 0.0
        %5418 = vmatpush.msra.mxu0 0.0
        %5419 = vmatpush.msra.mxu0 %v5120
        %5420 = vmatmul.f32.gmra.mxu0 %v5399
        %v5421 = vpop.f32.mrf.mxu0
        %v5422 = vadd.f32 0.0, %v5421
        %5423 = vmatmul.f32.gmra.mxu0 %v5402
        %v5424 = vpop.f32.mrf.mxu0
        %v5425 = vadd.f32 0.0, %v5424
        %5426 = vdwg.mxu0
        %v5428 = vsel %vm5136, %v4020, 0
        %v5431 = vsel %vm5136, %v4023, 0
        %5433 = vmatpush.msra.mxu0 0.0
        %5434 = vmatpush.msra.mxu0 0.0
        %5435 = vmatpush.msra.mxu0 0.0
        %5436 = vmatpush.msra.mxu0 0.0
        %5437 = vmatpush.msra.mxu0 0.0
        %5438 = vmatpush.msra.mxu0 0.0
        %5439 = vmatpush.msra.mxu0 0.0
        %5440 = vmatpush.msra.mxu0 0.0
        %5441 = vmatpush.msra.mxu0 0.0
        %5442 = vmatpush.msra.mxu0 0.0
        %5443 = vmatpush.msra.mxu0 0.0
        %5444 = vmatpush.msra.mxu0 0.0
        %5445 = vmatpush.msra.mxu0 0.0
        %5446 = vmatpush.msra.mxu0 0.0
        %5447 = vmatpush.msra.mxu0 0.0
        %5448 = vmatpush.msra.mxu0 %v5121
        %5449 = vmatmul.f32.gmra.mxu0 %v5428
        %v5450 = vpop.f32.mrf.mxu0
        %v5451 = vadd.f32 0.0, %v5450
        %5452 = vmatmul.f32.gmra.mxu0 %v5431
        %v5453 = vpop.f32.mrf.mxu0
        %v5454 = vadd.f32 0.0, %v5453
        %5455 = vdwg.mxu0
        %v5457 = vsel %vm5136, %v4026, 0
        %v5460 = vsel %vm5136, %v4029, 0
        %5462 = vmatpush.msra.mxu0 0.0
        %5463 = vmatpush.msra.mxu0 0.0
        %5464 = vmatpush.msra.mxu0 0.0
        %5465 = vmatpush.msra.mxu0 0.0
        %5466 = vmatpush.msra.mxu0 0.0
        %5467 = vmatpush.msra.mxu0 0.0
        %5468 = vmatpush.msra.mxu0 0.0
        %5469 = vmatpush.msra.mxu0 0.0
        %5470 = vmatpush.msra.mxu0 0.0
        %5471 = vmatpush.msra.mxu0 0.0
        %5472 = vmatpush.msra.mxu0 0.0
        %5473 = vmatpush.msra.mxu0 0.0
        %5474 = vmatpush.msra.mxu0 0.0
        %5475 = vmatpush.msra.mxu0 0.0
        %5476 = vmatpush.msra.mxu0 0.0
        %5477 = vmatpush.msra.mxu0 %v5122
        %5478 = vmatmul.f32.gmra.mxu0 %v5457
        %v5479 = vpop.f32.mrf.mxu0
        %v5480 = vadd.f32 0.0, %v5479
        %5481 = vmatmul.f32.gmra.mxu0 %v5460
        %v5482 = vpop.f32.mrf.mxu0
        %v5483 = vadd.f32 0.0, %v5482
        %5484 = vdwg.mxu0
        %v5486 = vsel %vm5136, %v4032, 0
        %v5489 = vsel %vm5136, %v4035, 0
        %5491 = vmatpush.msra.mxu0 0.0
        %5492 = vmatpush.msra.mxu0 0.0
        %5493 = vmatpush.msra.mxu0 0.0
        %5494 = vmatpush.msra.mxu0 0.0
        %5495 = vmatpush.msra.mxu0 0.0
        %5496 = vmatpush.msra.mxu0 0.0
        %5497 = vmatpush.msra.mxu0 0.0
        %5498 = vmatpush.msra.mxu0 0.0
        %5499 = vmatpush.msra.mxu0 0.0
        %5500 = vmatpush.msra.mxu0 0.0
        %5501 = vmatpush.msra.mxu0 0.0
        %5502 = vmatpush.msra.mxu0 0.0
        %5503 = vmatpush.msra.mxu0 0.0
        %5504 = vmatpush.msra.mxu0 0.0
        %5505 = vmatpush.msra.mxu0 0.0
        %5506 = vmatpush.msra.mxu0 %v5123
        %5507 = vmatmul.f32.gmra.mxu0 %v5486
        %v5508 = vpop.f32.mrf.mxu0
        %v5509 = vadd.f32 0.0, %v5508
        %5510 = vmatmul.f32.gmra.mxu0 %v5489
        %v5511 = vpop.f32.mrf.mxu0
        %v5512 = vadd.f32 0.0, %v5511
        %5513 = vdwg.mxu0
        %v5515 = vsel %vm5136, %v4038, 0
        %v5518 = vsel %vm5136, %v4041, 0
        %5520 = vmatpush.msra.mxu0 0.0
        %5521 = vmatpush.msra.mxu0 0.0
        %5522 = vmatpush.msra.mxu0 0.0
        %5523 = vmatpush.msra.mxu0 0.0
        %5524 = vmatpush.msra.mxu0 0.0
        %5525 = vmatpush.msra.mxu0 0.0
        %5526 = vmatpush.msra.mxu0 0.0
        %5527 = vmatpush.msra.mxu0 0.0
        %5528 = vmatpush.msra.mxu0 0.0
        %5529 = vmatpush.msra.mxu0 0.0
        %5530 = vmatpush.msra.mxu0 0.0
        %5531 = vmatpush.msra.mxu0 0.0
        %5532 = vmatpush.msra.mxu0 0.0
        %5533 = vmatpush.msra.mxu0 0.0
        %5534 = vmatpush.msra.mxu0 0.0
        %5535 = vmatpush.msra.mxu0 %v5124
        %5536 = vmatmul.f32.gmra.mxu0 %v5515
        %v5537 = vpop.f32.mrf.mxu0
        %v5538 = vadd.f32 0.0, %v5537
        %5539 = vmatmul.f32.gmra.mxu0 %v5518
        %v5540 = vpop.f32.mrf.mxu0
        %v5541 = vadd.f32 0.0, %v5540
        %5542 = vdwg.mxu0
        %v5544 = vsel %vm5136, %v4044, 0
        %v5547 = vsel %vm5136, %v4047, 0
        %5549 = vmatpush.msra.mxu0 0.0
        %5550 = vmatpush.msra.mxu0 0.0
        %5551 = vmatpush.msra.mxu0 0.0
        %5552 = vmatpush.msra.mxu0 0.0
        %5553 = vmatpush.msra.mxu0 0.0
        %5554 = vmatpush.msra.mxu0 0.0
        %5555 = vmatpush.msra.mxu0 0.0
        %5556 = vmatpush.msra.mxu0 0.0
        %5557 = vmatpush.msra.mxu0 0.0
        %5558 = vmatpush.msra.mxu0 0.0
        %5559 = vmatpush.msra.mxu0 0.0
        %5560 = vmatpush.msra.mxu0 0.0
        %5561 = vmatpush.msra.mxu0 0.0
        %5562 = vmatpush.msra.mxu0 0.0
        %5563 = vmatpush.msra.mxu0 0.0
        %5564 = vmatpush.msra.mxu0 %v5125
        %5565 = vmatmul.f32.gmra.mxu0 %v5544
        %v5566 = vpop.f32.mrf.mxu0
        %v5567 = vadd.f32 0.0, %v5566
        %5568 = vmatmul.f32.gmra.mxu0 %v5547
        %v5569 = vpop.f32.mrf.mxu0
        %v5570 = vadd.f32 0.0, %v5569
        %5571 = vdwg.mxu0
        %v5573 = vsel %vm5136, %v4050, 0
        %v5576 = vsel %vm5136, %v4053, 0
        %5578 = vmatpush.msra.mxu0 0.0
        %5579 = vmatpush.msra.mxu0 0.0
        %5580 = vmatpush.msra.mxu0 0.0
        %5581 = vmatpush.msra.mxu0 0.0
        %5582 = vmatpush.msra.mxu0 0.0
        %5583 = vmatpush.msra.mxu0 0.0
        %5584 = vmatpush.msra.mxu0 0.0
        %5585 = vmatpush.msra.mxu0 0.0
        %5586 = vmatpush.msra.mxu0 0.0
        %5587 = vmatpush.msra.mxu0 0.0
        %5588 = vmatpush.msra.mxu0 0.0
        %5589 = vmatpush.msra.mxu0 0.0
        %5590 = vmatpush.msra.mxu0 0.0
        %5591 = vmatpush.msra.mxu0 0.0
        %5592 = vmatpush.msra.mxu0 0.0
        %5593 = vmatpush.msra.mxu0 %v5126
        %5594 = vmatmul.f32.gmra.mxu0 %v5573
        %v5595 = vpop.f32.mrf.mxu0
        %v5596 = vadd.f32 0.0, %v5595
        %5597 = vmatmul.f32.gmra.mxu0 %v5576
        %v5598 = vpop.f32.mrf.mxu0
        %v5599 = vadd.f32 0.0, %v5598
        %5600 = vdwg.mxu0
        %v5602 = vsel %vm5136, %v4056, 0
        %v5605 = vsel %vm5136, %v4059, 0
        %5607 = vmatpush.msra.mxu0 0.0
        %5608 = vmatpush.msra.mxu0 0.0
        %5609 = vmatpush.msra.mxu0 0.0
        %5610 = vmatpush.msra.mxu0 0.0
        %5611 = vmatpush.msra.mxu0 0.0
        %5612 = vmatpush.msra.mxu0 0.0
        %5613 = vmatpush.msra.mxu0 0.0
        %5614 = vmatpush.msra.mxu0 0.0
        %5615 = vmatpush.msra.mxu0 0.0
        %5616 = vmatpush.msra.mxu0 0.0
        %5617 = vmatpush.msra.mxu0 0.0
        %5618 = vmatpush.msra.mxu0 0.0
        %5619 = vmatpush.msra.mxu0 0.0
        %5620 = vmatpush.msra.mxu0 0.0
        %5621 = vmatpush.msra.mxu0 0.0
        %5622 = vmatpush.msra.mxu0 %v5127
        %5623 = vmatmul.f32.gmra.mxu0 %v5602
        %v5624 = vpop.f32.mrf.mxu0
        %v5625 = vadd.f32 0.0, %v5624
        %5626 = vmatmul.f32.gmra.mxu0 %v5605
        %v5627 = vpop.f32.mrf.mxu0
        %v5628 = vadd.f32 0.0, %v5627
        %5629 = vdwg.mxu0
        %v5631 = vsel %vm5136, %v4062, 0
        %v5634 = vsel %vm5136, %v4065, 0
        %5636 = vmatpush.msra.mxu0 0.0
        %5637 = vmatpush.msra.mxu0 0.0
        %5638 = vmatpush.msra.mxu0 0.0
        %5639 = vmatpush.msra.mxu0 0.0
        %5640 = vmatpush.msra.mxu0 0.0
        %5641 = vmatpush.msra.mxu0 0.0
        %5642 = vmatpush.msra.mxu0 0.0
        %5643 = vmatpush.msra.mxu0 0.0
        %5644 = vmatpush.msra.mxu0 0.0
        %5645 = vmatpush.msra.mxu0 0.0
        %5646 = vmatpush.msra.mxu0 0.0
        %5647 = vmatpush.msra.mxu0 0.0
        %5648 = vmatpush.msra.mxu0 0.0
        %5649 = vmatpush.msra.mxu0 0.0
        %5650 = vmatpush.msra.mxu0 0.0
        %5651 = vmatpush.msra.mxu0 %v5128
        %5652 = vmatmul.f32.gmra.mxu0 %v5631
        %v5653 = vpop.f32.mrf.mxu0
        %v5654 = vadd.f32 0.0, %v5653
        %5655 = vmatmul.f32.gmra.mxu0 %v5634
        %v5656 = vpop.f32.mrf.mxu0
        %v5657 = vadd.f32 0.0, %v5656
        %5658 = vdwg.mxu0
        %v5660 = vsel %vm5136, %v4068, 0
        %v5663 = vsel %vm5136, %v4071, 0
        %5665 = vmatpush.msra.mxu0 0.0
        %5666 = vmatpush.msra.mxu0 0.0
        %5667 = vmatpush.msra.mxu0 0.0
        %5668 = vmatpush.msra.mxu0 0.0
        %5669 = vmatpush.msra.mxu0 0.0
        %5670 = vmatpush.msra.mxu0 0.0
        %5671 = vmatpush.msra.mxu0 0.0
        %5672 = vmatpush.msra.mxu0 0.0
        %5673 = vmatpush.msra.mxu0 0.0
        %5674 = vmatpush.msra.mxu0 0.0
        %5675 = vmatpush.msra.mxu0 0.0
        %5676 = vmatpush.msra.mxu0 0.0
        %5677 = vmatpush.msra.mxu0 0.0
        %5678 = vmatpush.msra.mxu0 0.0
        %5679 = vmatpush.msra.mxu0 0.0
        %5680 = vmatpush.msra.mxu0 %v5129
        %5681 = vmatmul.f32.gmra.mxu0 %v5660
        %v5682 = vpop.f32.mrf.mxu0
        %v5683 = vadd.f32 0.0, %v5682
        %5684 = vmatmul.f32.gmra.mxu0 %v5663
        %v5685 = vpop.f32.mrf.mxu0
        %v5686 = vadd.f32 0.0, %v5685
        %5687 = vdwg.mxu0
        %v5689 = vsel %vm5136, %v4074, 0
        %v5692 = vsel %vm5136, %v4077, 0
        %5694 = vmatpush.msra.mxu0 0.0
        %5695 = vmatpush.msra.mxu0 0.0
        %5696 = vmatpush.msra.mxu0 0.0
        %5697 = vmatpush.msra.mxu0 0.0
        %5698 = vmatpush.msra.mxu0 0.0
        %5699 = vmatpush.msra.mxu0 0.0
        %5700 = vmatpush.msra.mxu0 0.0
        %5701 = vmatpush.msra.mxu0 0.0
        %5702 = vmatpush.msra.mxu0 0.0
        %5703 = vmatpush.msra.mxu0 0.0
        %5704 = vmatpush.msra.mxu0 0.0
        %5705 = vmatpush.msra.mxu0 0.0
        %5706 = vmatpush.msra.mxu0 0.0
        %5707 = vmatpush.msra.mxu0 0.0
        %5708 = vmatpush.msra.mxu0 0.0
        %5709 = vmatpush.msra.mxu0 %v5130
        %5710 = vmatmul.f32.gmra.mxu0 %v5689
        %v5711 = vpop.f32.mrf.mxu0
        %v5712 = vadd.f32 0.0, %v5711
        %5713 = vmatmul.f32.gmra.mxu0 %v5692
        %v5714 = vpop.f32.mrf.mxu0
        %v5715 = vadd.f32 0.0, %v5714
        %5716 = vdwg.mxu0
        %v5718 = vsel %vm5136, %v4080, 0
        %v5721 = vsel %vm5136, %v4083, 0
        %5723 = vmatpush.msra.mxu0 0.0
        %5724 = vmatpush.msra.mxu0 0.0
        %5725 = vmatpush.msra.mxu0 0.0
        %5726 = vmatpush.msra.mxu0 0.0
        %5727 = vmatpush.msra.mxu0 0.0
        %5728 = vmatpush.msra.mxu0 0.0
        %5729 = vmatpush.msra.mxu0 0.0
        %5730 = vmatpush.msra.mxu0 0.0
        %5731 = vmatpush.msra.mxu0 0.0
        %5732 = vmatpush.msra.mxu0 0.0
        %5733 = vmatpush.msra.mxu0 0.0
        %5734 = vmatpush.msra.mxu0 0.0
        %5735 = vmatpush.msra.mxu0 0.0
        %5736 = vmatpush.msra.mxu0 0.0
        %5737 = vmatpush.msra.mxu0 0.0
        %5738 = vmatpush.msra.mxu0 %v5131
        %5739 = vmatmul.f32.gmra.mxu0 %v5718
        %v5740 = vpop.f32.mrf.mxu0
        %v5741 = vadd.f32 0.0, %v5740
        %5742 = vmatmul.f32.gmra.mxu0 %v5721
        %v5743 = vpop.f32.mrf.mxu0
        %v5744 = vadd.f32 0.0, %v5743
        %5745 = vdwg.mxu0
        %v5747 = vsel %vm5136, %v4086, 0
        %v5750 = vsel %vm5136, %v4089, 0
        %5752 = vmatpush.msra.mxu0 0.0
        %5753 = vmatpush.msra.mxu0 0.0
        %5754 = vmatpush.msra.mxu0 0.0
        %5755 = vmatpush.msra.mxu0 0.0
        %5756 = vmatpush.msra.mxu0 0.0
        %5757 = vmatpush.msra.mxu0 0.0
        %5758 = vmatpush.msra.mxu0 0.0
        %5759 = vmatpush.msra.mxu0 0.0
        %5760 = vmatpush.msra.mxu0 0.0
        %5761 = vmatpush.msra.mxu0 0.0
        %5762 = vmatpush.msra.mxu0 0.0
        %5763 = vmatpush.msra.mxu0 0.0
        %5764 = vmatpush.msra.mxu0 0.0
        %5765 = vmatpush.msra.mxu0 0.0
        %5766 = vmatpush.msra.mxu0 0.0
        %5767 = vmatpush.msra.mxu0 %v5132
        %5768 = vmatmul.f32.gmra.mxu0 %v5747
        %v5769 = vpop.f32.mrf.mxu0
        %v5770 = vadd.f32 0.0, %v5769
        %5771 = vmatmul.f32.gmra.mxu0 %v5750
        %v5772 = vpop.f32.mrf.mxu0
        %v5773 = vadd.f32 0.0, %v5772
        %5774 = vdwg.mxu0
        %v5776 = vsel %vm5136, %v4092, 0
        %v5779 = vsel %vm5136, %v4095, 0
        %5781 = vmatpush.msra.mxu0 0.0
        %5782 = vmatpush.msra.mxu0 0.0
        %5783 = vmatpush.msra.mxu0 0.0
        %5784 = vmatpush.msra.mxu0 0.0
        %5785 = vmatpush.msra.mxu0 0.0
        %5786 = vmatpush.msra.mxu0 0.0
        %5787 = vmatpush.msra.mxu0 0.0
        %5788 = vmatpush.msra.mxu0 0.0
        %5789 = vmatpush.msra.mxu0 0.0
        %5790 = vmatpush.msra.mxu0 0.0
        %5791 = vmatpush.msra.mxu0 0.0
        %5792 = vmatpush.msra.mxu0 0.0
        %5793 = vmatpush.msra.mxu0 0.0
        %5794 = vmatpush.msra.mxu0 0.0
        %5795 = vmatpush.msra.mxu0 0.0
        %5796 = vmatpush.msra.mxu0 %v5133
        %5797 = vmatmul.f32.gmra.mxu0 %v5776
        %v5798 = vpop.f32.mrf.mxu0
        %v5799 = vadd.f32 0.0, %v5798
        %5800 = vmatmul.f32.gmra.mxu0 %v5779
        %v5801 = vpop.f32.mrf.mxu0
        %v5802 = vadd.f32 0.0, %v5801
        %5803 = vdwg.mxu0
        %v5805 = vsel %vm5136, %v4098, 0
        %v5808 = vsel %vm5136, %v4101, 0
        %5810 = vmatpush.msra.mxu0 0.0
        %5811 = vmatpush.msra.mxu0 0.0
        %5812 = vmatpush.msra.mxu0 0.0
        %5813 = vmatpush.msra.mxu0 0.0
        %5814 = vmatpush.msra.mxu0 0.0
        %5815 = vmatpush.msra.mxu0 0.0
        %5816 = vmatpush.msra.mxu0 0.0
        %5817 = vmatpush.msra.mxu0 0.0
        %5818 = vmatpush.msra.mxu0 0.0
        %5819 = vmatpush.msra.mxu0 0.0
        %5820 = vmatpush.msra.mxu0 0.0
        %5821 = vmatpush.msra.mxu0 0.0
        %5822 = vmatpush.msra.mxu0 0.0
        %5823 = vmatpush.msra.mxu0 0.0
        %5824 = vmatpush.msra.mxu0 0.0
        %5825 = vmatpush.msra.mxu0 %v5134
        %5826 = vmatmul.f32.gmra.mxu0 %v5805
        %v5827 = vpop.f32.mrf.mxu0
        %v5828 = vadd.f32 0.0, %v5827
        %5829 = vmatmul.f32.gmra.mxu0 %v5808
        %v5830 = vpop.f32.mrf.mxu0
        %v5831 = vadd.f32 0.0, %v5830
        %5832 = vdwg.mxu0
        %v5834 = vsel %vm5136, %v4104, 0
        %v5837 = vsel %vm5136, %v4107, 0
        %5839 = vmatpush.msra.mxu0 0.0
        %5840 = vmatpush.msra.mxu0 0.0
        %5841 = vmatpush.msra.mxu0 0.0
        %5842 = vmatpush.msra.mxu0 0.0
        %5843 = vmatpush.msra.mxu0 0.0
        %5844 = vmatpush.msra.mxu0 0.0
        %5845 = vmatpush.msra.mxu0 0.0
        %5846 = vmatpush.msra.mxu0 0.0
        %5847 = vmatpush.msra.mxu0 0.0
        %5848 = vmatpush.msra.mxu0 0.0
        %5849 = vmatpush.msra.mxu0 0.0
        %5850 = vmatpush.msra.mxu0 0.0
        %5851 = vmatpush.msra.mxu0 0.0
        %5852 = vmatpush.msra.mxu0 0.0
        %5853 = vmatpush.msra.mxu0 0.0
        %5854 = vmatpush.msra.mxu0 %v5135
        %5855 = vmatmul.f32.gmra.mxu0 %v5834
        %v5856 = vpop.f32.mrf.mxu0
        %v5857 = vadd.f32 0.0, %v5856
        %5858 = vmatmul.f32.gmra.mxu0 %v5837
        %v5859 = vpop.f32.mrf.mxu0
        %v5860 = vadd.f32 0.0, %v5859
        %5861 = vdwg.mxu0
        %v5863 = vsel %vm5136, %v4294, 0
        %v5866 = vsel %vm5136, %v4297, 0
        %5868 = vmatpush.msra.mxu0 0.0
        %5869 = vmatpush.msra.mxu0 0.0
        %5870 = vmatpush.msra.mxu0 0.0
        %5871 = vmatpush.msra.mxu0 0.0
        %5872 = vmatpush.msra.mxu0 0.0
        %5873 = vmatpush.msra.mxu0 0.0
        %5874 = vmatpush.msra.mxu0 0.0
        %5875 = vmatpush.msra.mxu0 0.0
        %5876 = vmatpush.msra.mxu0 0.0
        %5877 = vmatpush.msra.mxu0 0.0
        %5878 = vmatpush.msra.mxu0 0.0
        %5879 = vmatpush.msra.mxu0 0.0
        %5880 = vmatpush.msra.mxu0 0.0
        %5881 = vmatpush.msra.mxu0 0.0
        %5882 = vmatpush.msra.mxu0 0.0
        %5883 = vmatpush.msra.mxu0 %v5111
        %5884 = vmatmul.f32.gmra.mxu0 %v5863
        %v5885 = vpop.f32.mrf.mxu0
        %v5886 = vadd.f32 0.0, %v5885
        %5887 = vmatmul.f32.gmra.mxu0 %v5866
        %v5888 = vpop.f32.mrf.mxu0
        %v5889 = vadd.f32 0.0, %v5888
        %5890 = vdwg.mxu0
        %v5892 = vsel %vm5136, %v4300, 0
        %v5895 = vsel %vm5136, %v4303, 0
        %5897 = vmatpush.msra.mxu0 0.0
        %5898 = vmatpush.msra.mxu0 0.0
        %5899 = vmatpush.msra.mxu0 0.0
        %5900 = vmatpush.msra.mxu0 0.0
        %5901 = vmatpush.msra.mxu0 0.0
        %5902 = vmatpush.msra.mxu0 0.0
        %5903 = vmatpush.msra.mxu0 0.0
        %5904 = vmatpush.msra.mxu0 0.0
        %5905 = vmatpush.msra.mxu0 0.0
        %5906 = vmatpush.msra.mxu0 0.0
        %5907 = vmatpush.msra.mxu0 0.0
        %5908 = vmatpush.msra.mxu0 0.0
        %5909 = vmatpush.msra.mxu0 0.0
        %5910 = vmatpush.msra.mxu0 0.0
        %5911 = vmatpush.msra.mxu0 0.0
        %5912 = vmatpush.msra.mxu0 %v5112
        %5913 = vmatmul.f32.gmra.mxu0 %v5892
        %v5914 = vpop.f32.mrf.mxu0
        %v5915 = vadd.f32 0.0, %v5914
        %5916 = vmatmul.f32.gmra.mxu0 %v5895
        %v5917 = vpop.f32.mrf.mxu0
        %v5918 = vadd.f32 0.0, %v5917
        %5919 = vdwg.mxu0
        %v5921 = vsel %vm5136, %v4306, 0
        %v5924 = vsel %vm5136, %v4309, 0
        %5926 = vmatpush.msra.mxu0 0.0
        %5927 = vmatpush.msra.mxu0 0.0
        %5928 = vmatpush.msra.mxu0 0.0
        %5929 = vmatpush.msra.mxu0 0.0
        %5930 = vmatpush.msra.mxu0 0.0
        %5931 = vmatpush.msra.mxu0 0.0
        %5932 = vmatpush.msra.mxu0 0.0
        %5933 = vmatpush.msra.mxu0 0.0
        %5934 = vmatpush.msra.mxu0 0.0
        %5935 = vmatpush.msra.mxu0 0.0
        %5936 = vmatpush.msra.mxu0 0.0
        %5937 = vmatpush.msra.mxu0 0.0
        %5938 = vmatpush.msra.mxu0 0.0
        %5939 = vmatpush.msra.mxu0 0.0
        %5940 = vmatpush.msra.mxu0 0.0
        %5941 = vmatpush.msra.mxu0 %v5113
        %5942 = vmatmul.f32.gmra.mxu0 %v5921
        %v5943 = vpop.f32.mrf.mxu0
        %v5944 = vadd.f32 0.0, %v5943
        %5945 = vmatmul.f32.gmra.mxu0 %v5924
        %v5946 = vpop.f32.mrf.mxu0
        %v5947 = vadd.f32 0.0, %v5946
        %5948 = vdwg.mxu0
        %v5950 = vsel %vm5136, %v4312, 0
        %v5953 = vsel %vm5136, %v4315, 0
        %5955 = vmatpush.msra.mxu0 0.0
        %5956 = vmatpush.msra.mxu0 0.0
        %5957 = vmatpush.msra.mxu0 0.0
        %5958 = vmatpush.msra.mxu0 0.0
        %5959 = vmatpush.msra.mxu0 0.0
        %5960 = vmatpush.msra.mxu0 0.0
        %5961 = vmatpush.msra.mxu0 0.0
        %5962 = vmatpush.msra.mxu0 0.0
        %5963 = vmatpush.msra.mxu0 0.0
        %5964 = vmatpush.msra.mxu0 0.0
        %5965 = vmatpush.msra.mxu0 0.0
        %5966 = vmatpush.msra.mxu0 0.0
        %5967 = vmatpush.msra.mxu0 0.0
        %5968 = vmatpush.msra.mxu0 0.0
        %5969 = vmatpush.msra.mxu0 0.0
        %5970 = vmatpush.msra.mxu0 %v5114
        %5971 = vmatmul.f32.gmra.mxu0 %v5950
        %v5972 = vpop.f32.mrf.mxu0
        %v5973 = vadd.f32 0.0, %v5972
        %5974 = vmatmul.f32.gmra.mxu0 %v5953
        %v5975 = vpop.f32.mrf.mxu0
        %v5976 = vadd.f32 0.0, %v5975
        %5977 = vdwg.mxu0
        %v5979 = vsel %vm5136, %v4318, 0
        %v5982 = vsel %vm5136, %v4321, 0
        %5984 = vmatpush.msra.mxu0 0.0
        %5985 = vmatpush.msra.mxu0 0.0
        %5986 = vmatpush.msra.mxu0 0.0
        %5987 = vmatpush.msra.mxu0 0.0
        %5988 = vmatpush.msra.mxu0 0.0
        %5989 = vmatpush.msra.mxu0 0.0
        %5990 = vmatpush.msra.mxu0 0.0
        %5991 = vmatpush.msra.mxu0 0.0
        %5992 = vmatpush.msra.mxu0 0.0
        %5993 = vmatpush.msra.mxu0 0.0
        %5994 = vmatpush.msra.mxu0 0.0
        %5995 = vmatpush.msra.mxu0 0.0
        %5996 = vmatpush.msra.mxu0 0.0
        %5997 = vmatpush.msra.mxu0 0.0
        %5998 = vmatpush.msra.mxu0 0.0
        %5999 = vmatpush.msra.mxu0 %v5115
        %6000 = vmatmul.f32.gmra.mxu0 %v5979
        %v6001 = vpop.f32.mrf.mxu0
        %v6002 = vadd.f32 0.0, %v6001
        %6003 = vmatmul.f32.gmra.mxu0 %v5982
        %v6004 = vpop.f32.mrf.mxu0
        %v6005 = vadd.f32 0.0, %v6004
        %6006 = vdwg.mxu0
        %v6008 = vsel %vm5136, %v4324, 0
        %v6011 = vsel %vm5136, %v4327, 0
        %6013 = vmatpush.msra.mxu0 0.0
        %6014 = vmatpush.msra.mxu0 0.0
        %6015 = vmatpush.msra.mxu0 0.0
        %6016 = vmatpush.msra.mxu0 0.0
        %6017 = vmatpush.msra.mxu0 0.0
        %6018 = vmatpush.msra.mxu0 0.0
        %6019 = vmatpush.msra.mxu0 0.0
        %6020 = vmatpush.msra.mxu0 0.0
        %6021 = vmatpush.msra.mxu0 0.0
        %6022 = vmatpush.msra.mxu0 0.0
        %6023 = vmatpush.msra.mxu0 0.0
        %6024 = vmatpush.msra.mxu0 0.0
        %6025 = vmatpush.msra.mxu0 0.0
        %6026 = vmatpush.msra.mxu0 0.0
        %6027 = vmatpush.msra.mxu0 0.0
        %6028 = vmatpush.msra.mxu0 %v5116
        %6029 = vmatmul.f32.gmra.mxu0 %v6008
        %v6030 = vpop.f32.mrf.mxu0
        %v6031 = vadd.f32 0.0, %v6030
        %6032 = vmatmul.f32.gmra.mxu0 %v6011
        %v6033 = vpop.f32.mrf.mxu0
        %v6034 = vadd.f32 0.0, %v6033
        %6035 = vdwg.mxu0
        %v6037 = vsel %vm5136, %v4330, 0
        %v6040 = vsel %vm5136, %v4333, 0
        %6042 = vmatpush.msra.mxu0 0.0
        %6043 = vmatpush.msra.mxu0 0.0
        %6044 = vmatpush.msra.mxu0 0.0
        %6045 = vmatpush.msra.mxu0 0.0
        %6046 = vmatpush.msra.mxu0 0.0
        %6047 = vmatpush.msra.mxu0 0.0
        %6048 = vmatpush.msra.mxu0 0.0
        %6049 = vmatpush.msra.mxu0 0.0
        %6050 = vmatpush.msra.mxu0 0.0
        %6051 = vmatpush.msra.mxu0 0.0
        %6052 = vmatpush.msra.mxu0 0.0
        %6053 = vmatpush.msra.mxu0 0.0
        %6054 = vmatpush.msra.mxu0 0.0
        %6055 = vmatpush.msra.mxu0 0.0
        %6056 = vmatpush.msra.mxu0 0.0
        %6057 = vmatpush.msra.mxu0 %v5117
        %6058 = vmatmul.f32.gmra.mxu0 %v6037
        %v6059 = vpop.f32.mrf.mxu0
        %v6060 = vadd.f32 0.0, %v6059
        %6061 = vmatmul.f32.gmra.mxu0 %v6040
        %v6062 = vpop.f32.mrf.mxu0
        %v6063 = vadd.f32 0.0, %v6062
        %6064 = vdwg.mxu0
        %v6066 = vsel %vm5136, %v4336, 0
        %v6069 = vsel %vm5136, %v4339, 0
        %6071 = vmatpush.msra.mxu0 0.0
        %6072 = vmatpush.msra.mxu0 0.0
        %6073 = vmatpush.msra.mxu0 0.0
        %6074 = vmatpush.msra.mxu0 0.0
        %6075 = vmatpush.msra.mxu0 0.0
        %6076 = vmatpush.msra.mxu0 0.0
        %6077 = vmatpush.msra.mxu0 0.0
        %6078 = vmatpush.msra.mxu0 0.0
        %6079 = vmatpush.msra.mxu0 0.0
        %6080 = vmatpush.msra.mxu0 0.0
        %6081 = vmatpush.msra.mxu0 0.0
        %6082 = vmatpush.msra.mxu0 0.0
        %6083 = vmatpush.msra.mxu0 0.0
        %6084 = vmatpush.msra.mxu0 0.0
        %6085 = vmatpush.msra.mxu0 0.0
        %6086 = vmatpush.msra.mxu0 %v5118
        %6087 = vmatmul.f32.gmra.mxu0 %v6066
        %v6088 = vpop.f32.mrf.mxu0
        %v6089 = vadd.f32 0.0, %v6088
        %6090 = vmatmul.f32.gmra.mxu0 %v6069
        %v6091 = vpop.f32.mrf.mxu0
        %v6092 = vadd.f32 0.0, %v6091
        %6093 = vdwg.mxu0
        %v6095 = vsel %vm5136, %v4342, 0
        %v6098 = vsel %vm5136, %v4345, 0
        %6100 = vmatpush.msra.mxu0 0.0
        %6101 = vmatpush.msra.mxu0 0.0
        %6102 = vmatpush.msra.mxu0 0.0
        %6103 = vmatpush.msra.mxu0 0.0
        %6104 = vmatpush.msra.mxu0 0.0
        %6105 = vmatpush.msra.mxu0 0.0
        %6106 = vmatpush.msra.mxu0 0.0
        %6107 = vmatpush.msra.mxu0 0.0
        %6108 = vmatpush.msra.mxu0 0.0
        %6109 = vmatpush.msra.mxu0 0.0
        %6110 = vmatpush.msra.mxu0 0.0
        %6111 = vmatpush.msra.mxu0 0.0
        %6112 = vmatpush.msra.mxu0 0.0
        %6113 = vmatpush.msra.mxu0 0.0
        %6114 = vmatpush.msra.mxu0 0.0
        %6115 = vmatpush.msra.mxu0 %v5119
        %6116 = vmatmul.f32.gmra.mxu0 %v6095
        %v6117 = vpop.f32.mrf.mxu0
        %v6118 = vadd.f32 0.0, %v6117
        %6119 = vmatmul.f32.gmra.mxu0 %v6098
        %v6120 = vpop.f32.mrf.mxu0
        %v6121 = vadd.f32 0.0, %v6120
        %6122 = vdwg.mxu0
        %v6124 = vsel %vm5136, %v4348, 0
        %v6127 = vsel %vm5136, %v4351, 0
        %6129 = vmatpush.msra.mxu0 0.0
        %6130 = vmatpush.msra.mxu0 0.0
        %6131 = vmatpush.msra.mxu0 0.0
        %6132 = vmatpush.msra.mxu0 0.0
        %6133 = vmatpush.msra.mxu0 0.0
        %6134 = vmatpush.msra.mxu0 0.0
        %6135 = vmatpush.msra.mxu0 0.0
        %6136 = vmatpush.msra.mxu0 0.0
        %6137 = vmatpush.msra.mxu0 0.0
        %6138 = vmatpush.msra.mxu0 0.0
        %6139 = vmatpush.msra.mxu0 0.0
        %6140 = vmatpush.msra.mxu0 0.0
        %6141 = vmatpush.msra.mxu0 0.0
        %6142 = vmatpush.msra.mxu0 0.0
        %6143 = vmatpush.msra.mxu0 0.0
        %6144 = vmatpush.msra.mxu0 %v5120
        %6145 = vmatmul.f32.gmra.mxu0 %v6124
        %v6146 = vpop.f32.mrf.mxu0
        %v6147 = vadd.f32 0.0, %v6146
        %6148 = vmatmul.f32.gmra.mxu0 %v6127
        %v6149 = vpop.f32.mrf.mxu0
        %v6150 = vadd.f32 0.0, %v6149
        %6151 = vdwg.mxu0
        %v6153 = vsel %vm5136, %v4354, 0
        %v6156 = vsel %vm5136, %v4357, 0
        %6158 = vmatpush.msra.mxu0 0.0
        %6159 = vmatpush.msra.mxu0 0.0
        %6160 = vmatpush.msra.mxu0 0.0
        %6161 = vmatpush.msra.mxu0 0.0
        %6162 = vmatpush.msra.mxu0 0.0
        %6163 = vmatpush.msra.mxu0 0.0
        %6164 = vmatpush.msra.mxu0 0.0
        %6165 = vmatpush.msra.mxu0 0.0
        %6166 = vmatpush.msra.mxu0 0.0
        %6167 = vmatpush.msra.mxu0 0.0
        %6168 = vmatpush.msra.mxu0 0.0
        %6169 = vmatpush.msra.mxu0 0.0
        %6170 = vmatpush.msra.mxu0 0.0
        %6171 = vmatpush.msra.mxu0 0.0
        %6172 = vmatpush.msra.mxu0 0.0
        %6173 = vmatpush.msra.mxu0 %v5121
        %6174 = vmatmul.f32.gmra.mxu0 %v6153
        %v6175 = vpop.f32.mrf.mxu0
        %v6176 = vadd.f32 0.0, %v6175
        %6177 = vmatmul.f32.gmra.mxu0 %v6156
        %v6178 = vpop.f32.mrf.mxu0
        %v6179 = vadd.f32 0.0, %v6178
        %6180 = vdwg.mxu0
        %v6182 = vsel %vm5136, %v4360, 0
        %v6185 = vsel %vm5136, %v4363, 0
        %6187 = vmatpush.msra.mxu0 0.0
        %6188 = vmatpush.msra.mxu0 0.0
        %6189 = vmatpush.msra.mxu0 0.0
        %6190 = vmatpush.msra.mxu0 0.0
        %6191 = vmatpush.msra.mxu0 0.0
        %6192 = vmatpush.msra.mxu0 0.0
        %6193 = vmatpush.msra.mxu0 0.0
        %6194 = vmatpush.msra.mxu0 0.0
        %6195 = vmatpush.msra.mxu0 0.0
        %6196 = vmatpush.msra.mxu0 0.0
        %6197 = vmatpush.msra.mxu0 0.0
        %6198 = vmatpush.msra.mxu0 0.0
        %6199 = vmatpush.msra.mxu0 0.0
        %6200 = vmatpush.msra.mxu0 0.0
        %6201 = vmatpush.msra.mxu0 0.0
        %6202 = vmatpush.msra.mxu0 %v5122
        %6203 = vmatmul.f32.gmra.mxu0 %v6182
        %v6204 = vpop.f32.mrf.mxu0
        %v6205 = vadd.f32 0.0, %v6204
        %6206 = vmatmul.f32.gmra.mxu0 %v6185
        %v6207 = vpop.f32.mrf.mxu0
        %v6208 = vadd.f32 0.0, %v6207
        %6209 = vdwg.mxu0
        %v6211 = vsel %vm5136, %v4366, 0
        %v6214 = vsel %vm5136, %v4369, 0
        %6216 = vmatpush.msra.mxu0 0.0
        %6217 = vmatpush.msra.mxu0 0.0
        %6218 = vmatpush.msra.mxu0 0.0
        %6219 = vmatpush.msra.mxu0 0.0
        %6220 = vmatpush.msra.mxu0 0.0
        %6221 = vmatpush.msra.mxu0 0.0
        %6222 = vmatpush.msra.mxu0 0.0
        %6223 = vmatpush.msra.mxu0 0.0
        %6224 = vmatpush.msra.mxu0 0.0
        %6225 = vmatpush.msra.mxu0 0.0
        %6226 = vmatpush.msra.mxu0 0.0
        %6227 = vmatpush.msra.mxu0 0.0
        %6228 = vmatpush.msra.mxu0 0.0
        %6229 = vmatpush.msra.mxu0 0.0
        %6230 = vmatpush.msra.mxu0 0.0
        %6231 = vmatpush.msra.mxu0 %v5123
        %6232 = vmatmul.f32.gmra.mxu0 %v6211
        %v6233 = vpop.f32.mrf.mxu0
        %v6234 = vadd.f32 0.0, %v6233
        %6235 = vmatmul.f32.gmra.mxu0 %v6214
        %v6236 = vpop.f32.mrf.mxu0
        %v6237 = vadd.f32 0.0, %v6236
        %6238 = vdwg.mxu0
        %v6240 = vsel %vm5136, %v4372, 0
        %v6243 = vsel %vm5136, %v4375, 0
        %6245 = vmatpush.msra.mxu0 0.0
        %6246 = vmatpush.msra.mxu0 0.0
        %6247 = vmatpush.msra.mxu0 0.0
        %6248 = vmatpush.msra.mxu0 0.0
        %6249 = vmatpush.msra.mxu0 0.0
        %6250 = vmatpush.msra.mxu0 0.0
        %6251 = vmatpush.msra.mxu0 0.0
        %6252 = vmatpush.msra.mxu0 0.0
        %6253 = vmatpush.msra.mxu0 0.0
        %6254 = vmatpush.msra.mxu0 0.0
        %6255 = vmatpush.msra.mxu0 0.0
        %6256 = vmatpush.msra.mxu0 0.0
        %6257 = vmatpush.msra.mxu0 0.0
        %6258 = vmatpush.msra.mxu0 0.0
        %6259 = vmatpush.msra.mxu0 0.0
        %6260 = vmatpush.msra.mxu0 %v5124
        %6261 = vmatmul.f32.gmra.mxu0 %v6240
        %v6262 = vpop.f32.mrf.mxu0
        %v6263 = vadd.f32 0.0, %v6262
        %6264 = vmatmul.f32.gmra.mxu0 %v6243
        %v6265 = vpop.f32.mrf.mxu0
        %v6266 = vadd.f32 0.0, %v6265
        %6267 = vdwg.mxu0
        %v6269 = vsel %vm5136, %v4378, 0
        %v6272 = vsel %vm5136, %v4381, 0
        %6274 = vmatpush.msra.mxu0 0.0
        %6275 = vmatpush.msra.mxu0 0.0
        %6276 = vmatpush.msra.mxu0 0.0
        %6277 = vmatpush.msra.mxu0 0.0
        %6278 = vmatpush.msra.mxu0 0.0
        %6279 = vmatpush.msra.mxu0 0.0
        %6280 = vmatpush.msra.mxu0 0.0
        %6281 = vmatpush.msra.mxu0 0.0
        %6282 = vmatpush.msra.mxu0 0.0
        %6283 = vmatpush.msra.mxu0 0.0
        %6284 = vmatpush.msra.mxu0 0.0
        %6285 = vmatpush.msra.mxu0 0.0
        %6286 = vmatpush.msra.mxu0 0.0
        %6287 = vmatpush.msra.mxu0 0.0
        %6288 = vmatpush.msra.mxu0 0.0
        %6289 = vmatpush.msra.mxu0 %v5125
        %6290 = vmatmul.f32.gmra.mxu0 %v6269
        %v6291 = vpop.f32.mrf.mxu0
        %v6292 = vadd.f32 0.0, %v6291
        %6293 = vmatmul.f32.gmra.mxu0 %v6272
        %v6294 = vpop.f32.mrf.mxu0
        %v6295 = vadd.f32 0.0, %v6294
        %6296 = vdwg.mxu0
        %v6298 = vsel %vm5136, %v4384, 0
        %v6301 = vsel %vm5136, %v4387, 0
        %6303 = vmatpush.msra.mxu0 0.0
        %6304 = vmatpush.msra.mxu0 0.0
        %6305 = vmatpush.msra.mxu0 0.0
        %6306 = vmatpush.msra.mxu0 0.0
        %6307 = vmatpush.msra.mxu0 0.0
        %6308 = vmatpush.msra.mxu0 0.0
        %6309 = vmatpush.msra.mxu0 0.0
        %6310 = vmatpush.msra.mxu0 0.0
        %6311 = vmatpush.msra.mxu0 0.0
        %6312 = vmatpush.msra.mxu0 0.0
        %6313 = vmatpush.msra.mxu0 0.0
        %6314 = vmatpush.msra.mxu0 0.0
        %6315 = vmatpush.msra.mxu0 0.0
        %6316 = vmatpush.msra.mxu0 0.0
        %6317 = vmatpush.msra.mxu0 0.0
        %6318 = vmatpush.msra.mxu0 %v5126
        %6319 = vmatmul.f32.gmra.mxu0 %v6298
        %v6320 = vpop.f32.mrf.mxu0
        %v6321 = vadd.f32 0.0, %v6320
        %6322 = vmatmul.f32.gmra.mxu0 %v6301
        %v6323 = vpop.f32.mrf.mxu0
        %v6324 = vadd.f32 0.0, %v6323
        %6325 = vdwg.mxu0
        %v6327 = vsel %vm5136, %v4390, 0
        %v6330 = vsel %vm5136, %v4393, 0
        %6332 = vmatpush.msra.mxu0 0.0
        %6333 = vmatpush.msra.mxu0 0.0
        %6334 = vmatpush.msra.mxu0 0.0
        %6335 = vmatpush.msra.mxu0 0.0
        %6336 = vmatpush.msra.mxu0 0.0
        %6337 = vmatpush.msra.mxu0 0.0
        %6338 = vmatpush.msra.mxu0 0.0
        %6339 = vmatpush.msra.mxu0 0.0
        %6340 = vmatpush.msra.mxu0 0.0
        %6341 = vmatpush.msra.mxu0 0.0
        %6342 = vmatpush.msra.mxu0 0.0
        %6343 = vmatpush.msra.mxu0 0.0
        %6344 = vmatpush.msra.mxu0 0.0
        %6345 = vmatpush.msra.mxu0 0.0
        %6346 = vmatpush.msra.mxu0 0.0
        %6347 = vmatpush.msra.mxu0 %v5127
        %6348 = vmatmul.f32.gmra.mxu0 %v6327
        %v6349 = vpop.f32.mrf.mxu0
        %v6350 = vadd.f32 0.0, %v6349
        %6351 = vmatmul.f32.gmra.mxu0 %v6330
        %v6352 = vpop.f32.mrf.mxu0
        %v6353 = vadd.f32 0.0, %v6352
        %6354 = vdwg.mxu0
        %v6356 = vsel %vm5136, %v4396, 0
        %v6359 = vsel %vm5136, %v4399, 0
        %6361 = vmatpush.msra.mxu0 0.0
        %6362 = vmatpush.msra.mxu0 0.0
        %6363 = vmatpush.msra.mxu0 0.0
        %6364 = vmatpush.msra.mxu0 0.0
        %6365 = vmatpush.msra.mxu0 0.0
        %6366 = vmatpush.msra.mxu0 0.0
        %6367 = vmatpush.msra.mxu0 0.0
        %6368 = vmatpush.msra.mxu0 0.0
        %6369 = vmatpush.msra.mxu0 0.0
        %6370 = vmatpush.msra.mxu0 0.0
        %6371 = vmatpush.msra.mxu0 0.0
        %6372 = vmatpush.msra.mxu0 0.0
        %6373 = vmatpush.msra.mxu0 0.0
        %6374 = vmatpush.msra.mxu0 0.0
        %6375 = vmatpush.msra.mxu0 0.0
        %6376 = vmatpush.msra.mxu0 %v5128
        %6377 = vmatmul.f32.gmra.mxu0 %v6356
        %v6378 = vpop.f32.mrf.mxu0
        %v6379 = vadd.f32 0.0, %v6378
        %6380 = vmatmul.f32.gmra.mxu0 %v6359
        %v6381 = vpop.f32.mrf.mxu0
        %v6382 = vadd.f32 0.0, %v6381
        %6383 = vdwg.mxu0
        %v6385 = vsel %vm5136, %v4402, 0
        %v6388 = vsel %vm5136, %v4405, 0
        %6390 = vmatpush.msra.mxu0 0.0
        %6391 = vmatpush.msra.mxu0 0.0
        %6392 = vmatpush.msra.mxu0 0.0
        %6393 = vmatpush.msra.mxu0 0.0
        %6394 = vmatpush.msra.mxu0 0.0
        %6395 = vmatpush.msra.mxu0 0.0
        %6396 = vmatpush.msra.mxu0 0.0
        %6397 = vmatpush.msra.mxu0 0.0
        %6398 = vmatpush.msra.mxu0 0.0
        %6399 = vmatpush.msra.mxu0 0.0
        %6400 = vmatpush.msra.mxu0 0.0
        %6401 = vmatpush.msra.mxu0 0.0
        %6402 = vmatpush.msra.mxu0 0.0
        %6403 = vmatpush.msra.mxu0 0.0
        %6404 = vmatpush.msra.mxu0 0.0
        %6405 = vmatpush.msra.mxu0 %v5129
        %6406 = vmatmul.f32.gmra.mxu0 %v6385
        %v6407 = vpop.f32.mrf.mxu0
        %v6408 = vadd.f32 0.0, %v6407
        %6409 = vmatmul.f32.gmra.mxu0 %v6388
        %v6410 = vpop.f32.mrf.mxu0
        %v6411 = vadd.f32 0.0, %v6410
        %6412 = vdwg.mxu0
        %v6414 = vsel %vm5136, %v4408, 0
        %v6417 = vsel %vm5136, %v4411, 0
        %6419 = vmatpush.msra.mxu0 0.0
        %6420 = vmatpush.msra.mxu0 0.0
        %6421 = vmatpush.msra.mxu0 0.0
        %6422 = vmatpush.msra.mxu0 0.0
        %6423 = vmatpush.msra.mxu0 0.0
        %6424 = vmatpush.msra.mxu0 0.0
        %6425 = vmatpush.msra.mxu0 0.0
        %6426 = vmatpush.msra.mxu0 0.0
        %6427 = vmatpush.msra.mxu0 0.0
        %6428 = vmatpush.msra.mxu0 0.0
        %6429 = vmatpush.msra.mxu0 0.0
        %6430 = vmatpush.msra.mxu0 0.0
        %6431 = vmatpush.msra.mxu0 0.0
        %6432 = vmatpush.msra.mxu0 0.0
        %6433 = vmatpush.msra.mxu0 0.0
        %6434 = vmatpush.msra.mxu0 %v5130
        %6435 = vmatmul.f32.gmra.mxu0 %v6414
        %v6436 = vpop.f32.mrf.mxu0
        %v6437 = vadd.f32 0.0, %v6436
        %6438 = vmatmul.f32.gmra.mxu0 %v6417
        %v6439 = vpop.f32.mrf.mxu0
        %v6440 = vadd.f32 0.0, %v6439
        %6441 = vdwg.mxu0
        %v6443 = vsel %vm5136, %v4414, 0
        %v6446 = vsel %vm5136, %v4417, 0
        %6448 = vmatpush.msra.mxu0 0.0
        %6449 = vmatpush.msra.mxu0 0.0
        %6450 = vmatpush.msra.mxu0 0.0
        %6451 = vmatpush.msra.mxu0 0.0
        %6452 = vmatpush.msra.mxu0 0.0
        %6453 = vmatpush.msra.mxu0 0.0
        %6454 = vmatpush.msra.mxu0 0.0
        %6455 = vmatpush.msra.mxu0 0.0
        %6456 = vmatpush.msra.mxu0 0.0
        %6457 = vmatpush.msra.mxu0 0.0
        %6458 = vmatpush.msra.mxu0 0.0
        %6459 = vmatpush.msra.mxu0 0.0
        %6460 = vmatpush.msra.mxu0 0.0
        %6461 = vmatpush.msra.mxu0 0.0
        %6462 = vmatpush.msra.mxu0 0.0
        %6463 = vmatpush.msra.mxu0 %v5131
        %6464 = vmatmul.f32.gmra.mxu0 %v6443
        %v6465 = vpop.f32.mrf.mxu0
        %v6466 = vadd.f32 0.0, %v6465
        %6467 = vmatmul.f32.gmra.mxu0 %v6446
        %v6468 = vpop.f32.mrf.mxu0
        %v6469 = vadd.f32 0.0, %v6468
        %6470 = vdwg.mxu0
        %v6472 = vsel %vm5136, %v4420, 0
        %v6475 = vsel %vm5136, %v4423, 0
        %6477 = vmatpush.msra.mxu0 0.0
        %6478 = vmatpush.msra.mxu0 0.0
        %6479 = vmatpush.msra.mxu0 0.0
        %6480 = vmatpush.msra.mxu0 0.0
        %6481 = vmatpush.msra.mxu0 0.0
        %6482 = vmatpush.msra.mxu0 0.0
        %6483 = vmatpush.msra.mxu0 0.0
        %6484 = vmatpush.msra.mxu0 0.0
        %6485 = vmatpush.msra.mxu0 0.0
        %6486 = vmatpush.msra.mxu0 0.0
        %6487 = vmatpush.msra.mxu0 0.0
        %6488 = vmatpush.msra.mxu0 0.0
        %6489 = vmatpush.msra.mxu0 0.0
        %6490 = vmatpush.msra.mxu0 0.0
        %6491 = vmatpush.msra.mxu0 0.0
        %6492 = vmatpush.msra.mxu0 %v5132
        %6493 = vmatmul.f32.gmra.mxu0 %v6472
        %v6494 = vpop.f32.mrf.mxu0
        %v6495 = vadd.f32 0.0, %v6494
        %6496 = vmatmul.f32.gmra.mxu0 %v6475
        %v6497 = vpop.f32.mrf.mxu0
        %v6498 = vadd.f32 0.0, %v6497
        %6499 = vdwg.mxu0
        %v6501 = vsel %vm5136, %v4426, 0
        %v6504 = vsel %vm5136, %v4429, 0
        %6506 = vmatpush.msra.mxu0 0.0
        %6507 = vmatpush.msra.mxu0 0.0
        %6508 = vmatpush.msra.mxu0 0.0
        %6509 = vmatpush.msra.mxu0 0.0
        %6510 = vmatpush.msra.mxu0 0.0
        %6511 = vmatpush.msra.mxu0 0.0
        %6512 = vmatpush.msra.mxu0 0.0
        %6513 = vmatpush.msra.mxu0 0.0
        %6514 = vmatpush.msra.mxu0 0.0
        %6515 = vmatpush.msra.mxu0 0.0
        %6516 = vmatpush.msra.mxu0 0.0
        %6517 = vmatpush.msra.mxu0 0.0
        %6518 = vmatpush.msra.mxu0 0.0
        %6519 = vmatpush.msra.mxu0 0.0
        %6520 = vmatpush.msra.mxu0 0.0
        %6521 = vmatpush.msra.mxu0 %v5133
        %6522 = vmatmul.f32.gmra.mxu0 %v6501
        %v6523 = vpop.f32.mrf.mxu0
        %v6524 = vadd.f32 0.0, %v6523
        %6525 = vmatmul.f32.gmra.mxu0 %v6504
        %v6526 = vpop.f32.mrf.mxu0
        %v6527 = vadd.f32 0.0, %v6526
        %6528 = vdwg.mxu0
        %v6530 = vsel %vm5136, %v4432, 0
        %v6533 = vsel %vm5136, %v4435, 0
        %6535 = vmatpush.msra.mxu0 0.0
        %6536 = vmatpush.msra.mxu0 0.0
        %6537 = vmatpush.msra.mxu0 0.0
        %6538 = vmatpush.msra.mxu0 0.0
        %6539 = vmatpush.msra.mxu0 0.0
        %6540 = vmatpush.msra.mxu0 0.0
        %6541 = vmatpush.msra.mxu0 0.0
        %6542 = vmatpush.msra.mxu0 0.0
        %6543 = vmatpush.msra.mxu0 0.0
        %6544 = vmatpush.msra.mxu0 0.0
        %6545 = vmatpush.msra.mxu0 0.0
        %6546 = vmatpush.msra.mxu0 0.0
        %6547 = vmatpush.msra.mxu0 0.0
        %6548 = vmatpush.msra.mxu0 0.0
        %6549 = vmatpush.msra.mxu0 0.0
        %6550 = vmatpush.msra.mxu0 %v5134
        %6551 = vmatmul.f32.gmra.mxu0 %v6530
        %v6552 = vpop.f32.mrf.mxu0
        %v6553 = vadd.f32 0.0, %v6552
        %6554 = vmatmul.f32.gmra.mxu0 %v6533
        %v6555 = vpop.f32.mrf.mxu0
        %v6556 = vadd.f32 0.0, %v6555
        %6557 = vdwg.mxu0
        %v6559 = vsel %vm5136, %v4438, 0
        %v6562 = vsel %vm5136, %v4441, 0
        %6564 = vmatpush.msra.mxu0 0.0
        %6565 = vmatpush.msra.mxu0 0.0
        %6566 = vmatpush.msra.mxu0 0.0
        %6567 = vmatpush.msra.mxu0 0.0
        %6568 = vmatpush.msra.mxu0 0.0
        %6569 = vmatpush.msra.mxu0 0.0
        %6570 = vmatpush.msra.mxu0 0.0
        %6571 = vmatpush.msra.mxu0 0.0
        %6572 = vmatpush.msra.mxu0 0.0
        %6573 = vmatpush.msra.mxu0 0.0
        %6574 = vmatpush.msra.mxu0 0.0
        %6575 = vmatpush.msra.mxu0 0.0
        %6576 = vmatpush.msra.mxu0 0.0
        %6577 = vmatpush.msra.mxu0 0.0
        %6578 = vmatpush.msra.mxu0 0.0
        %6579 = vmatpush.msra.mxu0 %v5135
        %6580 = vmatmul.f32.gmra.mxu0 %v6559
        %v6581 = vpop.f32.mrf.mxu0
        %v6582 = vadd.f32 0.0, %v6581
        %6583 = vmatmul.f32.gmra.mxu0 %v6562
        %v6584 = vpop.f32.mrf.mxu0
        %v6585 = vadd.f32 0.0, %v6584
        %6586 = vdwg.mxu0
        %v6588 = vsel %vm5136, %v4628, 0
        %v6591 = vsel %vm5136, %v4631, 0
        %6593 = vmatpush.msra.mxu0 0.0
        %6594 = vmatpush.msra.mxu0 0.0
        %6595 = vmatpush.msra.mxu0 0.0
        %6596 = vmatpush.msra.mxu0 0.0
        %6597 = vmatpush.msra.mxu0 0.0
        %6598 = vmatpush.msra.mxu0 0.0
        %6599 = vmatpush.msra.mxu0 0.0
        %6600 = vmatpush.msra.mxu0 0.0
        %6601 = vmatpush.msra.mxu0 0.0
        %6602 = vmatpush.msra.mxu0 0.0
        %6603 = vmatpush.msra.mxu0 0.0
        %6604 = vmatpush.msra.mxu0 0.0
        %6605 = vmatpush.msra.mxu0 0.0
        %6606 = vmatpush.msra.mxu0 0.0
        %6607 = vmatpush.msra.mxu0 0.0
        %6608 = vmatpush.msra.mxu0 %v5111
        %6609 = vmatmul.f32.gmra.mxu0 %v6588
        %v6610 = vpop.f32.mrf.mxu0
        %v6611 = vadd.f32 0.0, %v6610
        %6612 = vmatmul.f32.gmra.mxu0 %v6591
        %v6613 = vpop.f32.mrf.mxu0
        %v6614 = vadd.f32 0.0, %v6613
        %6615 = vdwg.mxu0
        %v6617 = vsel %vm5136, %v4634, 0
        %v6620 = vsel %vm5136, %v4637, 0
        %6622 = vmatpush.msra.mxu0 0.0
        %6623 = vmatpush.msra.mxu0 0.0
        %6624 = vmatpush.msra.mxu0 0.0
        %6625 = vmatpush.msra.mxu0 0.0
        %6626 = vmatpush.msra.mxu0 0.0
        %6627 = vmatpush.msra.mxu0 0.0
        %6628 = vmatpush.msra.mxu0 0.0
        %6629 = vmatpush.msra.mxu0 0.0
        %6630 = vmatpush.msra.mxu0 0.0
        %6631 = vmatpush.msra.mxu0 0.0
        %6632 = vmatpush.msra.mxu0 0.0
        %6633 = vmatpush.msra.mxu0 0.0
        %6634 = vmatpush.msra.mxu0 0.0
        %6635 = vmatpush.msra.mxu0 0.0
        %6636 = vmatpush.msra.mxu0 0.0
        %6637 = vmatpush.msra.mxu0 %v5112
        %6638 = vmatmul.f32.gmra.mxu0 %v6617
        %v6639 = vpop.f32.mrf.mxu0
        %v6640 = vadd.f32 0.0, %v6639
        %6641 = vmatmul.f32.gmra.mxu0 %v6620
        %v6642 = vpop.f32.mrf.mxu0
        %v6643 = vadd.f32 0.0, %v6642
        %6644 = vdwg.mxu0
        %v6646 = vsel %vm5136, %v4640, 0
        %v6649 = vsel %vm5136, %v4643, 0
        %6651 = vmatpush.msra.mxu0 0.0
        %6652 = vmatpush.msra.mxu0 0.0
        %6653 = vmatpush.msra.mxu0 0.0
        %6654 = vmatpush.msra.mxu0 0.0
        %6655 = vmatpush.msra.mxu0 0.0
        %6656 = vmatpush.msra.mxu0 0.0
        %6657 = vmatpush.msra.mxu0 0.0
        %6658 = vmatpush.msra.mxu0 0.0
        %6659 = vmatpush.msra.mxu0 0.0
        %6660 = vmatpush.msra.mxu0 0.0
        %6661 = vmatpush.msra.mxu0 0.0
        %6662 = vmatpush.msra.mxu0 0.0
        %6663 = vmatpush.msra.mxu0 0.0
        %6664 = vmatpush.msra.mxu0 0.0
        %6665 = vmatpush.msra.mxu0 0.0
        %6666 = vmatpush.msra.mxu0 %v5113
        %6667 = vmatmul.f32.gmra.mxu0 %v6646
        %v6668 = vpop.f32.mrf.mxu0
        %v6669 = vadd.f32 0.0, %v6668
        %6670 = vmatmul.f32.gmra.mxu0 %v6649
        %v6671 = vpop.f32.mrf.mxu0
        %v6672 = vadd.f32 0.0, %v6671
        %6673 = vdwg.mxu0
        %v6675 = vsel %vm5136, %v4646, 0
        %v6678 = vsel %vm5136, %v4649, 0
        %6680 = vmatpush.msra.mxu0 0.0
        %6681 = vmatpush.msra.mxu0 0.0
        %6682 = vmatpush.msra.mxu0 0.0
        %6683 = vmatpush.msra.mxu0 0.0
        %6684 = vmatpush.msra.mxu0 0.0
        %6685 = vmatpush.msra.mxu0 0.0
        %6686 = vmatpush.msra.mxu0 0.0
        %6687 = vmatpush.msra.mxu0 0.0
        %6688 = vmatpush.msra.mxu0 0.0
        %6689 = vmatpush.msra.mxu0 0.0
        %6690 = vmatpush.msra.mxu0 0.0
        %6691 = vmatpush.msra.mxu0 0.0
        %6692 = vmatpush.msra.mxu0 0.0
        %6693 = vmatpush.msra.mxu0 0.0
        %6694 = vmatpush.msra.mxu0 0.0
        %6695 = vmatpush.msra.mxu0 %v5114
        %6696 = vmatmul.f32.gmra.mxu0 %v6675
        %v6697 = vpop.f32.mrf.mxu0
        %v6698 = vadd.f32 0.0, %v6697
        %6699 = vmatmul.f32.gmra.mxu0 %v6678
        %v6700 = vpop.f32.mrf.mxu0
        %v6701 = vadd.f32 0.0, %v6700
        %6702 = vdwg.mxu0
        %v6704 = vsel %vm5136, %v4652, 0
        %v6707 = vsel %vm5136, %v4655, 0
        %6709 = vmatpush.msra.mxu0 0.0
        %6710 = vmatpush.msra.mxu0 0.0
        %6711 = vmatpush.msra.mxu0 0.0
        %6712 = vmatpush.msra.mxu0 0.0
        %6713 = vmatpush.msra.mxu0 0.0
        %6714 = vmatpush.msra.mxu0 0.0
        %6715 = vmatpush.msra.mxu0 0.0
        %6716 = vmatpush.msra.mxu0 0.0
        %6717 = vmatpush.msra.mxu0 0.0
        %6718 = vmatpush.msra.mxu0 0.0
        %6719 = vmatpush.msra.mxu0 0.0
        %6720 = vmatpush.msra.mxu0 0.0
        %6721 = vmatpush.msra.mxu0 0.0
        %6722 = vmatpush.msra.mxu0 0.0
        %6723 = vmatpush.msra.mxu0 0.0
        %6724 = vmatpush.msra.mxu0 %v5115
        %6725 = vmatmul.f32.gmra.mxu0 %v6704
        %v6726 = vpop.f32.mrf.mxu0
        %v6727 = vadd.f32 0.0, %v6726
        %6728 = vmatmul.f32.gmra.mxu0 %v6707
        %v6729 = vpop.f32.mrf.mxu0
        %v6730 = vadd.f32 0.0, %v6729
        %6731 = vdwg.mxu0
        %v6733 = vsel %vm5136, %v4658, 0
        %v6736 = vsel %vm5136, %v4661, 0
        %6738 = vmatpush.msra.mxu0 0.0
        %6739 = vmatpush.msra.mxu0 0.0
        %6740 = vmatpush.msra.mxu0 0.0
        %6741 = vmatpush.msra.mxu0 0.0
        %6742 = vmatpush.msra.mxu0 0.0
        %6743 = vmatpush.msra.mxu0 0.0
        %6744 = vmatpush.msra.mxu0 0.0
        %6745 = vmatpush.msra.mxu0 0.0
        %6746 = vmatpush.msra.mxu0 0.0
        %6747 = vmatpush.msra.mxu0 0.0
        %6748 = vmatpush.msra.mxu0 0.0
        %6749 = vmatpush.msra.mxu0 0.0
        %6750 = vmatpush.msra.mxu0 0.0
        %6751 = vmatpush.msra.mxu0 0.0
        %6752 = vmatpush.msra.mxu0 0.0
        %6753 = vmatpush.msra.mxu0 %v5116
        %6754 = vmatmul.f32.gmra.mxu0 %v6733
        %v6755 = vpop.f32.mrf.mxu0
        %v6756 = vadd.f32 0.0, %v6755
        %6757 = vmatmul.f32.gmra.mxu0 %v6736
        %v6758 = vpop.f32.mrf.mxu0
        %v6759 = vadd.f32 0.0, %v6758
        %6760 = vdwg.mxu0
        %v6762 = vsel %vm5136, %v4664, 0
        %v6765 = vsel %vm5136, %v4667, 0
        %6767 = vmatpush.msra.mxu0 0.0
        %6768 = vmatpush.msra.mxu0 0.0
        %6769 = vmatpush.msra.mxu0 0.0
        %6770 = vmatpush.msra.mxu0 0.0
        %6771 = vmatpush.msra.mxu0 0.0
        %6772 = vmatpush.msra.mxu0 0.0
        %6773 = vmatpush.msra.mxu0 0.0
        %6774 = vmatpush.msra.mxu0 0.0
        %6775 = vmatpush.msra.mxu0 0.0
        %6776 = vmatpush.msra.mxu0 0.0
        %6777 = vmatpush.msra.mxu0 0.0
        %6778 = vmatpush.msra.mxu0 0.0
        %6779 = vmatpush.msra.mxu0 0.0
        %6780 = vmatpush.msra.mxu0 0.0
        %6781 = vmatpush.msra.mxu0 0.0
        %6782 = vmatpush.msra.mxu0 %v5117
        %6783 = vmatmul.f32.gmra.mxu0 %v6762
        %v6784 = vpop.f32.mrf.mxu0
        %v6785 = vadd.f32 0.0, %v6784
        %6786 = vmatmul.f32.gmra.mxu0 %v6765
        %v6787 = vpop.f32.mrf.mxu0
        %v6788 = vadd.f32 0.0, %v6787
        %6789 = vdwg.mxu0
        %v6791 = vsel %vm5136, %v4670, 0
        %v6794 = vsel %vm5136, %v4673, 0
        %6796 = vmatpush.msra.mxu0 0.0
        %6797 = vmatpush.msra.mxu0 0.0
        %6798 = vmatpush.msra.mxu0 0.0
        %6799 = vmatpush.msra.mxu0 0.0
        %6800 = vmatpush.msra.mxu0 0.0
        %6801 = vmatpush.msra.mxu0 0.0
        %6802 = vmatpush.msra.mxu0 0.0
        %6803 = vmatpush.msra.mxu0 0.0
        %6804 = vmatpush.msra.mxu0 0.0
        %6805 = vmatpush.msra.mxu0 0.0
        %6806 = vmatpush.msra.mxu0 0.0
        %6807 = vmatpush.msra.mxu0 0.0
        %6808 = vmatpush.msra.mxu0 0.0
        %6809 = vmatpush.msra.mxu0 0.0
        %6810 = vmatpush.msra.mxu0 0.0
        %6811 = vmatpush.msra.mxu0 %v5118
        %6812 = vmatmul.f32.gmra.mxu0 %v6791
        %v6813 = vpop.f32.mrf.mxu0
        %v6814 = vadd.f32 0.0, %v6813
        %6815 = vmatmul.f32.gmra.mxu0 %v6794
        %v6816 = vpop.f32.mrf.mxu0
        %v6817 = vadd.f32 0.0, %v6816
        %6818 = vdwg.mxu0
        %v6820 = vsel %vm5136, %v4676, 0
        %v6823 = vsel %vm5136, %v4679, 0
        %6825 = vmatpush.msra.mxu0 0.0
        %6826 = vmatpush.msra.mxu0 0.0
        %6827 = vmatpush.msra.mxu0 0.0
        %6828 = vmatpush.msra.mxu0 0.0
        %6829 = vmatpush.msra.mxu0 0.0
        %6830 = vmatpush.msra.mxu0 0.0
        %6831 = vmatpush.msra.mxu0 0.0
        %6832 = vmatpush.msra.mxu0 0.0
        %6833 = vmatpush.msra.mxu0 0.0
        %6834 = vmatpush.msra.mxu0 0.0
        %6835 = vmatpush.msra.mxu0 0.0
        %6836 = vmatpush.msra.mxu0 0.0
        %6837 = vmatpush.msra.mxu0 0.0
        %6838 = vmatpush.msra.mxu0 0.0
        %6839 = vmatpush.msra.mxu0 0.0
        %6840 = vmatpush.msra.mxu0 %v5119
        %6841 = vmatmul.f32.gmra.mxu0 %v6820
        %v6842 = vpop.f32.mrf.mxu0
        %v6843 = vadd.f32 0.0, %v6842
        %6844 = vmatmul.f32.gmra.mxu0 %v6823
        %v6845 = vpop.f32.mrf.mxu0
        %v6846 = vadd.f32 0.0, %v6845
        %6847 = vdwg.mxu0
        %v6849 = vsel %vm5136, %v4682, 0
        %v6852 = vsel %vm5136, %v4685, 0
        %6854 = vmatpush.msra.mxu0 0.0
        %6855 = vmatpush.msra.mxu0 0.0
        %6856 = vmatpush.msra.mxu0 0.0
        %6857 = vmatpush.msra.mxu0 0.0
        %6858 = vmatpush.msra.mxu0 0.0
        %6859 = vmatpush.msra.mxu0 0.0
        %6860 = vmatpush.msra.mxu0 0.0
        %6861 = vmatpush.msra.mxu0 0.0
        %6862 = vmatpush.msra.mxu0 0.0
        %6863 = vmatpush.msra.mxu0 0.0
        %6864 = vmatpush.msra.mxu0 0.0
        %6865 = vmatpush.msra.mxu0 0.0
        %6866 = vmatpush.msra.mxu0 0.0
        %6867 = vmatpush.msra.mxu0 0.0
        %6868 = vmatpush.msra.mxu0 0.0
        %6869 = vmatpush.msra.mxu0 %v5120
        %6870 = vmatmul.f32.gmra.mxu0 %v6849
        %v6871 = vpop.f32.mrf.mxu0
        %v6872 = vadd.f32 0.0, %v6871
        %6873 = vmatmul.f32.gmra.mxu0 %v6852
        %v6874 = vpop.f32.mrf.mxu0
        %v6875 = vadd.f32 0.0, %v6874
        %6876 = vdwg.mxu0
        %v6878 = vsel %vm5136, %v4688, 0
        %v6881 = vsel %vm5136, %v4691, 0
        %6883 = vmatpush.msra.mxu0 0.0
        %6884 = vmatpush.msra.mxu0 0.0
        %6885 = vmatpush.msra.mxu0 0.0
        %6886 = vmatpush.msra.mxu0 0.0
        %6887 = vmatpush.msra.mxu0 0.0
        %6888 = vmatpush.msra.mxu0 0.0
        %6889 = vmatpush.msra.mxu0 0.0
        %6890 = vmatpush.msra.mxu0 0.0
        %6891 = vmatpush.msra.mxu0 0.0
        %6892 = vmatpush.msra.mxu0 0.0
        %6893 = vmatpush.msra.mxu0 0.0
        %6894 = vmatpush.msra.mxu0 0.0
        %6895 = vmatpush.msra.mxu0 0.0
        %6896 = vmatpush.msra.mxu0 0.0
        %6897 = vmatpush.msra.mxu0 0.0
        %6898 = vmatpush.msra.mxu0 %v5121
        %6899 = vmatmul.f32.gmra.mxu0 %v6878
        %v6900 = vpop.f32.mrf.mxu0
        %v6901 = vadd.f32 0.0, %v6900
        %6902 = vmatmul.f32.gmra.mxu0 %v6881
        %v6903 = vpop.f32.mrf.mxu0
        %v6904 = vadd.f32 0.0, %v6903
        %6905 = vdwg.mxu0
        %v6907 = vsel %vm5136, %v4694, 0
        %v6910 = vsel %vm5136, %v4697, 0
        %6912 = vmatpush.msra.mxu0 0.0
        %6913 = vmatpush.msra.mxu0 0.0
        %6914 = vmatpush.msra.mxu0 0.0
        %6915 = vmatpush.msra.mxu0 0.0
        %6916 = vmatpush.msra.mxu0 0.0
        %6917 = vmatpush.msra.mxu0 0.0
        %6918 = vmatpush.msra.mxu0 0.0
        %6919 = vmatpush.msra.mxu0 0.0
        %6920 = vmatpush.msra.mxu0 0.0
        %6921 = vmatpush.msra.mxu0 0.0
        %6922 = vmatpush.msra.mxu0 0.0
        %6923 = vmatpush.msra.mxu0 0.0
        %6924 = vmatpush.msra.mxu0 0.0
        %6925 = vmatpush.msra.mxu0 0.0
        %6926 = vmatpush.msra.mxu0 0.0
        %6927 = vmatpush.msra.mxu0 %v5122
        %6928 = vmatmul.f32.gmra.mxu0 %v6907
        %v6929 = vpop.f32.mrf.mxu0
        %v6930 = vadd.f32 0.0, %v6929
        %6931 = vmatmul.f32.gmra.mxu0 %v6910
        %v6932 = vpop.f32.mrf.mxu0
        %v6933 = vadd.f32 0.0, %v6932
        %6934 = vdwg.mxu0
        %v6936 = vsel %vm5136, %v4700, 0
        %v6939 = vsel %vm5136, %v4703, 0
        %6941 = vmatpush.msra.mxu0 0.0
        %6942 = vmatpush.msra.mxu0 0.0
        %6943 = vmatpush.msra.mxu0 0.0
        %6944 = vmatpush.msra.mxu0 0.0
        %6945 = vmatpush.msra.mxu0 0.0
        %6946 = vmatpush.msra.mxu0 0.0
        %6947 = vmatpush.msra.mxu0 0.0
        %6948 = vmatpush.msra.mxu0 0.0
        %6949 = vmatpush.msra.mxu0 0.0
        %6950 = vmatpush.msra.mxu0 0.0
        %6951 = vmatpush.msra.mxu0 0.0
        %6952 = vmatpush.msra.mxu0 0.0
        %6953 = vmatpush.msra.mxu0 0.0
        %6954 = vmatpush.msra.mxu0 0.0
        %6955 = vmatpush.msra.mxu0 0.0
        %6956 = vmatpush.msra.mxu0 %v5123
        %6957 = vmatmul.f32.gmra.mxu0 %v6936
        %v6958 = vpop.f32.mrf.mxu0
        %v6959 = vadd.f32 0.0, %v6958
        %6960 = vmatmul.f32.gmra.mxu0 %v6939
        %v6961 = vpop.f32.mrf.mxu0
        %v6962 = vadd.f32 0.0, %v6961
        %6963 = vdwg.mxu0
        %v6965 = vsel %vm5136, %v4706, 0
        %v6968 = vsel %vm5136, %v4709, 0
        %6970 = vmatpush.msra.mxu0 0.0
        %6971 = vmatpush.msra.mxu0 0.0
        %6972 = vmatpush.msra.mxu0 0.0
        %6973 = vmatpush.msra.mxu0 0.0
        %6974 = vmatpush.msra.mxu0 0.0
        %6975 = vmatpush.msra.mxu0 0.0
        %6976 = vmatpush.msra.mxu0 0.0
        %6977 = vmatpush.msra.mxu0 0.0
        %6978 = vmatpush.msra.mxu0 0.0
        %6979 = vmatpush.msra.mxu0 0.0
        %6980 = vmatpush.msra.mxu0 0.0
        %6981 = vmatpush.msra.mxu0 0.0
        %6982 = vmatpush.msra.mxu0 0.0
        %6983 = vmatpush.msra.mxu0 0.0
        %6984 = vmatpush.msra.mxu0 0.0
        %6985 = vmatpush.msra.mxu0 %v5124
        %6986 = vmatmul.f32.gmra.mxu0 %v6965
        %v6987 = vpop.f32.mrf.mxu0
        %v6988 = vadd.f32 0.0, %v6987
        %6989 = vmatmul.f32.gmra.mxu0 %v6968
        %v6990 = vpop.f32.mrf.mxu0
        %v6991 = vadd.f32 0.0, %v6990
        %6992 = vdwg.mxu0
        %v6994 = vsel %vm5136, %v4712, 0
        %v6997 = vsel %vm5136, %v4715, 0
        %6999 = vmatpush.msra.mxu0 0.0
        %7000 = vmatpush.msra.mxu0 0.0
        %7001 = vmatpush.msra.mxu0 0.0
        %7002 = vmatpush.msra.mxu0 0.0
        %7003 = vmatpush.msra.mxu0 0.0
        %7004 = vmatpush.msra.mxu0 0.0
        %7005 = vmatpush.msra.mxu0 0.0
        %7006 = vmatpush.msra.mxu0 0.0
        %7007 = vmatpush.msra.mxu0 0.0
        %7008 = vmatpush.msra.mxu0 0.0
        %7009 = vmatpush.msra.mxu0 0.0
        %7010 = vmatpush.msra.mxu0 0.0
        %7011 = vmatpush.msra.mxu0 0.0
        %7012 = vmatpush.msra.mxu0 0.0
        %7013 = vmatpush.msra.mxu0 0.0
        %7014 = vmatpush.msra.mxu0 %v5125
        %7015 = vmatmul.f32.gmra.mxu0 %v6994
        %v7016 = vpop.f32.mrf.mxu0
        %v7017 = vadd.f32 0.0, %v7016
        %7018 = vmatmul.f32.gmra.mxu0 %v6997
        %v7019 = vpop.f32.mrf.mxu0
        %v7020 = vadd.f32 0.0, %v7019
        %7021 = vdwg.mxu0
        %v7023 = vsel %vm5136, %v4718, 0
        %v7026 = vsel %vm5136, %v4721, 0
        %7028 = vmatpush.msra.mxu0 0.0
        %7029 = vmatpush.msra.mxu0 0.0
        %7030 = vmatpush.msra.mxu0 0.0
        %7031 = vmatpush.msra.mxu0 0.0
        %7032 = vmatpush.msra.mxu0 0.0
        %7033 = vmatpush.msra.mxu0 0.0
        %7034 = vmatpush.msra.mxu0 0.0
        %7035 = vmatpush.msra.mxu0 0.0
        %7036 = vmatpush.msra.mxu0 0.0
        %7037 = vmatpush.msra.mxu0 0.0
        %7038 = vmatpush.msra.mxu0 0.0
        %7039 = vmatpush.msra.mxu0 0.0
        %7040 = vmatpush.msra.mxu0 0.0
        %7041 = vmatpush.msra.mxu0 0.0
        %7042 = vmatpush.msra.mxu0 0.0
        %7043 = vmatpush.msra.mxu0 %v5126
        %7044 = vmatmul.f32.gmra.mxu0 %v7023
        %v7045 = vpop.f32.mrf.mxu0
        %v7046 = vadd.f32 0.0, %v7045
        %7047 = vmatmul.f32.gmra.mxu0 %v7026
        %v7048 = vpop.f32.mrf.mxu0
        %v7049 = vadd.f32 0.0, %v7048
        %7050 = vdwg.mxu0
        %v7052 = vsel %vm5136, %v4724, 0
        %v7055 = vsel %vm5136, %v4727, 0
        %7057 = vmatpush.msra.mxu0 0.0
        %7058 = vmatpush.msra.mxu0 0.0
        %7059 = vmatpush.msra.mxu0 0.0
        %7060 = vmatpush.msra.mxu0 0.0
        %7061 = vmatpush.msra.mxu0 0.0
        %7062 = vmatpush.msra.mxu0 0.0
        %7063 = vmatpush.msra.mxu0 0.0
        %7064 = vmatpush.msra.mxu0 0.0
        %7065 = vmatpush.msra.mxu0 0.0
        %7066 = vmatpush.msra.mxu0 0.0
        %7067 = vmatpush.msra.mxu0 0.0
        %7068 = vmatpush.msra.mxu0 0.0
        %7069 = vmatpush.msra.mxu0 0.0
        %7070 = vmatpush.msra.mxu0 0.0
        %7071 = vmatpush.msra.mxu0 0.0
        %7072 = vmatpush.msra.mxu0 %v5127
        %7073 = vmatmul.f32.gmra.mxu0 %v7052
        %v7074 = vpop.f32.mrf.mxu0
        %v7075 = vadd.f32 0.0, %v7074
        %7076 = vmatmul.f32.gmra.mxu0 %v7055
        %v7077 = vpop.f32.mrf.mxu0
        %v7078 = vadd.f32 0.0, %v7077
        %7079 = vdwg.mxu0
        %v7081 = vsel %vm5136, %v4730, 0
        %v7084 = vsel %vm5136, %v4733, 0
        %7086 = vmatpush.msra.mxu0 0.0
        %7087 = vmatpush.msra.mxu0 0.0
        %7088 = vmatpush.msra.mxu0 0.0
        %7089 = vmatpush.msra.mxu0 0.0
        %7090 = vmatpush.msra.mxu0 0.0
        %7091 = vmatpush.msra.mxu0 0.0
        %7092 = vmatpush.msra.mxu0 0.0
        %7093 = vmatpush.msra.mxu0 0.0
        %7094 = vmatpush.msra.mxu0 0.0
        %7095 = vmatpush.msra.mxu0 0.0
        %7096 = vmatpush.msra.mxu0 0.0
        %7097 = vmatpush.msra.mxu0 0.0
        %7098 = vmatpush.msra.mxu0 0.0
        %7099 = vmatpush.msra.mxu0 0.0
        %7100 = vmatpush.msra.mxu0 0.0
        %7101 = vmatpush.msra.mxu0 %v5128
        %7102 = vmatmul.f32.gmra.mxu0 %v7081
        %v7103 = vpop.f32.mrf.mxu0
        %v7104 = vadd.f32 0.0, %v7103
        %7105 = vmatmul.f32.gmra.mxu0 %v7084
        %v7106 = vpop.f32.mrf.mxu0
        %v7107 = vadd.f32 0.0, %v7106
        %7108 = vdwg.mxu0
        %v7110 = vsel %vm5136, %v4736, 0
        %v7113 = vsel %vm5136, %v4739, 0
        %7115 = vmatpush.msra.mxu0 0.0
        %7116 = vmatpush.msra.mxu0 0.0
        %7117 = vmatpush.msra.mxu0 0.0
        %7118 = vmatpush.msra.mxu0 0.0
        %7119 = vmatpush.msra.mxu0 0.0
        %7120 = vmatpush.msra.mxu0 0.0
        %7121 = vmatpush.msra.mxu0 0.0
        %7122 = vmatpush.msra.mxu0 0.0
        %7123 = vmatpush.msra.mxu0 0.0
        %7124 = vmatpush.msra.mxu0 0.0
        %7125 = vmatpush.msra.mxu0 0.0
        %7126 = vmatpush.msra.mxu0 0.0
        %7127 = vmatpush.msra.mxu0 0.0
        %7128 = vmatpush.msra.mxu0 0.0
        %7129 = vmatpush.msra.mxu0 0.0
        %7130 = vmatpush.msra.mxu0 %v5129
        %7131 = vmatmul.f32.gmra.mxu0 %v7110
        %v7132 = vpop.f32.mrf.mxu0
        %v7133 = vadd.f32 0.0, %v7132
        %7134 = vmatmul.f32.gmra.mxu0 %v7113
        %v7135 = vpop.f32.mrf.mxu0
        %v7136 = vadd.f32 0.0, %v7135
        %7137 = vdwg.mxu0
        %v7139 = vsel %vm5136, %v4742, 0
        %v7142 = vsel %vm5136, %v4745, 0
        %7144 = vmatpush.msra.mxu0 0.0
        %7145 = vmatpush.msra.mxu0 0.0
        %7146 = vmatpush.msra.mxu0 0.0
        %7147 = vmatpush.msra.mxu0 0.0
        %7148 = vmatpush.msra.mxu0 0.0
        %7149 = vmatpush.msra.mxu0 0.0
        %7150 = vmatpush.msra.mxu0 0.0
        %7151 = vmatpush.msra.mxu0 0.0
        %7152 = vmatpush.msra.mxu0 0.0
        %7153 = vmatpush.msra.mxu0 0.0
        %7154 = vmatpush.msra.mxu0 0.0
        %7155 = vmatpush.msra.mxu0 0.0
        %7156 = vmatpush.msra.mxu0 0.0
        %7157 = vmatpush.msra.mxu0 0.0
        %7158 = vmatpush.msra.mxu0 0.0
        %7159 = vmatpush.msra.mxu0 %v5130
        %7160 = vmatmul.f32.gmra.mxu0 %v7139
        %v7161 = vpop.f32.mrf.mxu0
        %v7162 = vadd.f32 0.0, %v7161
        %7163 = vmatmul.f32.gmra.mxu0 %v7142
        %v7164 = vpop.f32.mrf.mxu0
        %v7165 = vadd.f32 0.0, %v7164
        %7166 = vdwg.mxu0
        %v7168 = vsel %vm5136, %v4748, 0
        %v7171 = vsel %vm5136, %v4751, 0
        %7173 = vmatpush.msra.mxu0 0.0
        %7174 = vmatpush.msra.mxu0 0.0
        %7175 = vmatpush.msra.mxu0 0.0
        %7176 = vmatpush.msra.mxu0 0.0
        %7177 = vmatpush.msra.mxu0 0.0
        %7178 = vmatpush.msra.mxu0 0.0
        %7179 = vmatpush.msra.mxu0 0.0
        %7180 = vmatpush.msra.mxu0 0.0
        %7181 = vmatpush.msra.mxu0 0.0
        %7182 = vmatpush.msra.mxu0 0.0
        %7183 = vmatpush.msra.mxu0 0.0
        %7184 = vmatpush.msra.mxu0 0.0
        %7185 = vmatpush.msra.mxu0 0.0
        %7186 = vmatpush.msra.mxu0 0.0
        %7187 = vmatpush.msra.mxu0 0.0
        %7188 = vmatpush.msra.mxu0 %v5131
        %7189 = vmatmul.f32.gmra.mxu0 %v7168
        %v7190 = vpop.f32.mrf.mxu0
        %v7191 = vadd.f32 0.0, %v7190
        %7192 = vmatmul.f32.gmra.mxu0 %v7171
        %v7193 = vpop.f32.mrf.mxu0
        %v7194 = vadd.f32 0.0, %v7193
        %7195 = vdwg.mxu0
        %v7197 = vsel %vm5136, %v4754, 0
        %v7200 = vsel %vm5136, %v4757, 0
        %7202 = vmatpush.msra.mxu0 0.0
        %7203 = vmatpush.msra.mxu0 0.0
        %7204 = vmatpush.msra.mxu0 0.0
        %7205 = vmatpush.msra.mxu0 0.0
        %7206 = vmatpush.msra.mxu0 0.0
        %7207 = vmatpush.msra.mxu0 0.0
        %7208 = vmatpush.msra.mxu0 0.0
        %7209 = vmatpush.msra.mxu0 0.0
        %7210 = vmatpush.msra.mxu0 0.0
        %7211 = vmatpush.msra.mxu0 0.0
        %7212 = vmatpush.msra.mxu0 0.0
        %7213 = vmatpush.msra.mxu0 0.0
        %7214 = vmatpush.msra.mxu0 0.0
        %7215 = vmatpush.msra.mxu0 0.0
        %7216 = vmatpush.msra.mxu0 0.0
        %7217 = vmatpush.msra.mxu0 %v5132
        %7218 = vmatmul.f32.gmra.mxu0 %v7197
        %v7219 = vpop.f32.mrf.mxu0
        %v7220 = vadd.f32 0.0, %v7219
        %7221 = vmatmul.f32.gmra.mxu0 %v7200
        %v7222 = vpop.f32.mrf.mxu0
        %v7223 = vadd.f32 0.0, %v7222
        %7224 = vdwg.mxu0
        %v7226 = vsel %vm5136, %v4760, 0
        %v7229 = vsel %vm5136, %v4763, 0
        %7231 = vmatpush.msra.mxu0 0.0
        %7232 = vmatpush.msra.mxu0 0.0
        %7233 = vmatpush.msra.mxu0 0.0
        %7234 = vmatpush.msra.mxu0 0.0
        %7235 = vmatpush.msra.mxu0 0.0
        %7236 = vmatpush.msra.mxu0 0.0
        %7237 = vmatpush.msra.mxu0 0.0
        %7238 = vmatpush.msra.mxu0 0.0
        %7239 = vmatpush.msra.mxu0 0.0
        %7240 = vmatpush.msra.mxu0 0.0
        %7241 = vmatpush.msra.mxu0 0.0
        %7242 = vmatpush.msra.mxu0 0.0
        %7243 = vmatpush.msra.mxu0 0.0
        %7244 = vmatpush.msra.mxu0 0.0
        %7245 = vmatpush.msra.mxu0 0.0
        %7246 = vmatpush.msra.mxu0 %v5133
        %7247 = vmatmul.f32.gmra.mxu0 %v7226
        %v7248 = vpop.f32.mrf.mxu0
        %v7249 = vadd.f32 0.0, %v7248
        %7250 = vmatmul.f32.gmra.mxu0 %v7229
        %v7251 = vpop.f32.mrf.mxu0
        %v7252 = vadd.f32 0.0, %v7251
        %7253 = vdwg.mxu0
        %v7255 = vsel %vm5136, %v4766, 0
        %v7258 = vsel %vm5136, %v4769, 0
        %7260 = vmatpush.msra.mxu0 0.0
        %7261 = vmatpush.msra.mxu0 0.0
        %7262 = vmatpush.msra.mxu0 0.0
        %7263 = vmatpush.msra.mxu0 0.0
        %7264 = vmatpush.msra.mxu0 0.0
        %7265 = vmatpush.msra.mxu0 0.0
        %7266 = vmatpush.msra.mxu0 0.0
        %7267 = vmatpush.msra.mxu0 0.0
        %7268 = vmatpush.msra.mxu0 0.0
        %7269 = vmatpush.msra.mxu0 0.0
        %7270 = vmatpush.msra.mxu0 0.0
        %7271 = vmatpush.msra.mxu0 0.0
        %7272 = vmatpush.msra.mxu0 0.0
        %7273 = vmatpush.msra.mxu0 0.0
        %7274 = vmatpush.msra.mxu0 0.0
        %7275 = vmatpush.msra.mxu0 %v5134
        %7276 = vmatmul.f32.gmra.mxu0 %v7255
        %v7277 = vpop.f32.mrf.mxu0
        %v7278 = vadd.f32 0.0, %v7277
        %7279 = vmatmul.f32.gmra.mxu0 %v7258
        %v7280 = vpop.f32.mrf.mxu0
        %v7281 = vadd.f32 0.0, %v7280
        %7282 = vdwg.mxu0
        %v7284 = vsel %vm5136, %v4772, 0
        %v7287 = vsel %vm5136, %v4775, 0
        %7289 = vmatpush.msra.mxu0 0.0
        %7290 = vmatpush.msra.mxu0 0.0
        %7291 = vmatpush.msra.mxu0 0.0
        %7292 = vmatpush.msra.mxu0 0.0
        %7293 = vmatpush.msra.mxu0 0.0
        %7294 = vmatpush.msra.mxu0 0.0
        %7295 = vmatpush.msra.mxu0 0.0
        %7296 = vmatpush.msra.mxu0 0.0
        %7297 = vmatpush.msra.mxu0 0.0
        %7298 = vmatpush.msra.mxu0 0.0
        %7299 = vmatpush.msra.mxu0 0.0
        %7300 = vmatpush.msra.mxu0 0.0
        %7301 = vmatpush.msra.mxu0 0.0
        %7302 = vmatpush.msra.mxu0 0.0
        %7303 = vmatpush.msra.mxu0 0.0
        %7304 = vmatpush.msra.mxu0 %v5135
        %7305 = vmatmul.f32.gmra.mxu0 %v7284
        %v7306 = vpop.f32.mrf.mxu0
        %v7307 = vadd.f32 0.0, %v7306
        %7308 = vmatmul.f32.gmra.mxu0 %v7287
        %v7309 = vpop.f32.mrf.mxu0
        %v7310 = vadd.f32 0.0, %v7309
        %7311 = vdwg.mxu0
        %v7313 = vsel %vm5136, %v4962, 0
        %v7316 = vsel %vm5136, %v4965, 0
        %7318 = vmatpush.msra.mxu0 0.0
        %7319 = vmatpush.msra.mxu0 0.0
        %7320 = vmatpush.msra.mxu0 0.0
        %7321 = vmatpush.msra.mxu0 0.0
        %7322 = vmatpush.msra.mxu0 0.0
        %7323 = vmatpush.msra.mxu0 0.0
        %7324 = vmatpush.msra.mxu0 0.0
        %7325 = vmatpush.msra.mxu0 0.0
        %7326 = vmatpush.msra.mxu0 0.0
        %7327 = vmatpush.msra.mxu0 0.0
        %7328 = vmatpush.msra.mxu0 0.0
        %7329 = vmatpush.msra.mxu0 0.0
        %7330 = vmatpush.msra.mxu0 0.0
        %7331 = vmatpush.msra.mxu0 0.0
        %7332 = vmatpush.msra.mxu0 0.0
        %7333 = vmatpush.msra.mxu0 %v5111
        %7334 = vmatmul.f32.gmra.mxu0 %v7313
        %v7335 = vpop.f32.mrf.mxu0
        %v7336 = vadd.f32 0.0, %v7335
        %7337 = vmatmul.f32.gmra.mxu0 %v7316
        %v7338 = vpop.f32.mrf.mxu0
        %v7339 = vadd.f32 0.0, %v7338
        %7340 = vdwg.mxu0
        %v7342 = vsel %vm5136, %v4968, 0
        %v7345 = vsel %vm5136, %v4971, 0
        %7347 = vmatpush.msra.mxu0 0.0
        %7348 = vmatpush.msra.mxu0 0.0
        %7349 = vmatpush.msra.mxu0 0.0
        %7350 = vmatpush.msra.mxu0 0.0
        %7351 = vmatpush.msra.mxu0 0.0
        %7352 = vmatpush.msra.mxu0 0.0
        %7353 = vmatpush.msra.mxu0 0.0
        %7354 = vmatpush.msra.mxu0 0.0
        %7355 = vmatpush.msra.mxu0 0.0
        %7356 = vmatpush.msra.mxu0 0.0
        %7357 = vmatpush.msra.mxu0 0.0
        %7358 = vmatpush.msra.mxu0 0.0
        %7359 = vmatpush.msra.mxu0 0.0
        %7360 = vmatpush.msra.mxu0 0.0
        %7361 = vmatpush.msra.mxu0 0.0
        %7362 = vmatpush.msra.mxu0 %v5112
        %7363 = vmatmul.f32.gmra.mxu0 %v7342
        %v7364 = vpop.f32.mrf.mxu0
        %v7365 = vadd.f32 0.0, %v7364
        %7366 = vmatmul.f32.gmra.mxu0 %v7345
        %v7367 = vpop.f32.mrf.mxu0
        %v7368 = vadd.f32 0.0, %v7367
        %7369 = vdwg.mxu0
        %v7371 = vsel %vm5136, %v4974, 0
        %v7374 = vsel %vm5136, %v4977, 0
        %7376 = vmatpush.msra.mxu0 0.0
        %7377 = vmatpush.msra.mxu0 0.0
        %7378 = vmatpush.msra.mxu0 0.0
        %7379 = vmatpush.msra.mxu0 0.0
        %7380 = vmatpush.msra.mxu0 0.0
        %7381 = vmatpush.msra.mxu0 0.0
        %7382 = vmatpush.msra.mxu0 0.0
        %7383 = vmatpush.msra.mxu0 0.0
        %7384 = vmatpush.msra.mxu0 0.0
        %7385 = vmatpush.msra.mxu0 0.0
        %7386 = vmatpush.msra.mxu0 0.0
        %7387 = vmatpush.msra.mxu0 0.0
        %7388 = vmatpush.msra.mxu0 0.0
        %7389 = vmatpush.msra.mxu0 0.0
        %7390 = vmatpush.msra.mxu0 0.0
        %7391 = vmatpush.msra.mxu0 %v5113
        %7392 = vmatmul.f32.gmra.mxu0 %v7371
        %v7393 = vpop.f32.mrf.mxu0
        %v7394 = vadd.f32 0.0, %v7393
        %7395 = vmatmul.f32.gmra.mxu0 %v7374
        %v7396 = vpop.f32.mrf.mxu0
        %v7397 = vadd.f32 0.0, %v7396
        %7398 = vdwg.mxu0
        %v7400 = vsel %vm5136, %v4980, 0
        %v7403 = vsel %vm5136, %v4983, 0
        %7405 = vmatpush.msra.mxu0 0.0
        %7406 = vmatpush.msra.mxu0 0.0
        %7407 = vmatpush.msra.mxu0 0.0
        %7408 = vmatpush.msra.mxu0 0.0
        %7409 = vmatpush.msra.mxu0 0.0
        %7410 = vmatpush.msra.mxu0 0.0
        %7411 = vmatpush.msra.mxu0 0.0
        %7412 = vmatpush.msra.mxu0 0.0
        %7413 = vmatpush.msra.mxu0 0.0
        %7414 = vmatpush.msra.mxu0 0.0
        %7415 = vmatpush.msra.mxu0 0.0
        %7416 = vmatpush.msra.mxu0 0.0
        %7417 = vmatpush.msra.mxu0 0.0
        %7418 = vmatpush.msra.mxu0 0.0
        %7419 = vmatpush.msra.mxu0 0.0
        %7420 = vmatpush.msra.mxu0 %v5114
        %7421 = vmatmul.f32.gmra.mxu0 %v7400
        %v7422 = vpop.f32.mrf.mxu0
        %v7423 = vadd.f32 0.0, %v7422
        %7424 = vmatmul.f32.gmra.mxu0 %v7403
        %v7425 = vpop.f32.mrf.mxu0
        %v7426 = vadd.f32 0.0, %v7425
        %7427 = vdwg.mxu0
        %v7429 = vsel %vm5136, %v4986, 0
        %v7432 = vsel %vm5136, %v4989, 0
        %7434 = vmatpush.msra.mxu0 0.0
        %7435 = vmatpush.msra.mxu0 0.0
        %7436 = vmatpush.msra.mxu0 0.0
        %7437 = vmatpush.msra.mxu0 0.0
        %7438 = vmatpush.msra.mxu0 0.0
        %7439 = vmatpush.msra.mxu0 0.0
        %7440 = vmatpush.msra.mxu0 0.0
        %7441 = vmatpush.msra.mxu0 0.0
        %7442 = vmatpush.msra.mxu0 0.0
        %7443 = vmatpush.msra.mxu0 0.0
        %7444 = vmatpush.msra.mxu0 0.0
        %7445 = vmatpush.msra.mxu0 0.0
        %7446 = vmatpush.msra.mxu0 0.0
        %7447 = vmatpush.msra.mxu0 0.0
        %7448 = vmatpush.msra.mxu0 0.0
        %7449 = vmatpush.msra.mxu0 %v5115
        %7450 = vmatmul.f32.gmra.mxu0 %v7429
        %v7451 = vpop.f32.mrf.mxu0
        %v7452 = vadd.f32 0.0, %v7451
        %7453 = vmatmul.f32.gmra.mxu0 %v7432
        %v7454 = vpop.f32.mrf.mxu0
        %v7455 = vadd.f32 0.0, %v7454
        %7456 = vdwg.mxu0
        %v7458 = vsel %vm5136, %v4992, 0
        %v7461 = vsel %vm5136, %v4995, 0
        %7463 = vmatpush.msra.mxu0 0.0
        %7464 = vmatpush.msra.mxu0 0.0
        %7465 = vmatpush.msra.mxu0 0.0
        %7466 = vmatpush.msra.mxu0 0.0
        %7467 = vmatpush.msra.mxu0 0.0
        %7468 = vmatpush.msra.mxu0 0.0
        %7469 = vmatpush.msra.mxu0 0.0
        %7470 = vmatpush.msra.mxu0 0.0
        %7471 = vmatpush.msra.mxu0 0.0
        %7472 = vmatpush.msra.mxu0 0.0
        %7473 = vmatpush.msra.mxu0 0.0
        %7474 = vmatpush.msra.mxu0 0.0
        %7475 = vmatpush.msra.mxu0 0.0
        %7476 = vmatpush.msra.mxu0 0.0
        %7477 = vmatpush.msra.mxu0 0.0
        %7478 = vmatpush.msra.mxu0 %v5116
        %7479 = vmatmul.f32.gmra.mxu0 %v7458
        %v7480 = vpop.f32.mrf.mxu0
        %v7481 = vadd.f32 0.0, %v7480
        %7482 = vmatmul.f32.gmra.mxu0 %v7461
        %v7483 = vpop.f32.mrf.mxu0
        %v7484 = vadd.f32 0.0, %v7483
        %7485 = vdwg.mxu0
        %v7487 = vsel %vm5136, %v4998, 0
        %v7490 = vsel %vm5136, %v5001, 0
        %7492 = vmatpush.msra.mxu0 0.0
        %7493 = vmatpush.msra.mxu0 0.0
        %7494 = vmatpush.msra.mxu0 0.0
        %7495 = vmatpush.msra.mxu0 0.0
        %7496 = vmatpush.msra.mxu0 0.0
        %7497 = vmatpush.msra.mxu0 0.0
        %7498 = vmatpush.msra.mxu0 0.0
        %7499 = vmatpush.msra.mxu0 0.0
        %7500 = vmatpush.msra.mxu0 0.0
        %7501 = vmatpush.msra.mxu0 0.0
        %7502 = vmatpush.msra.mxu0 0.0
        %7503 = vmatpush.msra.mxu0 0.0
        %7504 = vmatpush.msra.mxu0 0.0
        %7505 = vmatpush.msra.mxu0 0.0
        %7506 = vmatpush.msra.mxu0 0.0
        %7507 = vmatpush.msra.mxu0 %v5117
        %7508 = vmatmul.f32.gmra.mxu0 %v7487
        %v7509 = vpop.f32.mrf.mxu0
        %v7510 = vadd.f32 0.0, %v7509
        %7511 = vmatmul.f32.gmra.mxu0 %v7490
        %v7512 = vpop.f32.mrf.mxu0
        %v7513 = vadd.f32 0.0, %v7512
        %7514 = vdwg.mxu0
        %v7516 = vsel %vm5136, %v5004, 0
        %v7519 = vsel %vm5136, %v5007, 0
        %7521 = vmatpush.msra.mxu0 0.0
        %7522 = vmatpush.msra.mxu0 0.0
        %7523 = vmatpush.msra.mxu0 0.0
        %7524 = vmatpush.msra.mxu0 0.0
        %7525 = vmatpush.msra.mxu0 0.0
        %7526 = vmatpush.msra.mxu0 0.0
        %7527 = vmatpush.msra.mxu0 0.0
        %7528 = vmatpush.msra.mxu0 0.0
        %7529 = vmatpush.msra.mxu0 0.0
        %7530 = vmatpush.msra.mxu0 0.0
        %7531 = vmatpush.msra.mxu0 0.0
        %7532 = vmatpush.msra.mxu0 0.0
        %7533 = vmatpush.msra.mxu0 0.0
        %7534 = vmatpush.msra.mxu0 0.0
        %7535 = vmatpush.msra.mxu0 0.0
        %7536 = vmatpush.msra.mxu0 %v5118
        %7537 = vmatmul.f32.gmra.mxu0 %v7516
        %v7538 = vpop.f32.mrf.mxu0
        %v7539 = vadd.f32 0.0, %v7538
        %7540 = vmatmul.f32.gmra.mxu0 %v7519
        %v7541 = vpop.f32.mrf.mxu0
        %v7542 = vadd.f32 0.0, %v7541
        %7543 = vdwg.mxu0
        %v7545 = vsel %vm5136, %v5010, 0
        %v7548 = vsel %vm5136, %v5013, 0
        %7550 = vmatpush.msra.mxu0 0.0
        %7551 = vmatpush.msra.mxu0 0.0
        %7552 = vmatpush.msra.mxu0 0.0
        %7553 = vmatpush.msra.mxu0 0.0
        %7554 = vmatpush.msra.mxu0 0.0
        %7555 = vmatpush.msra.mxu0 0.0
        %7556 = vmatpush.msra.mxu0 0.0
        %7557 = vmatpush.msra.mxu0 0.0
        %7558 = vmatpush.msra.mxu0 0.0
        %7559 = vmatpush.msra.mxu0 0.0
        %7560 = vmatpush.msra.mxu0 0.0
        %7561 = vmatpush.msra.mxu0 0.0
        %7562 = vmatpush.msra.mxu0 0.0
        %7563 = vmatpush.msra.mxu0 0.0
        %7564 = vmatpush.msra.mxu0 0.0
        %7565 = vmatpush.msra.mxu0 %v5119
        %7566 = vmatmul.f32.gmra.mxu0 %v7545
        %v7567 = vpop.f32.mrf.mxu0
        %v7568 = vadd.f32 0.0, %v7567
        %7569 = vmatmul.f32.gmra.mxu0 %v7548
        %v7570 = vpop.f32.mrf.mxu0
        %v7571 = vadd.f32 0.0, %v7570
        %7572 = vdwg.mxu0
        %v7574 = vsel %vm5136, %v5016, 0
        %v7577 = vsel %vm5136, %v5019, 0
        %7579 = vmatpush.msra.mxu0 0.0
        %7580 = vmatpush.msra.mxu0 0.0
        %7581 = vmatpush.msra.mxu0 0.0
        %7582 = vmatpush.msra.mxu0 0.0
        %7583 = vmatpush.msra.mxu0 0.0
        %7584 = vmatpush.msra.mxu0 0.0
        %7585 = vmatpush.msra.mxu0 0.0
        %7586 = vmatpush.msra.mxu0 0.0
        %7587 = vmatpush.msra.mxu0 0.0
        %7588 = vmatpush.msra.mxu0 0.0
        %7589 = vmatpush.msra.mxu0 0.0
        %7590 = vmatpush.msra.mxu0 0.0
        %7591 = vmatpush.msra.mxu0 0.0
        %7592 = vmatpush.msra.mxu0 0.0
        %7593 = vmatpush.msra.mxu0 0.0
        %7594 = vmatpush.msra.mxu0 %v5120
        %7595 = vmatmul.f32.gmra.mxu0 %v7574
        %v7596 = vpop.f32.mrf.mxu0
        %v7597 = vadd.f32 0.0, %v7596
        %7598 = vmatmul.f32.gmra.mxu0 %v7577
        %v7599 = vpop.f32.mrf.mxu0
        %v7600 = vadd.f32 0.0, %v7599
        %7601 = vdwg.mxu0
        %v7603 = vsel %vm5136, %v5022, 0
        %v7606 = vsel %vm5136, %v5025, 0
        %7608 = vmatpush.msra.mxu0 0.0
        %7609 = vmatpush.msra.mxu0 0.0
        %7610 = vmatpush.msra.mxu0 0.0
        %7611 = vmatpush.msra.mxu0 0.0
        %7612 = vmatpush.msra.mxu0 0.0
        %7613 = vmatpush.msra.mxu0 0.0
        %7614 = vmatpush.msra.mxu0 0.0
        %7615 = vmatpush.msra.mxu0 0.0
        %7616 = vmatpush.msra.mxu0 0.0
        %7617 = vmatpush.msra.mxu0 0.0
        %7618 = vmatpush.msra.mxu0 0.0
        %7619 = vmatpush.msra.mxu0 0.0
        %7620 = vmatpush.msra.mxu0 0.0
        %7621 = vmatpush.msra.mxu0 0.0
        %7622 = vmatpush.msra.mxu0 0.0
        %7623 = vmatpush.msra.mxu0 %v5121
        %7624 = vmatmul.f32.gmra.mxu0 %v7603
        %v7625 = vpop.f32.mrf.mxu0
        %v7626 = vadd.f32 0.0, %v7625
        %7627 = vmatmul.f32.gmra.mxu0 %v7606
        %v7628 = vpop.f32.mrf.mxu0
        %v7629 = vadd.f32 0.0, %v7628
        %7630 = vdwg.mxu0
        %v7632 = vsel %vm5136, %v5028, 0
        %v7635 = vsel %vm5136, %v5031, 0
        %7637 = vmatpush.msra.mxu0 0.0
        %7638 = vmatpush.msra.mxu0 0.0
        %7639 = vmatpush.msra.mxu0 0.0
        %7640 = vmatpush.msra.mxu0 0.0
        %7641 = vmatpush.msra.mxu0 0.0
        %7642 = vmatpush.msra.mxu0 0.0
        %7643 = vmatpush.msra.mxu0 0.0
        %7644 = vmatpush.msra.mxu0 0.0
        %7645 = vmatpush.msra.mxu0 0.0
        %7646 = vmatpush.msra.mxu0 0.0
        %7647 = vmatpush.msra.mxu0 0.0
        %7648 = vmatpush.msra.mxu0 0.0
        %7649 = vmatpush.msra.mxu0 0.0
        %7650 = vmatpush.msra.mxu0 0.0
        %7651 = vmatpush.msra.mxu0 0.0
        %7652 = vmatpush.msra.mxu0 %v5122
        %7653 = vmatmul.f32.gmra.mxu0 %v7632
        %v7654 = vpop.f32.mrf.mxu0
        %v7655 = vadd.f32 0.0, %v7654
        %7656 = vmatmul.f32.gmra.mxu0 %v7635
        %v7657 = vpop.f32.mrf.mxu0
        %v7658 = vadd.f32 0.0, %v7657
        %7659 = vdwg.mxu0
        %v7661 = vsel %vm5136, %v5034, 0
        %v7664 = vsel %vm5136, %v5037, 0
        %7666 = vmatpush.msra.mxu0 0.0
        %7667 = vmatpush.msra.mxu0 0.0
        %7668 = vmatpush.msra.mxu0 0.0
        %7669 = vmatpush.msra.mxu0 0.0
        %7670 = vmatpush.msra.mxu0 0.0
        %7671 = vmatpush.msra.mxu0 0.0
        %7672 = vmatpush.msra.mxu0 0.0
        %7673 = vmatpush.msra.mxu0 0.0
        %7674 = vmatpush.msra.mxu0 0.0
        %7675 = vmatpush.msra.mxu0 0.0
        %7676 = vmatpush.msra.mxu0 0.0
        %7677 = vmatpush.msra.mxu0 0.0
        %7678 = vmatpush.msra.mxu0 0.0
        %7679 = vmatpush.msra.mxu0 0.0
        %7680 = vmatpush.msra.mxu0 0.0
        %7681 = vmatpush.msra.mxu0 %v5123
        %7682 = vmatmul.f32.gmra.mxu0 %v7661
        %v7683 = vpop.f32.mrf.mxu0
        %v7684 = vadd.f32 0.0, %v7683
        %7685 = vmatmul.f32.gmra.mxu0 %v7664
        %v7686 = vpop.f32.mrf.mxu0
        %v7687 = vadd.f32 0.0, %v7686
        %7688 = vdwg.mxu0
        %v7690 = vsel %vm5136, %v5040, 0
        %v7693 = vsel %vm5136, %v5043, 0
        %7695 = vmatpush.msra.mxu0 0.0
        %7696 = vmatpush.msra.mxu0 0.0
        %7697 = vmatpush.msra.mxu0 0.0
        %7698 = vmatpush.msra.mxu0 0.0
        %7699 = vmatpush.msra.mxu0 0.0
        %7700 = vmatpush.msra.mxu0 0.0
        %7701 = vmatpush.msra.mxu0 0.0
        %7702 = vmatpush.msra.mxu0 0.0
        %7703 = vmatpush.msra.mxu0 0.0
        %7704 = vmatpush.msra.mxu0 0.0
        %7705 = vmatpush.msra.mxu0 0.0
        %7706 = vmatpush.msra.mxu0 0.0
        %7707 = vmatpush.msra.mxu0 0.0
        %7708 = vmatpush.msra.mxu0 0.0
        %7709 = vmatpush.msra.mxu0 0.0
        %7710 = vmatpush.msra.mxu0 %v5124
        %7711 = vmatmul.f32.gmra.mxu0 %v7690
        %v7712 = vpop.f32.mrf.mxu0
        %v7713 = vadd.f32 0.0, %v7712
        %7714 = vmatmul.f32.gmra.mxu0 %v7693
        %v7715 = vpop.f32.mrf.mxu0
        %v7716 = vadd.f32 0.0, %v7715
        %7717 = vdwg.mxu0
        %v7719 = vsel %vm5136, %v5046, 0
        %v7722 = vsel %vm5136, %v5049, 0
        %7724 = vmatpush.msra.mxu0 0.0
        %7725 = vmatpush.msra.mxu0 0.0
        %7726 = vmatpush.msra.mxu0 0.0
        %7727 = vmatpush.msra.mxu0 0.0
        %7728 = vmatpush.msra.mxu0 0.0
        %7729 = vmatpush.msra.mxu0 0.0
        %7730 = vmatpush.msra.mxu0 0.0
        %7731 = vmatpush.msra.mxu0 0.0
        %7732 = vmatpush.msra.mxu0 0.0
        %7733 = vmatpush.msra.mxu0 0.0
        %7734 = vmatpush.msra.mxu0 0.0
        %7735 = vmatpush.msra.mxu0 0.0
        %7736 = vmatpush.msra.mxu0 0.0
        %7737 = vmatpush.msra.mxu0 0.0
        %7738 = vmatpush.msra.mxu0 0.0
        %7739 = vmatpush.msra.mxu0 %v5125
        %7740 = vmatmul.f32.gmra.mxu0 %v7719
        %v7741 = vpop.f32.mrf.mxu0
        %v7742 = vadd.f32 0.0, %v7741
        %7743 = vmatmul.f32.gmra.mxu0 %v7722
        %v7744 = vpop.f32.mrf.mxu0
        %v7745 = vadd.f32 0.0, %v7744
        %7746 = vdwg.mxu0
        %v7748 = vsel %vm5136, %v5052, 0
        %v7751 = vsel %vm5136, %v5055, 0
        %7753 = vmatpush.msra.mxu0 0.0
        %7754 = vmatpush.msra.mxu0 0.0
        %7755 = vmatpush.msra.mxu0 0.0
        %7756 = vmatpush.msra.mxu0 0.0
        %7757 = vmatpush.msra.mxu0 0.0
        %7758 = vmatpush.msra.mxu0 0.0
        %7759 = vmatpush.msra.mxu0 0.0
        %7760 = vmatpush.msra.mxu0 0.0
        %7761 = vmatpush.msra.mxu0 0.0
        %7762 = vmatpush.msra.mxu0 0.0
        %7763 = vmatpush.msra.mxu0 0.0
        %7764 = vmatpush.msra.mxu0 0.0
        %7765 = vmatpush.msra.mxu0 0.0
        %7766 = vmatpush.msra.mxu0 0.0
        %7767 = vmatpush.msra.mxu0 0.0
        %7768 = vmatpush.msra.mxu0 %v5126
        %7769 = vmatmul.f32.gmra.mxu0 %v7748
        %v7770 = vpop.f32.mrf.mxu0
        %v7771 = vadd.f32 0.0, %v7770
        %7772 = vmatmul.f32.gmra.mxu0 %v7751
        %v7773 = vpop.f32.mrf.mxu0
        %v7774 = vadd.f32 0.0, %v7773
        %7775 = vdwg.mxu0
        %v7777 = vsel %vm5136, %v5058, 0
        %v7780 = vsel %vm5136, %v5061, 0
        %7782 = vmatpush.msra.mxu0 0.0
        %7783 = vmatpush.msra.mxu0 0.0
        %7784 = vmatpush.msra.mxu0 0.0
        %7785 = vmatpush.msra.mxu0 0.0
        %7786 = vmatpush.msra.mxu0 0.0
        %7787 = vmatpush.msra.mxu0 0.0
        %7788 = vmatpush.msra.mxu0 0.0
        %7789 = vmatpush.msra.mxu0 0.0
        %7790 = vmatpush.msra.mxu0 0.0
        %7791 = vmatpush.msra.mxu0 0.0
        %7792 = vmatpush.msra.mxu0 0.0
        %7793 = vmatpush.msra.mxu0 0.0
        %7794 = vmatpush.msra.mxu0 0.0
        %7795 = vmatpush.msra.mxu0 0.0
        %7796 = vmatpush.msra.mxu0 0.0
        %7797 = vmatpush.msra.mxu0 %v5127
        %7798 = vmatmul.f32.gmra.mxu0 %v7777
        %v7799 = vpop.f32.mrf.mxu0
        %v7800 = vadd.f32 0.0, %v7799
        %7801 = vmatmul.f32.gmra.mxu0 %v7780
        %v7802 = vpop.f32.mrf.mxu0
        %v7803 = vadd.f32 0.0, %v7802
        %7804 = vdwg.mxu0
        %v7806 = vsel %vm5136, %v5064, 0
        %v7809 = vsel %vm5136, %v5067, 0
        %7811 = vmatpush.msra.mxu0 0.0
        %7812 = vmatpush.msra.mxu0 0.0
        %7813 = vmatpush.msra.mxu0 0.0
        %7814 = vmatpush.msra.mxu0 0.0
        %7815 = vmatpush.msra.mxu0 0.0
        %7816 = vmatpush.msra.mxu0 0.0
        %7817 = vmatpush.msra.mxu0 0.0
        %7818 = vmatpush.msra.mxu0 0.0
        %7819 = vmatpush.msra.mxu0 0.0
        %7820 = vmatpush.msra.mxu0 0.0
        %7821 = vmatpush.msra.mxu0 0.0
        %7822 = vmatpush.msra.mxu0 0.0
        %7823 = vmatpush.msra.mxu0 0.0
        %7824 = vmatpush.msra.mxu0 0.0
        %7825 = vmatpush.msra.mxu0 0.0
        %7826 = vmatpush.msra.mxu0 %v5128
        %7827 = vmatmul.f32.gmra.mxu0 %v7806
        %v7828 = vpop.f32.mrf.mxu0
        %v7829 = vadd.f32 0.0, %v7828
        %7830 = vmatmul.f32.gmra.mxu0 %v7809
        %v7831 = vpop.f32.mrf.mxu0
        %v7832 = vadd.f32 0.0, %v7831
        %7833 = vdwg.mxu0
        %v7835 = vsel %vm5136, %v5070, 0
        %v7838 = vsel %vm5136, %v5073, 0
        %7840 = vmatpush.msra.mxu0 0.0
        %7841 = vmatpush.msra.mxu0 0.0
        %7842 = vmatpush.msra.mxu0 0.0
        %7843 = vmatpush.msra.mxu0 0.0
        %7844 = vmatpush.msra.mxu0 0.0
        %7845 = vmatpush.msra.mxu0 0.0
        %7846 = vmatpush.msra.mxu0 0.0
        %7847 = vmatpush.msra.mxu0 0.0
        %7848 = vmatpush.msra.mxu0 0.0
        %7849 = vmatpush.msra.mxu0 0.0
        %7850 = vmatpush.msra.mxu0 0.0
        %7851 = vmatpush.msra.mxu0 0.0
        %7852 = vmatpush.msra.mxu0 0.0
        %7853 = vmatpush.msra.mxu0 0.0
        %7854 = vmatpush.msra.mxu0 0.0
        %7855 = vmatpush.msra.mxu0 %v5129
        %7856 = vmatmul.f32.gmra.mxu0 %v7835
        %v7857 = vpop.f32.mrf.mxu0
        %v7858 = vadd.f32 0.0, %v7857
        %7859 = vmatmul.f32.gmra.mxu0 %v7838
        %v7860 = vpop.f32.mrf.mxu0
        %v7861 = vadd.f32 0.0, %v7860
        %7862 = vdwg.mxu0
        %v7864 = vsel %vm5136, %v5076, 0
        %v7867 = vsel %vm5136, %v5079, 0
        %7869 = vmatpush.msra.mxu0 0.0
        %7870 = vmatpush.msra.mxu0 0.0
        %7871 = vmatpush.msra.mxu0 0.0
        %7872 = vmatpush.msra.mxu0 0.0
        %7873 = vmatpush.msra.mxu0 0.0
        %7874 = vmatpush.msra.mxu0 0.0
        %7875 = vmatpush.msra.mxu0 0.0
        %7876 = vmatpush.msra.mxu0 0.0
        %7877 = vmatpush.msra.mxu0 0.0
        %7878 = vmatpush.msra.mxu0 0.0
        %7879 = vmatpush.msra.mxu0 0.0
        %7880 = vmatpush.msra.mxu0 0.0
        %7881 = vmatpush.msra.mxu0 0.0
        %7882 = vmatpush.msra.mxu0 0.0
        %7883 = vmatpush.msra.mxu0 0.0
        %7884 = vmatpush.msra.mxu0 %v5130
        %7885 = vmatmul.f32.gmra.mxu0 %v7864
        %v7886 = vpop.f32.mrf.mxu0
        %v7887 = vadd.f32 0.0, %v7886
        %7888 = vmatmul.f32.gmra.mxu0 %v7867
        %v7889 = vpop.f32.mrf.mxu0
        %v7890 = vadd.f32 0.0, %v7889
        %7891 = vdwg.mxu0
        %v7893 = vsel %vm5136, %v5082, 0
        %v7896 = vsel %vm5136, %v5085, 0
        %7898 = vmatpush.msra.mxu0 0.0
        %7899 = vmatpush.msra.mxu0 0.0
        %7900 = vmatpush.msra.mxu0 0.0
        %7901 = vmatpush.msra.mxu0 0.0
        %7902 = vmatpush.msra.mxu0 0.0
        %7903 = vmatpush.msra.mxu0 0.0
        %7904 = vmatpush.msra.mxu0 0.0
        %7905 = vmatpush.msra.mxu0 0.0
        %7906 = vmatpush.msra.mxu0 0.0
        %7907 = vmatpush.msra.mxu0 0.0
        %7908 = vmatpush.msra.mxu0 0.0
        %7909 = vmatpush.msra.mxu0 0.0
        %7910 = vmatpush.msra.mxu0 0.0
        %7911 = vmatpush.msra.mxu0 0.0
        %7912 = vmatpush.msra.mxu0 0.0
        %7913 = vmatpush.msra.mxu0 %v5131
        %7914 = vmatmul.f32.gmra.mxu0 %v7893
        %v7915 = vpop.f32.mrf.mxu0
        %v7916 = vadd.f32 0.0, %v7915
        %7917 = vmatmul.f32.gmra.mxu0 %v7896
        %v7918 = vpop.f32.mrf.mxu0
        %v7919 = vadd.f32 0.0, %v7918
        %7920 = vdwg.mxu0
        %v7922 = vsel %vm5136, %v5088, 0
        %v7925 = vsel %vm5136, %v5091, 0
        %7927 = vmatpush.msra.mxu0 0.0
        %7928 = vmatpush.msra.mxu0 0.0
        %7929 = vmatpush.msra.mxu0 0.0
        %7930 = vmatpush.msra.mxu0 0.0
        %7931 = vmatpush.msra.mxu0 0.0
        %7932 = vmatpush.msra.mxu0 0.0
        %7933 = vmatpush.msra.mxu0 0.0
        %7934 = vmatpush.msra.mxu0 0.0
        %7935 = vmatpush.msra.mxu0 0.0
        %7936 = vmatpush.msra.mxu0 0.0
        %7937 = vmatpush.msra.mxu0 0.0
        %7938 = vmatpush.msra.mxu0 0.0
        %7939 = vmatpush.msra.mxu0 0.0
        %7940 = vmatpush.msra.mxu0 0.0
        %7941 = vmatpush.msra.mxu0 0.0
        %7942 = vmatpush.msra.mxu0 %v5132
        %7943 = vmatmul.f32.gmra.mxu0 %v7922
        %v7944 = vpop.f32.mrf.mxu0
        %v7945 = vadd.f32 0.0, %v7944
        %7946 = vmatmul.f32.gmra.mxu0 %v7925
        %v7947 = vpop.f32.mrf.mxu0
        %v7948 = vadd.f32 0.0, %v7947
        %7949 = vdwg.mxu0
        %v7951 = vsel %vm5136, %v5094, 0
        %v7954 = vsel %vm5136, %v5097, 0
        %7956 = vmatpush.msra.mxu0 0.0
        %7957 = vmatpush.msra.mxu0 0.0
        %7958 = vmatpush.msra.mxu0 0.0
        %7959 = vmatpush.msra.mxu0 0.0
        %7960 = vmatpush.msra.mxu0 0.0
        %7961 = vmatpush.msra.mxu0 0.0
        %7962 = vmatpush.msra.mxu0 0.0
        %7963 = vmatpush.msra.mxu0 0.0
        %7964 = vmatpush.msra.mxu0 0.0
        %7965 = vmatpush.msra.mxu0 0.0
        %7966 = vmatpush.msra.mxu0 0.0
        %7967 = vmatpush.msra.mxu0 0.0
        %7968 = vmatpush.msra.mxu0 0.0
        %7969 = vmatpush.msra.mxu0 0.0
        %7970 = vmatpush.msra.mxu0 0.0
        %7971 = vmatpush.msra.mxu0 %v5133
        %7972 = vmatmul.f32.gmra.mxu0 %v7951
        %v7973 = vpop.f32.mrf.mxu0
        %v7974 = vadd.f32 0.0, %v7973
        %7975 = vmatmul.f32.gmra.mxu0 %v7954
        %v7976 = vpop.f32.mrf.mxu0
        %v7977 = vadd.f32 0.0, %v7976
        %7978 = vdwg.mxu0
        %v7980 = vsel %vm5136, %v5100, 0
        %v7983 = vsel %vm5136, %v5103, 0
        %7985 = vmatpush.msra.mxu0 0.0
        %7986 = vmatpush.msra.mxu0 0.0
        %7987 = vmatpush.msra.mxu0 0.0
        %7988 = vmatpush.msra.mxu0 0.0
        %7989 = vmatpush.msra.mxu0 0.0
        %7990 = vmatpush.msra.mxu0 0.0
        %7991 = vmatpush.msra.mxu0 0.0
        %7992 = vmatpush.msra.mxu0 0.0
        %7993 = vmatpush.msra.mxu0 0.0
        %7994 = vmatpush.msra.mxu0 0.0
        %7995 = vmatpush.msra.mxu0 0.0
        %7996 = vmatpush.msra.mxu0 0.0
        %7997 = vmatpush.msra.mxu0 0.0
        %7998 = vmatpush.msra.mxu0 0.0
        %7999 = vmatpush.msra.mxu0 0.0
        %8000 = vmatpush.msra.mxu0 %v5134
        %8001 = vmatmul.f32.gmra.mxu0 %v7980
        %v8002 = vpop.f32.mrf.mxu0
        %v8003 = vadd.f32 0.0, %v8002
        %8004 = vmatmul.f32.gmra.mxu0 %v7983
        %v8005 = vpop.f32.mrf.mxu0
        %v8006 = vadd.f32 0.0, %v8005
        %8007 = vdwg.mxu0
        %v8009 = vsel %vm5136, %v5106, 0
        %v8012 = vsel %vm5136, %v5109, 0
        %8014 = vmatpush.msra.mxu0 0.0
        %8015 = vmatpush.msra.mxu0 0.0
        %8016 = vmatpush.msra.mxu0 0.0
        %8017 = vmatpush.msra.mxu0 0.0
        %8018 = vmatpush.msra.mxu0 0.0
        %8019 = vmatpush.msra.mxu0 0.0
        %8020 = vmatpush.msra.mxu0 0.0
        %8021 = vmatpush.msra.mxu0 0.0
        %8022 = vmatpush.msra.mxu0 0.0
        %8023 = vmatpush.msra.mxu0 0.0
        %8024 = vmatpush.msra.mxu0 0.0
        %8025 = vmatpush.msra.mxu0 0.0
        %8026 = vmatpush.msra.mxu0 0.0
        %8027 = vmatpush.msra.mxu0 0.0
        %8028 = vmatpush.msra.mxu0 0.0
        %8029 = vmatpush.msra.mxu0 %v5135
        %8030 = vmatmul.f32.gmra.mxu0 %v8009
        %v8031 = vpop.f32.mrf.mxu0
        %v8032 = vadd.f32 0.0, %v8031
        %8033 = vmatmul.f32.gmra.mxu0 %v8012
        %v8034 = vpop.f32.mrf.mxu0
        %v8035 = vadd.f32 0.0, %v8034
        %8036 = vdwg.mxu0
        %vm8037 = vcmask 130048
        %v8038 = vsel %vm8037, %v5161, 0.0
        %v8039 = vsel %vm8037, %v5190, 0.0
        %v8040 = vadd.f32 %v8038, %v8039
        %v8041 = vsel %vm8037, %v5219, 0.0
        %v8042 = vadd.f32 %v8040, %v8041
        %v8043 = vsel %vm8037, %v5248, 0.0
        %v8044 = vadd.f32 %v8042, %v8043
        %v8045 = vsel %vm8037, %v5277, 0.0
        %v8046 = vadd.f32 %v8044, %v8045
        %v8047 = vsel %vm8037, %v5306, 0.0
        %v8048 = vadd.f32 %v8046, %v8047
        %v8049 = vsel %vm8037, %v5335, 0.0
        %v8050 = vadd.f32 %v8048, %v8049
        %v8051 = vsel %vm8037, %v5364, 0.0
        %v8052 = vadd.f32 %v8050, %v8051
        %v8053 = vsel %vm8037, %v5393, 0.0
        %v8054 = vadd.f32 %v8052, %v8053
        %v8055 = vsel %vm8037, %v5422, 0.0
        %v8056 = vadd.f32 %v8054, %v8055
        %v8057 = vsel %vm8037, %v5451, 0.0
        %v8058 = vadd.f32 %v8056, %v8057
        %v8059 = vsel %vm8037, %v5480, 0.0
        %v8060 = vadd.f32 %v8058, %v8059
        %v8061 = vsel %vm8037, %v5509, 0.0
        %v8062 = vadd.f32 %v8060, %v8061
        %v8063 = vsel %vm8037, %v5538, 0.0
        %v8064 = vadd.f32 %v8062, %v8063
        %v8065 = vsel %vm8037, %v5567, 0.0
        %v8066 = vadd.f32 %v8064, %v8065
        %v8067 = vsel %vm8037, %v5596, 0.0
        %v8068 = vadd.f32 %v8066, %v8067
        %v8069 = vsel %vm8037, %v5625, 0.0
        %v8070 = vadd.f32 %v8068, %v8069
        %v8071 = vsel %vm8037, %v5654, 0.0
        %v8072 = vadd.f32 %v8070, %v8071
        %v8073 = vsel %vm8037, %v5683, 0.0
        %v8074 = vadd.f32 %v8072, %v8073
        %v8075 = vsel %vm8037, %v5712, 0.0
        %v8076 = vadd.f32 %v8074, %v8075
        %v8077 = vsel %vm8037, %v5741, 0.0
        %v8078 = vadd.f32 %v8076, %v8077
        %v8079 = vsel %vm8037, %v5770, 0.0
        %v8080 = vadd.f32 %v8078, %v8079
        %v8081 = vsel %vm8037, %v5799, 0.0
        %v8082 = vadd.f32 %v8080, %v8081
        %v8083 = vsel %vm8037, %v5828, 0.0
        %v8084 = vadd.f32 %v8082, %v8083
        %v8085 = vsel %vm8037, %v5857, 0.0
        %v8086 = vadd.f32 %v8084, %v8085
        %v8087 = vsel %vm8037, %v5164, 0.0
        %v8088 = vsel %vm8037, %v5193, 0.0
        %v8089 = vadd.f32 %v8087, %v8088
        %v8090 = vsel %vm8037, %v5222, 0.0
        %v8091 = vadd.f32 %v8089, %v8090
        %v8092 = vsel %vm8037, %v5251, 0.0
        %v8093 = vadd.f32 %v8091, %v8092
        %v8094 = vsel %vm8037, %v5280, 0.0
        %v8095 = vadd.f32 %v8093, %v8094
        %v8096 = vsel %vm8037, %v5309, 0.0
        %v8097 = vadd.f32 %v8095, %v8096
        %v8098 = vsel %vm8037, %v5338, 0.0
        %v8099 = vadd.f32 %v8097, %v8098
        %v8100 = vsel %vm8037, %v5367, 0.0
        %v8101 = vadd.f32 %v8099, %v8100
        %v8102 = vsel %vm8037, %v5396, 0.0
        %v8103 = vadd.f32 %v8101, %v8102
        %v8104 = vsel %vm8037, %v5425, 0.0
        %v8105 = vadd.f32 %v8103, %v8104
        %v8106 = vsel %vm8037, %v5454, 0.0
        %v8107 = vadd.f32 %v8105, %v8106
        %v8108 = vsel %vm8037, %v5483, 0.0
        %v8109 = vadd.f32 %v8107, %v8108
        %v8110 = vsel %vm8037, %v5512, 0.0
        %v8111 = vadd.f32 %v8109, %v8110
        %v8112 = vsel %vm8037, %v5541, 0.0
        %v8113 = vadd.f32 %v8111, %v8112
        %v8114 = vsel %vm8037, %v5570, 0.0
        %v8115 = vadd.f32 %v8113, %v8114
        %v8116 = vsel %vm8037, %v5599, 0.0
        %v8117 = vadd.f32 %v8115, %v8116
        %v8118 = vsel %vm8037, %v5628, 0.0
        %v8119 = vadd.f32 %v8117, %v8118
        %v8120 = vsel %vm8037, %v5657, 0.0
        %v8121 = vadd.f32 %v8119, %v8120
        %v8122 = vsel %vm8037, %v5686, 0.0
        %v8123 = vadd.f32 %v8121, %v8122
        %v8124 = vsel %vm8037, %v5715, 0.0
        %v8125 = vadd.f32 %v8123, %v8124
        %v8126 = vsel %vm8037, %v5744, 0.0
        %v8127 = vadd.f32 %v8125, %v8126
        %v8128 = vsel %vm8037, %v5773, 0.0
        %v8129 = vadd.f32 %v8127, %v8128
        %v8130 = vsel %vm8037, %v5802, 0.0
        %v8131 = vadd.f32 %v8129, %v8130
        %v8132 = vsel %vm8037, %v5831, 0.0
        %v8133 = vadd.f32 %v8131, %v8132
        %v8134 = vsel %vm8037, %v5860, 0.0
        %v8135 = vadd.f32 %v8133, %v8134
        %v8136 = vsel %vm8037, %v5886, 0.0
        %v8137 = vsel %vm8037, %v5915, 0.0
        %v8138 = vadd.f32 %v8136, %v8137
        %v8139 = vsel %vm8037, %v5944, 0.0
        %v8140 = vadd.f32 %v8138, %v8139
        %v8141 = vsel %vm8037, %v5973, 0.0
        %v8142 = vadd.f32 %v8140, %v8141
        %v8143 = vsel %vm8037, %v6002, 0.0
        %v8144 = vadd.f32 %v8142, %v8143
        %v8145 = vsel %vm8037, %v6031, 0.0
        %v8146 = vadd.f32 %v8144, %v8145
        %v8147 = vsel %vm8037, %v6060, 0.0
        %v8148 = vadd.f32 %v8146, %v8147
        %v8149 = vsel %vm8037, %v6089, 0.0
        %v8150 = vadd.f32 %v8148, %v8149
        %v8151 = vsel %vm8037, %v6118, 0.0
        %v8152 = vadd.f32 %v8150, %v8151
        %v8153 = vsel %vm8037, %v6147, 0.0
        %v8154 = vadd.f32 %v8152, %v8153
        %v8155 = vsel %vm8037, %v6176, 0.0
        %v8156 = vadd.f32 %v8154, %v8155
        %v8157 = vsel %vm8037, %v6205, 0.0
        %v8158 = vadd.f32 %v8156, %v8157
        %v8159 = vsel %vm8037, %v6234, 0.0
        %v8160 = vadd.f32 %v8158, %v8159
        %v8161 = vsel %vm8037, %v6263, 0.0
        %v8162 = vadd.f32 %v8160, %v8161
        %v8163 = vsel %vm8037, %v6292, 0.0
        %v8164 = vadd.f32 %v8162, %v8163
        %v8165 = vsel %vm8037, %v6321, 0.0
        %v8166 = vadd.f32 %v8164, %v8165
        %v8167 = vsel %vm8037, %v6350, 0.0
        %v8168 = vadd.f32 %v8166, %v8167
        %v8169 = vsel %vm8037, %v6379, 0.0
        %v8170 = vadd.f32 %v8168, %v8169
        %v8171 = vsel %vm8037, %v6408, 0.0
        %v8172 = vadd.f32 %v8170, %v8171
        %v8173 = vsel %vm8037, %v6437, 0.0
        %v8174 = vadd.f32 %v8172, %v8173
        %v8175 = vsel %vm8037, %v6466, 0.0
        %v8176 = vadd.f32 %v8174, %v8175
        %v8177 = vsel %vm8037, %v6495, 0.0
        %v8178 = vadd.f32 %v8176, %v8177
        %v8179 = vsel %vm8037, %v6524, 0.0
        %v8180 = vadd.f32 %v8178, %v8179
        %v8181 = vsel %vm8037, %v6553, 0.0
        %v8182 = vadd.f32 %v8180, %v8181
        %v8183 = vsel %vm8037, %v6582, 0.0
        %v8184 = vadd.f32 %v8182, %v8183
        %v8185 = vsel %vm8037, %v5889, 0.0
        %v8186 = vsel %vm8037, %v5918, 0.0
        %v8187 = vadd.f32 %v8185, %v8186
        %v8188 = vsel %vm8037, %v5947, 0.0
        %v8189 = vadd.f32 %v8187, %v8188
        %v8190 = vsel %vm8037, %v5976, 0.0
        %v8191 = vadd.f32 %v8189, %v8190
        %v8192 = vsel %vm8037, %v6005, 0.0
        %v8193 = vadd.f32 %v8191, %v8192
        %v8194 = vsel %vm8037, %v6034, 0.0
        %v8195 = vadd.f32 %v8193, %v8194
        %v8196 = vsel %vm8037, %v6063, 0.0
        %v8197 = vadd.f32 %v8195, %v8196
        %v8198 = vsel %vm8037, %v6092, 0.0
        %v8199 = vadd.f32 %v8197, %v8198
        %v8200 = vsel %vm8037, %v6121, 0.0
        %v8201 = vadd.f32 %v8199, %v8200
        %v8202 = vsel %vm8037, %v6150, 0.0
        %v8203 = vadd.f32 %v8201, %v8202
        %v8204 = vsel %vm8037, %v6179, 0.0
        %v8205 = vadd.f32 %v8203, %v8204
        %v8206 = vsel %vm8037, %v6208, 0.0
        %v8207 = vadd.f32 %v8205, %v8206
        %v8208 = vsel %vm8037, %v6237, 0.0
        %v8209 = vadd.f32 %v8207, %v8208
        %v8210 = vsel %vm8037, %v6266, 0.0
        %v8211 = vadd.f32 %v8209, %v8210
        %v8212 = vsel %vm8037, %v6295, 0.0
        %v8213 = vadd.f32 %v8211, %v8212
        %v8214 = vsel %vm8037, %v6324, 0.0
        %v8215 = vadd.f32 %v8213, %v8214
        %v8216 = vsel %vm8037, %v6353, 0.0
        %v8217 = vadd.f32 %v8215, %v8216
        %v8218 = vsel %vm8037, %v6382, 0.0
        %v8219 = vadd.f32 %v8217, %v8218
        %v8220 = vsel %vm8037, %v6411, 0.0
        %v8221 = vadd.f32 %v8219, %v8220
        %v8222 = vsel %vm8037, %v6440, 0.0
        %v8223 = vadd.f32 %v8221, %v8222
        %v8224 = vsel %vm8037, %v6469, 0.0
        %v8225 = vadd.f32 %v8223, %v8224
        %v8226 = vsel %vm8037, %v6498, 0.0
        %v8227 = vadd.f32 %v8225, %v8226
        %v8228 = vsel %vm8037, %v6527, 0.0
        %v8229 = vadd.f32 %v8227, %v8228
        %v8230 = vsel %vm8037, %v6556, 0.0
        %v8231 = vadd.f32 %v8229, %v8230
        %v8232 = vsel %vm8037, %v6585, 0.0
        %v8233 = vadd.f32 %v8231, %v8232
        %v8234 = vsel %vm8037, %v6611, 0.0
        %v8235 = vsel %vm8037, %v6640, 0.0
        %v8236 = vadd.f32 %v8234, %v8235
        %v8237 = vsel %vm8037, %v6669, 0.0
        %v8238 = vadd.f32 %v8236, %v8237
        %v8239 = vsel %vm8037, %v6698, 0.0
        %v8240 = vadd.f32 %v8238, %v8239
        %v8241 = vsel %vm8037, %v6727, 0.0
        %v8242 = vadd.f32 %v8240, %v8241
        %v8243 = vsel %vm8037, %v6756, 0.0
        %v8244 = vadd.f32 %v8242, %v8243
        %v8245 = vsel %vm8037, %v6785, 0.0
        %v8246 = vadd.f32 %v8244, %v8245
        %v8247 = vsel %vm8037, %v6814, 0.0
        %v8248 = vadd.f32 %v8246, %v8247
        %v8249 = vsel %vm8037, %v6843, 0.0
        %v8250 = vadd.f32 %v8248, %v8249
        %v8251 = vsel %vm8037, %v6872, 0.0
        %v8252 = vadd.f32 %v8250, %v8251
        %v8253 = vsel %vm8037, %v6901, 0.0
        %v8254 = vadd.f32 %v8252, %v8253
        %v8255 = vsel %vm8037, %v6930, 0.0
        %v8256 = vadd.f32 %v8254, %v8255
        %v8257 = vsel %vm8037, %v6959, 0.0
        %v8258 = vadd.f32 %v8256, %v8257
        %v8259 = vsel %vm8037, %v6988, 0.0
        %v8260 = vadd.f32 %v8258, %v8259
        %v8261 = vsel %vm8037, %v7017, 0.0
        %v8262 = vadd.f32 %v8260, %v8261
        %v8263 = vsel %vm8037, %v7046, 0.0
        %v8264 = vadd.f32 %v8262, %v8263
        %v8265 = vsel %vm8037, %v7075, 0.0
        %v8266 = vadd.f32 %v8264, %v8265
        %v8267 = vsel %vm8037, %v7104, 0.0
        %v8268 = vadd.f32 %v8266, %v8267
        %v8269 = vsel %vm8037, %v7133, 0.0
        %v8270 = vadd.f32 %v8268, %v8269
        %v8271 = vsel %vm8037, %v7162, 0.0
        %v8272 = vadd.f32 %v8270, %v8271
        %v8273 = vsel %vm8037, %v7191, 0.0
        %v8274 = vadd.f32 %v8272, %v8273
        %v8275 = vsel %vm8037, %v7220, 0.0
        %v8276 = vadd.f32 %v8274, %v8275
        %v8277 = vsel %vm8037, %v7249, 0.0
        %v8278 = vadd.f32 %v8276, %v8277
        %v8279 = vsel %vm8037, %v7278, 0.0
        %v8280 = vadd.f32 %v8278, %v8279
        %v8281 = vsel %vm8037, %v7307, 0.0
        %v8282 = vadd.f32 %v8280, %v8281
        %v8283 = vsel %vm8037, %v6614, 0.0
        %v8284 = vsel %vm8037, %v6643, 0.0
        %v8285 = vadd.f32 %v8283, %v8284
        %v8286 = vsel %vm8037, %v6672, 0.0
        %v8287 = vadd.f32 %v8285, %v8286
        %v8288 = vsel %vm8037, %v6701, 0.0
        %v8289 = vadd.f32 %v8287, %v8288
        %v8290 = vsel %vm8037, %v6730, 0.0
        %v8291 = vadd.f32 %v8289, %v8290
        %v8292 = vsel %vm8037, %v6759, 0.0
        %v8293 = vadd.f32 %v8291, %v8292
        %v8294 = vsel %vm8037, %v6788, 0.0
        %v8295 = vadd.f32 %v8293, %v8294
        %v8296 = vsel %vm8037, %v6817, 0.0
        %v8297 = vadd.f32 %v8295, %v8296
        %v8298 = vsel %vm8037, %v6846, 0.0
        %v8299 = vadd.f32 %v8297, %v8298
        %v8300 = vsel %vm8037, %v6875, 0.0
        %v8301 = vadd.f32 %v8299, %v8300
        %v8302 = vsel %vm8037, %v6904, 0.0
        %v8303 = vadd.f32 %v8301, %v8302
        %v8304 = vsel %vm8037, %v6933, 0.0
        %v8305 = vadd.f32 %v8303, %v8304
        %v8306 = vsel %vm8037, %v6962, 0.0
        %v8307 = vadd.f32 %v8305, %v8306
        %v8308 = vsel %vm8037, %v6991, 0.0
        %v8309 = vadd.f32 %v8307, %v8308
        %v8310 = vsel %vm8037, %v7020, 0.0
        %v8311 = vadd.f32 %v8309, %v8310
        %v8312 = vsel %vm8037, %v7049, 0.0
        %v8313 = vadd.f32 %v8311, %v8312
        %v8314 = vsel %vm8037, %v7078, 0.0
        %v8315 = vadd.f32 %v8313, %v8314
        %v8316 = vsel %vm8037, %v7107, 0.0
        %v8317 = vadd.f32 %v8315, %v8316
        %v8318 = vsel %vm8037, %v7136, 0.0
        %v8319 = vadd.f32 %v8317, %v8318
        %v8320 = vsel %vm8037, %v7165, 0.0
        %v8321 = vadd.f32 %v8319, %v8320
        %v8322 = vsel %vm8037, %v7194, 0.0
        %v8323 = vadd.f32 %v8321, %v8322
        %v8324 = vsel %vm8037, %v7223, 0.0
        %v8325 = vadd.f32 %v8323, %v8324
        %v8326 = vsel %vm8037, %v7252, 0.0
        %v8327 = vadd.f32 %v8325, %v8326
        %v8328 = vsel %vm8037, %v7281, 0.0
        %v8329 = vadd.f32 %v8327, %v8328
        %v8330 = vsel %vm8037, %v7310, 0.0
        %v8331 = vadd.f32 %v8329, %v8330
        %v8332 = vsel %vm8037, %v7336, 0.0
        %v8333 = vsel %vm8037, %v7365, 0.0
        %v8334 = vadd.f32 %v8332, %v8333
        %v8335 = vsel %vm8037, %v7394, 0.0
        %v8336 = vadd.f32 %v8334, %v8335
        %v8337 = vsel %vm8037, %v7423, 0.0
        %v8338 = vadd.f32 %v8336, %v8337
        %v8339 = vsel %vm8037, %v7452, 0.0
        %v8340 = vadd.f32 %v8338, %v8339
        %v8341 = vsel %vm8037, %v7481, 0.0
        %v8342 = vadd.f32 %v8340, %v8341
        %v8343 = vsel %vm8037, %v7510, 0.0
        %v8344 = vadd.f32 %v8342, %v8343
        %v8345 = vsel %vm8037, %v7539, 0.0
        %v8346 = vadd.f32 %v8344, %v8345
        %v8347 = vsel %vm8037, %v7568, 0.0
        %v8348 = vadd.f32 %v8346, %v8347
        %v8349 = vsel %vm8037, %v7597, 0.0
        %v8350 = vadd.f32 %v8348, %v8349
        %v8351 = vsel %vm8037, %v7626, 0.0
        %v8352 = vadd.f32 %v8350, %v8351
        %v8353 = vsel %vm8037, %v7655, 0.0
        %v8354 = vadd.f32 %v8352, %v8353
        %v8355 = vsel %vm8037, %v7684, 0.0
        %v8356 = vadd.f32 %v8354, %v8355
        %v8357 = vsel %vm8037, %v7713, 0.0
        %v8358 = vadd.f32 %v8356, %v8357
        %v8359 = vsel %vm8037, %v7742, 0.0
        %v8360 = vadd.f32 %v8358, %v8359
        %v8361 = vsel %vm8037, %v7771, 0.0
        %v8362 = vadd.f32 %v8360, %v8361
        %v8363 = vsel %vm8037, %v7800, 0.0
        %v8364 = vadd.f32 %v8362, %v8363
        %v8365 = vsel %vm8037, %v7829, 0.0
        %v8366 = vadd.f32 %v8364, %v8365
        %v8367 = vsel %vm8037, %v7858, 0.0
        %v8368 = vadd.f32 %v8366, %v8367
        %v8369 = vsel %vm8037, %v7887, 0.0
        %v8370 = vadd.f32 %v8368, %v8369
        %v8371 = vsel %vm8037, %v7916, 0.0
        %v8372 = vadd.f32 %v8370, %v8371
        %v8373 = vsel %vm8037, %v7945, 0.0
        %v8374 = vadd.f32 %v8372, %v8373
        %v8375 = vsel %vm8037, %v7974, 0.0
        %v8376 = vadd.f32 %v8374, %v8375
        %v8377 = vsel %vm8037, %v8003, 0.0
        %v8378 = vadd.f32 %v8376, %v8377
        %v8379 = vsel %vm8037, %v8032, 0.0
        %v8380 = vadd.f32 %v8378, %v8379
        %v8381 = vsel %vm8037, %v7339, 0.0
        %v8382 = vsel %vm8037, %v7368, 0.0
        %v8383 = vadd.f32 %v8381, %v8382
        %v8384 = vsel %vm8037, %v7397, 0.0
        %v8385 = vadd.f32 %v8383, %v8384
        %v8386 = vsel %vm8037, %v7426, 0.0
        %v8387 = vadd.f32 %v8385, %v8386
        %v8388 = vsel %vm8037, %v7455, 0.0
        %v8389 = vadd.f32 %v8387, %v8388
        %v8390 = vsel %vm8037, %v7484, 0.0
        %v8391 = vadd.f32 %v8389, %v8390
        %v8392 = vsel %vm8037, %v7513, 0.0
        %v8393 = vadd.f32 %v8391, %v8392
        %v8394 = vsel %vm8037, %v7542, 0.0
        %v8395 = vadd.f32 %v8393, %v8394
        %v8396 = vsel %vm8037, %v7571, 0.0
        %v8397 = vadd.f32 %v8395, %v8396
        %v8398 = vsel %vm8037, %v7600, 0.0
        %v8399 = vadd.f32 %v8397, %v8398
        %v8400 = vsel %vm8037, %v7629, 0.0
        %v8401 = vadd.f32 %v8399, %v8400
        %v8402 = vsel %vm8037, %v7658, 0.0
        %v8403 = vadd.f32 %v8401, %v8402
        %v8404 = vsel %vm8037, %v7687, 0.0
        %v8405 = vadd.f32 %v8403, %v8404
        %v8406 = vsel %vm8037, %v7716, 0.0
        %v8407 = vadd.f32 %v8405, %v8406
        %v8408 = vsel %vm8037, %v7745, 0.0
        %v8409 = vadd.f32 %v8407, %v8408
        %v8410 = vsel %vm8037, %v7774, 0.0
        %v8411 = vadd.f32 %v8409, %v8410
        %v8412 = vsel %vm8037, %v7803, 0.0
        %v8413 = vadd.f32 %v8411, %v8412
        %v8414 = vsel %vm8037, %v7832, 0.0
        %v8415 = vadd.f32 %v8413, %v8414
        %v8416 = vsel %vm8037, %v7861, 0.0
        %v8417 = vadd.f32 %v8415, %v8416
        %v8418 = vsel %vm8037, %v7890, 0.0
        %v8419 = vadd.f32 %v8417, %v8418
        %v8420 = vsel %vm8037, %v7919, 0.0
        %v8421 = vadd.f32 %v8419, %v8420
        %v8422 = vsel %vm8037, %v7948, 0.0
        %v8423 = vadd.f32 %v8421, %v8422
        %v8424 = vsel %vm8037, %v7977, 0.0
        %v8425 = vadd.f32 %v8423, %v8424
        %v8426 = vsel %vm8037, %v8006, 0.0
        %v8427 = vadd.f32 %v8425, %v8426
        %v8428 = vsel %vm8037, %v8035, 0.0
        %v8429 = vadd.f32 %v8427, %v8428
        %v8430 = vld [vmem:[%s4 + $0x1] sm:$0x1]
        %v8431 = vperm.slane %v8430, 0
        %v8432 = vadd.f32 %v8086, %v8431
        %v8433 = vadd.f32 %v8135, %v8431
        %v8434 = vadd.f32 %v8184, %v8431
        %v8435 = vadd.f32 %v8233, %v8431
        %v8436 = vadd.f32 %v8282, %v8431
        %v8437 = vadd.f32 %v8331, %v8431
        %v8438 = vadd.f32 %v8380, %v8431
        %v8439 = vadd.f32 %v8429, %v8431
        %v8440 = vxor.u32 %v8432, 2147483648
        %v8441 = vxor.u32 %v8433, 2147483648
        %v8442 = vxor.u32 %v8434, 2147483648
        %v8443 = vxor.u32 %v8435, 2147483648
        %v8444 = vxor.u32 %v8436, 2147483648
        %v8445 = vxor.u32 %v8437, 2147483648
        %v8446 = vxor.u32 %v8438, 2147483648
        %v8447 = vxor.u32 %v8439, 2147483648
        %v8448 = vmul.f32 %v8440, 1.442695
        %v8449 = vpow.pop %v8448
        %v8450 = vmul.f32 %v8441, 1.442695
        %v8451 = vpow.pop %v8450
        %v8452 = vmul.f32 %v8442, 1.442695
        %v8453 = vpow.pop %v8452
        %v8454 = vmul.f32 %v8443, 1.442695
        %v8455 = vpow.pop %v8454
        %v8456 = vmul.f32 %v8444, 1.442695
        %v8457 = vpow.pop %v8456
        %v8458 = vmul.f32 %v8445, 1.442695
        %v8459 = vpow.pop %v8458
        %v8460 = vmul.f32 %v8446, 1.442695
        %v8461 = vpow.pop %v8460
        %v8462 = vmul.f32 %v8447, 1.442695
        %v8463 = vpow.pop %v8462
        %v8464 = vadd.f32 %v8449, 1.0
        %v8465 = vadd.f32 %v8451, 1.0
        %v8466 = vadd.f32 %v8453, 1.0
        %v8467 = vadd.f32 %v8455, 1.0
        %v8468 = vadd.f32 %v8457, 1.0
        %v8469 = vadd.f32 %v8459, 1.0
        %v8470 = vadd.f32 %v8461, 1.0
        %v8471 = vadd.f32 %v8463, 1.0
        %v8472 = vrcp.pop %v8464
        %v8473 = vmul.f32 %v8464, %v8472
        %v8474 = vsub.f32 1.0, %v8473
        %v8475 = vmul.f32 %v8472, %v8474
        %v8476 = vadd.f32 %v8472, %v8475
        %vm8477 = vweird.f32 %v8464
        %vm8478 = vweird.f32 %v8472
        %vm8479 = vmor %vm8477, %vm8478
        %v8480 = vsel %vm8479, %v8472, %v8476
        %v8481 = vand.u32 2147483647, %v8464
        %vm8482 = vcmp.eq.f32.partialorder %v8481, 8.507059e+37
        %v8483 = vand.u32 %v8464, 2147483648
        %v8484 = vor.u32 1.1754944e-38, %v8483
        %v8485 = vsel %vm8482, %v8484, %v8480
        %v8486 = vmul.f32 1.0, %v8485
        %v8487 = vrcp.pop %v8465
        %v8488 = vmul.f32 %v8465, %v8487
        %v8489 = vsub.f32 1.0, %v8488
        %v8490 = vmul.f32 %v8487, %v8489
        %v8491 = vadd.f32 %v8487, %v8490
        %vm8492 = vweird.f32 %v8465
        %vm8493 = vweird.f32 %v8487
        %vm8494 = vmor %vm8492, %vm8493
        %v8495 = vsel %vm8494, %v8487, %v8491
        %v8496 = vand.u32 2147483647, %v8465
        %vm8497 = vcmp.eq.f32.partialorder %v8496, 8.507059e+37
        %v8498 = vand.u32 %v8465, 2147483648
        %v8499 = vor.u32 1.1754944e-38, %v8498
        %v8500 = vsel %vm8497, %v8499, %v8495
        %v8501 = vmul.f32 1.0, %v8500
        %v8502 = vrcp.pop %v8466
        %v8503 = vmul.f32 %v8466, %v8502
        %v8504 = vsub.f32 1.0, %v8503
        %v8505 = vmul.f32 %v8502, %v8504
        %v8506 = vadd.f32 %v8502, %v8505
        %vm8507 = vweird.f32 %v8466
        %vm8508 = vweird.f32 %v8502
        %vm8509 = vmor %vm8507, %vm8508
        %v8510 = vsel %vm8509, %v8502, %v8506
        %v8511 = vand.u32 2147483647, %v8466
        %vm8512 = vcmp.eq.f32.partialorder %v8511, 8.507059e+37
        %v8513 = vand.u32 %v8466, 2147483648
        %v8514 = vor.u32 1.1754944e-38, %v8513
        %v8515 = vsel %vm8512, %v8514, %v8510
        %v8516 = vmul.f32 1.0, %v8515
        %v8517 = vrcp.pop %v8467
        %v8518 = vmul.f32 %v8467, %v8517
        %v8519 = vsub.f32 1.0, %v8518
        %v8520 = vmul.f32 %v8517, %v8519
        %v8521 = vadd.f32 %v8517, %v8520
        %vm8522 = vweird.f32 %v8467
        %vm8523 = vweird.f32 %v8517
        %vm8524 = vmor %vm8522, %vm8523
        %v8525 = vsel %vm8524, %v8517, %v8521
        %v8526 = vand.u32 2147483647, %v8467
        %vm8527 = vcmp.eq.f32.partialorder %v8526, 8.507059e+37
        %v8528 = vand.u32 %v8467, 2147483648
        %v8529 = vor.u32 1.1754944e-38, %v8528
        %v8530 = vsel %vm8527, %v8529, %v8525
        %v8531 = vmul.f32 1.0, %v8530
        %v8532 = vrcp.pop %v8468
        %v8533 = vmul.f32 %v8468, %v8532
        %v8534 = vsub.f32 1.0, %v8533
        %v8535 = vmul.f32 %v8532, %v8534
        %v8536 = vadd.f32 %v8532, %v8535
        %vm8537 = vweird.f32 %v8468
        %vm8538 = vweird.f32 %v8532
        %vm8539 = vmor %vm8537, %vm8538
        %v8540 = vsel %vm8539, %v8532, %v8536
        %v8541 = vand.u32 2147483647, %v8468
        %vm8542 = vcmp.eq.f32.partialorder %v8541, 8.507059e+37
        %v8543 = vand.u32 %v8468, 2147483648
        %v8544 = vor.u32 1.1754944e-38, %v8543
        %v8545 = vsel %vm8542, %v8544, %v8540
        %v8546 = vmul.f32 1.0, %v8545
        %v8547 = vrcp.pop %v8469
        %v8548 = vmul.f32 %v8469, %v8547
        %v8549 = vsub.f32 1.0, %v8548
        %v8550 = vmul.f32 %v8547, %v8549
        %v8551 = vadd.f32 %v8547, %v8550
        %vm8552 = vweird.f32 %v8469
        %vm8553 = vweird.f32 %v8547
        %vm8554 = vmor %vm8552, %vm8553
        %v8555 = vsel %vm8554, %v8547, %v8551
        %v8556 = vand.u32 2147483647, %v8469
        %vm8557 = vcmp.eq.f32.partialorder %v8556, 8.507059e+37
        %v8558 = vand.u32 %v8469, 2147483648
        %v8559 = vor.u32 1.1754944e-38, %v8558
        %v8560 = vsel %vm8557, %v8559, %v8555
        %v8561 = vmul.f32 1.0, %v8560
        %v8562 = vrcp.pop %v8470
        %v8563 = vmul.f32 %v8470, %v8562
        %v8564 = vsub.f32 1.0, %v8563
        %v8565 = vmul.f32 %v8562, %v8564
        %v8566 = vadd.f32 %v8562, %v8565
        %vm8567 = vweird.f32 %v8470
        %vm8568 = vweird.f32 %v8562
        %vm8569 = vmor %vm8567, %vm8568
        %v8570 = vsel %vm8569, %v8562, %v8566
        %v8571 = vand.u32 2147483647, %v8470
        %vm8572 = vcmp.eq.f32.partialorder %v8571, 8.507059e+37
        %v8573 = vand.u32 %v8470, 2147483648
        %v8574 = vor.u32 1.1754944e-38, %v8573
        %v8575 = vsel %vm8572, %v8574, %v8570
        %v8576 = vmul.f32 1.0, %v8575
        %v8577 = vrcp.pop %v8471
        %v8578 = vmul.f32 %v8471, %v8577
        %v8579 = vsub.f32 1.0, %v8578
        %v8580 = vmul.f32 %v8577, %v8579
        %v8581 = vadd.f32 %v8577, %v8580
        %vm8582 = vweird.f32 %v8471
        %vm8583 = vweird.f32 %v8577
        %vm8584 = vmor %vm8582, %vm8583
        %v8585 = vsel %vm8584, %v8577, %v8581
        %v8586 = vand.u32 2147483647, %v8471
        %vm8587 = vcmp.eq.f32.partialorder %v8586, 8.507059e+37
        %v8588 = vand.u32 %v8471, 2147483648
        %v8589 = vor.u32 1.1754944e-38, %v8588
        %v8590 = vsel %vm8587, %v8589, %v8585
        %v8591 = vmul.f32 1.0, %v8590
        %v8592 = vsel %vm8037, %v8486, 0.0
        %v8593 = vsel %vm8037, %v8501, 0.0
        %v8594 = vadd.f32 %v8592, %v8593
        %v8595 = vrot.slane %v8594, 4
        %v8596 = vadd.f32 %v8594, %v8595
        %v8597 = vrot.slane %v8596, 2
        %v8598 = vadd.f32 %v8596, %v8597
        %v8599 = vrot.slane %v8598, 1
        %v8600 = vadd.f32 %v8598, %v8599
        %v8601 = vsel %vm8037, %v8516, 0.0
        %v8602 = vsel %vm8037, %v8531, 0.0
        %v8603 = vadd.f32 %v8601, %v8602
        %v8604 = vrot.slane %v8603, 4
        %v8605 = vadd.f32 %v8603, %v8604
        %v8606 = vrot.slane %v8605, 2
        %v8607 = vadd.f32 %v8605, %v8606
        %v8608 = vrot.slane %v8607, 1
        %v8609 = vadd.f32 %v8607, %v8608
        %v8610 = vsel %vm8037, %v8546, 0.0
        %v8611 = vsel %vm8037, %v8561, 0.0
        %v8612 = vadd.f32 %v8610, %v8611
        %v8613 = vrot.slane %v8612, 4
        %v8614 = vadd.f32 %v8612, %v8613
        %v8615 = vrot.slane %v8614, 2
        %v8616 = vadd.f32 %v8614, %v8615
        %v8617 = vrot.slane %v8616, 1
        %v8618 = vadd.f32 %v8616, %v8617
        %v8619 = vsel %vm8037, %v8576, 0.0
        %v8620 = vsel %vm8037, %v8591, 0.0
        %v8621 = vadd.f32 %v8619, %v8620
        %v8622 = vrot.slane %v8621, 4
        %v8623 = vadd.f32 %v8621, %v8622
        %v8624 = vrot.slane %v8623, 2
        %v8625 = vadd.f32 %v8623, %v8624
        %v8626 = vrot.slane %v8625, 1
        %v8627 = vadd.f32 %v8625, %v8626
        %v8628 = vrcp.pop 16.0
        %v8629 = vmul.f32 16.0, %v8628
        %v8630 = vsub.f32 1.0, %v8629
        %v8631 = vmul.f32 %v8628, %v8630
        %v8632 = vadd.f32 %v8628, %v8631
        %vm8633 = vweird.f32 %v8628
        %v8634 = vsel %vm8633, %v8628, %v8632
        %v8635 = vmul.f32 %v8600, %v8634
        %v8636 = vmul.f32 %v8609, %v8634
        %v8637 = vmul.f32 %v8618, %v8634
        %v8638 = vmul.f32 %v8627, %v8634
        %v8639 = vld [vmem:[%s5] sm:$0xff]
        %v8640 = vld [vmem:[%s5 + $0x8] sm:$0xff]
        %v8641 = vld [vmem:[%s4 + $0x2] sm:$0x1]
        %v8642 = vperm.slane %v8641, 0
        %vm8647 = vcmask 1041409
        %v8648 = vsel %vm8647, %v8636, %v8635
        %vm8649 = vcmask 1042434
        %v8650 = vsel %vm8649, %v8637, %v8648
        %vm8651 = vcmask 1043459
        %v8652 = vsel %vm8651, %v8638, %v8650
        %v8653 = vsel %vm8037, %v8652, 0
        %8655 = vmatpush.msra.mxu0 0.0
        %8656 = vmatpush.msra.mxu0 0.0
        %8657 = vmatpush.msra.mxu0 0.0
        %8658 = vmatpush.msra.mxu0 0.0
        %8659 = vmatpush.msra.mxu0 0.0
        %8660 = vmatpush.msra.mxu0 0.0
        %8661 = vmatpush.msra.mxu0 0.0
        %8662 = vmatpush.msra.mxu0 0.0
        %8663 = vmatpush.msra.mxu0 0.0
        %8664 = vmatpush.msra.mxu0 0.0
        %8665 = vmatpush.msra.mxu0 0.0
        %8666 = vmatpush.msra.mxu0 0.0
        %8667 = vmatpush.msra.mxu0 0.0
        %8668 = vmatpush.msra.mxu0 0.0
        %8669 = vmatpush.msra.mxu0 %v8640
        %8670 = vmatpush.msra.mxu0 %v8639
        %8671 = vmatmul.f32.gmra.mxu0 %v8653
        %v8672 = vpop.f32.mrf.mxu0
        %v8673 = vadd.f32 %v8642, %v8672
        %8674 = vdwg.mxu0
        %v8675 = vxor.u32 %v8673, 2147483648
        %v8676 = vmul.f32 %v8675, 1.442695
        %v8677 = vpow.pop %v8676
        %v8678 = vadd.f32 %v8677, 1.0
        %v8679 = vrcp.pop %v8678
        %v8680 = vmul.f32 %v8678, %v8679
        %v8681 = vsub.f32 1.0, %v8680
        %v8682 = vmul.f32 %v8679, %v8681
        %v8683 = vadd.f32 %v8679, %v8682
        %vm8684 = vweird.f32 %v8678
        %vm8685 = vweird.f32 %v8679
        %vm8686 = vmor %vm8684, %vm8685
        %v8687 = vsel %vm8686, %v8679, %v8683
        %v8688 = vand.u32 2147483647, %v8678
        %vm8689 = vcmp.eq.f32.partialorder %v8688, 8.507059e+37
        %v8690 = vand.u32 %v8678, 2147483648
        %v8691 = vor.u32 1.1754944e-38, %v8690
        %v8692 = vsel %vm8689, %v8691, %v8687
        %v8693 = vmul.f32 1.0, %v8692
        %v8694 = vld [vmem:[%s6] sm:$0xff]
        %v8695 = vld [vmem:[%s6 + $0x8] sm:$0xff]
        %v8696 = vld [vmem:[%s6 + $0x10] sm:$0xff]
        %v8697 = vld [vmem:[%s6 + $0x18] sm:$0xff]
        %v8698 = vld [vmem:[%s6 + $0x20] sm:$0xff]
        %v8699 = vld [vmem:[%s6 + $0x28] sm:$0xff]
        %v8700 = vld [vmem:[%s6 + $0x30] sm:$0xff]
        %v8701 = vld [vmem:[%s6 + $0x38] sm:$0xff]
        %v8702 = vld [vmem:[%s6 + $0x40] sm:$0xff]
        %v8703 = vld [vmem:[%s6 + $0x48] sm:$0xff]
        %v8704 = vld [vmem:[%s6 + $0x50] sm:$0xff]
        %v8705 = vld [vmem:[%s6 + $0x58] sm:$0xff]
        %v8706 = vld [vmem:[%s6 + $0x60] sm:$0xff]
        %v8707 = vld [vmem:[%s6 + $0x68] sm:$0xff]
        %v8708 = vld [vmem:[%s6 + $0x70] sm:$0xff]
        %v8709 = vld [vmem:[%s4 + $0x3] sm:$0x1]
        %v8710 = vperm.slane %v8709, 0
        %vm8711 = vcmask 982016
        %v8713 = vsel %vm8711, %v8693, 0
        %8715 = vmatpush.msra.mxu0 0.0
        %8716 = vmatpush.msra.mxu0 %v8708
        %8717 = vmatpush.msra.mxu0 %v8707
        %8718 = vmatpush.msra.mxu0 %v8706
        %8719 = vmatpush.msra.mxu0 %v8705
        %8720 = vmatpush.msra.mxu0 %v8704
        %8721 = vmatpush.msra.mxu0 %v8703
        %8722 = vmatpush.msra.mxu0 %v8702
        %8723 = vmatpush.msra.mxu0 %v8701
        %8724 = vmatpush.msra.mxu0 %v8700
        %8725 = vmatpush.msra.mxu0 %v8699
        %8726 = vmatpush.msra.mxu0 %v8698
        %8727 = vmatpush.msra.mxu0 %v8697
        %8728 = vmatpush.msra.mxu0 %v8696
        %8729 = vmatpush.msra.mxu0 %v8695
        %8730 = vmatpush.msra.mxu0 %v8694
        %8731 = vmatmul.f32.gmra.mxu0 %v8713
        %v8732 = vpop.f32.mrf.mxu0
        %v8733 = vadd.f32 %v8710, %v8732
        %8734 = vdwg.mxu0
        %v8735 = vxor.u32 %v8733, 2147483648
        %v8736 = vmul.f32 %v8735, 1.442695
        %v8737 = vpow.pop %v8736
        %v8738 = vadd.f32 %v8737, 1.0
        %v8739 = vrcp.pop %v8738
        %v8740 = vmul.f32 %v8738, %v8739
        %v8741 = vsub.f32 1.0, %v8740
        %v8742 = vmul.f32 %v8739, %v8741
        %v8743 = vadd.f32 %v8739, %v8742
        %vm8744 = vweird.f32 %v8738
        %vm8745 = vweird.f32 %v8739
        %vm8746 = vmor %vm8744, %vm8745
        %v8747 = vsel %vm8746, %v8739, %v8743
        %v8748 = vand.u32 2147483647, %v8738
        %vm8749 = vcmp.eq.f32.partialorder %v8748, 8.507059e+37
        %v8750 = vand.u32 %v8738, 2147483648
        %v8751 = vor.u32 1.1754944e-38, %v8750
        %v8752 = vsel %vm8749, %v8751, %v8747
        %v8753 = vmul.f32 1.0, %v8752
        %v8754 = vld [vmem:[%s7] sm:$0xff]
        %v8755 = vld [vmem:[%s7 + $0x8] sm:$0xff]
        %v8756 = vld [vmem:[%s7 + $0x10] sm:$0xff]
        %v8757 = vld [vmem:[%s7 + $0x18] sm:$0xff]
        %v8758 = vld [vmem:[%s7 + $0x20] sm:$0xff]
        %v8759 = vld [vmem:[%s7 + $0x28] sm:$0xff]
        %v8760 = vld [vmem:[%s7 + $0x30] sm:$0xff]
        %v8761 = vld [vmem:[%s7 + $0x38] sm:$0xff]
        %v8762 = vld [vmem:[%s7 + $0x40] sm:$0xff]
        %v8763 = vld [vmem:[%s7 + $0x48] sm:$0xff]
        %v8764 = vld [vmem:[%s7 + $0x50] sm:$0xf]
        %v8765 = vld [vmem:[%s8] sm:$0x1]
        %v8767 = vperm.slane %v8765, 0
        %vm8769 = vcmask 687104
        %v8771 = vsel %vm8769, %v8753, 0
        %vm8773 = vcmask 1043456
        %v8775 = vsel %vm8773, %v8764, 0
        %8777 = vmatpush.msra.mxu0 0.0
        %8778 = vmatpush.msra.mxu0 0.0
        %8779 = vmatpush.msra.mxu0 0.0
        %8780 = vmatpush.msra.mxu0 0.0
        %8781 = vmatpush.msra.mxu0 0.0
        %8782 = vmatpush.msra.mxu0 %v8775
        %8783 = vmatpush.msra.mxu0 %v8763
        %8784 = vmatpush.msra.mxu0 %v8762
        %8785 = vmatpush.msra.mxu0 %v8761
        %8786 = vmatpush.msra.mxu0 %v8760
        %8787 = vmatpush.msra.mxu0 %v8759
        %8788 = vmatpush.msra.mxu0 %v8758
        %8789 = vmatpush.msra.mxu0 %v8757
        %8790 = vmatpush.msra.mxu0 %v8756
        %8791 = vmatpush.msra.mxu0 %v8755
        %8792 = vmatpush.msra.mxu0 %v8754
        %8793 = vmatmul.f32.gmra.mxu0 %v8771
        %v8794 = vpop.f32.mrf.mxu0
        %v8795 = vadd.f32 %v8767, %v8794
        %8796 = vdwg.mxu0
        %8797 = vst [vmem:[%s328] sm:$0xf] %v8795
        %s8798 = sand.u32 %s225, 1
        %s8799 = scalar_lea.sflag [#allocation3], %s8798
        %s8800 = sand.u32 %s225, 1
        %s8801 = smul.addr %s8800, 4
        %s8802 = scalar_lea.vmem [#allocation2], %s8801
        // Predicated region
        $region57: #{_lambda_.1} parent=55 // pred_check
          %p8803 = pneg %p235
        $region58: #{_lambda_.1} parent=55 // pred_check_branch
          %8805 = sbr.rel (%p8803) target = $region60
        $region59: #{_lambda_.1} parent=55 // pred_region
          %8807 = vsyncadd %s8799, 0
          %s8808 = smul.addr %s23, 4
          %s8809 = scalar_lea.hbm %s9, %s8808
          %s8811 = sshll.u32 %s8802, 4
          %s8812 = int_to_ptr.vmem [resolvable:$true] %s8811
          %s8813 = sshll.u32 %s8809, 4
          %s8814 = int_to_ptr.hbm [resolvable:$true] %s8813
          %8816 = dma.vmem_to_hbm [thread:$0]  %s8812, 64, %s8814, %s8799
        $region60: #{_lambda_.1} parent=55 // pred_fallthru
          _
      $region56: #{_lambda_.1} parent=5 // pred_fallthru
        _
      %p8817 = scmp.le.s32.totalorder 2, %s18
      // Predicated region
      $region61: #{_lambda_.1} parent=5 // pred_check
        %p8818 = pneg %p8817
      $region62: #{_lambda_.1} parent=5 // pred_check_branch
        %8820 = sbr.rel (%p8818) target = $region64
      $region63: #{_lambda_.1} parent=5 // pred_region
        %s8821 = ssub.s32 %s18, 2
        // Predicated region
        $region65: #{_lambda_.1} parent=63 // pred_check
          %p8822 = pneg %p241
        $region66: #{_lambda_.1} parent=63 // pred_check_branch
          %8824 = sbr.rel (%p8822) target = $region68
        $region67: #{_lambda_.1} parent=63 // pred_region
          %s8825 = sand.u32 %s226, 1
          %s8826 = scalar_lea.sflag [#allocation3], %s8825
          %s8827 = sand.u32 %s226, 1
          %s8828 = smul.addr %s8827, 4
          %s8829 = scalar_lea.vmem [#allocation2], %s8828
          %8831 = dma.done %s8826, 64
        $region68: #{_lambda_.1} parent=63 // pred_fallthru
          _
      $region64: #{_lambda_.1} parent=5 // pred_fallthru
        _
    $region6: #{_lambda_.1} parent=1 // loop_footer
      %s22 = sadd.s32 1, %s18
    $region7: #{_lambda_.1} parent=1 // loop_footer_branch
      %17 = sbr.rel target = $region3
    $region8: #{_lambda_.1} parent=1 // loop_exit
      _
    %8832 = vsyncpa [#allocation3], 1
    %s8833 = scalar_lea.sflag [#allocation3], 1
    %8834 = vsyncpa %s8833, 1

</llo_original>
